<compile_context>
chip_gen: v6e
topology: v6e:2x2x1
jax: 0.10.0
libtpu: 0.0.40
codegen_flags: <defaults>
</compile_context>

<pallas_src>
import functools

import jax
import jax.numpy as jnp
from jax import lax
from jax.experimental import pallas as pl
from jax.experimental.pallas import tpu as pltpu


def _resblock_kernel(x_ref, w1_ref, w2_ref, o_ref, hpad_ref, *, H, W, Cp, eps):
    """Fused conv1+IN+ReLU -> conv2+IN -> residual add for one batch element.

    x_ref:    (1, H+2, W+2, Cp) bf16  zero-padded input (spatial + channel pad)
    w1_ref:   (9, Cp, Cp)       bf16  conv1 taps, ordered (kh, kw), layout (Cin, Cout)
    w2_ref:   (9, Cp, Cp)       bf16  conv2 taps
    o_ref:    (1, H*W, Cp)      f32   h + conv2(h)   (lane-dense output)
    hpad_ref: (H+2, W+2, Cp)    f32   VMEM scratch holding zero-bordered h
    """
    P = H * W

    def conv3x3(tap_fn, w_ref):
        # 9 shifted MXU dots, f32 accumulation (statically unrolled).
        acc = None
        t = 0
        for kh in range(3):
            for kw in range(3):
                xt = tap_fn(kh, kw)                              # (P, Cp) bf16
                d = jnp.dot(xt, w_ref[t], preferred_element_type=jnp.float32)
                acc = d if acc is None else acc + d
                t += 1
        return acc                                               # (P, Cp) f32

    def instnorm(acc, relu):
        # One-pass biased mean/var per channel over all spatial positions (f32).
        inv_n = 1.0 / float(P)
        mean = jnp.sum(acc, axis=0, keepdims=True) * inv_n       # (1, Cp)
        ex2 = jnp.sum(acc * acc, axis=0, keepdims=True) * inv_n  # E[y^2]
        var = jnp.maximum(ex2 - mean * mean, 0.0)
        y = (acc - mean) * lax.rsqrt(var + eps)
        return jnp.maximum(y, 0.0) if relu else y

    # ---- conv1 + InstanceNorm + ReLU --------------------------------------
    def x_tap(kh, kw):
        return x_ref[0, kh:kh + H, kw:kw + W, :].reshape(P, Cp)

    h = instnorm(conv3x3(x_tap, w1_ref), relu=True)              # (P, Cp) f32

    # Stash h in VMEM with a zero border so conv2's taps can be sliced from it.
    hpad_ref[...] = jnp.zeros_like(hpad_ref)
    hpad_ref[1:H + 1, 1:W + 1, :] = h.reshape(H, W, Cp)

    # ---- conv2 + InstanceNorm (no ReLU) -----------------------------------
    def h_tap(kh, kw):
        return hpad_ref[kh:kh + H, kw:kw + W, :].reshape(P, Cp).astype(jnp.bfloat16)

    y2 = instnorm(conv3x3(h_tap, w2_ref), relu=False)            # (P, Cp) f32

    # ---- residual add: h + conv2(h) ----------------------------------------
    h_res = hpad_ref[1:H + 1, 1:W + 1, :].reshape(P, Cp)
    o_ref[0] = (h_res + y2).astype(o_ref.dtype)


def _prep_weight(w, Cp):
    """torch Conv2d weight (Cout, Cin, 3, 3) -> (9, Cp, Cp) bf16, taps ordered (kh, kw)."""
    c_out, c_in, kh, kw = w.shape
    wt = jnp.transpose(w, (2, 3, 1, 0)).reshape(kh * kw, c_in, c_out)
    wt = jnp.pad(wt, ((0, 0), (0, Cp - c_in), (0, Cp - c_out)))
    return wt.astype(jnp.bfloat16)


def residual_block(x_nchw, w1, w2, *, eps=1e-5, lane=128):
    """h = relu(IN(conv3x3(x, w1)));  out = h + IN(conv3x3(h, w2)).  NCHW in / NCHW out."""
    N, C, H, W = x_nchw.shape
    P = H * W
    Cp = ((C + lane - 1) // lane) * lane                         # lane-dense channels

    x = jnp.transpose(x_nchw, (0, 2, 3, 1))                      # NCHW -> NHWC
    x = jnp.pad(x, ((0, 0), (1, 1), (1, 1), (0, Cp - C)))        # spatial zero pad + chan pad
    xb = x.astype(jnp.bfloat16)

    w1b = _prep_weight(w1, Cp)
    w2b = _prep_weight(w2, Cp)

    kernel = functools.partial(_resblock_kernel, H=H, W=W, Cp=Cp, eps=eps)
    out = pl.pallas_call(
        kernel,
        out_shape=jax.ShapeDtypeStruct((N, P, Cp), jnp.float32),
        grid=(N,),
        in_specs=[
            pl.BlockSpec((1, H + 2, W + 2, Cp), lambda b: (b, 0, 0, 0)),
            pl.BlockSpec((9, Cp, Cp), lambda b: (0, 0, 0)),
            pl.BlockSpec((9, Cp, Cp), lambda b: (0, 0, 0)),
        ],
        out_specs=pl.BlockSpec((1, P, Cp), lambda b: (b, 0, 0)),
        scratch_shapes=[pltpu.VMEM((H + 2, W + 2, Cp), jnp.float32)],
        compiler_params=pltpu.CompilerParams(
            dimension_semantics=("parallel",),
            vmem_limit_bytes=32 * 1024 * 1024,
        ),
    )(xb, w1b, w2b)

    out = out.reshape(N, H, W, Cp)[..., :C]                      # drop padded channels
    return jnp.transpose(out, (0, 3, 1, 2))                      # NHWC -> NCHW


def _reference(x, w1, w2, eps=1e-5):
    """Pure-JAX f32 reference matching the PyTorch module."""
    def conv_in(x, w, relu):
        y = lax.conv_general_dilated(
            x, w, window_strides=(1, 1), padding=((1, 1), (1, 1)),
            dimension_numbers=("NCHW", "OIHW", "NCHW"))
        mean = jnp.mean(y, axis=(2, 3), keepdims=True)
        var = jnp.var(y, axis=(2, 3), keepdims=True)             # biased, like InstanceNorm2d
        y = (y - mean) * lax.rsqrt(var + eps)
        return jnp.maximum(y, 0.0) if relu else y

    h = conv_in(x, w1, True)
    return h + conv_in(h, w2, False)


if __name__ == "__main__":
    key = jax.random.PRNGKey(0)
    kw1, kw2, kx = jax.random.split(key, 3)

    # ResidualBlock requires Cin == Cout for the skip connection.
    N, C, H, W = 2, 32, 16, 16
    fan_in = C * 3 * 3
    w1 = jax.random.normal(kw1, (C, C, 3, 3), jnp.float32) / jnp.sqrt(jnp.float32(fan_in))
    w2 = jax.random.normal(kw2, (C, C, 3, 3), jnp.float32) / jnp.sqrt(jnp.float32(fan_in))
    x = jax.random.normal(kx, (N, C, H, W), jnp.float32)

    out = jax.jit(residual_block)(x, w1, w2)
    out = jax.block_until_ready(out)

    assert out.shape == (N, C, H, W), out.shape
    assert bool(jnp.all(jnp.isfinite(out)))

    ref = _reference(x, w1, w2)
    err = float(jnp.max(jnp.abs(out - ref)))
    # bf16 MXU inputs, f32 accumulation/stats -> small mixed-precision tolerance.
    assert err < 0.15, f"max abs err vs f32 reference: {err}"
    print("KERNEL_OK")
</pallas_src>

<mosaic_0001>
module attributes {stable_mosaic.version = 11 : i64} {
  func.func @_resblock_kernel(%arg0: i32, %arg1: memref<1x18x18x128xbf16, #tpu.memory_space<vmem>>, %arg2: memref<9x128x128xbf16, #tpu.memory_space<vmem>>, %arg3: memref<9x128x128xbf16, #tpu.memory_space<vmem>>, %arg4: memref<1x256x128xf32, #tpu.memory_space<vmem>>, %arg5: memref<18x18x128xf32, #tpu.memory_space<vmem>>) attributes {dimension_semantics = [#tpu.dimension_semantics<parallel>], iteration_bounds = array<i64: 2>, scalar_prefetch = 0 : i64, scratch_operands = 1 : i64, tpu.core_type = #tpu.core_type<tc>, window_params = [{transform_indices = @transform_0, window_bounds = array<i64: 1, 18, 18, 128>}, {pipeline_mode = #tpu.pipeline_mode<synchronous>, transform_indices = @transform_1, window_bounds = array<i64: 9, 128, 128>}, {pipeline_mode = #tpu.pipeline_mode<synchronous>, transform_indices = @transform_2, window_bounds = array<i64: 9, 128, 128>}, {transform_indices = @transform_3, window_bounds = array<i64: 1, 256, 128>}]} {
    %c0 = arith.constant 0 : index
    %c0_0 = arith.constant 0 : index
    %c0_1 = arith.constant 0 : index
    %c0_2 = arith.constant 0 : index
    %0 = vector.load %arg1[%c0, %c0_0, %c0_1, %c0_2] : memref<1x18x18x128xbf16, #tpu.memory_space<vmem>>, vector<1x16x16x128xbf16>
    %1 = vector.shape_cast %0 : vector<1x16x16x128xbf16> to vector<16x16x128xbf16>
    %2 = vector.shape_cast %1 : vector<16x16x128xbf16> to vector<256x128xbf16>
    %c0_3 = arith.constant 0 : index
    %c0_4 = arith.constant 0 : index
    %c0_5 = arith.constant 0 : index
    %3 = vector.load %arg2[%c0_3, %c0_4, %c0_5] : memref<9x128x128xbf16, #tpu.memory_space<vmem>>, vector<1x128x128xbf16>
    %4 = vector.shape_cast %3 : vector<1x128x128xbf16> to vector<128x128xbf16>
    %cst = arith.constant dense<0.000000e+00> : vector<256x128xf32>
    %5 = tpu.matmul %2, %4, %cst {dimension_numbers = #tpu.dot_dimension_numbers<[1], [0], [0], [1], [0, 0, 1, 1], [], []>} : vector<256x128xbf16>, vector<128x128xbf16>, vector<256x128xf32> -> vector<256x128xf32>
    %c0_6 = arith.constant 0 : index
    %c0_7 = arith.constant 0 : index
    %c1 = arith.constant 1 : index
    %c0_8 = arith.constant 0 : index
    %6 = vector.load %arg1[%c0_6, %c0_7, %c1, %c0_8] : memref<1x18x18x128xbf16, #tpu.memory_space<vmem>>, vector<1x16x16x128xbf16>
    %7 = vector.shape_cast %6 : vector<1x16x16x128xbf16> to vector<16x16x128xbf16>
    %8 = vector.shape_cast %7 : vector<16x16x128xbf16> to vector<256x128xbf16>
    %c1_9 = arith.constant 1 : index
    %c0_10 = arith.constant 0 : index
    %c0_11 = arith.constant 0 : index
    %9 = vector.load %arg2[%c1_9, %c0_10, %c0_11] : memref<9x128x128xbf16, #tpu.memory_space<vmem>>, vector<1x128x128xbf16>
    %10 = vector.shape_cast %9 : vector<1x128x128xbf16> to vector<128x128xbf16>
    %cst_12 = arith.constant dense<0.000000e+00> : vector<256x128xf32>
    %11 = tpu.matmul %8, %10, %cst_12 {dimension_numbers = #tpu.dot_dimension_numbers<[1], [0], [0], [1], [0, 0, 1, 1], [], []>} : vector<256x128xbf16>, vector<128x128xbf16>, vector<256x128xf32> -> vector<256x128xf32>
    %12 = arith.addf %5, %11 : vector<256x128xf32>
    %c0_13 = arith.constant 0 : index
    %c0_14 = arith.constant 0 : index
    %c2 = arith.constant 2 : index
    %c0_15 = arith.constant 0 : index
    %13 = vector.load %arg1[%c0_13, %c0_14, %c2, %c0_15] : memref<1x18x18x128xbf16, #tpu.memory_space<vmem>>, vector<1x16x16x128xbf16>
    %14 = vector.shape_cast %13 : vector<1x16x16x128xbf16> to vector<16x16x128xbf16>
    %15 = vector.shape_cast %14 : vector<16x16x128xbf16> to vector<256x128xbf16>
    %c2_16 = arith.constant 2 : index
    %c0_17 = arith.constant 0 : index
    %c0_18 = arith.constant 0 : index
    %16 = vector.load %arg2[%c2_16, %c0_17, %c0_18] : memref<9x128x128xbf16, #tpu.memory_space<vmem>>, vector<1x128x128xbf16>
    %17 = vector.shape_cast %16 : vector<1x128x128xbf16> to vector<128x128xbf16>
    %cst_19 = arith.constant dense<0.000000e+00> : vector<256x128xf32>
    %18 = tpu.matmul %15, %17, %cst_19 {dimension_numbers = #tpu.dot_dimension_numbers<[1], [0], [0], [1], [0, 0, 1, 1], [], []>} : vector<256x128xbf16>, vector<128x128xbf16>, vector<256x128xf32> -> vector<256x128xf32>
    %19 = arith.addf %12, %18 : vector<256x128xf32>
    %c0_20 = arith.constant 0 : index
    %c1_21 = arith.constant 1 : index
    %c0_22 = arith.constant 0 : index
    %c0_23 = arith.constant 0 : index
    %20 = vector.load %arg1[%c0_20, %c1_21, %c0_22, %c0_23] : memref<1x18x18x128xbf16, #tpu.memory_space<vmem>>, vector<1x16x16x128xbf16>
    %21 = vector.shape_cast %20 : vector<1x16x16x128xbf16> to vector<16x16x128xbf16>
    %22 = vector.shape_cast %21 : vector<16x16x128xbf16> to vector<256x128xbf16>
    %c3 = arith.constant 3 : index
    %c0_24 = arith.constant 0 : index
    %c0_25 = arith.constant 0 : index
    %23 = vector.load %arg2[%c3, %c0_24, %c0_25] : memref<9x128x128xbf16, #tpu.memory_space<vmem>>, vector<1x128x128xbf16>
    %24 = vector.shape_cast %23 : vector<1x128x128xbf16> to vector<128x128xbf16>
    %cst_26 = arith.constant dense<0.000000e+00> : vector<256x128xf32>
    %25 = tpu.matmul %22, %24, %cst_26 {dimension_numbers = #tpu.dot_dimension_numbers<[1], [0], [0], [1], [0, 0, 1, 1], [], []>} : vector<256x128xbf16>, vector<128x128xbf16>, vector<256x128xf32> -> vector<256x128xf32>
    %26 = arith.addf %19, %25 : vector<256x128xf32>
    %c0_27 = arith.constant 0 : index
    %c1_28 = arith.constant 1 : index
    %c1_29 = arith.constant 1 : index
    %c0_30 = arith.constant 0 : index
    %27 = vector.load %arg1[%c0_27, %c1_28, %c1_29, %c0_30] : memref<1x18x18x128xbf16, #tpu.memory_space<vmem>>, vector<1x16x16x128xbf16>
    %28 = vector.shape_cast %27 : vector<1x16x16x128xbf16> to vector<16x16x128xbf16>
    %29 = vector.shape_cast %28 : vector<16x16x128xbf16> to vector<256x128xbf16>
    %c4 = arith.constant 4 : index
    %c0_31 = arith.constant 0 : index
    %c0_32 = arith.constant 0 : index
    %30 = vector.load %arg2[%c4, %c0_31, %c0_32] : memref<9x128x128xbf16, #tpu.memory_space<vmem>>, vector<1x128x128xbf16>
    %31 = vector.shape_cast %30 : vector<1x128x128xbf16> to vector<128x128xbf16>
    %cst_33 = arith.constant dense<0.000000e+00> : vector<256x128xf32>
    %32 = tpu.matmul %29, %31, %cst_33 {dimension_numbers = #tpu.dot_dimension_numbers<[1], [0], [0], [1], [0, 0, 1, 1], [], []>} : vector<256x128xbf16>, vector<128x128xbf16>, vector<256x128xf32> -> vector<256x128xf32>
    %33 = arith.addf %26, %32 : vector<256x128xf32>
    %c0_34 = arith.constant 0 : index
    %c1_35 = arith.constant 1 : index
    %c2_36 = arith.constant 2 : index
    %c0_37 = arith.constant 0 : index
    %34 = vector.load %arg1[%c0_34, %c1_35, %c2_36, %c0_37] : memref<1x18x18x128xbf16, #tpu.memory_space<vmem>>, vector<1x16x16x128xbf16>
    %35 = vector.shape_cast %34 : vector<1x16x16x128xbf16> to vector<16x16x128xbf16>
    %36 = vector.shape_cast %35 : vector<16x16x128xbf16> to vector<256x128xbf16>
    %c5 = arith.constant 5 : index
    %c0_38 = arith.constant 0 : index
    %c0_39 = arith.constant 0 : index
    %37 = vector.load %arg2[%c5, %c0_38, %c0_39] : memref<9x128x128xbf16, #tpu.memory_space<vmem>>, vector<1x128x128xbf16>
    %38 = vector.shape_cast %37 : vector<1x128x128xbf16> to vector<128x128xbf16>
    %cst_40 = arith.constant dense<0.000000e+00> : vector<256x128xf32>
    %39 = tpu.matmul %36, %38, %cst_40 {dimension_numbers = #tpu.dot_dimension_numbers<[1], [0], [0], [1], [0, 0, 1, 1], [], []>} : vector<256x128xbf16>, vector<128x128xbf16>, vector<256x128xf32> -> vector<256x128xf32>
    %40 = arith.addf %33, %39 : vector<256x128xf32>
    %c0_41 = arith.constant 0 : index
    %c2_42 = arith.constant 2 : index
    %c0_43 = arith.constant 0 : index
    %c0_44 = arith.constant 0 : index
    %41 = vector.load %arg1[%c0_41, %c2_42, %c0_43, %c0_44] : memref<1x18x18x128xbf16, #tpu.memory_space<vmem>>, vector<1x16x16x128xbf16>
    %42 = vector.shape_cast %41 : vector<1x16x16x128xbf16> to vector<16x16x128xbf16>
    %43 = vector.shape_cast %42 : vector<16x16x128xbf16> to vector<256x128xbf16>
    %c6 = arith.constant 6 : index
    %c0_45 = arith.constant 0 : index
    %c0_46 = arith.constant 0 : index
    %44 = vector.load %arg2[%c6, %c0_45, %c0_46] : memref<9x128x128xbf16, #tpu.memory_space<vmem>>, vector<1x128x128xbf16>
    %45 = vector.shape_cast %44 : vector<1x128x128xbf16> to vector<128x128xbf16>
    %cst_47 = arith.constant dense<0.000000e+00> : vector<256x128xf32>
    %46 = tpu.matmul %43, %45, %cst_47 {dimension_numbers = #tpu.dot_dimension_numbers<[1], [0], [0], [1], [0, 0, 1, 1], [], []>} : vector<256x128xbf16>, vector<128x128xbf16>, vector<256x128xf32> -> vector<256x128xf32>
    %47 = arith.addf %40, %46 : vector<256x128xf32>
    %c0_48 = arith.constant 0 : index
    %c2_49 = arith.constant 2 : index
    %c1_50 = arith.constant 1 : index
    %c0_51 = arith.constant 0 : index
    %48 = vector.load %arg1[%c0_48, %c2_49, %c1_50, %c0_51] : memref<1x18x18x128xbf16, #tpu.memory_space<vmem>>, vector<1x16x16x128xbf16>
    %49 = vector.shape_cast %48 : vector<1x16x16x128xbf16> to vector<16x16x128xbf16>
    %50 = vector.shape_cast %49 : vector<16x16x128xbf16> to vector<256x128xbf16>
    %c7 = arith.constant 7 : index
    %c0_52 = arith.constant 0 : index
    %c0_53 = arith.constant 0 : index
    %51 = vector.load %arg2[%c7, %c0_52, %c0_53] : memref<9x128x128xbf16, #tpu.memory_space<vmem>>, vector<1x128x128xbf16>
    %52 = vector.shape_cast %51 : vector<1x128x128xbf16> to vector<128x128xbf16>
    %cst_54 = arith.constant dense<0.000000e+00> : vector<256x128xf32>
    %53 = tpu.matmul %50, %52, %cst_54 {dimension_numbers = #tpu.dot_dimension_numbers<[1], [0], [0], [1], [0, 0, 1, 1], [], []>} : vector<256x128xbf16>, vector<128x128xbf16>, vector<256x128xf32> -> vector<256x128xf32>
    %54 = arith.addf %47, %53 : vector<256x128xf32>
    %c0_55 = arith.constant 0 : index
    %c2_56 = arith.constant 2 : index
    %c2_57 = arith.constant 2 : index
    %c0_58 = arith.constant 0 : index
    %55 = vector.load %arg1[%c0_55, %c2_56, %c2_57, %c0_58] : memref<1x18x18x128xbf16, #tpu.memory_space<vmem>>, vector<1x16x16x128xbf16>
    %56 = vector.shape_cast %55 : vector<1x16x16x128xbf16> to vector<16x16x128xbf16>
    %57 = vector.shape_cast %56 : vector<16x16x128xbf16> to vector<256x128xbf16>
    %c8 = arith.constant 8 : index
    %c0_59 = arith.constant 0 : index
    %c0_60 = arith.constant 0 : index
    %58 = vector.load %arg2[%c8, %c0_59, %c0_60] : memref<9x128x128xbf16, #tpu.memory_space<vmem>>, vector<1x128x128xbf16>
    %59 = vector.shape_cast %58 : vector<1x128x128xbf16> to vector<128x128xbf16>
    %cst_61 = arith.constant dense<0.000000e+00> : vector<256x128xf32>
    %60 = tpu.matmul %57, %59, %cst_61 {dimension_numbers = #tpu.dot_dimension_numbers<[1], [0], [0], [1], [0, 0, 1, 1], [], []>} : vector<256x128xbf16>, vector<128x128xbf16>, vector<256x128xf32> -> vector<256x128xf32>
    %61 = arith.addf %54, %60 : vector<256x128xf32>
    %cst_62 = arith.constant dense<0.000000e+00> : vector<128xf32>
    %62 = vector.multi_reduction <add>, %61, %cst_62 [0] : vector<256x128xf32> to vector<128xf32>
    %63 = vector.shape_cast %62 : vector<128xf32> to vector<1x128xf32>
    %cst_63 = arith.constant 3.906250e-03 : f32
    %64 = vector.broadcast %cst_63 : f32 to vector<1x128xf32>
    %65 = arith.mulf %63, %64 : vector<1x128xf32>
    %66 = arith.mulf %61, %61 : vector<256x128xf32>
    %cst_64 = arith.constant dense<0.000000e+00> : vector<128xf32>
    %67 = vector.multi_reduction <add>, %66, %cst_64 [0] : vector<256x128xf32> to vector<128xf32>
    %68 = vector.shape_cast %67 : vector<128xf32> to vector<1x128xf32>
    %cst_65 = arith.constant 3.906250e-03 : f32
    %69 = vector.broadcast %cst_65 : f32 to vector<1x128xf32>
    %70 = arith.mulf %68, %69 : vector<1x128xf32>
    %71 = arith.mulf %65, %65 : vector<1x128xf32>
    %72 = arith.subf %70, %71 : vector<1x128xf32>
    %cst_66 = arith.constant 0.000000e+00 : f32
    %73 = vector.broadcast %cst_66 : f32 to vector<1x128xf32>
    %74 = arith.maximumf %72, %73 : vector<1x128xf32>
    %75 = vector.broadcast %65 : vector<1x128xf32> to vector<256x128xf32>
    %76 = arith.subf %61, %75 : vector<256x128xf32>
    %cst_67 = arith.constant 9.99999974E-6 : f32
    %77 = vector.broadcast %cst_67 : f32 to vector<1x128xf32>
    %78 = arith.addf %74, %77 : vector<1x128xf32>
    %79 = math.rsqrt %78 : vector<1x128xf32>
    %80 = vector.broadcast %79 : vector<1x128xf32> to vector<256x128xf32>
    %81 = arith.mulf %76, %80 : vector<256x128xf32>
    %cst_68 = arith.constant 0.000000e+00 : f32
    %82 = vector.broadcast %cst_68 : f32 to vector<256x128xf32>
    %83 = arith.maximumf %81, %82 : vector<256x128xf32>
    %cst_69 = arith.constant 0.000000e+00 : f32
    %84 = vector.broadcast %cst_69 : f32 to vector<18x18x128xf32>
    %c0_70 = arith.constant 0 : index
    %c0_71 = arith.constant 0 : index
    %c0_72 = arith.constant 0 : index
    %85 = vector.load %arg5[%c0_70, %c0_71, %c0_72] : memref<18x18x128xf32, #tpu.memory_space<vmem>>, vector<18x18x128xf32>
    tpu.vector_store %arg5[%c0_70, %c0_71, %c0_72], %84 {strides = array<i32>} : memref<18x18x128xf32, #tpu.memory_space<vmem>>, vector<18x18x128xf32>,
    %86 = vector.shape_cast %83 : vector<256x128xf32> to vector<16x16x128xf32>
    %c1_73 = arith.constant 1 : index
    %c1_74 = arith.constant 1 : index
    %c0_75 = arith.constant 0 : index
    %87 = vector.load %arg5[%c1_73, %c1_74, %c0_75] : memref<18x18x128xf32, #tpu.memory_space<vmem>>, vector<16x16x128xf32>
    tpu.vector_store %arg5[%c1_73, %c1_74, %c0_75], %86 {strides = array<i32>} : memref<18x18x128xf32, #tpu.memory_space<vmem>>, vector<16x16x128xf32>,
    %c0_76 = arith.constant 0 : index
    %c0_77 = arith.constant 0 : index
    %c0_78 = arith.constant 0 : index
    %88 = vector.load %arg5[%c0_76, %c0_77, %c0_78] : memref<18x18x128xf32, #tpu.memory_space<vmem>>, vector<16x16x128xf32>
    %89 = vector.shape_cast %88 : vector<16x16x128xf32> to vector<256x128xf32>
    %90 = arith.truncf %89 : vector<256x128xf32> to vector<256x128xbf16>
    %c0_79 = arith.constant 0 : index
    %c0_80 = arith.constant 0 : index
    %c0_81 = arith.constant 0 : index
    %91 = vector.load %arg3[%c0_79, %c0_80, %c0_81] : memref<9x128x128xbf16, #tpu.memory_space<vmem>>, vector<1x128x128xbf16>
    %92 = vector.shape_cast %91 : vector<1x128x128xbf16> to vector<128x128xbf16>
    %cst_82 = arith.constant dense<0.000000e+00> : vector<256x128xf32>
    %93 = tpu.matmul %90, %92, %cst_82 {dimension_numbers = #tpu.dot_dimension_numbers<[1], [0], [0], [1], [0, 0, 1, 1], [], []>} : vector<256x128xbf16>, vector<128x128xbf16>, vector<256x128xf32> -> vector<256x128xf32>
    %c0_83 = arith.constant 0 : index
    %c1_84 = arith.constant 1 : index
    %c0_85 = arith.constant 0 : index
    %94 = vector.load %arg5[%c0_83, %c1_84, %c0_85] : memref<18x18x128xf32, #tpu.memory_space<vmem>>, vector<16x16x128xf32>
    %95 = vector.shape_cast %94 : vector<16x16x128xf32> to vector<256x128xf32>
    %96 = arith.truncf %95 : vector<256x128xf32> to vector<256x128xbf16>
    %c1_86 = arith.constant 1 : index
    %c0_87 = arith.constant 0 : index
    %c0_88 = arith.constant 0 : index
    %97 = vector.load %arg3[%c1_86, %c0_87, %c0_88] : memref<9x128x128xbf16, #tpu.memory_space<vmem>>, vector<1x128x128xbf16>
    %98 = vector.shape_cast %97 : vector<1x128x128xbf16> to vector<128x128xbf16>
    %cst_89 = arith.constant dense<0.000000e+00> : vector<256x128xf32>
    %99 = tpu.matmul %96, %98, %cst_89 {dimension_numbers = #tpu.dot_dimension_numbers<[1], [0], [0], [1], [0, 0, 1, 1], [], []>} : vector<256x128xbf16>, vector<128x128xbf16>, vector<256x128xf32> -> vector<256x128xf32>
    %100 = arith.addf %93, %99 : vector<256x128xf32>
    %c0_90 = arith.constant 0 : index
    %c2_91 = arith.constant 2 : index
    %c0_92 = arith.constant 0 : index
    %101 = vector.load %arg5[%c0_90, %c2_91, %c0_92] : memref<18x18x128xf32, #tpu.memory_space<vmem>>, vector<16x16x128xf32>
    %102 = vector.shape_cast %101 : vector<16x16x128xf32> to vector<256x128xf32>
    %103 = arith.truncf %102 : vector<256x128xf32> to vector<256x128xbf16>
    %c2_93 = arith.constant 2 : index
    %c0_94 = arith.constant 0 : index
    %c0_95 = arith.constant 0 : index
    %104 = vector.load %arg3[%c2_93, %c0_94, %c0_95] : memref<9x128x128xbf16, #tpu.memory_space<vmem>>, vector<1x128x128xbf16>
    %105 = vector.shape_cast %104 : vector<1x128x128xbf16> to vector<128x128xbf16>
    %cst_96 = arith.constant dense<0.000000e+00> : vector<256x128xf32>
    %106 = tpu.matmul %103, %105, %cst_96 {dimension_numbers = #tpu.dot_dimension_numbers<[1], [0], [0], [1], [0, 0, 1, 1], [], []>} : vector<256x128xbf16>, vector<128x128xbf16>, vector<256x128xf32> -> vector<256x128xf32>
    %107 = arith.addf %100, %106 : vector<256x128xf32>
    %c1_97 = arith.constant 1 : index
    %c0_98 = arith.constant 0 : index
    %c0_99 = arith.constant 0 : index
    %108 = vector.load %arg5[%c1_97, %c0_98, %c0_99] : memref<18x18x128xf32, #tpu.memory_space<vmem>>, vector<16x16x128xf32>
    %109 = vector.shape_cast %108 : vector<16x16x128xf32> to vector<256x128xf32>
    %110 = arith.truncf %109 : vector<256x128xf32> to vector<256x128xbf16>
    %c3_100 = arith.constant 3 : index
    %c0_101 = arith.constant 0 : index
    %c0_102 = arith.constant 0 : index
    %111 = vector.load %arg3[%c3_100, %c0_101, %c0_102] : memref<9x128x128xbf16, #tpu.memory_space<vmem>>, vector<1x128x128xbf16>
    %112 = vector.shape_cast %111 : vector<1x128x128xbf16> to vector<128x128xbf16>
    %cst_103 = arith.constant dense<0.000000e+00> : vector<256x128xf32>
    %113 = tpu.matmul %110, %112, %cst_103 {dimension_numbers = #tpu.dot_dimension_numbers<[1], [0], [0], [1], [0, 0, 1, 1], [], []>} : vector<256x128xbf16>, vector<128x128xbf16>, vector<256x128xf32> -> vector<256x128xf32>
    %114 = arith.addf %107, %113 : vector<256x128xf32>
    %c1_104 = arith.constant 1 : index
    %c1_105 = arith.constant 1 : index
    %c0_106 = arith.constant 0 : index
    %115 = vector.load %arg5[%c1_104, %c1_105, %c0_106] : memref<18x18x128xf32, #tpu.memory_space<vmem>>, vector<16x16x128xf32>
    %116 = vector.shape_cast %115 : vector<16x16x128xf32> to vector<256x128xf32>
    %117 = arith.truncf %116 : vector<256x128xf32> to vector<256x128xbf16>
    %c4_107 = arith.constant 4 : index
    %c0_108 = arith.constant 0 : index
    %c0_109 = arith.constant 0 : index
    %118 = vector.load %arg3[%c4_107, %c0_108, %c0_109] : memref<9x128x128xbf16, #tpu.memory_space<vmem>>, vector<1x128x128xbf16>
    %119 = vector.shape_cast %118 : vector<1x128x128xbf16> to vector<128x128xbf16>
    %cst_110 = arith.constant dense<0.000000e+00> : vector<256x128xf32>
    %120 = tpu.matmul %117, %119, %cst_110 {dimension_numbers = #tpu.dot_dimension_numbers<[1], [0], [0], [1], [0, 0, 1, 1], [], []>} : vector<256x128xbf16>, vector<128x128xbf16>, vector<256x128xf32> -> vector<256x128xf32>
    %121 = arith.addf %114, %120 : vector<256x128xf32>
    %c1_111 = arith.constant 1 : index
    %c2_112 = arith.constant 2 : index
    %c0_113 = arith.constant 0 : index
    %122 = vector.load %arg5[%c1_111, %c2_112, %c0_113] : memref<18x18x128xf32, #tpu.memory_space<vmem>>, vector<16x16x128xf32>
    %123 = vector.shape_cast %122 : vector<16x16x128xf32> to vector<256x128xf32>
    %124 = arith.truncf %123 : vector<256x128xf32> to vector<256x128xbf16>
    %c5_114 = arith.constant 5 : index
    %c0_115 = arith.constant 0 : index
    %c0_116 = arith.constant 0 : index
    %125 = vector.load %arg3[%c5_114, %c0_115, %c0_116] : memref<9x128x128xbf16, #tpu.memory_space<vmem>>, vector<1x128x128xbf16>
    %126 = vector.shape_cast %125 : vector<1x128x128xbf16> to vector<128x128xbf16>
    %cst_117 = arith.constant dense<0.000000e+00> : vector<256x128xf32>
    %127 = tpu.matmul %124, %126, %cst_117 {dimension_numbers = #tpu.dot_dimension_numbers<[1], [0], [0], [1], [0, 0, 1, 1], [], []>} : vector<256x128xbf16>, vector<128x128xbf16>, vector<256x128xf32> -> vector<256x128xf32>
    %128 = arith.addf %121, %127 : vector<256x128xf32>
    %c2_118 = arith.constant 2 : index
    %c0_119 = arith.constant 0 : index
    %c0_120 = arith.constant 0 : index
    %129 = vector.load %arg5[%c2_118, %c0_119, %c0_120] : memref<18x18x128xf32, #tpu.memory_space<vmem>>, vector<16x16x128xf32>
    %130 = vector.shape_cast %129 : vector<16x16x128xf32> to vector<256x128xf32>
    %131 = arith.truncf %130 : vector<256x128xf32> to vector<256x128xbf16>
    %c6_121 = arith.constant 6 : index
    %c0_122 = arith.constant 0 : index
    %c0_123 = arith.constant 0 : index
    %132 = vector.load %arg3[%c6_121, %c0_122, %c0_123] : memref<9x128x128xbf16, #tpu.memory_space<vmem>>, vector<1x128x128xbf16>
    %133 = vector.shape_cast %132 : vector<1x128x128xbf16> to vector<128x128xbf16>
    %cst_124 = arith.constant dense<0.000000e+00> : vector<256x128xf32>
    %134 = tpu.matmul %131, %133, %cst_124 {dimension_numbers = #tpu.dot_dimension_numbers<[1], [0], [0], [1], [0, 0, 1, 1], [], []>} : vector<256x128xbf16>, vector<128x128xbf16>, vector<256x128xf32> -> vector<256x128xf32>
    %135 = arith.addf %128, %134 : vector<256x128xf32>
    %c2_125 = arith.constant 2 : index
    %c1_126 = arith.constant 1 : index
    %c0_127 = arith.constant 0 : index
    %136 = vector.load %arg5[%c2_125, %c1_126, %c0_127] : memref<18x18x128xf32, #tpu.memory_space<vmem>>, vector<16x16x128xf32>
    %137 = vector.shape_cast %136 : vector<16x16x128xf32> to vector<256x128xf32>
    %138 = arith.truncf %137 : vector<256x128xf32> to vector<256x128xbf16>
    %c7_128 = arith.constant 7 : index
    %c0_129 = arith.constant 0 : index
    %c0_130 = arith.constant 0 : index
    %139 = vector.load %arg3[%c7_128, %c0_129, %c0_130] : memref<9x128x128xbf16, #tpu.memory_space<vmem>>, vector<1x128x128xbf16>
    %140 = vector.shape_cast %139 : vector<1x128x128xbf16> to vector<128x128xbf16>
    %cst_131 = arith.constant dense<0.000000e+00> : vector<256x128xf32>
    %141 = tpu.matmul %138, %140, %cst_131 {dimension_numbers = #tpu.dot_dimension_numbers<[1], [0], [0], [1], [0, 0, 1, 1], [], []>} : vector<256x128xbf16>, vector<128x128xbf16>, vector<256x128xf32> -> vector<256x128xf32>
    %142 = arith.addf %135, %141 : vector<256x128xf32>
    %c2_132 = arith.constant 2 : index
    %c2_133 = arith.constant 2 : index
    %c0_134 = arith.constant 0 : index
    %143 = vector.load %arg5[%c2_132, %c2_133, %c0_134] : memref<18x18x128xf32, #tpu.memory_space<vmem>>, vector<16x16x128xf32>
    %144 = vector.shape_cast %143 : vector<16x16x128xf32> to vector<256x128xf32>
    %145 = arith.truncf %144 : vector<256x128xf32> to vector<256x128xbf16>
    %c8_135 = arith.constant 8 : index
    %c0_136 = arith.constant 0 : index
    %c0_137 = arith.constant 0 : index
    %146 = vector.load %arg3[%c8_135, %c0_136, %c0_137] : memref<9x128x128xbf16, #tpu.memory_space<vmem>>, vector<1x128x128xbf16>
    %147 = vector.shape_cast %146 : vector<1x128x128xbf16> to vector<128x128xbf16>
    %cst_138 = arith.constant dense<0.000000e+00> : vector<256x128xf32>
    %148 = tpu.matmul %145, %147, %cst_138 {dimension_numbers = #tpu.dot_dimension_numbers<[1], [0], [0], [1], [0, 0, 1, 1], [], []>} : vector<256x128xbf16>, vector<128x128xbf16>, vector<256x128xf32> -> vector<256x128xf32>
    %149 = arith.addf %142, %148 : vector<256x128xf32>
    %cst_139 = arith.constant dense<0.000000e+00> : vector<128xf32>
    %150 = vector.multi_reduction <add>, %149, %cst_139 [0] : vector<256x128xf32> to vector<128xf32>
    %151 = vector.shape_cast %150 : vector<128xf32> to vector<1x128xf32>
    %cst_140 = arith.constant 3.906250e-03 : f32
    %152 = vector.broadcast %cst_140 : f32 to vector<1x128xf32>
    %153 = arith.mulf %151, %152 : vector<1x128xf32>
    %154 = arith.mulf %149, %149 : vector<256x128xf32>
    %cst_141 = arith.constant dense<0.000000e+00> : vector<128xf32>
    %155 = vector.multi_reduction <add>, %154, %cst_141 [0] : vector<256x128xf32> to vector<128xf32>
    %156 = vector.shape_cast %155 : vector<128xf32> to vector<1x128xf32>
    %cst_142 = arith.constant 3.906250e-03 : f32
    %157 = vector.broadcast %cst_142 : f32 to vector<1x128xf32>
    %158 = arith.mulf %156, %157 : vector<1x128xf32>
    %159 = arith.mulf %153, %153 : vector<1x128xf32>
    %160 = arith.subf %158, %159 : vector<1x128xf32>
    %cst_143 = arith.constant 0.000000e+00 : f32
    %161 = vector.broadcast %cst_143 : f32 to vector<1x128xf32>
    %162 = arith.maximumf %160, %161 : vector<1x128xf32>
    %163 = vector.broadcast %153 : vector<1x128xf32> to vector<256x128xf32>
    %164 = arith.subf %149, %163 : vector<256x128xf32>
    %cst_144 = arith.constant 9.99999974E-6 : f32
    %165 = vector.broadcast %cst_144 : f32 to vector<1x128xf32>
    %166 = arith.addf %162, %165 : vector<1x128xf32>
    %167 = math.rsqrt %166 : vector<1x128xf32>
    %168 = vector.broadcast %167 : vector<1x128xf32> to vector<256x128xf32>
    %169 = arith.mulf %164, %168 : vector<256x128xf32>
    %c1_145 = arith.constant 1 : index
    %c1_146 = arith.constant 1 : index
    %c0_147 = arith.constant 0 : index
    %170 = vector.load %arg5[%c1_145, %c1_146, %c0_147] : memref<18x18x128xf32, #tpu.memory_space<vmem>>, vector<16x16x128xf32>
    %171 = vector.shape_cast %170 : vector<16x16x128xf32> to vector<256x128xf32>
    %172 = arith.addf %171, %169 : vector<256x128xf32>
    %c0_148 = arith.constant 0 : index
    %c0_149 = arith.constant 0 : index
    %c0_150 = arith.constant 0 : index
    %173 = vector.load %arg4[%c0_148, %c0_149, %c0_150] : memref<1x256x128xf32, #tpu.memory_space<vmem>>, vector<1x256x128xf32>
    %174 = vector.shape_cast %173 : vector<1x256x128xf32> to vector<256x128xf32>
    %175 = vector.shape_cast %172 : vector<256x128xf32> to vector<1x256x128xf32>
    tpu.vector_store %arg4[%c0_148, %c0_149, %c0_150], %175 {strides = array<i32>} : memref<1x256x128xf32, #tpu.memory_space<vmem>>, vector<1x256x128xf32>,
    return
  }
  func.func @transform_0(%arg0: i32) -> (i32, i32, i32, i32) {
    %c0_i32 = arith.constant 0 : i32
    %c0_i32_0 = arith.constant 0 : i32
    %c0_i32_1 = arith.constant 0 : i32
    %c0_i32_2 = arith.constant 0 : i32
    return %arg0, %c0_i32, %c0_i32_0, %c0_i32_1 : i32, i32, i32, i32
  }
  func.func @transform_1(%arg0: i32) -> (i32, i32, i32) {
    %c0_i32 = arith.constant 0 : i32
    %c0_i32_0 = arith.constant 0 : i32
    %c0_i32_1 = arith.constant 0 : i32
    %c0_i32_2 = arith.constant 0 : i32
    return %c0_i32, %c0_i32_0, %c0_i32_1 : i32, i32, i32
  }
  func.func @transform_2(%arg0: i32) -> (i32, i32, i32) {
    %c0_i32 = arith.constant 0 : i32
    %c0_i32_0 = arith.constant 0 : i32
    %c0_i32_1 = arith.constant 0 : i32
    %c0_i32_2 = arith.constant 0 : i32
    return %c0_i32, %c0_i32_0, %c0_i32_1 : i32, i32, i32
  }
  func.func @transform_3(%arg0: i32) -> (i32, i32, i32) {
    %c0_i32 = arith.constant 0 : i32
    %c0_i32_0 = arith.constant 0 : i32
    %c0_i32_1 = arith.constant 0 : i32
    return %arg0, %c0_i32, %c0_i32_0 : i32, i32, i32
  }
}

</mosaic_0001>

<llo_original>
// kernel: residual_block.1
$region0: #{residual_block.1}
  #allocation0 [shape = 'u32[]', space=smem, size = 0x4, offset = 0x4, fixed_abs, tag = 'smem constant byte address 0x4 - core index']
  #allocation1 [shape = 'u32[144,128]{1,0:T(1,128)}', space=vmem, size = 0x12000, scoped, tag = 'internal scratch']
  #allocation2 [shape = 'f32[18,18,128]{2,1,0:T(8,128)}', space=vmem, size = 0x36000, scoped, tag = 'scratch operand']
  %s0 = inlined_call_operand.vmem [shape: bf16[2,18,18,128], index: 0, kind: input, shape index: {}]
  %s1 = inlined_call_operand.vmem [shape: bf16[9,128,128], index: 1, kind: input, shape index: {}]
  %s2 = inlined_call_operand.vmem [shape: bf16[9,128,128], index: 2, kind: input, shape index: {}]
  %s3 = inlined_call_operand.vmem [shape: f32[2,256,128], index: 3, kind: output, shape index: {}]
  %s4 = sld [smem:[#allocation0]]
  $region45: #{residual_block.1} parent=0
    _
  %s6 = ssub.s32 1, %s4
  %s7 = scalar_select 0, %s6, %s4
  loop: start=0, step=1, limit=4
  $region2: #{residual_block.1} parent=0 // loop_pre_header
    _
  $region3: #{residual_block.1} parent=0 // loop_header
    %s9 = sphi 0, %s13
    %p10 = scmp.ge.s32.totalorder %s9, 4
    %s19 = sphi 0, %s21
    %s22 = sphi 0, %s19
    %s23 = sphi 0, %s22
    %s39 = sphi 0, %s23
    %s43 = sphi 0, %s43
    %s45 = sphi 0, %s43
    %s46 = sphi 0, %s45
    %s60 = sphi 0, %s46
    %s64 = sphi 0, %s64
    %s66 = sphi 0, %s64
    %s67 = sphi 0, %s66
    %s81 = sphi 0, %s67
    %s87 = sphi 0, %s89
    %s90 = sphi 0, %s87
    %s91 = sphi 0, %s90
    %s107 = sphi 0, %s91
  $region4: #{residual_block.1} parent=0 // loop_header_branch
    %12 = sbr.rel (%p10) target = $region8
  $region5: #{residual_block.1} parent=0 // loop_body
    %s14 = ssub.s32 %s9, 1
    %s15 = ssub.s32 %s9, 2
    %s16 = sadd.s32 %s9, 1
    %s17 = ssub.s32 %s9, %s16
    %p18 = scmp.eq.s32.totalorder %s17, 0
    %s20 = sadd.s32 %s19, 1
    %s21 = scalar_select %p18, %s19, %s20
    %p24 = pneg %p18
    %p25 = scmp.eq.s32.totalorder %s9, 1
    %p26 = por %p24, %p25
    %p27 = scmp.ne.s32.totalorder %s19, %s22
    %p28 = scmp.eq.s32.totalorder %s9, 0
    %p29 = por %p27, %p28
    %p30 = scmp.ne.s32.totalorder %s19, %s22
    %p31 = scmp.eq.s32.totalorder %s14, 1
    %p32 = por %p30, %p31
    %p33 = scmp.ne.s32.totalorder %s22, %s23
    %p34 = scmp.eq.s32.totalorder %s14, 0
    %p35 = por %p33, %p34
    %p36 = scmp.ne.s32.totalorder %s22, %s23
    %p37 = scmp.eq.s32.totalorder %s15, 1
    %p38 = por %p36, %p37
    %p40 = scmp.ne.s32.totalorder %s23, %s39
    %p41 = scmp.eq.s32.totalorder %s15, 0
    %p42 = por %p40, %p41
    %s44 = sadd.s32 %s43, 1
    %p47 = scmp.eq.s32.totalorder %s9, 1
    %p48 = scmp.ne.s32.totalorder %s43, %s45
    %p49 = scmp.eq.s32.totalorder %s9, 0
    %p50 = por %p48, %p49
    %p51 = scmp.ne.s32.totalorder %s43, %s45
    %p52 = scmp.eq.s32.totalorder %s14, 1
    %p53 = por %p51, %p52
    %p54 = scmp.ne.s32.totalorder %s45, %s46
    %p55 = scmp.eq.s32.totalorder %s14, 0
    %p56 = por %p54, %p55
    %p57 = scmp.ne.s32.totalorder %s45, %s46
    %p58 = scmp.eq.s32.totalorder %s15, 1
    %p59 = por %p57, %p58
    %p61 = scmp.ne.s32.totalorder %s46, %s60
    %p62 = scmp.eq.s32.totalorder %s15, 0
    %p63 = por %p61, %p62
    %s65 = sadd.s32 %s64, 1
    %p68 = scmp.eq.s32.totalorder %s9, 1
    %p69 = scmp.ne.s32.totalorder %s64, %s66
    %p70 = scmp.eq.s32.totalorder %s9, 0
    %p71 = por %p69, %p70
    %p72 = scmp.ne.s32.totalorder %s64, %s66
    %p73 = scmp.eq.s32.totalorder %s14, 1
    %p74 = por %p72, %p73
    %p75 = scmp.ne.s32.totalorder %s66, %s67
    %p76 = scmp.eq.s32.totalorder %s14, 0
    %p77 = por %p75, %p76
    %p78 = scmp.ne.s32.totalorder %s66, %s67
    %p79 = scmp.eq.s32.totalorder %s15, 1
    %p80 = por %p78, %p79
    %p82 = scmp.ne.s32.totalorder %s67, %s81
    %p83 = scmp.eq.s32.totalorder %s15, 0
    %p84 = por %p82, %p83
    %s85 = ssub.s32 %s9, %s16
    %p86 = scmp.eq.s32.totalorder %s85, 0
    %s88 = sadd.s32 %s87, 1
    %s89 = scalar_select %p86, %s87, %s88
    %p92 = pneg %p86
    %p93 = scmp.eq.s32.totalorder %s9, 1
    %p94 = por %p92, %p93
    %p95 = scmp.ne.s32.totalorder %s87, %s90
    %p96 = scmp.eq.s32.totalorder %s9, 0
    %p97 = por %p95, %p96
    %p98 = scmp.ne.s32.totalorder %s87, %s90
    %p99 = scmp.eq.s32.totalorder %s14, 1
    %p100 = por %p98, %p99
    %p101 = scmp.ne.s32.totalorder %s90, %s91
    %p102 = scmp.eq.s32.totalorder %s14, 0
    %p103 = por %p101, %p102
    %p104 = scmp.ne.s32.totalorder %s90, %s91
    %p105 = scmp.eq.s32.totalorder %s15, 1
    %p106 = por %p104, %p105
    %p108 = scmp.ne.s32.totalorder %s91, %s107
    %p109 = scmp.eq.s32.totalorder %s15, 0
    %p110 = por %p108, %p109
    %p111 = scmp.le.s32.totalorder 1, %s9
    %p112 = scmp.lt.s32.totalorder %s9, 3
    %p113 = pnand %p111, %p112
    %p114 = pneg %p113
    // Predicated region
    $region9: #{residual_block.1} parent=5 // pred_check
      _
    $region10: #{residual_block.1} parent=5 // pred_check_branch
      %116 = sbr.rel (%p113) target = $region12
    $region11: #{residual_block.1} parent=5 // pred_region
      %s117 = ssub.s32 %s9, 1
      // Predicated region
      $region13: #{residual_block.1} parent=11 // pred_check
        %p118 = pneg %p56
      $region14: #{residual_block.1} parent=11 // pred_check_branch
        %120 = sbr.rel (%p118) target = $region16
      $region15: #{residual_block.1} parent=11 // pred_region
        _
      $region16: #{residual_block.1} parent=11 // pred_fallthru
        _
      // Predicated region
      $region17: #{residual_block.1} parent=11 // pred_check
        %p121 = pneg %p77
      $region18: #{residual_block.1} parent=11 // pred_check_branch
        %123 = sbr.rel (%p121) target = $region20
      $region19: #{residual_block.1} parent=11 // pred_region
        _
      $region20: #{residual_block.1} parent=11 // pred_fallthru
        _
    $region12: #{residual_block.1} parent=5 // pred_fallthru
      _
    %p124 = scmp.lt.s32.totalorder %s9, 2
    // Predicated region
    $region21: #{residual_block.1} parent=5 // pred_check
      %p125 = pneg %p124
    $region22: #{residual_block.1} parent=5 // pred_check_branch
      %127 = sbr.rel (%p125) target = $region24
    $region23: #{residual_block.1} parent=5 // pred_region
      // Predicated region
      $region25: #{residual_block.1} parent=23 // pred_check
        %p128 = pneg %p29
      $region26: #{residual_block.1} parent=23 // pred_check_branch
        %130 = sbr.rel (%p128) target = $region28
      $region27: #{residual_block.1} parent=23 // pred_region
        %p131 = scmp.lt.s32.totalorder %s9, 1
        %s132 = scalar_select %p131, %s9, 1
        %s133 = smul.addr %s132, 54
        %s134 = smul.addr %s133, 4
        %s135 = scalar_lea.vmem %s0, %s134
      $region28: #{residual_block.1} parent=23 // pred_fallthru
        _
    $region24: #{residual_block.1} parent=5 // pred_fallthru
      _
    %p136 = scmp.le.s32.totalorder 1, %s9
    %p137 = scmp.lt.s32.totalorder %s9, 3
    %p138 = pnand %p136, %p137
    %p139 = pneg %p138
    // Predicated region
    $region29: #{residual_block.1} parent=5 // pred_check
      _
    $region30: #{residual_block.1} parent=5 // pred_check_branch
      %141 = sbr.rel (%p138) target = $region32
    $region31: #{residual_block.1} parent=5 // pred_region
      %s142 = ssub.s32 %s9, 1
      %p143 = scmp.lt.s32.totalorder %s14, 1
      %s144 = scalar_select %p143, %s14, 1
      %s145 = smul.addr %s144, 54
      %s146 = smul.addr %s145, 4
      %s147 = scalar_lea.vmem %s0, %s146
      %p148 = pneg %p35
      %p149 = pneg %p32
      %p150 = pneg %p56
      %p151 = pneg %p53
      %p152 = pneg %p77
      %p153 = pneg %p74
      %p154 = pneg %p103
      %p155 = pneg %p100
      %p156 = scmp.lt.s32.totalorder %s14, 1
      %s157 = scalar_select %p156, %s14, 1
      %s158 = smul.addr %s157, 32
      %s159 = smul.addr %s158, 8
      %s160 = scalar_lea.vmem %s3, %s159
      %p161 = scmp.lt.s32.totalorder %s14, 1
      %s162 = scalar_select %p161, %s14, 1
      %s163 = smul.addr %s162, 54
      %s164 = smul.addr %s163, 4
      %s165 = scalar_lea.vmem %s0, %s164
      %p166 = scmp.lt.s32.totalorder %s14, 1
      %s167 = scalar_select %p166, %s14, 1
      %s168 = smul.addr %s167, 32
      %s169 = smul.addr %s168, 8
      %s170 = scalar_lea.vmem %s3, %s169
      %v172 = vld [vmem:[%s165] sm:$0xf]
      %v173 = vld [vmem:[%s165 + $0x4] sm:$0xf]
      %v174 = vld [vmem:[%s165 + $0xc] sm:$0xf]
      %v175 = vld [vmem:[%s165 + $0x10] sm:$0xf]
      %v176 = vld [vmem:[%s165 + $0x18] sm:$0xf]
      %v177 = vld [vmem:[%s165 + $0x1c] sm:$0xf]
      %v178 = vld [vmem:[%s165 + $0x24] sm:$0xf]
      %v179 = vld [vmem:[%s165 + $0x28] sm:$0xf]
      %v180 = vld [vmem:[%s165 + $0x30] sm:$0xf]
      %v181 = vld [vmem:[%s165 + $0x34] sm:$0xf]
      %v182 = vld [vmem:[%s165 + $0x3c] sm:$0xf]
      %v183 = vld [vmem:[%s165 + $0x40] sm:$0xf]
      %v184 = vld [vmem:[%s165 + $0x48] sm:$0xf]
      %v185 = vld [vmem:[%s165 + $0x4c] sm:$0xf]
      %v186 = vld [vmem:[%s165 + $0x54] sm:$0xf]
      %v187 = vld [vmem:[%s165 + $0x58] sm:$0xf]
      %v188 = vld [vmem:[%s165 + $0x60] sm:$0xf]
      %v189 = vld [vmem:[%s165 + $0x64] sm:$0xf]
      %v190 = vld [vmem:[%s165 + $0x6c] sm:$0xf]
      %v191 = vld [vmem:[%s165 + $0x70] sm:$0xf]
      %v192 = vld [vmem:[%s165 + $0x78] sm:$0xf]
      %v193 = vld [vmem:[%s165 + $0x7c] sm:$0xf]
      %v194 = vld [vmem:[%s165 + $0x84] sm:$0xf]
      %v195 = vld [vmem:[%s165 + $0x88] sm:$0xf]
      %v196 = vld [vmem:[%s165 + $0x90] sm:$0xf]
      %v197 = vld [vmem:[%s165 + $0x94] sm:$0xf]
      %v198 = vld [vmem:[%s165 + $0x9c] sm:$0xf]
      %v199 = vld [vmem:[%s165 + $0xa0] sm:$0xf]
      %v200 = vld [vmem:[%s165 + $0xa8] sm:$0xf]
      %v201 = vld [vmem:[%s165 + $0xac] sm:$0xf]
      %v202 = vld [vmem:[%s165 + $0xb4] sm:$0xf]
      %v203 = vld [vmem:[%s165 + $0xb8] sm:$0xf]
      %v204 = vld [vmem:[%s1] sm:$0xf]
      %v205 = vld [vmem:[%s1 + $0x4] sm:$0xf]
      %v206 = vld [vmem:[%s1 + $0x8] sm:$0xf]
      %v207 = vld [vmem:[%s1 + $0xc] sm:$0xf]
      %v208 = vld [vmem:[%s1 + $0x10] sm:$0xf]
      %v209 = vld [vmem:[%s1 + $0x14] sm:$0xf]
      %v210 = vld [vmem:[%s1 + $0x18] sm:$0xf]
      %v211 = vld [vmem:[%s1 + $0x1c] sm:$0xf]
      %v212 = vld [vmem:[%s1 + $0x20] sm:$0xf]
      %v213 = vld [vmem:[%s1 + $0x24] sm:$0xf]
      %v214 = vld [vmem:[%s1 + $0x28] sm:$0xf]
      %v215 = vld [vmem:[%s1 + $0x2c] sm:$0xf]
      %v216 = vld [vmem:[%s1 + $0x30] sm:$0xf]
      %v217 = vld [vmem:[%s1 + $0x34] sm:$0xf]
      %v218 = vld [vmem:[%s1 + $0x38] sm:$0xf]
      %v219 = vld [vmem:[%s1 + $0x3c] sm:$0xf]
      %v220 = vld [vmem:[%s165 + $0x8] sm:$0x1]
      %v221 = vld [vmem:[%s165 + $0x14] sm:$0x1]
      %v222 = vld [vmem:[%s165 + $0x20] sm:$0x1]
      %v223 = vld [vmem:[%s165 + $0x2c] sm:$0x1]
      %v224 = vld [vmem:[%s165 + $0x38] sm:$0x1]
      %v225 = vld [vmem:[%s165 + $0x44] sm:$0x1]
      %v226 = vld [vmem:[%s165 + $0x50] sm:$0x1]
      %v227 = vld [vmem:[%s165 + $0x5c] sm:$0x1]
      %v228 = vld [vmem:[%s165 + $0x68] sm:$0x1]
      %v229 = vld [vmem:[%s165 + $0x74] sm:$0x1]
      %v230 = vld [vmem:[%s165 + $0x80] sm:$0x1]
      %v231 = vld [vmem:[%s165 + $0x8c] sm:$0x1]
      %v232 = vld [vmem:[%s165 + $0x98] sm:$0x1]
      %v233 = vld [vmem:[%s165 + $0xa4] sm:$0x1]
      %v234 = vld [vmem:[%s165 + $0xb0] sm:$0x1]
      %v235 = vld [vmem:[%s165 + $0xbc] sm:$0x1]
      %vm236 = vsmask.f32 3328
      %vm237 = vsmask.f32 7440
      %vm238 = vmor %vm236, %vm237
      %v240 = vshrl.u32 %v172, 16
      %v242 = vrot.slane %v240, 4
      %v243 = vshll.u32 %v172, 16
      %v245 = vrot.slane %v243, 5
      %v246 = vor.u32 %v242, %v245
      %v247 = vrot.slane %v246, 4
      %v249 = vshll.u32 %v173, 16
      %v251 = vrot.slane %v249, 5
      %v252 = vsel %vm238, %v247, %v251
      %v253 = vshrl.u32 %v173, 16
      %v255 = vrot.slane %v253, 4
      %v256 = vor.u32 %v255, %v251
      %v257 = vrot.slane %v256, 4
      %v259 = vshll.u32 %v220, 16
      %v261 = vrot.slane %v259, 5
      %v262 = vsel %vm238, %v257, %v261
      %v264 = vshrl.u32 %v174, 16
      %v266 = vrot.slane %v264, 4
      %v267 = vshll.u32 %v174, 16
      %v269 = vrot.slane %v267, 5
      %v270 = vor.u32 %v266, %v269
      %v271 = vrot.slane %v270, 4
      %v273 = vshll.u32 %v175, 16
      %v275 = vrot.slane %v273, 5
      %v276 = vsel %vm238, %v271, %v275
      %v277 = vshrl.u32 %v175, 16
      %v279 = vrot.slane %v277, 4
      %v280 = vor.u32 %v279, %v275
      %v281 = vrot.slane %v280, 4
      %v283 = vshll.u32 %v221, 16
      %v285 = vrot.slane %v283, 5
      %v286 = vsel %vm238, %v281, %v285
      %v288 = vshrl.u32 %v176, 16
      %v290 = vrot.slane %v288, 4
      %v291 = vshll.u32 %v176, 16
      %v293 = vrot.slane %v291, 5
      %v294 = vor.u32 %v290, %v293
      %v295 = vrot.slane %v294, 4
      %v297 = vshll.u32 %v177, 16
      %v299 = vrot.slane %v297, 5
      %v300 = vsel %vm238, %v295, %v299
      %v301 = vshrl.u32 %v177, 16
      %v303 = vrot.slane %v301, 4
      %v304 = vor.u32 %v303, %v299
      %v305 = vrot.slane %v304, 4
      %v307 = vshll.u32 %v222, 16
      %v309 = vrot.slane %v307, 5
      %v310 = vsel %vm238, %v305, %v309
      %v312 = vshrl.u32 %v178, 16
      %v314 = vrot.slane %v312, 4
      %v315 = vshll.u32 %v178, 16
      %v317 = vrot.slane %v315, 5
      %v318 = vor.u32 %v314, %v317
      %v319 = vrot.slane %v318, 4
      %v321 = vshll.u32 %v179, 16
      %v323 = vrot.slane %v321, 5
      %v324 = vsel %vm238, %v319, %v323
      %v325 = vshrl.u32 %v179, 16
      %v327 = vrot.slane %v325, 4
      %v328 = vor.u32 %v327, %v323
      %v329 = vrot.slane %v328, 4
      %v331 = vshll.u32 %v223, 16
      %v333 = vrot.slane %v331, 5
      %v334 = vsel %vm238, %v329, %v333
      %v336 = vshrl.u32 %v180, 16
      %v338 = vrot.slane %v336, 4
      %v339 = vshll.u32 %v180, 16
      %v341 = vrot.slane %v339, 5
      %v342 = vor.u32 %v338, %v341
      %v343 = vrot.slane %v342, 4
      %v345 = vshll.u32 %v181, 16
      %v347 = vrot.slane %v345, 5
      %v348 = vsel %vm238, %v343, %v347
      %v349 = vshrl.u32 %v181, 16
      %v351 = vrot.slane %v349, 4
      %v352 = vor.u32 %v351, %v347
      %v353 = vrot.slane %v352, 4
      %v355 = vshll.u32 %v224, 16
      %v357 = vrot.slane %v355, 5
      %v358 = vsel %vm238, %v353, %v357
      %v360 = vshrl.u32 %v182, 16
      %v362 = vrot.slane %v360, 4
      %v363 = vshll.u32 %v182, 16
      %v365 = vrot.slane %v363, 5
      %v366 = vor.u32 %v362, %v365
      %v367 = vrot.slane %v366, 4
      %v369 = vshll.u32 %v183, 16
      %v371 = vrot.slane %v369, 5
      %v372 = vsel %vm238, %v367, %v371
      %v373 = vshrl.u32 %v183, 16
      %v375 = vrot.slane %v373, 4
      %v376 = vor.u32 %v375, %v371
      %v377 = vrot.slane %v376, 4
      %v379 = vshll.u32 %v225, 16
      %v381 = vrot.slane %v379, 5
      %v382 = vsel %vm238, %v377, %v381
      %v384 = vshrl.u32 %v184, 16
      %v386 = vrot.slane %v384, 4
      %v387 = vshll.u32 %v184, 16
      %v389 = vrot.slane %v387, 5
      %v390 = vor.u32 %v386, %v389
      %v391 = vrot.slane %v390, 4
      %v393 = vshll.u32 %v185, 16
      %v395 = vrot.slane %v393, 5
      %v396 = vsel %vm238, %v391, %v395
      %v397 = vshrl.u32 %v185, 16
      %v399 = vrot.slane %v397, 4
      %v400 = vor.u32 %v399, %v395
      %v401 = vrot.slane %v400, 4
      %v403 = vshll.u32 %v226, 16
      %v405 = vrot.slane %v403, 5
      %v406 = vsel %vm238, %v401, %v405
      %v408 = vshrl.u32 %v186, 16
      %v410 = vrot.slane %v408, 4
      %v411 = vshll.u32 %v186, 16
      %v413 = vrot.slane %v411, 5
      %v414 = vor.u32 %v410, %v413
      %v415 = vrot.slane %v414, 4
      %v417 = vshll.u32 %v187, 16
      %v419 = vrot.slane %v417, 5
      %v420 = vsel %vm238, %v415, %v419
      %v421 = vshrl.u32 %v187, 16
      %v423 = vrot.slane %v421, 4
      %v424 = vor.u32 %v423, %v419
      %v425 = vrot.slane %v424, 4
      %v427 = vshll.u32 %v227, 16
      %v429 = vrot.slane %v427, 5
      %v430 = vsel %vm238, %v425, %v429
      %v432 = vshrl.u32 %v188, 16
      %v434 = vrot.slane %v432, 4
      %v435 = vshll.u32 %v188, 16
      %v437 = vrot.slane %v435, 5
      %v438 = vor.u32 %v434, %v437
      %v439 = vrot.slane %v438, 4
      %v441 = vshll.u32 %v189, 16
      %v443 = vrot.slane %v441, 5
      %v444 = vsel %vm238, %v439, %v443
      %v445 = vshrl.u32 %v189, 16
      %v447 = vrot.slane %v445, 4
      %v448 = vor.u32 %v447, %v443
      %v449 = vrot.slane %v448, 4
      %v451 = vshll.u32 %v228, 16
      %v453 = vrot.slane %v451, 5
      %v454 = vsel %vm238, %v449, %v453
      %v456 = vshrl.u32 %v190, 16
      %v458 = vrot.slane %v456, 4
      %v459 = vshll.u32 %v190, 16
      %v461 = vrot.slane %v459, 5
      %v462 = vor.u32 %v458, %v461
      %v463 = vrot.slane %v462, 4
      %v465 = vshll.u32 %v191, 16
      %v467 = vrot.slane %v465, 5
      %v468 = vsel %vm238, %v463, %v467
      %v469 = vshrl.u32 %v191, 16
      %v471 = vrot.slane %v469, 4
      %v472 = vor.u32 %v471, %v467
      %v473 = vrot.slane %v472, 4
      %v475 = vshll.u32 %v229, 16
      %v477 = vrot.slane %v475, 5
      %v478 = vsel %vm238, %v473, %v477
      %v480 = vshrl.u32 %v192, 16
      %v482 = vrot.slane %v480, 4
      %v483 = vshll.u32 %v192, 16
      %v485 = vrot.slane %v483, 5
      %v486 = vor.u32 %v482, %v485
      %v487 = vrot.slane %v486, 4
      %v489 = vshll.u32 %v193, 16
      %v491 = vrot.slane %v489, 5
      %v492 = vsel %vm238, %v487, %v491
      %v493 = vshrl.u32 %v193, 16
      %v495 = vrot.slane %v493, 4
      %v496 = vor.u32 %v495, %v491
      %v497 = vrot.slane %v496, 4
      %v499 = vshll.u32 %v230, 16
      %v501 = vrot.slane %v499, 5
      %v502 = vsel %vm238, %v497, %v501
      %v504 = vshrl.u32 %v194, 16
      %v506 = vrot.slane %v504, 4
      %v507 = vshll.u32 %v194, 16
      %v509 = vrot.slane %v507, 5
      %v510 = vor.u32 %v506, %v509
      %v511 = vrot.slane %v510, 4
      %v513 = vshll.u32 %v195, 16
      %v515 = vrot.slane %v513, 5
      %v516 = vsel %vm238, %v511, %v515
      %v517 = vshrl.u32 %v195, 16
      %v519 = vrot.slane %v517, 4
      %v520 = vor.u32 %v519, %v515
      %v521 = vrot.slane %v520, 4
      %v523 = vshll.u32 %v231, 16
      %v525 = vrot.slane %v523, 5
      %v526 = vsel %vm238, %v521, %v525
      %v528 = vshrl.u32 %v196, 16
      %v530 = vrot.slane %v528, 4
      %v531 = vshll.u32 %v196, 16
      %v533 = vrot.slane %v531, 5
      %v534 = vor.u32 %v530, %v533
      %v535 = vrot.slane %v534, 4
      %v537 = vshll.u32 %v197, 16
      %v539 = vrot.slane %v537, 5
      %v540 = vsel %vm238, %v535, %v539
      %v541 = vshrl.u32 %v197, 16
      %v543 = vrot.slane %v541, 4
      %v544 = vor.u32 %v543, %v539
      %v545 = vrot.slane %v544, 4
      %v547 = vshll.u32 %v232, 16
      %v549 = vrot.slane %v547, 5
      %v550 = vsel %vm238, %v545, %v549
      %v552 = vshrl.u32 %v198, 16
      %v554 = vrot.slane %v552, 4
      %v555 = vshll.u32 %v198, 16
      %v557 = vrot.slane %v555, 5
      %v558 = vor.u32 %v554, %v557
      %v559 = vrot.slane %v558, 4
      %v561 = vshll.u32 %v199, 16
      %v563 = vrot.slane %v561, 5
      %v564 = vsel %vm238, %v559, %v563
      %v565 = vshrl.u32 %v199, 16
      %v567 = vrot.slane %v565, 4
      %v568 = vor.u32 %v567, %v563
      %v569 = vrot.slane %v568, 4
      %v571 = vshll.u32 %v233, 16
      %v573 = vrot.slane %v571, 5
      %v574 = vsel %vm238, %v569, %v573
      %v576 = vshrl.u32 %v200, 16
      %v578 = vrot.slane %v576, 4
      %v579 = vshll.u32 %v200, 16
      %v581 = vrot.slane %v579, 5
      %v582 = vor.u32 %v578, %v581
      %v583 = vrot.slane %v582, 4
      %v585 = vshll.u32 %v201, 16
      %v587 = vrot.slane %v585, 5
      %v588 = vsel %vm238, %v583, %v587
      %v589 = vshrl.u32 %v201, 16
      %v591 = vrot.slane %v589, 4
      %v592 = vor.u32 %v591, %v587
      %v593 = vrot.slane %v592, 4
      %v595 = vshll.u32 %v234, 16
      %v597 = vrot.slane %v595, 5
      %v598 = vsel %vm238, %v593, %v597
      %v600 = vshrl.u32 %v202, 16
      %v602 = vrot.slane %v600, 4
      %v603 = vshll.u32 %v202, 16
      %v605 = vrot.slane %v603, 5
      %v606 = vor.u32 %v602, %v605
      %v607 = vrot.slane %v606, 4
      %v609 = vshll.u32 %v203, 16
      %v611 = vrot.slane %v609, 5
      %v612 = vsel %vm238, %v607, %v611
      %v613 = vshrl.u32 %v203, 16
      %v615 = vrot.slane %v613, 4
      %v616 = vor.u32 %v615, %v611
      %v617 = vrot.slane %v616, 4
      %v619 = vshll.u32 %v235, 16
      %v621 = vrot.slane %v619, 5
      %v622 = vsel %vm238, %v617, %v621
      %s623 = scalar_lea.vmem %s1, 64
      %v624 = vld [vmem:[%s623] sm:$0xf]
      %v625 = vld [vmem:[%s623 + $0x4] sm:$0xf]
      %v626 = vld [vmem:[%s623 + $0x8] sm:$0xf]
      %v627 = vld [vmem:[%s623 + $0xc] sm:$0xf]
      %v628 = vld [vmem:[%s623 + $0x10] sm:$0xf]
      %v629 = vld [vmem:[%s623 + $0x14] sm:$0xf]
      %v630 = vld [vmem:[%s623 + $0x18] sm:$0xf]
      %v631 = vld [vmem:[%s623 + $0x1c] sm:$0xf]
      %v632 = vld [vmem:[%s623 + $0x20] sm:$0xf]
      %v633 = vld [vmem:[%s623 + $0x24] sm:$0xf]
      %v634 = vld [vmem:[%s623 + $0x28] sm:$0xf]
      %v635 = vld [vmem:[%s623 + $0x2c] sm:$0xf]
      %v636 = vld [vmem:[%s623 + $0x30] sm:$0xf]
      %v637 = vld [vmem:[%s623 + $0x34] sm:$0xf]
      %v638 = vld [vmem:[%s623 + $0x38] sm:$0xf]
      %v639 = vld [vmem:[%s623 + $0x3c] sm:$0xf]
      %v640 = vunpack.c.l.b16 %v252
      %v641 = vunpack.c.l.b16 %v262
      %v642 = vunpack.c.l.b16 %v276
      %v643 = vunpack.c.l.b16 %v286
      %v644 = vunpack.c.l.b16 %v300
      %v645 = vunpack.c.l.b16 %v310
      %v646 = vunpack.c.l.b16 %v324
      %v647 = vunpack.c.l.b16 %v334
      %v648 = vunpack.c.l.b16 %v348
      %v649 = vunpack.c.l.b16 %v358
      %v650 = vunpack.c.l.b16 %v372
      %v651 = vunpack.c.l.b16 %v382
      %v652 = vunpack.c.l.b16 %v396
      %v653 = vunpack.c.l.b16 %v406
      %v654 = vunpack.c.l.b16 %v420
      %v655 = vunpack.c.l.b16 %v430
      %v656 = vunpack.c.l.b16 %v444
      %v657 = vunpack.c.l.b16 %v454
      %v658 = vunpack.c.l.b16 %v468
      %v659 = vunpack.c.l.b16 %v478
      %v660 = vunpack.c.l.b16 %v492
      %v661 = vunpack.c.l.b16 %v502
      %v662 = vunpack.c.l.b16 %v516
      %v663 = vunpack.c.l.b16 %v526
      %v664 = vunpack.c.l.b16 %v540
      %v665 = vunpack.c.l.b16 %v550
      %v666 = vunpack.c.l.b16 %v564
      %v667 = vunpack.c.l.b16 %v574
      %v668 = vunpack.c.l.b16 %v588
      %v669 = vunpack.c.l.b16 %v598
      %v670 = vunpack.c.l.b16 %v612
      %v671 = vunpack.c.l.b16 %v622
      %v672 = vpack.c.b16 %v641, %v640
      %v673 = vpack.c.b16 %v643, %v642
      %v674 = vpack.c.b16 %v645, %v644
      %v675 = vpack.c.b16 %v647, %v646
      %v676 = vpack.c.b16 %v649, %v648
      %v677 = vpack.c.b16 %v651, %v650
      %v678 = vpack.c.b16 %v653, %v652
      %v679 = vpack.c.b16 %v655, %v654
      %v680 = vpack.c.b16 %v657, %v656
      %v681 = vpack.c.b16 %v659, %v658
      %v682 = vpack.c.b16 %v661, %v660
      %v683 = vpack.c.b16 %v663, %v662
      %v684 = vpack.c.b16 %v665, %v664
      %v685 = vpack.c.b16 %v667, %v666
      %v686 = vpack.c.b16 %v669, %v668
      %v687 = vpack.c.b16 %v671, %v670
      %v720 = vunpack.c.l.b16 %v624
      %v721 = vunpack.c.l.b16 %v625
      %v722 = vunpack.c.l.b16 %v626
      %v723 = vunpack.c.l.b16 %v627
      %v724 = vunpack.c.l.b16 %v628
      %v725 = vunpack.c.l.b16 %v629
      %v726 = vunpack.c.l.b16 %v630
      %v727 = vunpack.c.l.b16 %v631
      %v728 = vunpack.c.l.b16 %v632
      %v729 = vunpack.c.l.b16 %v633
      %v730 = vunpack.c.l.b16 %v634
      %v731 = vunpack.c.l.b16 %v635
      %v732 = vunpack.c.l.b16 %v636
      %v733 = vunpack.c.l.b16 %v637
      %v734 = vunpack.c.l.b16 %v638
      %v735 = vunpack.c.l.b16 %v639
      %v736 = vpack.c.b16 %v721, %v720
      %v737 = vpack.c.b16 %v723, %v722
      %v738 = vpack.c.b16 %v725, %v724
      %v739 = vpack.c.b16 %v727, %v726
      %v740 = vpack.c.b16 %v729, %v728
      %v741 = vpack.c.b16 %v731, %v730
      %v742 = vpack.c.b16 %v733, %v732
      %v743 = vpack.c.b16 %v735, %v734
      %752 = vmatprep.subr.bf16.mxu0 0
      %753 = vmatpush1.bf16.msra.mxu0 %v743
      %754 = vmatprep.subr.bf16.mxu0 0
      %755 = vmatpush1.bf16.msra.mxu0 %v742
      %756 = vmatprep.subr.bf16.mxu0 0
      %757 = vmatpush1.bf16.msra.mxu0 %v741
      %758 = vmatprep.subr.bf16.mxu0 0
      %759 = vmatpush1.bf16.msra.mxu0 %v740
      %760 = vmatprep.subr.bf16.mxu0 0
      %761 = vmatpush1.bf16.msra.mxu0 %v739
      %762 = vmatprep.subr.bf16.mxu0 0
      %763 = vmatpush1.bf16.msra.mxu0 %v738
      %764 = vmatprep.subr.bf16.mxu0 0
      %765 = vmatpush1.bf16.msra.mxu0 %v737
      %766 = vmatprep.subr.bf16.mxu0 0
      %767 = vmatpush1.bf16.msra.mxu0 %v736
      %768 = vmatprep.subr.bf16.mxu0 0
      %769 = vmatpush2.bf16.msra.mxu0 0
      %770 = vmatprep.subr.bf16.mxu0 0
      %771 = vmatpush2.bf16.msra.mxu0 0
      %772 = vmatprep.subr.bf16.mxu0 0
      %773 = vmatpush2.bf16.msra.mxu0 0
      %774 = vmatprep.subr.bf16.mxu0 0
      %775 = vmatpush2.bf16.msra.mxu0 0
      %776 = vmatprep.subr.bf16.mxu0 0
      %777 = vmatpush2.bf16.msra.mxu0 0
      %778 = vmatprep.subr.bf16.mxu0 0
      %779 = vmatpush2.bf16.msra.mxu0 0
      %780 = vmatprep.subr.bf16.mxu0 0
      %781 = vmatpush2.bf16.msra.mxu0 0
      %782 = vmatprep.subr.bf16.mxu0 0
      %783 = vmatpush2.bf16.msra.mxu0 0
      %784 = vmatprep.mubr.bf16.mxu0 0
      %785 = vmatmul.mubr.bf16.gmra.mxu0 %v672
      %v786 = vpop.f32.mrf.mxu0
      %v787 = vadd.f32 0.0, %v786
      %v788 = vpop.f32.mrf.mxu0
      %v789 = vpop.f32.mrf.mxu0
      %v790 = vadd.f32 0.0, %v789
      %v791 = vpop.f32.mrf.mxu0
      %792 = vmatprep.mubr.bf16.mxu0 0
      %793 = vmatmul.mubr.bf16.gmra.mxu0 %v673
      %v794 = vpop.f32.mrf.mxu0
      %v795 = vadd.f32 0.0, %v794
      %v796 = vpop.f32.mrf.mxu0
      %v797 = vpop.f32.mrf.mxu0
      %v798 = vadd.f32 0.0, %v797
      %v799 = vpop.f32.mrf.mxu0
      %800 = vmatprep.mubr.bf16.mxu0 0
      %801 = vmatmul.mubr.bf16.gmra.mxu0 %v674
      %v802 = vpop.f32.mrf.mxu0
      %v803 = vadd.f32 0.0, %v802
      %v804 = vpop.f32.mrf.mxu0
      %v805 = vpop.f32.mrf.mxu0
      %v806 = vadd.f32 0.0, %v805
      %v807 = vpop.f32.mrf.mxu0
      %808 = vmatprep.mubr.bf16.mxu0 0
      %809 = vmatmul.mubr.bf16.gmra.mxu0 %v675
      %v810 = vpop.f32.mrf.mxu0
      %v811 = vadd.f32 0.0, %v810
      %v812 = vpop.f32.mrf.mxu0
      %v813 = vpop.f32.mrf.mxu0
      %v814 = vadd.f32 0.0, %v813
      %v815 = vpop.f32.mrf.mxu0
      %816 = vmatprep.mubr.bf16.mxu0 0
      %817 = vmatmul.mubr.bf16.gmra.mxu0 %v676
      %v818 = vpop.f32.mrf.mxu0
      %v819 = vadd.f32 0.0, %v818
      %v820 = vpop.f32.mrf.mxu0
      %v821 = vpop.f32.mrf.mxu0
      %v822 = vadd.f32 0.0, %v821
      %v823 = vpop.f32.mrf.mxu0
      %824 = vmatprep.mubr.bf16.mxu0 0
      %825 = vmatmul.mubr.bf16.gmra.mxu0 %v677
      %v826 = vpop.f32.mrf.mxu0
      %v827 = vadd.f32 0.0, %v826
      %v828 = vpop.f32.mrf.mxu0
      %v829 = vpop.f32.mrf.mxu0
      %v830 = vadd.f32 0.0, %v829
      %v831 = vpop.f32.mrf.mxu0
      %832 = vmatprep.mubr.bf16.mxu0 0
      %833 = vmatmul.mubr.bf16.gmra.mxu0 %v678
      %v834 = vpop.f32.mrf.mxu0
      %v835 = vadd.f32 0.0, %v834
      %v836 = vpop.f32.mrf.mxu0
      %v837 = vpop.f32.mrf.mxu0
      %v838 = vadd.f32 0.0, %v837
      %v839 = vpop.f32.mrf.mxu0
      %840 = vmatprep.mubr.bf16.mxu0 0
      %841 = vmatmul.mubr.bf16.gmra.mxu0 %v679
      %v842 = vpop.f32.mrf.mxu0
      %v843 = vadd.f32 0.0, %v842
      %v844 = vpop.f32.mrf.mxu0
      %v845 = vpop.f32.mrf.mxu0
      %v846 = vadd.f32 0.0, %v845
      %v847 = vpop.f32.mrf.mxu0
      %848 = vmatprep.mubr.bf16.mxu0 0
      %849 = vmatmul.mubr.bf16.gmra.mxu0 %v680
      %v850 = vpop.f32.mrf.mxu0
      %v851 = vadd.f32 0.0, %v850
      %v852 = vpop.f32.mrf.mxu0
      %v853 = vpop.f32.mrf.mxu0
      %v854 = vadd.f32 0.0, %v853
      %v855 = vpop.f32.mrf.mxu0
      %856 = vmatprep.mubr.bf16.mxu0 0
      %857 = vmatmul.mubr.bf16.gmra.mxu0 %v681
      %v858 = vpop.f32.mrf.mxu0
      %v859 = vadd.f32 0.0, %v858
      %v860 = vpop.f32.mrf.mxu0
      %v861 = vpop.f32.mrf.mxu0
      %v862 = vadd.f32 0.0, %v861
      %v863 = vpop.f32.mrf.mxu0
      %864 = vmatprep.mubr.bf16.mxu0 0
      %865 = vmatmul.mubr.bf16.gmra.mxu0 %v682
      %v866 = vpop.f32.mrf.mxu0
      %v867 = vadd.f32 0.0, %v866
      %v868 = vpop.f32.mrf.mxu0
      %v869 = vpop.f32.mrf.mxu0
      %v870 = vadd.f32 0.0, %v869
      %v871 = vpop.f32.mrf.mxu0
      %872 = vmatprep.mubr.bf16.mxu0 0
      %873 = vmatmul.mubr.bf16.gmra.mxu0 %v683
      %v874 = vpop.f32.mrf.mxu0
      %v875 = vadd.f32 0.0, %v874
      %v876 = vpop.f32.mrf.mxu0
      %v877 = vpop.f32.mrf.mxu0
      %v878 = vadd.f32 0.0, %v877
      %v879 = vpop.f32.mrf.mxu0
      %880 = vmatprep.mubr.bf16.mxu0 0
      %881 = vmatmul.mubr.bf16.gmra.mxu0 %v684
      %v882 = vpop.f32.mrf.mxu0
      %v883 = vadd.f32 0.0, %v882
      %v884 = vpop.f32.mrf.mxu0
      %v885 = vpop.f32.mrf.mxu0
      %v886 = vadd.f32 0.0, %v885
      %v887 = vpop.f32.mrf.mxu0
      %888 = vmatprep.mubr.bf16.mxu0 0
      %889 = vmatmul.mubr.bf16.gmra.mxu0 %v685
      %v890 = vpop.f32.mrf.mxu0
      %v891 = vadd.f32 0.0, %v890
      %v892 = vpop.f32.mrf.mxu0
      %v893 = vpop.f32.mrf.mxu0
      %v894 = vadd.f32 0.0, %v893
      %v895 = vpop.f32.mrf.mxu0
      %896 = vmatprep.mubr.bf16.mxu0 0
      %897 = vmatmul.mubr.bf16.gmra.mxu0 %v686
      %v898 = vpop.f32.mrf.mxu0
      %v899 = vadd.f32 0.0, %v898
      %v900 = vpop.f32.mrf.mxu0
      %v901 = vpop.f32.mrf.mxu0
      %v902 = vadd.f32 0.0, %v901
      %v903 = vpop.f32.mrf.mxu0
      %904 = vmatprep.mubr.bf16.mxu0 0
      %905 = vmatmul.mubr.bf16.gmra.mxu0 %v687
      %v906 = vpop.f32.mrf.mxu0
      %v907 = vadd.f32 0.0, %v906
      %v908 = vpop.f32.mrf.mxu0
      %v909 = vpop.f32.mrf.mxu0
      %v910 = vadd.f32 0.0, %v909
      %v911 = vpop.f32.mrf.mxu0
      %912 = vdwg.mxu0
      %v945 = vunpack.c.l.b16 %v172
      %v946 = vunpack.c.l.b16 %v173
      %v947 = vunpack.c.l.b16 %v174
      %v948 = vunpack.c.l.b16 %v175
      %v949 = vunpack.c.l.b16 %v176
      %v950 = vunpack.c.l.b16 %v177
      %v951 = vunpack.c.l.b16 %v178
      %v952 = vunpack.c.l.b16 %v179
      %v953 = vunpack.c.l.b16 %v180
      %v954 = vunpack.c.l.b16 %v181
      %v955 = vunpack.c.l.b16 %v182
      %v956 = vunpack.c.l.b16 %v183
      %v957 = vunpack.c.l.b16 %v184
      %v958 = vunpack.c.l.b16 %v185
      %v959 = vunpack.c.l.b16 %v186
      %v960 = vunpack.c.l.b16 %v187
      %v961 = vunpack.c.l.b16 %v188
      %v962 = vunpack.c.l.b16 %v189
      %v963 = vunpack.c.l.b16 %v190
      %v964 = vunpack.c.l.b16 %v191
      %v965 = vunpack.c.l.b16 %v192
      %v966 = vunpack.c.l.b16 %v193
      %v967 = vunpack.c.l.b16 %v194
      %v968 = vunpack.c.l.b16 %v195
      %v969 = vunpack.c.l.b16 %v196
      %v970 = vunpack.c.l.b16 %v197
      %v971 = vunpack.c.l.b16 %v198
      %v972 = vunpack.c.l.b16 %v199
      %v973 = vunpack.c.l.b16 %v200
      %v974 = vunpack.c.l.b16 %v201
      %v975 = vunpack.c.l.b16 %v202
      %v976 = vunpack.c.l.b16 %v203
      %v977 = vpack.c.b16 %v946, %v945
      %v978 = vpack.c.b16 %v948, %v947
      %v979 = vpack.c.b16 %v950, %v949
      %v980 = vpack.c.b16 %v952, %v951
      %v981 = vpack.c.b16 %v954, %v953
      %v982 = vpack.c.b16 %v956, %v955
      %v983 = vpack.c.b16 %v958, %v957
      %v984 = vpack.c.b16 %v960, %v959
      %v985 = vpack.c.b16 %v962, %v961
      %v986 = vpack.c.b16 %v964, %v963
      %v987 = vpack.c.b16 %v966, %v965
      %v988 = vpack.c.b16 %v968, %v967
      %v989 = vpack.c.b16 %v970, %v969
      %v990 = vpack.c.b16 %v972, %v971
      %v991 = vpack.c.b16 %v974, %v973
      %v992 = vpack.c.b16 %v976, %v975
      %v1025 = vunpack.c.l.b16 %v204
      %v1026 = vunpack.c.l.b16 %v205
      %v1027 = vunpack.c.l.b16 %v206
      %v1028 = vunpack.c.l.b16 %v207
      %v1029 = vunpack.c.l.b16 %v208
      %v1030 = vunpack.c.l.b16 %v209
      %v1031 = vunpack.c.l.b16 %v210
      %v1032 = vunpack.c.l.b16 %v211
      %v1033 = vunpack.c.l.b16 %v212
      %v1034 = vunpack.c.l.b16 %v213
      %v1035 = vunpack.c.l.b16 %v214
      %v1036 = vunpack.c.l.b16 %v215
      %v1037 = vunpack.c.l.b16 %v216
      %v1038 = vunpack.c.l.b16 %v217
      %v1039 = vunpack.c.l.b16 %v218
      %v1040 = vunpack.c.l.b16 %v219
      %v1041 = vpack.c.b16 %v1026, %v1025
      %v1042 = vpack.c.b16 %v1028, %v1027
      %v1043 = vpack.c.b16 %v1030, %v1029
      %v1044 = vpack.c.b16 %v1032, %v1031
      %v1045 = vpack.c.b16 %v1034, %v1033
      %v1046 = vpack.c.b16 %v1036, %v1035
      %v1047 = vpack.c.b16 %v1038, %v1037
      %v1048 = vpack.c.b16 %v1040, %v1039
      %1057 = vmatprep.subr.bf16.mxu0 0
      %1058 = vmatpush1.bf16.msra.mxu0 %v1048
      %1059 = vmatprep.subr.bf16.mxu0 0
      %1060 = vmatpush1.bf16.msra.mxu0 %v1047
      %1061 = vmatprep.subr.bf16.mxu0 0
      %1062 = vmatpush1.bf16.msra.mxu0 %v1046
      %1063 = vmatprep.subr.bf16.mxu0 0
      %1064 = vmatpush1.bf16.msra.mxu0 %v1045
      %1065 = vmatprep.subr.bf16.mxu0 0
      %1066 = vmatpush1.bf16.msra.mxu0 %v1044
      %1067 = vmatprep.subr.bf16.mxu0 0
      %1068 = vmatpush1.bf16.msra.mxu0 %v1043
      %1069 = vmatprep.subr.bf16.mxu0 0
      %1070 = vmatpush1.bf16.msra.mxu0 %v1042
      %1071 = vmatprep.subr.bf16.mxu0 0
      %1072 = vmatpush1.bf16.msra.mxu0 %v1041
      %1073 = vmatprep.subr.bf16.mxu0 0
      %1074 = vmatpush2.bf16.msra.mxu0 0
      %1075 = vmatprep.subr.bf16.mxu0 0
      %1076 = vmatpush2.bf16.msra.mxu0 0
      %1077 = vmatprep.subr.bf16.mxu0 0
      %1078 = vmatpush2.bf16.msra.mxu0 0
      %1079 = vmatprep.subr.bf16.mxu0 0
      %1080 = vmatpush2.bf16.msra.mxu0 0
      %1081 = vmatprep.subr.bf16.mxu0 0
      %1082 = vmatpush2.bf16.msra.mxu0 0
      %1083 = vmatprep.subr.bf16.mxu0 0
      %1084 = vmatpush2.bf16.msra.mxu0 0
      %1085 = vmatprep.subr.bf16.mxu0 0
      %1086 = vmatpush2.bf16.msra.mxu0 0
      %1087 = vmatprep.subr.bf16.mxu0 0
      %1088 = vmatpush2.bf16.msra.mxu0 0
      %1089 = vmatprep.mubr.bf16.mxu0 0
      %1090 = vmatmul.mubr.bf16.gmra.mxu0 %v977
      %v1091 = vpop.f32.mrf.mxu0
      %v1092 = vadd.f32 %v787, %v1091
      %v1093 = vpop.f32.mrf.mxu0
      %v1094 = vpop.f32.mrf.mxu0
      %v1095 = vadd.f32 %v790, %v1094
      %v1096 = vpop.f32.mrf.mxu0
      %1097 = vmatprep.mubr.bf16.mxu0 0
      %1098 = vmatmul.mubr.bf16.gmra.mxu0 %v978
      %v1099 = vpop.f32.mrf.mxu0
      %v1100 = vadd.f32 %v795, %v1099
      %v1101 = vpop.f32.mrf.mxu0
      %v1102 = vpop.f32.mrf.mxu0
      %v1103 = vadd.f32 %v798, %v1102
      %v1104 = vpop.f32.mrf.mxu0
      %1105 = vmatprep.mubr.bf16.mxu0 0
      %1106 = vmatmul.mubr.bf16.gmra.mxu0 %v979
      %v1107 = vpop.f32.mrf.mxu0
      %v1108 = vadd.f32 %v803, %v1107
      %v1109 = vpop.f32.mrf.mxu0
      %v1110 = vpop.f32.mrf.mxu0
      %v1111 = vadd.f32 %v806, %v1110
      %v1112 = vpop.f32.mrf.mxu0
      %1113 = vmatprep.mubr.bf16.mxu0 0
      %1114 = vmatmul.mubr.bf16.gmra.mxu0 %v980
      %v1115 = vpop.f32.mrf.mxu0
      %v1116 = vadd.f32 %v811, %v1115
      %v1117 = vpop.f32.mrf.mxu0
      %v1118 = vpop.f32.mrf.mxu0
      %v1119 = vadd.f32 %v814, %v1118
      %v1120 = vpop.f32.mrf.mxu0
      %1121 = vmatprep.mubr.bf16.mxu0 0
      %1122 = vmatmul.mubr.bf16.gmra.mxu0 %v981
      %v1123 = vpop.f32.mrf.mxu0
      %v1124 = vadd.f32 %v819, %v1123
      %v1125 = vpop.f32.mrf.mxu0
      %v1126 = vpop.f32.mrf.mxu0
      %v1127 = vadd.f32 %v822, %v1126
      %v1128 = vpop.f32.mrf.mxu0
      %1129 = vmatprep.mubr.bf16.mxu0 0
      %1130 = vmatmul.mubr.bf16.gmra.mxu0 %v982
      %v1131 = vpop.f32.mrf.mxu0
      %v1132 = vadd.f32 %v827, %v1131
      %v1133 = vpop.f32.mrf.mxu0
      %v1134 = vpop.f32.mrf.mxu0
      %v1135 = vadd.f32 %v830, %v1134
      %v1136 = vpop.f32.mrf.mxu0
      %1137 = vmatprep.mubr.bf16.mxu0 0
      %1138 = vmatmul.mubr.bf16.gmra.mxu0 %v983
      %v1139 = vpop.f32.mrf.mxu0
      %v1140 = vadd.f32 %v835, %v1139
      %v1141 = vpop.f32.mrf.mxu0
      %v1142 = vpop.f32.mrf.mxu0
      %v1143 = vadd.f32 %v838, %v1142
      %v1144 = vpop.f32.mrf.mxu0
      %1145 = vmatprep.mubr.bf16.mxu0 0
      %1146 = vmatmul.mubr.bf16.gmra.mxu0 %v984
      %v1147 = vpop.f32.mrf.mxu0
      %v1148 = vadd.f32 %v843, %v1147
      %v1149 = vpop.f32.mrf.mxu0
      %v1150 = vpop.f32.mrf.mxu0
      %v1151 = vadd.f32 %v846, %v1150
      %v1152 = vpop.f32.mrf.mxu0
      %1153 = vmatprep.mubr.bf16.mxu0 0
      %1154 = vmatmul.mubr.bf16.gmra.mxu0 %v985
      %v1155 = vpop.f32.mrf.mxu0
      %v1156 = vadd.f32 %v851, %v1155
      %v1157 = vpop.f32.mrf.mxu0
      %v1158 = vpop.f32.mrf.mxu0
      %v1159 = vadd.f32 %v854, %v1158
      %v1160 = vpop.f32.mrf.mxu0
      %1161 = vmatprep.mubr.bf16.mxu0 0
      %1162 = vmatmul.mubr.bf16.gmra.mxu0 %v986
      %v1163 = vpop.f32.mrf.mxu0
      %v1164 = vadd.f32 %v859, %v1163
      %v1165 = vpop.f32.mrf.mxu0
      %v1166 = vpop.f32.mrf.mxu0
      %v1167 = vadd.f32 %v862, %v1166
      %v1168 = vpop.f32.mrf.mxu0
      %1169 = vmatprep.mubr.bf16.mxu0 0
      %1170 = vmatmul.mubr.bf16.gmra.mxu0 %v987
      %v1171 = vpop.f32.mrf.mxu0
      %v1172 = vadd.f32 %v867, %v1171
      %v1173 = vpop.f32.mrf.mxu0
      %v1174 = vpop.f32.mrf.mxu0
      %v1175 = vadd.f32 %v870, %v1174
      %v1176 = vpop.f32.mrf.mxu0
      %1177 = vmatprep.mubr.bf16.mxu0 0
      %1178 = vmatmul.mubr.bf16.gmra.mxu0 %v988
      %v1179 = vpop.f32.mrf.mxu0
      %v1180 = vadd.f32 %v875, %v1179
      %v1181 = vpop.f32.mrf.mxu0
      %v1182 = vpop.f32.mrf.mxu0
      %v1183 = vadd.f32 %v878, %v1182
      %v1184 = vpop.f32.mrf.mxu0
      %1185 = vmatprep.mubr.bf16.mxu0 0
      %1186 = vmatmul.mubr.bf16.gmra.mxu0 %v989
      %v1187 = vpop.f32.mrf.mxu0
      %v1188 = vadd.f32 %v883, %v1187
      %v1189 = vpop.f32.mrf.mxu0
      %v1190 = vpop.f32.mrf.mxu0
      %v1191 = vadd.f32 %v886, %v1190
      %v1192 = vpop.f32.mrf.mxu0
      %1193 = vmatprep.mubr.bf16.mxu0 0
      %1194 = vmatmul.mubr.bf16.gmra.mxu0 %v990
      %v1195 = vpop.f32.mrf.mxu0
      %v1196 = vadd.f32 %v891, %v1195
      %v1197 = vpop.f32.mrf.mxu0
      %v1198 = vpop.f32.mrf.mxu0
      %v1199 = vadd.f32 %v894, %v1198
      %v1200 = vpop.f32.mrf.mxu0
      %1201 = vmatprep.mubr.bf16.mxu0 0
      %1202 = vmatmul.mubr.bf16.gmra.mxu0 %v991
      %v1203 = vpop.f32.mrf.mxu0
      %v1204 = vadd.f32 %v899, %v1203
      %v1205 = vpop.f32.mrf.mxu0
      %v1206 = vpop.f32.mrf.mxu0
      %v1207 = vadd.f32 %v902, %v1206
      %v1208 = vpop.f32.mrf.mxu0
      %1209 = vmatprep.mubr.bf16.mxu0 0
      %1210 = vmatmul.mubr.bf16.gmra.mxu0 %v992
      %v1211 = vpop.f32.mrf.mxu0
      %v1212 = vadd.f32 %v907, %v1211
      %v1213 = vpop.f32.mrf.mxu0
      %v1214 = vpop.f32.mrf.mxu0
      %v1215 = vadd.f32 %v910, %v1214
      %v1216 = vpop.f32.mrf.mxu0
      %1217 = vdwg.mxu0
      %v1218 = vld [vmem:[%s165] sm:$0xe]
      %v1219 = vld [vmem:[%s165 + $0xc] sm:$0xe]
      %v1220 = vld [vmem:[%s165 + $0x18] sm:$0xe]
      %v1221 = vld [vmem:[%s165 + $0x24] sm:$0xe]
      %v1222 = vld [vmem:[%s165 + $0x30] sm:$0xe]
      %v1223 = vld [vmem:[%s165 + $0x3c] sm:$0xe]
      %v1224 = vld [vmem:[%s165 + $0x48] sm:$0xe]
      %v1225 = vld [vmem:[%s165 + $0x54] sm:$0xe]
      %v1226 = vld [vmem:[%s165 + $0x60] sm:$0xe]
      %v1227 = vld [vmem:[%s165 + $0x6c] sm:$0xe]
      %v1228 = vld [vmem:[%s165 + $0x78] sm:$0xe]
      %v1229 = vld [vmem:[%s165 + $0x84] sm:$0xe]
      %v1230 = vld [vmem:[%s165 + $0x90] sm:$0xe]
      %v1231 = vld [vmem:[%s165 + $0x9c] sm:$0xe]
      %v1232 = vld [vmem:[%s165 + $0xa8] sm:$0xe]
      %v1233 = vld [vmem:[%s165 + $0xb4] sm:$0xe]
      %vm1266 = vcmask 1042432
      %vm1267 = vcmask 1046532
      %vm1268 = vmor %vm1266, %vm1267
      %v1269 = vrot.slane %v1218, 5
      %v1270 = vrot.slane %v1269, 4
      %v1271 = vrot.slane %v173, 5
      %v1272 = vsel %vm1268, %v1270, %v1271
      %v1273 = vrot.slane %v1271, 4
      %v1274 = vrot.slane %v220, 5
      %v1275 = vsel %vm1268, %v1273, %v1274
      %v1276 = vrot.slane %v1219, 5
      %v1277 = vrot.slane %v1276, 4
      %v1278 = vrot.slane %v175, 5
      %v1279 = vsel %vm1268, %v1277, %v1278
      %v1280 = vrot.slane %v1278, 4
      %v1281 = vrot.slane %v221, 5
      %v1282 = vsel %vm1268, %v1280, %v1281
      %v1283 = vrot.slane %v1220, 5
      %v1284 = vrot.slane %v1283, 4
      %v1285 = vrot.slane %v177, 5
      %v1286 = vsel %vm1268, %v1284, %v1285
      %v1287 = vrot.slane %v1285, 4
      %v1288 = vrot.slane %v222, 5
      %v1289 = vsel %vm1268, %v1287, %v1288
      %v1290 = vrot.slane %v1221, 5
      %v1291 = vrot.slane %v1290, 4
      %v1292 = vrot.slane %v179, 5
      %v1293 = vsel %vm1268, %v1291, %v1292
      %v1294 = vrot.slane %v1292, 4
      %v1295 = vrot.slane %v223, 5
      %v1296 = vsel %vm1268, %v1294, %v1295
      %v1297 = vrot.slane %v1222, 5
      %v1298 = vrot.slane %v1297, 4
      %v1299 = vrot.slane %v181, 5
      %v1300 = vsel %vm1268, %v1298, %v1299
      %v1301 = vrot.slane %v1299, 4
      %v1302 = vrot.slane %v224, 5
      %v1303 = vsel %vm1268, %v1301, %v1302
      %v1304 = vrot.slane %v1223, 5
      %v1305 = vrot.slane %v1304, 4
      %v1306 = vrot.slane %v183, 5
      %v1307 = vsel %vm1268, %v1305, %v1306
      %v1308 = vrot.slane %v1306, 4
      %v1309 = vrot.slane %v225, 5
      %v1310 = vsel %vm1268, %v1308, %v1309
      %v1311 = vrot.slane %v1224, 5
      %v1312 = vrot.slane %v1311, 4
      %v1313 = vrot.slane %v185, 5
      %v1314 = vsel %vm1268, %v1312, %v1313
      %v1315 = vrot.slane %v1313, 4
      %v1316 = vrot.slane %v226, 5
      %v1317 = vsel %vm1268, %v1315, %v1316
      %v1318 = vrot.slane %v1225, 5
      %v1319 = vrot.slane %v1318, 4
      %v1320 = vrot.slane %v187, 5
      %v1321 = vsel %vm1268, %v1319, %v1320
      %v1322 = vrot.slane %v1320, 4
      %v1323 = vrot.slane %v227, 5
      %v1324 = vsel %vm1268, %v1322, %v1323
      %v1325 = vrot.slane %v1226, 5
      %v1326 = vrot.slane %v1325, 4
      %v1327 = vrot.slane %v189, 5
      %v1328 = vsel %vm1268, %v1326, %v1327
      %v1329 = vrot.slane %v1327, 4
      %v1330 = vrot.slane %v228, 5
      %v1331 = vsel %vm1268, %v1329, %v1330
      %v1332 = vrot.slane %v1227, 5
      %v1333 = vrot.slane %v1332, 4
      %v1334 = vrot.slane %v191, 5
      %v1335 = vsel %vm1268, %v1333, %v1334
      %v1336 = vrot.slane %v1334, 4
      %v1337 = vrot.slane %v229, 5
      %v1338 = vsel %vm1268, %v1336, %v1337
      %v1339 = vrot.slane %v1228, 5
      %v1340 = vrot.slane %v1339, 4
      %v1341 = vrot.slane %v193, 5
      %v1342 = vsel %vm1268, %v1340, %v1341
      %v1343 = vrot.slane %v1341, 4
      %v1344 = vrot.slane %v230, 5
      %v1345 = vsel %vm1268, %v1343, %v1344
      %v1346 = vrot.slane %v1229, 5
      %v1347 = vrot.slane %v1346, 4
      %v1348 = vrot.slane %v195, 5
      %v1349 = vsel %vm1268, %v1347, %v1348
      %v1350 = vrot.slane %v1348, 4
      %v1351 = vrot.slane %v231, 5
      %v1352 = vsel %vm1268, %v1350, %v1351
      %v1353 = vrot.slane %v1230, 5
      %v1354 = vrot.slane %v1353, 4
      %v1355 = vrot.slane %v197, 5
      %v1356 = vsel %vm1268, %v1354, %v1355
      %v1357 = vrot.slane %v1355, 4
      %v1358 = vrot.slane %v232, 5
      %v1359 = vsel %vm1268, %v1357, %v1358
      %v1360 = vrot.slane %v1231, 5
      %v1361 = vrot.slane %v1360, 4
      %v1362 = vrot.slane %v199, 5
      %v1363 = vsel %vm1268, %v1361, %v1362
      %v1364 = vrot.slane %v1362, 4
      %v1365 = vrot.slane %v233, 5
      %v1366 = vsel %vm1268, %v1364, %v1365
      %v1367 = vrot.slane %v1232, 5
      %v1368 = vrot.slane %v1367, 4
      %v1369 = vrot.slane %v201, 5
      %v1370 = vsel %vm1268, %v1368, %v1369
      %v1371 = vrot.slane %v1369, 4
      %v1372 = vrot.slane %v234, 5
      %v1373 = vsel %vm1268, %v1371, %v1372
      %v1374 = vrot.slane %v1233, 5
      %v1375 = vrot.slane %v1374, 4
      %v1376 = vrot.slane %v203, 5
      %v1377 = vsel %vm1268, %v1375, %v1376
      %v1378 = vrot.slane %v1376, 4
      %v1379 = vrot.slane %v235, 5
      %v1380 = vsel %vm1268, %v1378, %v1379
      %s1381 = scalar_lea.vmem %s1, 128
      %v1382 = vld [vmem:[%s1381] sm:$0xf]
      %v1383 = vld [vmem:[%s1381 + $0x4] sm:$0xf]
      %v1384 = vld [vmem:[%s1381 + $0x8] sm:$0xf]
      %v1385 = vld [vmem:[%s1381 + $0xc] sm:$0xf]
      %v1386 = vld [vmem:[%s1381 + $0x10] sm:$0xf]
      %v1387 = vld [vmem:[%s1381 + $0x14] sm:$0xf]
      %v1388 = vld [vmem:[%s1381 + $0x18] sm:$0xf]
      %v1389 = vld [vmem:[%s1381 + $0x1c] sm:$0xf]
      %v1390 = vld [vmem:[%s1381 + $0x20] sm:$0xf]
      %v1391 = vld [vmem:[%s1381 + $0x24] sm:$0xf]
      %v1392 = vld [vmem:[%s1381 + $0x28] sm:$0xf]
      %v1393 = vld [vmem:[%s1381 + $0x2c] sm:$0xf]
      %v1394 = vld [vmem:[%s1381 + $0x30] sm:$0xf]
      %v1395 = vld [vmem:[%s1381 + $0x34] sm:$0xf]
      %v1396 = vld [vmem:[%s1381 + $0x38] sm:$0xf]
      %v1397 = vld [vmem:[%s1381 + $0x3c] sm:$0xf]
      %v1398 = vunpack.c.l.b16 %v1272
      %v1399 = vunpack.c.l.b16 %v1275
      %v1400 = vunpack.c.l.b16 %v1279
      %v1401 = vunpack.c.l.b16 %v1282
      %v1402 = vunpack.c.l.b16 %v1286
      %v1403 = vunpack.c.l.b16 %v1289
      %v1404 = vunpack.c.l.b16 %v1293
      %v1405 = vunpack.c.l.b16 %v1296
      %v1406 = vunpack.c.l.b16 %v1300
      %v1407 = vunpack.c.l.b16 %v1303
      %v1408 = vunpack.c.l.b16 %v1307
      %v1409 = vunpack.c.l.b16 %v1310
      %v1410 = vunpack.c.l.b16 %v1314
      %v1411 = vunpack.c.l.b16 %v1317
      %v1412 = vunpack.c.l.b16 %v1321
      %v1413 = vunpack.c.l.b16 %v1324
      %v1414 = vunpack.c.l.b16 %v1328
      %v1415 = vunpack.c.l.b16 %v1331
      %v1416 = vunpack.c.l.b16 %v1335
      %v1417 = vunpack.c.l.b16 %v1338
      %v1418 = vunpack.c.l.b16 %v1342
      %v1419 = vunpack.c.l.b16 %v1345
      %v1420 = vunpack.c.l.b16 %v1349
      %v1421 = vunpack.c.l.b16 %v1352
      %v1422 = vunpack.c.l.b16 %v1356
      %v1423 = vunpack.c.l.b16 %v1359
      %v1424 = vunpack.c.l.b16 %v1363
      %v1425 = vunpack.c.l.b16 %v1366
      %v1426 = vunpack.c.l.b16 %v1370
      %v1427 = vunpack.c.l.b16 %v1373
      %v1428 = vunpack.c.l.b16 %v1377
      %v1429 = vunpack.c.l.b16 %v1380
      %v1430 = vpack.c.b16 %v1399, %v1398
      %v1431 = vpack.c.b16 %v1401, %v1400
      %v1432 = vpack.c.b16 %v1403, %v1402
      %v1433 = vpack.c.b16 %v1405, %v1404
      %v1434 = vpack.c.b16 %v1407, %v1406
      %v1435 = vpack.c.b16 %v1409, %v1408
      %v1436 = vpack.c.b16 %v1411, %v1410
      %v1437 = vpack.c.b16 %v1413, %v1412
      %v1438 = vpack.c.b16 %v1415, %v1414
      %v1439 = vpack.c.b16 %v1417, %v1416
      %v1440 = vpack.c.b16 %v1419, %v1418
      %v1441 = vpack.c.b16 %v1421, %v1420
      %v1442 = vpack.c.b16 %v1423, %v1422
      %v1443 = vpack.c.b16 %v1425, %v1424
      %v1444 = vpack.c.b16 %v1427, %v1426
      %v1445 = vpack.c.b16 %v1429, %v1428
      %v1478 = vunpack.c.l.b16 %v1382
      %v1479 = vunpack.c.l.b16 %v1383
      %v1480 = vunpack.c.l.b16 %v1384
      %v1481 = vunpack.c.l.b16 %v1385
      %v1482 = vunpack.c.l.b16 %v1386
      %v1483 = vunpack.c.l.b16 %v1387
      %v1484 = vunpack.c.l.b16 %v1388
      %v1485 = vunpack.c.l.b16 %v1389
      %v1486 = vunpack.c.l.b16 %v1390
      %v1487 = vunpack.c.l.b16 %v1391
      %v1488 = vunpack.c.l.b16 %v1392
      %v1489 = vunpack.c.l.b16 %v1393
      %v1490 = vunpack.c.l.b16 %v1394
      %v1491 = vunpack.c.l.b16 %v1395
      %v1492 = vunpack.c.l.b16 %v1396
      %v1493 = vunpack.c.l.b16 %v1397
      %v1494 = vpack.c.b16 %v1479, %v1478
      %v1495 = vpack.c.b16 %v1481, %v1480
      %v1496 = vpack.c.b16 %v1483, %v1482
      %v1497 = vpack.c.b16 %v1485, %v1484
      %v1498 = vpack.c.b16 %v1487, %v1486
      %v1499 = vpack.c.b16 %v1489, %v1488
      %v1500 = vpack.c.b16 %v1491, %v1490
      %v1501 = vpack.c.b16 %v1493, %v1492
      %1510 = vmatprep.subr.bf16.mxu0 0
      %1511 = vmatpush1.bf16.msra.mxu0 %v1501
      %1512 = vmatprep.subr.bf16.mxu0 0
      %1513 = vmatpush1.bf16.msra.mxu0 %v1500
      %1514 = vmatprep.subr.bf16.mxu0 0
      %1515 = vmatpush1.bf16.msra.mxu0 %v1499
      %1516 = vmatprep.subr.bf16.mxu0 0
      %1517 = vmatpush1.bf16.msra.mxu0 %v1498
      %1518 = vmatprep.subr.bf16.mxu0 0
      %1519 = vmatpush1.bf16.msra.mxu0 %v1497
      %1520 = vmatprep.subr.bf16.mxu0 0
      %1521 = vmatpush1.bf16.msra.mxu0 %v1496
      %1522 = vmatprep.subr.bf16.mxu0 0
      %1523 = vmatpush1.bf16.msra.mxu0 %v1495
      %1524 = vmatprep.subr.bf16.mxu0 0
      %1525 = vmatpush1.bf16.msra.mxu0 %v1494
      %1526 = vmatprep.subr.bf16.mxu0 0
      %1527 = vmatpush2.bf16.msra.mxu0 0
      %1528 = vmatprep.subr.bf16.mxu0 0
      %1529 = vmatpush2.bf16.msra.mxu0 0
      %1530 = vmatprep.subr.bf16.mxu0 0
      %1531 = vmatpush2.bf16.msra.mxu0 0
      %1532 = vmatprep.subr.bf16.mxu0 0
      %1533 = vmatpush2.bf16.msra.mxu0 0
      %1534 = vmatprep.subr.bf16.mxu0 0
      %1535 = vmatpush2.bf16.msra.mxu0 0
      %1536 = vmatprep.subr.bf16.mxu0 0
      %1537 = vmatpush2.bf16.msra.mxu0 0
      %1538 = vmatprep.subr.bf16.mxu0 0
      %1539 = vmatpush2.bf16.msra.mxu0 0
      %1540 = vmatprep.subr.bf16.mxu0 0
      %1541 = vmatpush2.bf16.msra.mxu0 0
      %1542 = vmatprep.mubr.bf16.mxu0 0
      %1543 = vmatmul.mubr.bf16.gmra.mxu0 %v1430
      %v1544 = vpop.f32.mrf.mxu0
      %v1545 = vadd.f32 0.0, %v1544
      %v1546 = vpop.f32.mrf.mxu0
      %v1547 = vpop.f32.mrf.mxu0
      %v1548 = vadd.f32 0.0, %v1547
      %v1549 = vpop.f32.mrf.mxu0
      %1550 = vmatprep.mubr.bf16.mxu0 0
      %1551 = vmatmul.mubr.bf16.gmra.mxu0 %v1431
      %v1552 = vpop.f32.mrf.mxu0
      %v1553 = vadd.f32 0.0, %v1552
      %v1554 = vpop.f32.mrf.mxu0
      %v1555 = vpop.f32.mrf.mxu0
      %v1556 = vadd.f32 0.0, %v1555
      %v1557 = vpop.f32.mrf.mxu0
      %1558 = vmatprep.mubr.bf16.mxu0 0
      %1559 = vmatmul.mubr.bf16.gmra.mxu0 %v1432
      %v1560 = vpop.f32.mrf.mxu0
      %v1561 = vadd.f32 0.0, %v1560
      %v1562 = vpop.f32.mrf.mxu0
      %v1563 = vpop.f32.mrf.mxu0
      %v1564 = vadd.f32 0.0, %v1563
      %v1565 = vpop.f32.mrf.mxu0
      %1566 = vmatprep.mubr.bf16.mxu0 0
      %1567 = vmatmul.mubr.bf16.gmra.mxu0 %v1433
      %v1568 = vpop.f32.mrf.mxu0
      %v1569 = vadd.f32 0.0, %v1568
      %v1570 = vpop.f32.mrf.mxu0
      %v1571 = vpop.f32.mrf.mxu0
      %v1572 = vadd.f32 0.0, %v1571
      %v1573 = vpop.f32.mrf.mxu0
      %1574 = vmatprep.mubr.bf16.mxu0 0
      %1575 = vmatmul.mubr.bf16.gmra.mxu0 %v1434
      %v1576 = vpop.f32.mrf.mxu0
      %v1577 = vadd.f32 0.0, %v1576
      %v1578 = vpop.f32.mrf.mxu0
      %v1579 = vpop.f32.mrf.mxu0
      %v1580 = vadd.f32 0.0, %v1579
      %v1581 = vpop.f32.mrf.mxu0
      %1582 = vmatprep.mubr.bf16.mxu0 0
      %1583 = vmatmul.mubr.bf16.gmra.mxu0 %v1435
      %v1584 = vpop.f32.mrf.mxu0
      %v1585 = vadd.f32 0.0, %v1584
      %v1586 = vpop.f32.mrf.mxu0
      %v1587 = vpop.f32.mrf.mxu0
      %v1588 = vadd.f32 0.0, %v1587
      %v1589 = vpop.f32.mrf.mxu0
      %1590 = vmatprep.mubr.bf16.mxu0 0
      %1591 = vmatmul.mubr.bf16.gmra.mxu0 %v1436
      %v1592 = vpop.f32.mrf.mxu0
      %v1593 = vadd.f32 0.0, %v1592
      %v1594 = vpop.f32.mrf.mxu0
      %v1595 = vpop.f32.mrf.mxu0
      %v1596 = vadd.f32 0.0, %v1595
      %v1597 = vpop.f32.mrf.mxu0
      %1598 = vmatprep.mubr.bf16.mxu0 0
      %1599 = vmatmul.mubr.bf16.gmra.mxu0 %v1437
      %v1600 = vpop.f32.mrf.mxu0
      %v1601 = vadd.f32 0.0, %v1600
      %v1602 = vpop.f32.mrf.mxu0
      %v1603 = vpop.f32.mrf.mxu0
      %v1604 = vadd.f32 0.0, %v1603
      %v1605 = vpop.f32.mrf.mxu0
      %1606 = vmatprep.mubr.bf16.mxu0 0
      %1607 = vmatmul.mubr.bf16.gmra.mxu0 %v1438
      %v1608 = vpop.f32.mrf.mxu0
      %v1609 = vadd.f32 0.0, %v1608
      %v1610 = vpop.f32.mrf.mxu0
      %v1611 = vpop.f32.mrf.mxu0
      %v1612 = vadd.f32 0.0, %v1611
      %v1613 = vpop.f32.mrf.mxu0
      %1614 = vmatprep.mubr.bf16.mxu0 0
      %1615 = vmatmul.mubr.bf16.gmra.mxu0 %v1439
      %v1616 = vpop.f32.mrf.mxu0
      %v1617 = vadd.f32 0.0, %v1616
      %v1618 = vpop.f32.mrf.mxu0
      %v1619 = vpop.f32.mrf.mxu0
      %v1620 = vadd.f32 0.0, %v1619
      %v1621 = vpop.f32.mrf.mxu0
      %1622 = vmatprep.mubr.bf16.mxu0 0
      %1623 = vmatmul.mubr.bf16.gmra.mxu0 %v1440
      %v1624 = vpop.f32.mrf.mxu0
      %v1625 = vadd.f32 0.0, %v1624
      %v1626 = vpop.f32.mrf.mxu0
      %v1627 = vpop.f32.mrf.mxu0
      %v1628 = vadd.f32 0.0, %v1627
      %v1629 = vpop.f32.mrf.mxu0
      %1630 = vmatprep.mubr.bf16.mxu0 0
      %1631 = vmatmul.mubr.bf16.gmra.mxu0 %v1441
      %v1632 = vpop.f32.mrf.mxu0
      %v1633 = vadd.f32 0.0, %v1632
      %v1634 = vpop.f32.mrf.mxu0
      %v1635 = vpop.f32.mrf.mxu0
      %v1636 = vadd.f32 0.0, %v1635
      %v1637 = vpop.f32.mrf.mxu0
      %1638 = vmatprep.mubr.bf16.mxu0 0
      %1639 = vmatmul.mubr.bf16.gmra.mxu0 %v1442
      %v1640 = vpop.f32.mrf.mxu0
      %v1641 = vadd.f32 0.0, %v1640
      %v1642 = vpop.f32.mrf.mxu0
      %v1643 = vpop.f32.mrf.mxu0
      %v1644 = vadd.f32 0.0, %v1643
      %v1645 = vpop.f32.mrf.mxu0
      %1646 = vmatprep.mubr.bf16.mxu0 0
      %1647 = vmatmul.mubr.bf16.gmra.mxu0 %v1443
      %v1648 = vpop.f32.mrf.mxu0
      %v1649 = vadd.f32 0.0, %v1648
      %v1650 = vpop.f32.mrf.mxu0
      %v1651 = vpop.f32.mrf.mxu0
      %v1652 = vadd.f32 0.0, %v1651
      %v1653 = vpop.f32.mrf.mxu0
      %1654 = vmatprep.mubr.bf16.mxu0 0
      %1655 = vmatmul.mubr.bf16.gmra.mxu0 %v1444
      %v1656 = vpop.f32.mrf.mxu0
      %v1657 = vadd.f32 0.0, %v1656
      %v1658 = vpop.f32.mrf.mxu0
      %v1659 = vpop.f32.mrf.mxu0
      %v1660 = vadd.f32 0.0, %v1659
      %v1661 = vpop.f32.mrf.mxu0
      %1662 = vmatprep.mubr.bf16.mxu0 0
      %1663 = vmatmul.mubr.bf16.gmra.mxu0 %v1445
      %v1664 = vpop.f32.mrf.mxu0
      %v1665 = vadd.f32 0.0, %v1664
      %v1666 = vpop.f32.mrf.mxu0
      %v1667 = vpop.f32.mrf.mxu0
      %v1668 = vadd.f32 0.0, %v1667
      %v1669 = vpop.f32.mrf.mxu0
      %1670 = vdwg.mxu0
      %v1671 = vadd.f32 %v1092, %v1545
      %v1672 = vadd.f32 %v1095, %v1548
      %v1673 = vadd.f32 %v1100, %v1553
      %v1674 = vadd.f32 %v1103, %v1556
      %v1675 = vadd.f32 %v1108, %v1561
      %v1676 = vadd.f32 %v1111, %v1564
      %v1677 = vadd.f32 %v1116, %v1569
      %v1678 = vadd.f32 %v1119, %v1572
      %v1679 = vadd.f32 %v1124, %v1577
      %v1680 = vadd.f32 %v1127, %v1580
      %v1681 = vadd.f32 %v1132, %v1585
      %v1682 = vadd.f32 %v1135, %v1588
      %v1683 = vadd.f32 %v1140, %v1593
      %v1684 = vadd.f32 %v1143, %v1596
      %v1685 = vadd.f32 %v1148, %v1601
      %v1686 = vadd.f32 %v1151, %v1604
      %v1687 = vadd.f32 %v1156, %v1609
      %v1688 = vadd.f32 %v1159, %v1612
      %v1689 = vadd.f32 %v1164, %v1617
      %v1690 = vadd.f32 %v1167, %v1620
      %v1691 = vadd.f32 %v1172, %v1625
      %v1692 = vadd.f32 %v1175, %v1628
      %v1693 = vadd.f32 %v1180, %v1633
      %v1694 = vadd.f32 %v1183, %v1636
      %v1695 = vadd.f32 %v1188, %v1641
      %v1696 = vadd.f32 %v1191, %v1644
      %v1697 = vadd.f32 %v1196, %v1649
      %v1698 = vadd.f32 %v1199, %v1652
      %v1699 = vadd.f32 %v1204, %v1657
      %v1700 = vadd.f32 %v1207, %v1660
      %v1701 = vadd.f32 %v1212, %v1665
      %v1702 = vadd.f32 %v1215, %v1668
      %s1703 = scalar_lea.vmem %s165, 12
      %v1704 = vld [vmem:[%s1703] sm:$0xf]
      %v1705 = vld [vmem:[%s1703 + $0x4] sm:$0xf]
      %v1706 = vld [vmem:[%s1703 + $0xc] sm:$0xf]
      %v1707 = vld [vmem:[%s1703 + $0x10] sm:$0xf]
      %v1708 = vld [vmem:[%s1703 + $0x18] sm:$0xf]
      %v1709 = vld [vmem:[%s1703 + $0x1c] sm:$0xf]
      %v1710 = vld [vmem:[%s1703 + $0x24] sm:$0xf]
      %v1711 = vld [vmem:[%s1703 + $0x28] sm:$0xf]
      %v1712 = vld [vmem:[%s1703 + $0x30] sm:$0xf]
      %v1713 = vld [vmem:[%s1703 + $0x34] sm:$0xf]
      %v1714 = vld [vmem:[%s1703 + $0x3c] sm:$0xf]
      %v1715 = vld [vmem:[%s1703 + $0x40] sm:$0xf]
      %v1716 = vld [vmem:[%s1703 + $0x48] sm:$0xf]
      %v1717 = vld [vmem:[%s1703 + $0x4c] sm:$0xf]
      %v1718 = vld [vmem:[%s1703 + $0x54] sm:$0xf]
      %v1719 = vld [vmem:[%s1703 + $0x58] sm:$0xf]
      %v1720 = vld [vmem:[%s1703 + $0x60] sm:$0xf]
      %v1721 = vld [vmem:[%s1703 + $0x64] sm:$0xf]
      %v1722 = vld [vmem:[%s1703 + $0x6c] sm:$0xf]
      %v1723 = vld [vmem:[%s1703 + $0x70] sm:$0xf]
      %v1724 = vld [vmem:[%s1703 + $0x78] sm:$0xf]
      %v1725 = vld [vmem:[%s1703 + $0x7c] sm:$0xf]
      %v1726 = vld [vmem:[%s1703 + $0x84] sm:$0xf]
      %v1727 = vld [vmem:[%s1703 + $0x88] sm:$0xf]
      %v1728 = vld [vmem:[%s1703 + $0x90] sm:$0xf]
      %v1729 = vld [vmem:[%s1703 + $0x94] sm:$0xf]
      %v1730 = vld [vmem:[%s1703 + $0x9c] sm:$0xf]
      %v1731 = vld [vmem:[%s1703 + $0xa0] sm:$0xf]
      %v1732 = vld [vmem:[%s1703 + $0xa8] sm:$0xf]
      %v1733 = vld [vmem:[%s1703 + $0xac] sm:$0xf]
      %v1734 = vld [vmem:[%s1703 + $0xb4] sm:$0xf]
      %v1735 = vld [vmem:[%s1703 + $0xb8] sm:$0xf]
      %s1736 = scalar_lea.vmem %s1, 192
      %v1737 = vld [vmem:[%s1736] sm:$0xf]
      %v1738 = vld [vmem:[%s1736 + $0x4] sm:$0xf]
      %v1739 = vld [vmem:[%s1736 + $0x8] sm:$0xf]
      %v1740 = vld [vmem:[%s1736 + $0xc] sm:$0xf]
      %v1741 = vld [vmem:[%s1736 + $0x10] sm:$0xf]
      %v1742 = vld [vmem:[%s1736 + $0x14] sm:$0xf]
      %v1743 = vld [vmem:[%s1736 + $0x18] sm:$0xf]
      %v1744 = vld [vmem:[%s1736 + $0x1c] sm:$0xf]
      %v1745 = vld [vmem:[%s1736 + $0x20] sm:$0xf]
      %v1746 = vld [vmem:[%s1736 + $0x24] sm:$0xf]
      %v1747 = vld [vmem:[%s1736 + $0x28] sm:$0xf]
      %v1748 = vld [vmem:[%s1736 + $0x2c] sm:$0xf]
      %v1749 = vld [vmem:[%s1736 + $0x30] sm:$0xf]
      %v1750 = vld [vmem:[%s1736 + $0x34] sm:$0xf]
      %v1751 = vld [vmem:[%s1736 + $0x38] sm:$0xf]
      %v1752 = vld [vmem:[%s1736 + $0x3c] sm:$0xf]
      %v1785 = vunpack.c.l.b16 %v1704
      %v1786 = vunpack.c.l.b16 %v1705
      %v1787 = vunpack.c.l.b16 %v1706
      %v1788 = vunpack.c.l.b16 %v1707
      %v1789 = vunpack.c.l.b16 %v1708
      %v1790 = vunpack.c.l.b16 %v1709
      %v1791 = vunpack.c.l.b16 %v1710
      %v1792 = vunpack.c.l.b16 %v1711
      %v1793 = vunpack.c.l.b16 %v1712
      %v1794 = vunpack.c.l.b16 %v1713
      %v1795 = vunpack.c.l.b16 %v1714
      %v1796 = vunpack.c.l.b16 %v1715
      %v1797 = vunpack.c.l.b16 %v1716
      %v1798 = vunpack.c.l.b16 %v1717
      %v1799 = vunpack.c.l.b16 %v1718
      %v1800 = vunpack.c.l.b16 %v1719
      %v1801 = vunpack.c.l.b16 %v1720
      %v1802 = vunpack.c.l.b16 %v1721
      %v1803 = vunpack.c.l.b16 %v1722
      %v1804 = vunpack.c.l.b16 %v1723
      %v1805 = vunpack.c.l.b16 %v1724
      %v1806 = vunpack.c.l.b16 %v1725
      %v1807 = vunpack.c.l.b16 %v1726
      %v1808 = vunpack.c.l.b16 %v1727
      %v1809 = vunpack.c.l.b16 %v1728
      %v1810 = vunpack.c.l.b16 %v1729
      %v1811 = vunpack.c.l.b16 %v1730
      %v1812 = vunpack.c.l.b16 %v1731
      %v1813 = vunpack.c.l.b16 %v1732
      %v1814 = vunpack.c.l.b16 %v1733
      %v1815 = vunpack.c.l.b16 %v1734
      %v1816 = vunpack.c.l.b16 %v1735
      %v1817 = vpack.c.b16 %v1786, %v1785
      %v1818 = vpack.c.b16 %v1788, %v1787
      %v1819 = vpack.c.b16 %v1790, %v1789
      %v1820 = vpack.c.b16 %v1792, %v1791
      %v1821 = vpack.c.b16 %v1794, %v1793
      %v1822 = vpack.c.b16 %v1796, %v1795
      %v1823 = vpack.c.b16 %v1798, %v1797
      %v1824 = vpack.c.b16 %v1800, %v1799
      %v1825 = vpack.c.b16 %v1802, %v1801
      %v1826 = vpack.c.b16 %v1804, %v1803
      %v1827 = vpack.c.b16 %v1806, %v1805
      %v1828 = vpack.c.b16 %v1808, %v1807
      %v1829 = vpack.c.b16 %v1810, %v1809
      %v1830 = vpack.c.b16 %v1812, %v1811
      %v1831 = vpack.c.b16 %v1814, %v1813
      %v1832 = vpack.c.b16 %v1816, %v1815
      %v1865 = vunpack.c.l.b16 %v1737
      %v1866 = vunpack.c.l.b16 %v1738
      %v1867 = vunpack.c.l.b16 %v1739
      %v1868 = vunpack.c.l.b16 %v1740
      %v1869 = vunpack.c.l.b16 %v1741
      %v1870 = vunpack.c.l.b16 %v1742
      %v1871 = vunpack.c.l.b16 %v1743
      %v1872 = vunpack.c.l.b16 %v1744
      %v1873 = vunpack.c.l.b16 %v1745
      %v1874 = vunpack.c.l.b16 %v1746
      %v1875 = vunpack.c.l.b16 %v1747
      %v1876 = vunpack.c.l.b16 %v1748
      %v1877 = vunpack.c.l.b16 %v1749
      %v1878 = vunpack.c.l.b16 %v1750
      %v1879 = vunpack.c.l.b16 %v1751
      %v1880 = vunpack.c.l.b16 %v1752
      %v1881 = vpack.c.b16 %v1866, %v1865
      %v1882 = vpack.c.b16 %v1868, %v1867
      %v1883 = vpack.c.b16 %v1870, %v1869
      %v1884 = vpack.c.b16 %v1872, %v1871
      %v1885 = vpack.c.b16 %v1874, %v1873
      %v1886 = vpack.c.b16 %v1876, %v1875
      %v1887 = vpack.c.b16 %v1878, %v1877
      %v1888 = vpack.c.b16 %v1880, %v1879
      %1897 = vmatprep.subr.bf16.mxu0 0
      %1898 = vmatpush1.bf16.msra.mxu0 %v1888
      %1899 = vmatprep.subr.bf16.mxu0 0
      %1900 = vmatpush1.bf16.msra.mxu0 %v1887
      %1901 = vmatprep.subr.bf16.mxu0 0
      %1902 = vmatpush1.bf16.msra.mxu0 %v1886
      %1903 = vmatprep.subr.bf16.mxu0 0
      %1904 = vmatpush1.bf16.msra.mxu0 %v1885
      %1905 = vmatprep.subr.bf16.mxu0 0
      %1906 = vmatpush1.bf16.msra.mxu0 %v1884
      %1907 = vmatprep.subr.bf16.mxu0 0
      %1908 = vmatpush1.bf16.msra.mxu0 %v1883
      %1909 = vmatprep.subr.bf16.mxu0 0
      %1910 = vmatpush1.bf16.msra.mxu0 %v1882
      %1911 = vmatprep.subr.bf16.mxu0 0
      %1912 = vmatpush1.bf16.msra.mxu0 %v1881
      %1913 = vmatprep.subr.bf16.mxu0 0
      %1914 = vmatpush2.bf16.msra.mxu0 0
      %1915 = vmatprep.subr.bf16.mxu0 0
      %1916 = vmatpush2.bf16.msra.mxu0 0
      %1917 = vmatprep.subr.bf16.mxu0 0
      %1918 = vmatpush2.bf16.msra.mxu0 0
      %1919 = vmatprep.subr.bf16.mxu0 0
      %1920 = vmatpush2.bf16.msra.mxu0 0
      %1921 = vmatprep.subr.bf16.mxu0 0
      %1922 = vmatpush2.bf16.msra.mxu0 0
      %1923 = vmatprep.subr.bf16.mxu0 0
      %1924 = vmatpush2.bf16.msra.mxu0 0
      %1925 = vmatprep.subr.bf16.mxu0 0
      %1926 = vmatpush2.bf16.msra.mxu0 0
      %1927 = vmatprep.subr.bf16.mxu0 0
      %1928 = vmatpush2.bf16.msra.mxu0 0
      %1929 = vmatprep.mubr.bf16.mxu0 0
      %1930 = vmatmul.mubr.bf16.gmra.mxu0 %v1817
      %v1931 = vpop.f32.mrf.mxu0
      %v1932 = vadd.f32 0.0, %v1931
      %v1933 = vpop.f32.mrf.mxu0
      %v1934 = vpop.f32.mrf.mxu0
      %v1935 = vadd.f32 0.0, %v1934
      %v1936 = vpop.f32.mrf.mxu0
      %1937 = vmatprep.mubr.bf16.mxu0 0
      %1938 = vmatmul.mubr.bf16.gmra.mxu0 %v1818
      %v1939 = vpop.f32.mrf.mxu0
      %v1940 = vadd.f32 0.0, %v1939
      %v1941 = vpop.f32.mrf.mxu0
      %v1942 = vpop.f32.mrf.mxu0
      %v1943 = vadd.f32 0.0, %v1942
      %v1944 = vpop.f32.mrf.mxu0
      %1945 = vmatprep.mubr.bf16.mxu0 0
      %1946 = vmatmul.mubr.bf16.gmra.mxu0 %v1819
      %v1947 = vpop.f32.mrf.mxu0
      %v1948 = vadd.f32 0.0, %v1947
      %v1949 = vpop.f32.mrf.mxu0
      %v1950 = vpop.f32.mrf.mxu0
      %v1951 = vadd.f32 0.0, %v1950
      %v1952 = vpop.f32.mrf.mxu0
      %1953 = vmatprep.mubr.bf16.mxu0 0
      %1954 = vmatmul.mubr.bf16.gmra.mxu0 %v1820
      %v1955 = vpop.f32.mrf.mxu0
      %v1956 = vadd.f32 0.0, %v1955
      %v1957 = vpop.f32.mrf.mxu0
      %v1958 = vpop.f32.mrf.mxu0
      %v1959 = vadd.f32 0.0, %v1958
      %v1960 = vpop.f32.mrf.mxu0
      %1961 = vmatprep.mubr.bf16.mxu0 0
      %1962 = vmatmul.mubr.bf16.gmra.mxu0 %v1821
      %v1963 = vpop.f32.mrf.mxu0
      %v1964 = vadd.f32 0.0, %v1963
      %v1965 = vpop.f32.mrf.mxu0
      %v1966 = vpop.f32.mrf.mxu0
      %v1967 = vadd.f32 0.0, %v1966
      %v1968 = vpop.f32.mrf.mxu0
      %1969 = vmatprep.mubr.bf16.mxu0 0
      %1970 = vmatmul.mubr.bf16.gmra.mxu0 %v1822
      %v1971 = vpop.f32.mrf.mxu0
      %v1972 = vadd.f32 0.0, %v1971
      %v1973 = vpop.f32.mrf.mxu0
      %v1974 = vpop.f32.mrf.mxu0
      %v1975 = vadd.f32 0.0, %v1974
      %v1976 = vpop.f32.mrf.mxu0
      %1977 = vmatprep.mubr.bf16.mxu0 0
      %1978 = vmatmul.mubr.bf16.gmra.mxu0 %v1823
      %v1979 = vpop.f32.mrf.mxu0
      %v1980 = vadd.f32 0.0, %v1979
      %v1981 = vpop.f32.mrf.mxu0
      %v1982 = vpop.f32.mrf.mxu0
      %v1983 = vadd.f32 0.0, %v1982
      %v1984 = vpop.f32.mrf.mxu0
      %1985 = vmatprep.mubr.bf16.mxu0 0
      %1986 = vmatmul.mubr.bf16.gmra.mxu0 %v1824
      %v1987 = vpop.f32.mrf.mxu0
      %v1988 = vadd.f32 0.0, %v1987
      %v1989 = vpop.f32.mrf.mxu0
      %v1990 = vpop.f32.mrf.mxu0
      %v1991 = vadd.f32 0.0, %v1990
      %v1992 = vpop.f32.mrf.mxu0
      %1993 = vmatprep.mubr.bf16.mxu0 0
      %1994 = vmatmul.mubr.bf16.gmra.mxu0 %v1825
      %v1995 = vpop.f32.mrf.mxu0
      %v1996 = vadd.f32 0.0, %v1995
      %v1997 = vpop.f32.mrf.mxu0
      %v1998 = vpop.f32.mrf.mxu0
      %v1999 = vadd.f32 0.0, %v1998
      %v2000 = vpop.f32.mrf.mxu0
      %2001 = vmatprep.mubr.bf16.mxu0 0
      %2002 = vmatmul.mubr.bf16.gmra.mxu0 %v1826
      %v2003 = vpop.f32.mrf.mxu0
      %v2004 = vadd.f32 0.0, %v2003
      %v2005 = vpop.f32.mrf.mxu0
      %v2006 = vpop.f32.mrf.mxu0
      %v2007 = vadd.f32 0.0, %v2006
      %v2008 = vpop.f32.mrf.mxu0
      %2009 = vmatprep.mubr.bf16.mxu0 0
      %2010 = vmatmul.mubr.bf16.gmra.mxu0 %v1827
      %v2011 = vpop.f32.mrf.mxu0
      %v2012 = vadd.f32 0.0, %v2011
      %v2013 = vpop.f32.mrf.mxu0
      %v2014 = vpop.f32.mrf.mxu0
      %v2015 = vadd.f32 0.0, %v2014
      %v2016 = vpop.f32.mrf.mxu0
      %2017 = vmatprep.mubr.bf16.mxu0 0
      %2018 = vmatmul.mubr.bf16.gmra.mxu0 %v1828
      %v2019 = vpop.f32.mrf.mxu0
      %v2020 = vadd.f32 0.0, %v2019
      %v2021 = vpop.f32.mrf.mxu0
      %v2022 = vpop.f32.mrf.mxu0
      %v2023 = vadd.f32 0.0, %v2022
      %v2024 = vpop.f32.mrf.mxu0
      %2025 = vmatprep.mubr.bf16.mxu0 0
      %2026 = vmatmul.mubr.bf16.gmra.mxu0 %v1829
      %v2027 = vpop.f32.mrf.mxu0
      %v2028 = vadd.f32 0.0, %v2027
      %v2029 = vpop.f32.mrf.mxu0
      %v2030 = vpop.f32.mrf.mxu0
      %v2031 = vadd.f32 0.0, %v2030
      %v2032 = vpop.f32.mrf.mxu0
      %2033 = vmatprep.mubr.bf16.mxu0 0
      %2034 = vmatmul.mubr.bf16.gmra.mxu0 %v1830
      %v2035 = vpop.f32.mrf.mxu0
      %v2036 = vadd.f32 0.0, %v2035
      %v2037 = vpop.f32.mrf.mxu0
      %v2038 = vpop.f32.mrf.mxu0
      %v2039 = vadd.f32 0.0, %v2038
      %v2040 = vpop.f32.mrf.mxu0
      %2041 = vmatprep.mubr.bf16.mxu0 0
      %2042 = vmatmul.mubr.bf16.gmra.mxu0 %v1831
      %v2043 = vpop.f32.mrf.mxu0
      %v2044 = vadd.f32 0.0, %v2043
      %v2045 = vpop.f32.mrf.mxu0
      %v2046 = vpop.f32.mrf.mxu0
      %v2047 = vadd.f32 0.0, %v2046
      %v2048 = vpop.f32.mrf.mxu0
      %2049 = vmatprep.mubr.bf16.mxu0 0
      %2050 = vmatmul.mubr.bf16.gmra.mxu0 %v1832
      %v2051 = vpop.f32.mrf.mxu0
      %v2052 = vadd.f32 0.0, %v2051
      %v2053 = vpop.f32.mrf.mxu0
      %v2054 = vpop.f32.mrf.mxu0
      %v2055 = vadd.f32 0.0, %v2054
      %v2056 = vpop.f32.mrf.mxu0
      %2057 = vdwg.mxu0
      %v2058 = vadd.f32 %v1671, %v1932
      %v2059 = vadd.f32 %v1672, %v1935
      %v2060 = vadd.f32 %v1673, %v1940
      %v2061 = vadd.f32 %v1674, %v1943
      %v2062 = vadd.f32 %v1675, %v1948
      %v2063 = vadd.f32 %v1676, %v1951
      %v2064 = vadd.f32 %v1677, %v1956
      %v2065 = vadd.f32 %v1678, %v1959
      %v2066 = vadd.f32 %v1679, %v1964
      %v2067 = vadd.f32 %v1680, %v1967
      %v2068 = vadd.f32 %v1681, %v1972
      %v2069 = vadd.f32 %v1682, %v1975
      %v2070 = vadd.f32 %v1683, %v1980
      %v2071 = vadd.f32 %v1684, %v1983
      %v2072 = vadd.f32 %v1685, %v1988
      %v2073 = vadd.f32 %v1686, %v1991
      %v2074 = vadd.f32 %v1687, %v1996
      %v2075 = vadd.f32 %v1688, %v1999
      %v2076 = vadd.f32 %v1689, %v2004
      %v2077 = vadd.f32 %v1690, %v2007
      %v2078 = vadd.f32 %v1691, %v2012
      %v2079 = vadd.f32 %v1692, %v2015
      %v2080 = vadd.f32 %v1693, %v2020
      %v2081 = vadd.f32 %v1694, %v2023
      %v2082 = vadd.f32 %v1695, %v2028
      %v2083 = vadd.f32 %v1696, %v2031
      %v2084 = vadd.f32 %v1697, %v2036
      %v2085 = vadd.f32 %v1698, %v2039
      %v2086 = vadd.f32 %v1699, %v2044
      %v2087 = vadd.f32 %v1700, %v2047
      %v2088 = vadd.f32 %v1701, %v2052
      %v2089 = vadd.f32 %v1702, %v2055
      %v2090 = vld [vmem:[%s1703] sm:$0xf]
      %v2091 = vld [vmem:[%s1703 + $0x4] sm:$0xf]
      %v2092 = vld [vmem:[%s1703 + $0x8] sm:$0x1]
      %v2093 = vld [vmem:[%s1703 + $0xc] sm:$0xf]
      %v2094 = vld [vmem:[%s1703 + $0x10] sm:$0xf]
      %v2095 = vld [vmem:[%s1703 + $0x14] sm:$0x1]
      %v2096 = vld [vmem:[%s1703 + $0x18] sm:$0xf]
      %v2097 = vld [vmem:[%s1703 + $0x1c] sm:$0xf]
      %v2098 = vld [vmem:[%s1703 + $0x20] sm:$0x1]
      %v2099 = vld [vmem:[%s1703 + $0x24] sm:$0xf]
      %v2100 = vld [vmem:[%s1703 + $0x28] sm:$0xf]
      %v2101 = vld [vmem:[%s1703 + $0x2c] sm:$0x1]
      %v2102 = vld [vmem:[%s1703 + $0x30] sm:$0xf]
      %v2103 = vld [vmem:[%s1703 + $0x34] sm:$0xf]
      %v2104 = vld [vmem:[%s1703 + $0x38] sm:$0x1]
      %v2105 = vld [vmem:[%s1703 + $0x3c] sm:$0xf]
      %v2106 = vld [vmem:[%s1703 + $0x40] sm:$0xf]
      %v2107 = vld [vmem:[%s1703 + $0x44] sm:$0x1]
      %v2108 = vld [vmem:[%s1703 + $0x48] sm:$0xf]
      %v2109 = vld [vmem:[%s1703 + $0x4c] sm:$0xf]
      %v2110 = vld [vmem:[%s1703 + $0x50] sm:$0x1]
      %v2111 = vld [vmem:[%s1703 + $0x54] sm:$0xf]
      %v2112 = vld [vmem:[%s1703 + $0x58] sm:$0xf]
      %v2113 = vld [vmem:[%s1703 + $0x5c] sm:$0x1]
      %v2114 = vld [vmem:[%s1703 + $0x60] sm:$0xf]
      %v2115 = vld [vmem:[%s1703 + $0x64] sm:$0xf]
      %v2116 = vld [vmem:[%s1703 + $0x68] sm:$0x1]
      %v2117 = vld [vmem:[%s1703 + $0x6c] sm:$0xf]
      %v2118 = vld [vmem:[%s1703 + $0x70] sm:$0xf]
      %v2119 = vld [vmem:[%s1703 + $0x74] sm:$0x1]
      %v2120 = vld [vmem:[%s1703 + $0x78] sm:$0xf]
      %v2121 = vld [vmem:[%s1703 + $0x7c] sm:$0xf]
      %v2122 = vld [vmem:[%s1703 + $0x80] sm:$0x1]
      %v2123 = vld [vmem:[%s1703 + $0x84] sm:$0xf]
      %v2124 = vld [vmem:[%s1703 + $0x88] sm:$0xf]
      %v2125 = vld [vmem:[%s1703 + $0x8c] sm:$0x1]
      %v2126 = vld [vmem:[%s1703 + $0x90] sm:$0xf]
      %v2127 = vld [vmem:[%s1703 + $0x94] sm:$0xf]
      %v2128 = vld [vmem:[%s1703 + $0x98] sm:$0x1]
      %v2129 = vld [vmem:[%s1703 + $0x9c] sm:$0xf]
      %v2130 = vld [vmem:[%s1703 + $0xa0] sm:$0xf]
      %v2131 = vld [vmem:[%s1703 + $0xa4] sm:$0x1]
      %v2132 = vld [vmem:[%s1703 + $0xa8] sm:$0xf]
      %v2133 = vld [vmem:[%s1703 + $0xac] sm:$0xf]
      %v2134 = vld [vmem:[%s1703 + $0xb0] sm:$0x1]
      %v2135 = vld [vmem:[%s1703 + $0xb4] sm:$0xf]
      %v2136 = vld [vmem:[%s1703 + $0xb8] sm:$0xf]
      %v2137 = vld [vmem:[%s1703 + $0xbc] sm:$0x1]
      %v2139 = vshrl.u32 %v2090, 16
      %v2141 = vrot.slane %v2139, 4
      %v2142 = vshll.u32 %v2090, 16
      %v2144 = vrot.slane %v2142, 5
      %v2145 = vor.u32 %v2141, %v2144
      %v2146 = vrot.slane %v2145, 4
      %v2148 = vshll.u32 %v2091, 16
      %v2150 = vrot.slane %v2148, 5
      %v2151 = vsel %vm238, %v2146, %v2150
      %v2152 = vshrl.u32 %v2091, 16
      %v2154 = vrot.slane %v2152, 4
      %v2155 = vor.u32 %v2154, %v2150
      %v2156 = vrot.slane %v2155, 4
      %v2158 = vshll.u32 %v2092, 16
      %v2160 = vrot.slane %v2158, 5
      %v2161 = vsel %vm238, %v2156, %v2160
      %v2163 = vshrl.u32 %v2093, 16
      %v2165 = vrot.slane %v2163, 4
      %v2166 = vshll.u32 %v2093, 16
      %v2168 = vrot.slane %v2166, 5
      %v2169 = vor.u32 %v2165, %v2168
      %v2170 = vrot.slane %v2169, 4
      %v2172 = vshll.u32 %v2094, 16
      %v2174 = vrot.slane %v2172, 5
      %v2175 = vsel %vm238, %v2170, %v2174
      %v2176 = vshrl.u32 %v2094, 16
      %v2178 = vrot.slane %v2176, 4
      %v2179 = vor.u32 %v2178, %v2174
      %v2180 = vrot.slane %v2179, 4
      %v2182 = vshll.u32 %v2095, 16
      %v2184 = vrot.slane %v2182, 5
      %v2185 = vsel %vm238, %v2180, %v2184
      %v2187 = vshrl.u32 %v2096, 16
      %v2189 = vrot.slane %v2187, 4
      %v2190 = vshll.u32 %v2096, 16
      %v2192 = vrot.slane %v2190, 5
      %v2193 = vor.u32 %v2189, %v2192
      %v2194 = vrot.slane %v2193, 4
      %v2196 = vshll.u32 %v2097, 16
      %v2198 = vrot.slane %v2196, 5
      %v2199 = vsel %vm238, %v2194, %v2198
      %v2200 = vshrl.u32 %v2097, 16
      %v2202 = vrot.slane %v2200, 4
      %v2203 = vor.u32 %v2202, %v2198
      %v2204 = vrot.slane %v2203, 4
      %v2206 = vshll.u32 %v2098, 16
      %v2208 = vrot.slane %v2206, 5
      %v2209 = vsel %vm238, %v2204, %v2208
      %v2211 = vshrl.u32 %v2099, 16
      %v2213 = vrot.slane %v2211, 4
      %v2214 = vshll.u32 %v2099, 16
      %v2216 = vrot.slane %v2214, 5
      %v2217 = vor.u32 %v2213, %v2216
      %v2218 = vrot.slane %v2217, 4
      %v2220 = vshll.u32 %v2100, 16
      %v2222 = vrot.slane %v2220, 5
      %v2223 = vsel %vm238, %v2218, %v2222
      %v2224 = vshrl.u32 %v2100, 16
      %v2226 = vrot.slane %v2224, 4
      %v2227 = vor.u32 %v2226, %v2222
      %v2228 = vrot.slane %v2227, 4
      %v2230 = vshll.u32 %v2101, 16
      %v2232 = vrot.slane %v2230, 5
      %v2233 = vsel %vm238, %v2228, %v2232
      %v2235 = vshrl.u32 %v2102, 16
      %v2237 = vrot.slane %v2235, 4
      %v2238 = vshll.u32 %v2102, 16
      %v2240 = vrot.slane %v2238, 5
      %v2241 = vor.u32 %v2237, %v2240
      %v2242 = vrot.slane %v2241, 4
      %v2244 = vshll.u32 %v2103, 16
      %v2246 = vrot.slane %v2244, 5
      %v2247 = vsel %vm238, %v2242, %v2246
      %v2248 = vshrl.u32 %v2103, 16
      %v2250 = vrot.slane %v2248, 4
      %v2251 = vor.u32 %v2250, %v2246
      %v2252 = vrot.slane %v2251, 4
      %v2254 = vshll.u32 %v2104, 16
      %v2256 = vrot.slane %v2254, 5
      %v2257 = vsel %vm238, %v2252, %v2256
      %v2259 = vshrl.u32 %v2105, 16
      %v2261 = vrot.slane %v2259, 4
      %v2262 = vshll.u32 %v2105, 16
      %v2264 = vrot.slane %v2262, 5
      %v2265 = vor.u32 %v2261, %v2264
      %v2266 = vrot.slane %v2265, 4
      %v2268 = vshll.u32 %v2106, 16
      %v2270 = vrot.slane %v2268, 5
      %v2271 = vsel %vm238, %v2266, %v2270
      %v2272 = vshrl.u32 %v2106, 16
      %v2274 = vrot.slane %v2272, 4
      %v2275 = vor.u32 %v2274, %v2270
      %v2276 = vrot.slane %v2275, 4
      %v2278 = vshll.u32 %v2107, 16
      %v2280 = vrot.slane %v2278, 5
      %v2281 = vsel %vm238, %v2276, %v2280
      %v2283 = vshrl.u32 %v2108, 16
      %v2285 = vrot.slane %v2283, 4
      %v2286 = vshll.u32 %v2108, 16
      %v2288 = vrot.slane %v2286, 5
      %v2289 = vor.u32 %v2285, %v2288
      %v2290 = vrot.slane %v2289, 4
      %v2292 = vshll.u32 %v2109, 16
      %v2294 = vrot.slane %v2292, 5
      %v2295 = vsel %vm238, %v2290, %v2294
      %v2296 = vshrl.u32 %v2109, 16
      %v2298 = vrot.slane %v2296, 4
      %v2299 = vor.u32 %v2298, %v2294
      %v2300 = vrot.slane %v2299, 4
      %v2302 = vshll.u32 %v2110, 16
      %v2304 = vrot.slane %v2302, 5
      %v2305 = vsel %vm238, %v2300, %v2304
      %v2307 = vshrl.u32 %v2111, 16
      %v2309 = vrot.slane %v2307, 4
      %v2310 = vshll.u32 %v2111, 16
      %v2312 = vrot.slane %v2310, 5
      %v2313 = vor.u32 %v2309, %v2312
      %v2314 = vrot.slane %v2313, 4
      %v2316 = vshll.u32 %v2112, 16
      %v2318 = vrot.slane %v2316, 5
      %v2319 = vsel %vm238, %v2314, %v2318
      %v2320 = vshrl.u32 %v2112, 16
      %v2322 = vrot.slane %v2320, 4
      %v2323 = vor.u32 %v2322, %v2318
      %v2324 = vrot.slane %v2323, 4
      %v2326 = vshll.u32 %v2113, 16
      %v2328 = vrot.slane %v2326, 5
      %v2329 = vsel %vm238, %v2324, %v2328
      %v2331 = vshrl.u32 %v2114, 16
      %v2333 = vrot.slane %v2331, 4
      %v2334 = vshll.u32 %v2114, 16
      %v2336 = vrot.slane %v2334, 5
      %v2337 = vor.u32 %v2333, %v2336
      %v2338 = vrot.slane %v2337, 4
      %v2340 = vshll.u32 %v2115, 16
      %v2342 = vrot.slane %v2340, 5
      %v2343 = vsel %vm238, %v2338, %v2342
      %v2344 = vshrl.u32 %v2115, 16
      %v2346 = vrot.slane %v2344, 4
      %v2347 = vor.u32 %v2346, %v2342
      %v2348 = vrot.slane %v2347, 4
      %v2350 = vshll.u32 %v2116, 16
      %v2352 = vrot.slane %v2350, 5
      %v2353 = vsel %vm238, %v2348, %v2352
      %v2355 = vshrl.u32 %v2117, 16
      %v2357 = vrot.slane %v2355, 4
      %v2358 = vshll.u32 %v2117, 16
      %v2360 = vrot.slane %v2358, 5
      %v2361 = vor.u32 %v2357, %v2360
      %v2362 = vrot.slane %v2361, 4
      %v2364 = vshll.u32 %v2118, 16
      %v2366 = vrot.slane %v2364, 5
      %v2367 = vsel %vm238, %v2362, %v2366
      %v2368 = vshrl.u32 %v2118, 16
      %v2370 = vrot.slane %v2368, 4
      %v2371 = vor.u32 %v2370, %v2366
      %v2372 = vrot.slane %v2371, 4
      %v2374 = vshll.u32 %v2119, 16
      %v2376 = vrot.slane %v2374, 5
      %v2377 = vsel %vm238, %v2372, %v2376
      %v2379 = vshrl.u32 %v2120, 16
      %v2381 = vrot.slane %v2379, 4
      %v2382 = vshll.u32 %v2120, 16
      %v2384 = vrot.slane %v2382, 5
      %v2385 = vor.u32 %v2381, %v2384
      %v2386 = vrot.slane %v2385, 4
      %v2388 = vshll.u32 %v2121, 16
      %v2390 = vrot.slane %v2388, 5
      %v2391 = vsel %vm238, %v2386, %v2390
      %v2392 = vshrl.u32 %v2121, 16
      %v2394 = vrot.slane %v2392, 4
      %v2395 = vor.u32 %v2394, %v2390
      %v2396 = vrot.slane %v2395, 4
      %v2398 = vshll.u32 %v2122, 16
      %v2400 = vrot.slane %v2398, 5
      %v2401 = vsel %vm238, %v2396, %v2400
      %v2403 = vshrl.u32 %v2123, 16
      %v2405 = vrot.slane %v2403, 4
      %v2406 = vshll.u32 %v2123, 16
      %v2408 = vrot.slane %v2406, 5
      %v2409 = vor.u32 %v2405, %v2408
      %v2410 = vrot.slane %v2409, 4
      %v2412 = vshll.u32 %v2124, 16
      %v2414 = vrot.slane %v2412, 5
      %v2415 = vsel %vm238, %v2410, %v2414
      %v2416 = vshrl.u32 %v2124, 16
      %v2418 = vrot.slane %v2416, 4
      %v2419 = vor.u32 %v2418, %v2414
      %v2420 = vrot.slane %v2419, 4
      %v2422 = vshll.u32 %v2125, 16
      %v2424 = vrot.slane %v2422, 5
      %v2425 = vsel %vm238, %v2420, %v2424
      %v2427 = vshrl.u32 %v2126, 16
      %v2429 = vrot.slane %v2427, 4
      %v2430 = vshll.u32 %v2126, 16
      %v2432 = vrot.slane %v2430, 5
      %v2433 = vor.u32 %v2429, %v2432
      %v2434 = vrot.slane %v2433, 4
      %v2436 = vshll.u32 %v2127, 16
      %v2438 = vrot.slane %v2436, 5
      %v2439 = vsel %vm238, %v2434, %v2438
      %v2440 = vshrl.u32 %v2127, 16
      %v2442 = vrot.slane %v2440, 4
      %v2443 = vor.u32 %v2442, %v2438
      %v2444 = vrot.slane %v2443, 4
      %v2446 = vshll.u32 %v2128, 16
      %v2448 = vrot.slane %v2446, 5
      %v2449 = vsel %vm238, %v2444, %v2448
      %v2451 = vshrl.u32 %v2129, 16
      %v2453 = vrot.slane %v2451, 4
      %v2454 = vshll.u32 %v2129, 16
      %v2456 = vrot.slane %v2454, 5
      %v2457 = vor.u32 %v2453, %v2456
      %v2458 = vrot.slane %v2457, 4
      %v2460 = vshll.u32 %v2130, 16
      %v2462 = vrot.slane %v2460, 5
      %v2463 = vsel %vm238, %v2458, %v2462
      %v2464 = vshrl.u32 %v2130, 16
      %v2466 = vrot.slane %v2464, 4
      %v2467 = vor.u32 %v2466, %v2462
      %v2468 = vrot.slane %v2467, 4
      %v2470 = vshll.u32 %v2131, 16
      %v2472 = vrot.slane %v2470, 5
      %v2473 = vsel %vm238, %v2468, %v2472
      %v2475 = vshrl.u32 %v2132, 16
      %v2477 = vrot.slane %v2475, 4
      %v2478 = vshll.u32 %v2132, 16
      %v2480 = vrot.slane %v2478, 5
      %v2481 = vor.u32 %v2477, %v2480
      %v2482 = vrot.slane %v2481, 4
      %v2484 = vshll.u32 %v2133, 16
      %v2486 = vrot.slane %v2484, 5
      %v2487 = vsel %vm238, %v2482, %v2486
      %v2488 = vshrl.u32 %v2133, 16
      %v2490 = vrot.slane %v2488, 4
      %v2491 = vor.u32 %v2490, %v2486
      %v2492 = vrot.slane %v2491, 4
      %v2494 = vshll.u32 %v2134, 16
      %v2496 = vrot.slane %v2494, 5
      %v2497 = vsel %vm238, %v2492, %v2496
      %v2499 = vshrl.u32 %v2135, 16
      %v2501 = vrot.slane %v2499, 4
      %v2502 = vshll.u32 %v2135, 16
      %v2504 = vrot.slane %v2502, 5
      %v2505 = vor.u32 %v2501, %v2504
      %v2506 = vrot.slane %v2505, 4
      %v2508 = vshll.u32 %v2136, 16
      %v2510 = vrot.slane %v2508, 5
      %v2511 = vsel %vm238, %v2506, %v2510
      %v2512 = vshrl.u32 %v2136, 16
      %v2514 = vrot.slane %v2512, 4
      %v2515 = vor.u32 %v2514, %v2510
      %v2516 = vrot.slane %v2515, 4
      %v2518 = vshll.u32 %v2137, 16
      %v2520 = vrot.slane %v2518, 5
      %v2521 = vsel %vm238, %v2516, %v2520
      %s2522 = scalar_lea.vmem %s1, 256
      %v2523 = vld [vmem:[%s2522] sm:$0xf]
      %v2524 = vld [vmem:[%s2522 + $0x4] sm:$0xf]
      %v2525 = vld [vmem:[%s2522 + $0x8] sm:$0xf]
      %v2526 = vld [vmem:[%s2522 + $0xc] sm:$0xf]
      %v2527 = vld [vmem:[%s2522 + $0x10] sm:$0xf]
      %v2528 = vld [vmem:[%s2522 + $0x14] sm:$0xf]
      %v2529 = vld [vmem:[%s2522 + $0x18] sm:$0xf]
      %v2530 = vld [vmem:[%s2522 + $0x1c] sm:$0xf]
      %v2531 = vld [vmem:[%s2522 + $0x20] sm:$0xf]
      %v2532 = vld [vmem:[%s2522 + $0x24] sm:$0xf]
      %v2533 = vld [vmem:[%s2522 + $0x28] sm:$0xf]
      %v2534 = vld [vmem:[%s2522 + $0x2c] sm:$0xf]
      %v2535 = vld [vmem:[%s2522 + $0x30] sm:$0xf]
      %v2536 = vld [vmem:[%s2522 + $0x34] sm:$0xf]
      %v2537 = vld [vmem:[%s2522 + $0x38] sm:$0xf]
      %v2538 = vld [vmem:[%s2522 + $0x3c] sm:$0xf]
      %v2539 = vunpack.c.l.b16 %v2151
      %v2540 = vunpack.c.l.b16 %v2161
      %v2541 = vunpack.c.l.b16 %v2175
      %v2542 = vunpack.c.l.b16 %v2185
      %v2543 = vunpack.c.l.b16 %v2199
      %v2544 = vunpack.c.l.b16 %v2209
      %v2545 = vunpack.c.l.b16 %v2223
      %v2546 = vunpack.c.l.b16 %v2233
      %v2547 = vunpack.c.l.b16 %v2247
      %v2548 = vunpack.c.l.b16 %v2257
      %v2549 = vunpack.c.l.b16 %v2271
      %v2550 = vunpack.c.l.b16 %v2281
      %v2551 = vunpack.c.l.b16 %v2295
      %v2552 = vunpack.c.l.b16 %v2305
      %v2553 = vunpack.c.l.b16 %v2319
      %v2554 = vunpack.c.l.b16 %v2329
      %v2555 = vunpack.c.l.b16 %v2343
      %v2556 = vunpack.c.l.b16 %v2353
      %v2557 = vunpack.c.l.b16 %v2367
      %v2558 = vunpack.c.l.b16 %v2377
      %v2559 = vunpack.c.l.b16 %v2391
      %v2560 = vunpack.c.l.b16 %v2401
      %v2561 = vunpack.c.l.b16 %v2415
      %v2562 = vunpack.c.l.b16 %v2425
      %v2563 = vunpack.c.l.b16 %v2439
      %v2564 = vunpack.c.l.b16 %v2449
      %v2565 = vunpack.c.l.b16 %v2463
      %v2566 = vunpack.c.l.b16 %v2473
      %v2567 = vunpack.c.l.b16 %v2487
      %v2568 = vunpack.c.l.b16 %v2497
      %v2569 = vunpack.c.l.b16 %v2511
      %v2570 = vunpack.c.l.b16 %v2521
      %v2571 = vpack.c.b16 %v2540, %v2539
      %v2572 = vpack.c.b16 %v2542, %v2541
      %v2573 = vpack.c.b16 %v2544, %v2543
      %v2574 = vpack.c.b16 %v2546, %v2545
      %v2575 = vpack.c.b16 %v2548, %v2547
      %v2576 = vpack.c.b16 %v2550, %v2549
      %v2577 = vpack.c.b16 %v2552, %v2551
      %v2578 = vpack.c.b16 %v2554, %v2553
      %v2579 = vpack.c.b16 %v2556, %v2555
      %v2580 = vpack.c.b16 %v2558, %v2557
      %v2581 = vpack.c.b16 %v2560, %v2559
      %v2582 = vpack.c.b16 %v2562, %v2561
      %v2583 = vpack.c.b16 %v2564, %v2563
      %v2584 = vpack.c.b16 %v2566, %v2565
      %v2585 = vpack.c.b16 %v2568, %v2567
      %v2586 = vpack.c.b16 %v2570, %v2569
      %v2619 = vunpack.c.l.b16 %v2523
      %v2620 = vunpack.c.l.b16 %v2524
      %v2621 = vunpack.c.l.b16 %v2525
      %v2622 = vunpack.c.l.b16 %v2526
      %v2623 = vunpack.c.l.b16 %v2527
      %v2624 = vunpack.c.l.b16 %v2528
      %v2625 = vunpack.c.l.b16 %v2529
      %v2626 = vunpack.c.l.b16 %v2530
      %v2627 = vunpack.c.l.b16 %v2531
      %v2628 = vunpack.c.l.b16 %v2532
      %v2629 = vunpack.c.l.b16 %v2533
      %v2630 = vunpack.c.l.b16 %v2534
      %v2631 = vunpack.c.l.b16 %v2535
      %v2632 = vunpack.c.l.b16 %v2536
      %v2633 = vunpack.c.l.b16 %v2537
      %v2634 = vunpack.c.l.b16 %v2538
      %v2635 = vpack.c.b16 %v2620, %v2619
      %v2636 = vpack.c.b16 %v2622, %v2621
      %v2637 = vpack.c.b16 %v2624, %v2623
      %v2638 = vpack.c.b16 %v2626, %v2625
      %v2639 = vpack.c.b16 %v2628, %v2627
      %v2640 = vpack.c.b16 %v2630, %v2629
      %v2641 = vpack.c.b16 %v2632, %v2631
      %v2642 = vpack.c.b16 %v2634, %v2633
      %2651 = vmatprep.subr.bf16.mxu0 0
      %2652 = vmatpush1.bf16.msra.mxu0 %v2642
      %2653 = vmatprep.subr.bf16.mxu0 0
      %2654 = vmatpush1.bf16.msra.mxu0 %v2641
      %2655 = vmatprep.subr.bf16.mxu0 0
      %2656 = vmatpush1.bf16.msra.mxu0 %v2640
      %2657 = vmatprep.subr.bf16.mxu0 0
      %2658 = vmatpush1.bf16.msra.mxu0 %v2639
      %2659 = vmatprep.subr.bf16.mxu0 0
      %2660 = vmatpush1.bf16.msra.mxu0 %v2638
      %2661 = vmatprep.subr.bf16.mxu0 0
      %2662 = vmatpush1.bf16.msra.mxu0 %v2637
      %2663 = vmatprep.subr.bf16.mxu0 0
      %2664 = vmatpush1.bf16.msra.mxu0 %v2636
      %2665 = vmatprep.subr.bf16.mxu0 0
      %2666 = vmatpush1.bf16.msra.mxu0 %v2635
      %2667 = vmatprep.subr.bf16.mxu0 0
      %2668 = vmatpush2.bf16.msra.mxu0 0
      %2669 = vmatprep.subr.bf16.mxu0 0
      %2670 = vmatpush2.bf16.msra.mxu0 0
      %2671 = vmatprep.subr.bf16.mxu0 0
      %2672 = vmatpush2.bf16.msra.mxu0 0
      %2673 = vmatprep.subr.bf16.mxu0 0
      %2674 = vmatpush2.bf16.msra.mxu0 0
      %2675 = vmatprep.subr.bf16.mxu0 0
      %2676 = vmatpush2.bf16.msra.mxu0 0
      %2677 = vmatprep.subr.bf16.mxu0 0
      %2678 = vmatpush2.bf16.msra.mxu0 0
      %2679 = vmatprep.subr.bf16.mxu0 0
      %2680 = vmatpush2.bf16.msra.mxu0 0
      %2681 = vmatprep.subr.bf16.mxu0 0
      %2682 = vmatpush2.bf16.msra.mxu0 0
      %2683 = vmatprep.mubr.bf16.mxu0 0
      %2684 = vmatmul.mubr.bf16.gmra.mxu0 %v2571
      %v2685 = vpop.f32.mrf.mxu0
      %v2686 = vadd.f32 0.0, %v2685
      %v2687 = vpop.f32.mrf.mxu0
      %v2688 = vpop.f32.mrf.mxu0
      %v2689 = vadd.f32 0.0, %v2688
      %v2690 = vpop.f32.mrf.mxu0
      %2691 = vmatprep.mubr.bf16.mxu0 0
      %2692 = vmatmul.mubr.bf16.gmra.mxu0 %v2572
      %v2693 = vpop.f32.mrf.mxu0
      %v2694 = vadd.f32 0.0, %v2693
      %v2695 = vpop.f32.mrf.mxu0
      %v2696 = vpop.f32.mrf.mxu0
      %v2697 = vadd.f32 0.0, %v2696
      %v2698 = vpop.f32.mrf.mxu0
      %2699 = vmatprep.mubr.bf16.mxu0 0
      %2700 = vmatmul.mubr.bf16.gmra.mxu0 %v2573
      %v2701 = vpop.f32.mrf.mxu0
      %v2702 = vadd.f32 0.0, %v2701
      %v2703 = vpop.f32.mrf.mxu0
      %v2704 = vpop.f32.mrf.mxu0
      %v2705 = vadd.f32 0.0, %v2704
      %v2706 = vpop.f32.mrf.mxu0
      %2707 = vmatprep.mubr.bf16.mxu0 0
      %2708 = vmatmul.mubr.bf16.gmra.mxu0 %v2574
      %v2709 = vpop.f32.mrf.mxu0
      %v2710 = vadd.f32 0.0, %v2709
      %v2711 = vpop.f32.mrf.mxu0
      %v2712 = vpop.f32.mrf.mxu0
      %v2713 = vadd.f32 0.0, %v2712
      %v2714 = vpop.f32.mrf.mxu0
      %2715 = vmatprep.mubr.bf16.mxu0 0
      %2716 = vmatmul.mubr.bf16.gmra.mxu0 %v2575
      %v2717 = vpop.f32.mrf.mxu0
      %v2718 = vadd.f32 0.0, %v2717
      %v2719 = vpop.f32.mrf.mxu0
      %v2720 = vpop.f32.mrf.mxu0
      %v2721 = vadd.f32 0.0, %v2720
      %v2722 = vpop.f32.mrf.mxu0
      %2723 = vmatprep.mubr.bf16.mxu0 0
      %2724 = vmatmul.mubr.bf16.gmra.mxu0 %v2576
      %v2725 = vpop.f32.mrf.mxu0
      %v2726 = vadd.f32 0.0, %v2725
      %v2727 = vpop.f32.mrf.mxu0
      %v2728 = vpop.f32.mrf.mxu0
      %v2729 = vadd.f32 0.0, %v2728
      %v2730 = vpop.f32.mrf.mxu0
      %2731 = vmatprep.mubr.bf16.mxu0 0
      %2732 = vmatmul.mubr.bf16.gmra.mxu0 %v2577
      %v2733 = vpop.f32.mrf.mxu0
      %v2734 = vadd.f32 0.0, %v2733
      %v2735 = vpop.f32.mrf.mxu0
      %v2736 = vpop.f32.mrf.mxu0
      %v2737 = vadd.f32 0.0, %v2736
      %v2738 = vpop.f32.mrf.mxu0
      %2739 = vmatprep.mubr.bf16.mxu0 0
      %2740 = vmatmul.mubr.bf16.gmra.mxu0 %v2578
      %v2741 = vpop.f32.mrf.mxu0
      %v2742 = vadd.f32 0.0, %v2741
      %v2743 = vpop.f32.mrf.mxu0
      %v2744 = vpop.f32.mrf.mxu0
      %v2745 = vadd.f32 0.0, %v2744
      %v2746 = vpop.f32.mrf.mxu0
      %2747 = vmatprep.mubr.bf16.mxu0 0
      %2748 = vmatmul.mubr.bf16.gmra.mxu0 %v2579
      %v2749 = vpop.f32.mrf.mxu0
      %v2750 = vadd.f32 0.0, %v2749
      %v2751 = vpop.f32.mrf.mxu0
      %v2752 = vpop.f32.mrf.mxu0
      %v2753 = vadd.f32 0.0, %v2752
      %v2754 = vpop.f32.mrf.mxu0
      %2755 = vmatprep.mubr.bf16.mxu0 0
      %2756 = vmatmul.mubr.bf16.gmra.mxu0 %v2580
      %v2757 = vpop.f32.mrf.mxu0
      %v2758 = vadd.f32 0.0, %v2757
      %v2759 = vpop.f32.mrf.mxu0
      %v2760 = vpop.f32.mrf.mxu0
      %v2761 = vadd.f32 0.0, %v2760
      %v2762 = vpop.f32.mrf.mxu0
      %2763 = vmatprep.mubr.bf16.mxu0 0
      %2764 = vmatmul.mubr.bf16.gmra.mxu0 %v2581
      %v2765 = vpop.f32.mrf.mxu0
      %v2766 = vadd.f32 0.0, %v2765
      %v2767 = vpop.f32.mrf.mxu0
      %v2768 = vpop.f32.mrf.mxu0
      %v2769 = vadd.f32 0.0, %v2768
      %v2770 = vpop.f32.mrf.mxu0
      %2771 = vmatprep.mubr.bf16.mxu0 0
      %2772 = vmatmul.mubr.bf16.gmra.mxu0 %v2582
      %v2773 = vpop.f32.mrf.mxu0
      %v2774 = vadd.f32 0.0, %v2773
      %v2775 = vpop.f32.mrf.mxu0
      %v2776 = vpop.f32.mrf.mxu0
      %v2777 = vadd.f32 0.0, %v2776
      %v2778 = vpop.f32.mrf.mxu0
      %2779 = vmatprep.mubr.bf16.mxu0 0
      %2780 = vmatmul.mubr.bf16.gmra.mxu0 %v2583
      %v2781 = vpop.f32.mrf.mxu0
      %v2782 = vadd.f32 0.0, %v2781
      %v2783 = vpop.f32.mrf.mxu0
      %v2784 = vpop.f32.mrf.mxu0
      %v2785 = vadd.f32 0.0, %v2784
      %v2786 = vpop.f32.mrf.mxu0
      %2787 = vmatprep.mubr.bf16.mxu0 0
      %2788 = vmatmul.mubr.bf16.gmra.mxu0 %v2584
      %v2789 = vpop.f32.mrf.mxu0
      %v2790 = vadd.f32 0.0, %v2789
      %v2791 = vpop.f32.mrf.mxu0
      %v2792 = vpop.f32.mrf.mxu0
      %v2793 = vadd.f32 0.0, %v2792
      %v2794 = vpop.f32.mrf.mxu0
      %2795 = vmatprep.mubr.bf16.mxu0 0
      %2796 = vmatmul.mubr.bf16.gmra.mxu0 %v2585
      %v2797 = vpop.f32.mrf.mxu0
      %v2798 = vadd.f32 0.0, %v2797
      %v2799 = vpop.f32.mrf.mxu0
      %v2800 = vpop.f32.mrf.mxu0
      %v2801 = vadd.f32 0.0, %v2800
      %v2802 = vpop.f32.mrf.mxu0
      %2803 = vmatprep.mubr.bf16.mxu0 0
      %2804 = vmatmul.mubr.bf16.gmra.mxu0 %v2586
      %v2805 = vpop.f32.mrf.mxu0
      %v2806 = vadd.f32 0.0, %v2805
      %v2807 = vpop.f32.mrf.mxu0
      %v2808 = vpop.f32.mrf.mxu0
      %v2809 = vadd.f32 0.0, %v2808
      %v2810 = vpop.f32.mrf.mxu0
      %2811 = vdwg.mxu0
      %v2812 = vadd.f32 %v2058, %v2686
      %v2813 = vadd.f32 %v2059, %v2689
      %v2814 = vadd.f32 %v2060, %v2694
      %v2815 = vadd.f32 %v2061, %v2697
      %v2816 = vadd.f32 %v2062, %v2702
      %v2817 = vadd.f32 %v2063, %v2705
      %v2818 = vadd.f32 %v2064, %v2710
      %v2819 = vadd.f32 %v2065, %v2713
      %v2820 = vadd.f32 %v2066, %v2718
      %v2821 = vadd.f32 %v2067, %v2721
      %v2822 = vadd.f32 %v2068, %v2726
      %v2823 = vadd.f32 %v2069, %v2729
      %v2824 = vadd.f32 %v2070, %v2734
      %v2825 = vadd.f32 %v2071, %v2737
      %v2826 = vadd.f32 %v2072, %v2742
      %v2827 = vadd.f32 %v2073, %v2745
      %v2828 = vadd.f32 %v2074, %v2750
      %v2829 = vadd.f32 %v2075, %v2753
      %v2830 = vadd.f32 %v2076, %v2758
      %v2831 = vadd.f32 %v2077, %v2761
      %v2832 = vadd.f32 %v2078, %v2766
      %v2833 = vadd.f32 %v2079, %v2769
      %v2834 = vadd.f32 %v2080, %v2774
      %v2835 = vadd.f32 %v2081, %v2777
      %v2836 = vadd.f32 %v2082, %v2782
      %v2837 = vadd.f32 %v2083, %v2785
      %v2838 = vadd.f32 %v2084, %v2790
      %v2839 = vadd.f32 %v2085, %v2793
      %v2840 = vadd.f32 %v2086, %v2798
      %v2841 = vadd.f32 %v2087, %v2801
      %v2842 = vadd.f32 %v2088, %v2806
      %v2843 = vadd.f32 %v2089, %v2809
      %v2844 = vld [vmem:[%s1703] sm:$0xe]
      %v2845 = vld [vmem:[%s1703 + $0xc] sm:$0xe]
      %v2846 = vld [vmem:[%s1703 + $0x18] sm:$0xe]
      %v2847 = vld [vmem:[%s1703 + $0x24] sm:$0xe]
      %v2848 = vld [vmem:[%s1703 + $0x30] sm:$0xe]
      %v2849 = vld [vmem:[%s1703 + $0x3c] sm:$0xe]
      %v2850 = vld [vmem:[%s1703 + $0x48] sm:$0xe]
      %v2851 = vld [vmem:[%s1703 + $0x54] sm:$0xe]
      %v2852 = vld [vmem:[%s1703 + $0x60] sm:$0xe]
      %v2853 = vld [vmem:[%s1703 + $0x6c] sm:$0xe]
      %v2854 = vld [vmem:[%s1703 + $0x78] sm:$0xe]
      %v2855 = vld [vmem:[%s1703 + $0x84] sm:$0xe]
      %v2856 = vld [vmem:[%s1703 + $0x90] sm:$0xe]
      %v2857 = vld [vmem:[%s1703 + $0x9c] sm:$0xe]
      %v2858 = vld [vmem:[%s1703 + $0xa8] sm:$0xe]
      %v2859 = vld [vmem:[%s1703 + $0xb4] sm:$0xe]
      %v2908 = vrot.slane %v2844, 5
      %v2909 = vrot.slane %v2908, 4
      %v2910 = vrot.slane %v2091, 5
      %v2911 = vsel %vm1268, %v2909, %v2910
      %v2912 = vrot.slane %v2910, 4
      %v2913 = vrot.slane %v2092, 5
      %v2914 = vsel %vm1268, %v2912, %v2913
      %v2915 = vrot.slane %v2845, 5
      %v2916 = vrot.slane %v2915, 4
      %v2917 = vrot.slane %v2094, 5
      %v2918 = vsel %vm1268, %v2916, %v2917
      %v2919 = vrot.slane %v2917, 4
      %v2920 = vrot.slane %v2095, 5
      %v2921 = vsel %vm1268, %v2919, %v2920
      %v2922 = vrot.slane %v2846, 5
      %v2923 = vrot.slane %v2922, 4
      %v2924 = vrot.slane %v2097, 5
      %v2925 = vsel %vm1268, %v2923, %v2924
      %v2926 = vrot.slane %v2924, 4
      %v2927 = vrot.slane %v2098, 5
      %v2928 = vsel %vm1268, %v2926, %v2927
      %v2929 = vrot.slane %v2847, 5
      %v2930 = vrot.slane %v2929, 4
      %v2931 = vrot.slane %v2100, 5
      %v2932 = vsel %vm1268, %v2930, %v2931
      %v2933 = vrot.slane %v2931, 4
      %v2934 = vrot.slane %v2101, 5
      %v2935 = vsel %vm1268, %v2933, %v2934
      %v2936 = vrot.slane %v2848, 5
      %v2937 = vrot.slane %v2936, 4
      %v2938 = vrot.slane %v2103, 5
      %v2939 = vsel %vm1268, %v2937, %v2938
      %v2940 = vrot.slane %v2938, 4
      %v2941 = vrot.slane %v2104, 5
      %v2942 = vsel %vm1268, %v2940, %v2941
      %v2943 = vrot.slane %v2849, 5
      %v2944 = vrot.slane %v2943, 4
      %v2945 = vrot.slane %v2106, 5
      %v2946 = vsel %vm1268, %v2944, %v2945
      %v2947 = vrot.slane %v2945, 4
      %v2948 = vrot.slane %v2107, 5
      %v2949 = vsel %vm1268, %v2947, %v2948
      %v2950 = vrot.slane %v2850, 5
      %v2951 = vrot.slane %v2950, 4
      %v2952 = vrot.slane %v2109, 5
      %v2953 = vsel %vm1268, %v2951, %v2952
      %v2954 = vrot.slane %v2952, 4
      %v2955 = vrot.slane %v2110, 5
      %v2956 = vsel %vm1268, %v2954, %v2955
      %v2957 = vrot.slane %v2851, 5
      %v2958 = vrot.slane %v2957, 4
      %v2959 = vrot.slane %v2112, 5
      %v2960 = vsel %vm1268, %v2958, %v2959
      %v2961 = vrot.slane %v2959, 4
      %v2962 = vrot.slane %v2113, 5
      %v2963 = vsel %vm1268, %v2961, %v2962
      %v2964 = vrot.slane %v2852, 5
      %v2965 = vrot.slane %v2964, 4
      %v2966 = vrot.slane %v2115, 5
      %v2967 = vsel %vm1268, %v2965, %v2966
      %v2968 = vrot.slane %v2966, 4
      %v2969 = vrot.slane %v2116, 5
      %v2970 = vsel %vm1268, %v2968, %v2969
      %v2971 = vrot.slane %v2853, 5
      %v2972 = vrot.slane %v2971, 4
      %v2973 = vrot.slane %v2118, 5
      %v2974 = vsel %vm1268, %v2972, %v2973
      %v2975 = vrot.slane %v2973, 4
      %v2976 = vrot.slane %v2119, 5
      %v2977 = vsel %vm1268, %v2975, %v2976
      %v2978 = vrot.slane %v2854, 5
      %v2979 = vrot.slane %v2978, 4
      %v2980 = vrot.slane %v2121, 5
      %v2981 = vsel %vm1268, %v2979, %v2980
      %v2982 = vrot.slane %v2980, 4
      %v2983 = vrot.slane %v2122, 5
      %v2984 = vsel %vm1268, %v2982, %v2983
      %v2985 = vrot.slane %v2855, 5
      %v2986 = vrot.slane %v2985, 4
      %v2987 = vrot.slane %v2124, 5
      %v2988 = vsel %vm1268, %v2986, %v2987
      %v2989 = vrot.slane %v2987, 4
      %v2990 = vrot.slane %v2125, 5
      %v2991 = vsel %vm1268, %v2989, %v2990
      %v2992 = vrot.slane %v2856, 5
      %v2993 = vrot.slane %v2992, 4
      %v2994 = vrot.slane %v2127, 5
      %v2995 = vsel %vm1268, %v2993, %v2994
      %v2996 = vrot.slane %v2994, 4
      %v2997 = vrot.slane %v2128, 5
      %v2998 = vsel %vm1268, %v2996, %v2997
      %v2999 = vrot.slane %v2857, 5
      %v3000 = vrot.slane %v2999, 4
      %v3001 = vrot.slane %v2130, 5
      %v3002 = vsel %vm1268, %v3000, %v3001
      %v3003 = vrot.slane %v3001, 4
      %v3004 = vrot.slane %v2131, 5
      %v3005 = vsel %vm1268, %v3003, %v3004
      %v3006 = vrot.slane %v2858, 5
      %v3007 = vrot.slane %v3006, 4
      %v3008 = vrot.slane %v2133, 5
      %v3009 = vsel %vm1268, %v3007, %v3008
      %v3010 = vrot.slane %v3008, 4
      %v3011 = vrot.slane %v2134, 5
      %v3012 = vsel %vm1268, %v3010, %v3011
      %v3013 = vrot.slane %v2859, 5
      %v3014 = vrot.slane %v3013, 4
      %v3015 = vrot.slane %v2136, 5
      %v3016 = vsel %vm1268, %v3014, %v3015
      %v3017 = vrot.slane %v3015, 4
      %v3018 = vrot.slane %v2137, 5
      %v3019 = vsel %vm1268, %v3017, %v3018
      %s3020 = scalar_lea.vmem %s1, 320
      %v3021 = vld [vmem:[%s3020] sm:$0xf]
      %v3022 = vld [vmem:[%s3020 + $0x4] sm:$0xf]
      %v3023 = vld [vmem:[%s3020 + $0x8] sm:$0xf]
      %v3024 = vld [vmem:[%s3020 + $0xc] sm:$0xf]
      %v3025 = vld [vmem:[%s3020 + $0x10] sm:$0xf]
      %v3026 = vld [vmem:[%s3020 + $0x14] sm:$0xf]
      %v3027 = vld [vmem:[%s3020 + $0x18] sm:$0xf]
      %v3028 = vld [vmem:[%s3020 + $0x1c] sm:$0xf]
      %v3029 = vld [vmem:[%s3020 + $0x20] sm:$0xf]
      %v3030 = vld [vmem:[%s3020 + $0x24] sm:$0xf]
      %v3031 = vld [vmem:[%s3020 + $0x28] sm:$0xf]
      %v3032 = vld [vmem:[%s3020 + $0x2c] sm:$0xf]
      %v3033 = vld [vmem:[%s3020 + $0x30] sm:$0xf]
      %v3034 = vld [vmem:[%s3020 + $0x34] sm:$0xf]
      %v3035 = vld [vmem:[%s3020 + $0x38] sm:$0xf]
      %v3036 = vld [vmem:[%s3020 + $0x3c] sm:$0xf]
      %v3037 = vunpack.c.l.b16 %v2911
      %v3038 = vunpack.c.l.b16 %v2914
      %v3039 = vunpack.c.l.b16 %v2918
      %v3040 = vunpack.c.l.b16 %v2921
      %v3041 = vunpack.c.l.b16 %v2925
      %v3042 = vunpack.c.l.b16 %v2928
      %v3043 = vunpack.c.l.b16 %v2932
      %v3044 = vunpack.c.l.b16 %v2935
      %v3045 = vunpack.c.l.b16 %v2939
      %v3046 = vunpack.c.l.b16 %v2942
      %v3047 = vunpack.c.l.b16 %v2946
      %v3048 = vunpack.c.l.b16 %v2949
      %v3049 = vunpack.c.l.b16 %v2953
      %v3050 = vunpack.c.l.b16 %v2956
      %v3051 = vunpack.c.l.b16 %v2960
      %v3052 = vunpack.c.l.b16 %v2963
      %v3053 = vunpack.c.l.b16 %v2967
      %v3054 = vunpack.c.l.b16 %v2970
      %v3055 = vunpack.c.l.b16 %v2974
      %v3056 = vunpack.c.l.b16 %v2977
      %v3057 = vunpack.c.l.b16 %v2981
      %v3058 = vunpack.c.l.b16 %v2984
      %v3059 = vunpack.c.l.b16 %v2988
      %v3060 = vunpack.c.l.b16 %v2991
      %v3061 = vunpack.c.l.b16 %v2995
      %v3062 = vunpack.c.l.b16 %v2998
      %v3063 = vunpack.c.l.b16 %v3002
      %v3064 = vunpack.c.l.b16 %v3005
      %v3065 = vunpack.c.l.b16 %v3009
      %v3066 = vunpack.c.l.b16 %v3012
      %v3067 = vunpack.c.l.b16 %v3016
      %v3068 = vunpack.c.l.b16 %v3019
      %v3069 = vpack.c.b16 %v3038, %v3037
      %v3070 = vpack.c.b16 %v3040, %v3039
      %v3071 = vpack.c.b16 %v3042, %v3041
      %v3072 = vpack.c.b16 %v3044, %v3043
      %v3073 = vpack.c.b16 %v3046, %v3045
      %v3074 = vpack.c.b16 %v3048, %v3047
      %v3075 = vpack.c.b16 %v3050, %v3049
      %v3076 = vpack.c.b16 %v3052, %v3051
      %v3077 = vpack.c.b16 %v3054, %v3053
      %v3078 = vpack.c.b16 %v3056, %v3055
      %v3079 = vpack.c.b16 %v3058, %v3057
      %v3080 = vpack.c.b16 %v3060, %v3059
      %v3081 = vpack.c.b16 %v3062, %v3061
      %v3082 = vpack.c.b16 %v3064, %v3063
      %v3083 = vpack.c.b16 %v3066, %v3065
      %v3084 = vpack.c.b16 %v3068, %v3067
      %v3117 = vunpack.c.l.b16 %v3021
      %v3118 = vunpack.c.l.b16 %v3022
      %v3119 = vunpack.c.l.b16 %v3023
      %v3120 = vunpack.c.l.b16 %v3024
      %v3121 = vunpack.c.l.b16 %v3025
      %v3122 = vunpack.c.l.b16 %v3026
      %v3123 = vunpack.c.l.b16 %v3027
      %v3124 = vunpack.c.l.b16 %v3028
      %v3125 = vunpack.c.l.b16 %v3029
      %v3126 = vunpack.c.l.b16 %v3030
      %v3127 = vunpack.c.l.b16 %v3031
      %v3128 = vunpack.c.l.b16 %v3032
      %v3129 = vunpack.c.l.b16 %v3033
      %v3130 = vunpack.c.l.b16 %v3034
      %v3131 = vunpack.c.l.b16 %v3035
      %v3132 = vunpack.c.l.b16 %v3036
      %v3133 = vpack.c.b16 %v3118, %v3117
      %v3134 = vpack.c.b16 %v3120, %v3119
      %v3135 = vpack.c.b16 %v3122, %v3121
      %v3136 = vpack.c.b16 %v3124, %v3123
      %v3137 = vpack.c.b16 %v3126, %v3125
      %v3138 = vpack.c.b16 %v3128, %v3127
      %v3139 = vpack.c.b16 %v3130, %v3129
      %v3140 = vpack.c.b16 %v3132, %v3131
      %3149 = vmatprep.subr.bf16.mxu0 0
      %3150 = vmatpush1.bf16.msra.mxu0 %v3140
      %3151 = vmatprep.subr.bf16.mxu0 0
      %3152 = vmatpush1.bf16.msra.mxu0 %v3139
      %3153 = vmatprep.subr.bf16.mxu0 0
      %3154 = vmatpush1.bf16.msra.mxu0 %v3138
      %3155 = vmatprep.subr.bf16.mxu0 0
      %3156 = vmatpush1.bf16.msra.mxu0 %v3137
      %3157 = vmatprep.subr.bf16.mxu0 0
      %3158 = vmatpush1.bf16.msra.mxu0 %v3136
      %3159 = vmatprep.subr.bf16.mxu0 0
      %3160 = vmatpush1.bf16.msra.mxu0 %v3135
      %3161 = vmatprep.subr.bf16.mxu0 0
      %3162 = vmatpush1.bf16.msra.mxu0 %v3134
      %3163 = vmatprep.subr.bf16.mxu0 0
      %3164 = vmatpush1.bf16.msra.mxu0 %v3133
      %3165 = vmatprep.subr.bf16.mxu0 0
      %3166 = vmatpush2.bf16.msra.mxu0 0
      %3167 = vmatprep.subr.bf16.mxu0 0
      %3168 = vmatpush2.bf16.msra.mxu0 0
      %3169 = vmatprep.subr.bf16.mxu0 0
      %3170 = vmatpush2.bf16.msra.mxu0 0
      %3171 = vmatprep.subr.bf16.mxu0 0
      %3172 = vmatpush2.bf16.msra.mxu0 0
      %3173 = vmatprep.subr.bf16.mxu0 0
      %3174 = vmatpush2.bf16.msra.mxu0 0
      %3175 = vmatprep.subr.bf16.mxu0 0
      %3176 = vmatpush2.bf16.msra.mxu0 0
      %3177 = vmatprep.subr.bf16.mxu0 0
      %3178 = vmatpush2.bf16.msra.mxu0 0
      %3179 = vmatprep.subr.bf16.mxu0 0
      %3180 = vmatpush2.bf16.msra.mxu0 0
      %3181 = vmatprep.mubr.bf16.mxu0 0
      %3182 = vmatmul.mubr.bf16.gmra.mxu0 %v3069
      %v3183 = vpop.f32.mrf.mxu0
      %v3184 = vadd.f32 0.0, %v3183
      %v3185 = vpop.f32.mrf.mxu0
      %v3186 = vpop.f32.mrf.mxu0
      %v3187 = vadd.f32 0.0, %v3186
      %v3188 = vpop.f32.mrf.mxu0
      %3189 = vmatprep.mubr.bf16.mxu0 0
      %3190 = vmatmul.mubr.bf16.gmra.mxu0 %v3070
      %v3191 = vpop.f32.mrf.mxu0
      %v3192 = vadd.f32 0.0, %v3191
      %v3193 = vpop.f32.mrf.mxu0
      %v3194 = vpop.f32.mrf.mxu0
      %v3195 = vadd.f32 0.0, %v3194
      %v3196 = vpop.f32.mrf.mxu0
      %3197 = vmatprep.mubr.bf16.mxu0 0
      %3198 = vmatmul.mubr.bf16.gmra.mxu0 %v3071
      %v3199 = vpop.f32.mrf.mxu0
      %v3200 = vadd.f32 0.0, %v3199
      %v3201 = vpop.f32.mrf.mxu0
      %v3202 = vpop.f32.mrf.mxu0
      %v3203 = vadd.f32 0.0, %v3202
      %v3204 = vpop.f32.mrf.mxu0
      %3205 = vmatprep.mubr.bf16.mxu0 0
      %3206 = vmatmul.mubr.bf16.gmra.mxu0 %v3072
      %v3207 = vpop.f32.mrf.mxu0
      %v3208 = vadd.f32 0.0, %v3207
      %v3209 = vpop.f32.mrf.mxu0
      %v3210 = vpop.f32.mrf.mxu0
      %v3211 = vadd.f32 0.0, %v3210
      %v3212 = vpop.f32.mrf.mxu0
      %3213 = vmatprep.mubr.bf16.mxu0 0
      %3214 = vmatmul.mubr.bf16.gmra.mxu0 %v3073
      %v3215 = vpop.f32.mrf.mxu0
      %v3216 = vadd.f32 0.0, %v3215
      %v3217 = vpop.f32.mrf.mxu0
      %v3218 = vpop.f32.mrf.mxu0
      %v3219 = vadd.f32 0.0, %v3218
      %v3220 = vpop.f32.mrf.mxu0
      %3221 = vmatprep.mubr.bf16.mxu0 0
      %3222 = vmatmul.mubr.bf16.gmra.mxu0 %v3074
      %v3223 = vpop.f32.mrf.mxu0
      %v3224 = vadd.f32 0.0, %v3223
      %v3225 = vpop.f32.mrf.mxu0
      %v3226 = vpop.f32.mrf.mxu0
      %v3227 = vadd.f32 0.0, %v3226
      %v3228 = vpop.f32.mrf.mxu0
      %3229 = vmatprep.mubr.bf16.mxu0 0
      %3230 = vmatmul.mubr.bf16.gmra.mxu0 %v3075
      %v3231 = vpop.f32.mrf.mxu0
      %v3232 = vadd.f32 0.0, %v3231
      %v3233 = vpop.f32.mrf.mxu0
      %v3234 = vpop.f32.mrf.mxu0
      %v3235 = vadd.f32 0.0, %v3234
      %v3236 = vpop.f32.mrf.mxu0
      %3237 = vmatprep.mubr.bf16.mxu0 0
      %3238 = vmatmul.mubr.bf16.gmra.mxu0 %v3076
      %v3239 = vpop.f32.mrf.mxu0
      %v3240 = vadd.f32 0.0, %v3239
      %v3241 = vpop.f32.mrf.mxu0
      %v3242 = vpop.f32.mrf.mxu0
      %v3243 = vadd.f32 0.0, %v3242
      %v3244 = vpop.f32.mrf.mxu0
      %3245 = vmatprep.mubr.bf16.mxu0 0
      %3246 = vmatmul.mubr.bf16.gmra.mxu0 %v3077
      %v3247 = vpop.f32.mrf.mxu0
      %v3248 = vadd.f32 0.0, %v3247
      %v3249 = vpop.f32.mrf.mxu0
      %v3250 = vpop.f32.mrf.mxu0
      %v3251 = vadd.f32 0.0, %v3250
      %v3252 = vpop.f32.mrf.mxu0
      %3253 = vmatprep.mubr.bf16.mxu0 0
      %3254 = vmatmul.mubr.bf16.gmra.mxu0 %v3078
      %v3255 = vpop.f32.mrf.mxu0
      %v3256 = vadd.f32 0.0, %v3255
      %v3257 = vpop.f32.mrf.mxu0
      %v3258 = vpop.f32.mrf.mxu0
      %v3259 = vadd.f32 0.0, %v3258
      %v3260 = vpop.f32.mrf.mxu0
      %3261 = vmatprep.mubr.bf16.mxu0 0
      %3262 = vmatmul.mubr.bf16.gmra.mxu0 %v3079
      %v3263 = vpop.f32.mrf.mxu0
      %v3264 = vadd.f32 0.0, %v3263
      %v3265 = vpop.f32.mrf.mxu0
      %v3266 = vpop.f32.mrf.mxu0
      %v3267 = vadd.f32 0.0, %v3266
      %v3268 = vpop.f32.mrf.mxu0
      %3269 = vmatprep.mubr.bf16.mxu0 0
      %3270 = vmatmul.mubr.bf16.gmra.mxu0 %v3080
      %v3271 = vpop.f32.mrf.mxu0
      %v3272 = vadd.f32 0.0, %v3271
      %v3273 = vpop.f32.mrf.mxu0
      %v3274 = vpop.f32.mrf.mxu0
      %v3275 = vadd.f32 0.0, %v3274
      %v3276 = vpop.f32.mrf.mxu0
      %3277 = vmatprep.mubr.bf16.mxu0 0
      %3278 = vmatmul.mubr.bf16.gmra.mxu0 %v3081
      %v3279 = vpop.f32.mrf.mxu0
      %v3280 = vadd.f32 0.0, %v3279
      %v3281 = vpop.f32.mrf.mxu0
      %v3282 = vpop.f32.mrf.mxu0
      %v3283 = vadd.f32 0.0, %v3282
      %v3284 = vpop.f32.mrf.mxu0
      %3285 = vmatprep.mubr.bf16.mxu0 0
      %3286 = vmatmul.mubr.bf16.gmra.mxu0 %v3082
      %v3287 = vpop.f32.mrf.mxu0
      %v3288 = vadd.f32 0.0, %v3287
      %v3289 = vpop.f32.mrf.mxu0
      %v3290 = vpop.f32.mrf.mxu0
      %v3291 = vadd.f32 0.0, %v3290
      %v3292 = vpop.f32.mrf.mxu0
      %3293 = vmatprep.mubr.bf16.mxu0 0
      %3294 = vmatmul.mubr.bf16.gmra.mxu0 %v3083
      %v3295 = vpop.f32.mrf.mxu0
      %v3296 = vadd.f32 0.0, %v3295
      %v3297 = vpop.f32.mrf.mxu0
      %v3298 = vpop.f32.mrf.mxu0
      %v3299 = vadd.f32 0.0, %v3298
      %v3300 = vpop.f32.mrf.mxu0
      %3301 = vmatprep.mubr.bf16.mxu0 0
      %3302 = vmatmul.mubr.bf16.gmra.mxu0 %v3084
      %v3303 = vpop.f32.mrf.mxu0
      %v3304 = vadd.f32 0.0, %v3303
      %v3305 = vpop.f32.mrf.mxu0
      %v3306 = vpop.f32.mrf.mxu0
      %v3307 = vadd.f32 0.0, %v3306
      %v3308 = vpop.f32.mrf.mxu0
      %3309 = vdwg.mxu0
      %v3310 = vadd.f32 %v2812, %v3184
      %v3311 = vadd.f32 %v2813, %v3187
      %v3312 = vadd.f32 %v2814, %v3192
      %v3313 = vadd.f32 %v2815, %v3195
      %v3314 = vadd.f32 %v2816, %v3200
      %v3315 = vadd.f32 %v2817, %v3203
      %v3316 = vadd.f32 %v2818, %v3208
      %v3317 = vadd.f32 %v2819, %v3211
      %v3318 = vadd.f32 %v2820, %v3216
      %v3319 = vadd.f32 %v2821, %v3219
      %v3320 = vadd.f32 %v2822, %v3224
      %v3321 = vadd.f32 %v2823, %v3227
      %v3322 = vadd.f32 %v2824, %v3232
      %v3323 = vadd.f32 %v2825, %v3235
      %v3324 = vadd.f32 %v2826, %v3240
      %v3325 = vadd.f32 %v2827, %v3243
      %v3326 = vadd.f32 %v2828, %v3248
      %v3327 = vadd.f32 %v2829, %v3251
      %v3328 = vadd.f32 %v2830, %v3256
      %v3329 = vadd.f32 %v2831, %v3259
      %v3330 = vadd.f32 %v2832, %v3264
      %v3331 = vadd.f32 %v2833, %v3267
      %v3332 = vadd.f32 %v2834, %v3272
      %v3333 = vadd.f32 %v2835, %v3275
      %v3334 = vadd.f32 %v2836, %v3280
      %v3335 = vadd.f32 %v2837, %v3283
      %v3336 = vadd.f32 %v2838, %v3288
      %v3337 = vadd.f32 %v2839, %v3291
      %v3338 = vadd.f32 %v2840, %v3296
      %v3339 = vadd.f32 %v2841, %v3299
      %v3340 = vadd.f32 %v2842, %v3304
      %v3341 = vadd.f32 %v2843, %v3307
      %s3342 = scalar_lea.vmem %s165, 24
      %v3343 = vld [vmem:[%s3342] sm:$0xf]
      %v3344 = vld [vmem:[%s3342 + $0x4] sm:$0xf]
      %v3345 = vld [vmem:[%s3342 + $0xc] sm:$0xf]
      %v3346 = vld [vmem:[%s3342 + $0x10] sm:$0xf]
      %v3347 = vld [vmem:[%s3342 + $0x18] sm:$0xf]
      %v3348 = vld [vmem:[%s3342 + $0x1c] sm:$0xf]
      %v3349 = vld [vmem:[%s3342 + $0x24] sm:$0xf]
      %v3350 = vld [vmem:[%s3342 + $0x28] sm:$0xf]
      %v3351 = vld [vmem:[%s3342 + $0x30] sm:$0xf]
      %v3352 = vld [vmem:[%s3342 + $0x34] sm:$0xf]
      %v3353 = vld [vmem:[%s3342 + $0x3c] sm:$0xf]
      %v3354 = vld [vmem:[%s3342 + $0x40] sm:$0xf]
      %v3355 = vld [vmem:[%s3342 + $0x48] sm:$0xf]
      %v3356 = vld [vmem:[%s3342 + $0x4c] sm:$0xf]
      %v3357 = vld [vmem:[%s3342 + $0x54] sm:$0xf]
      %v3358 = vld [vmem:[%s3342 + $0x58] sm:$0xf]
      %v3359 = vld [vmem:[%s3342 + $0x60] sm:$0xf]
      %v3360 = vld [vmem:[%s3342 + $0x64] sm:$0xf]
      %v3361 = vld [vmem:[%s3342 + $0x6c] sm:$0xf]
      %v3362 = vld [vmem:[%s3342 + $0x70] sm:$0xf]
      %v3363 = vld [vmem:[%s3342 + $0x78] sm:$0xf]
      %v3364 = vld [vmem:[%s3342 + $0x7c] sm:$0xf]
      %v3365 = vld [vmem:[%s3342 + $0x84] sm:$0xf]
      %v3366 = vld [vmem:[%s3342 + $0x88] sm:$0xf]
      %v3367 = vld [vmem:[%s3342 + $0x90] sm:$0xf]
      %v3368 = vld [vmem:[%s3342 + $0x94] sm:$0xf]
      %v3369 = vld [vmem:[%s3342 + $0x9c] sm:$0xf]
      %v3370 = vld [vmem:[%s3342 + $0xa0] sm:$0xf]
      %v3371 = vld [vmem:[%s3342 + $0xa8] sm:$0xf]
      %v3372 = vld [vmem:[%s3342 + $0xac] sm:$0xf]
      %v3373 = vld [vmem:[%s3342 + $0xb4] sm:$0xf]
      %v3374 = vld [vmem:[%s3342 + $0xb8] sm:$0xf]
      %s3375 = scalar_lea.vmem %s1, 384
      %v3376 = vld [vmem:[%s3375] sm:$0xf]
      %v3377 = vld [vmem:[%s3375 + $0x4] sm:$0xf]
      %v3378 = vld [vmem:[%s3375 + $0x8] sm:$0xf]
      %v3379 = vld [vmem:[%s3375 + $0xc] sm:$0xf]
      %v3380 = vld [vmem:[%s3375 + $0x10] sm:$0xf]
      %v3381 = vld [vmem:[%s3375 + $0x14] sm:$0xf]
      %v3382 = vld [vmem:[%s3375 + $0x18] sm:$0xf]
      %v3383 = vld [vmem:[%s3375 + $0x1c] sm:$0xf]
      %v3384 = vld [vmem:[%s3375 + $0x20] sm:$0xf]
      %v3385 = vld [vmem:[%s3375 + $0x24] sm:$0xf]
      %v3386 = vld [vmem:[%s3375 + $0x28] sm:$0xf]
      %v3387 = vld [vmem:[%s3375 + $0x2c] sm:$0xf]
      %v3388 = vld [vmem:[%s3375 + $0x30] sm:$0xf]
      %v3389 = vld [vmem:[%s3375 + $0x34] sm:$0xf]
      %v3390 = vld [vmem:[%s3375 + $0x38] sm:$0xf]
      %v3391 = vld [vmem:[%s3375 + $0x3c] sm:$0xf]
      %v3424 = vunpack.c.l.b16 %v3343
      %v3425 = vunpack.c.l.b16 %v3344
      %v3426 = vunpack.c.l.b16 %v3345
      %v3427 = vunpack.c.l.b16 %v3346
      %v3428 = vunpack.c.l.b16 %v3347
      %v3429 = vunpack.c.l.b16 %v3348
      %v3430 = vunpack.c.l.b16 %v3349
      %v3431 = vunpack.c.l.b16 %v3350
      %v3432 = vunpack.c.l.b16 %v3351
      %v3433 = vunpack.c.l.b16 %v3352
      %v3434 = vunpack.c.l.b16 %v3353
      %v3435 = vunpack.c.l.b16 %v3354
      %v3436 = vunpack.c.l.b16 %v3355
      %v3437 = vunpack.c.l.b16 %v3356
      %v3438 = vunpack.c.l.b16 %v3357
      %v3439 = vunpack.c.l.b16 %v3358
      %v3440 = vunpack.c.l.b16 %v3359
      %v3441 = vunpack.c.l.b16 %v3360
      %v3442 = vunpack.c.l.b16 %v3361
      %v3443 = vunpack.c.l.b16 %v3362
      %v3444 = vunpack.c.l.b16 %v3363
      %v3445 = vunpack.c.l.b16 %v3364
      %v3446 = vunpack.c.l.b16 %v3365
      %v3447 = vunpack.c.l.b16 %v3366
      %v3448 = vunpack.c.l.b16 %v3367
      %v3449 = vunpack.c.l.b16 %v3368
      %v3450 = vunpack.c.l.b16 %v3369
      %v3451 = vunpack.c.l.b16 %v3370
      %v3452 = vunpack.c.l.b16 %v3371
      %v3453 = vunpack.c.l.b16 %v3372
      %v3454 = vunpack.c.l.b16 %v3373
      %v3455 = vunpack.c.l.b16 %v3374
      %v3456 = vpack.c.b16 %v3425, %v3424
      %v3457 = vpack.c.b16 %v3427, %v3426
      %v3458 = vpack.c.b16 %v3429, %v3428
      %v3459 = vpack.c.b16 %v3431, %v3430
      %v3460 = vpack.c.b16 %v3433, %v3432
      %v3461 = vpack.c.b16 %v3435, %v3434
      %v3462 = vpack.c.b16 %v3437, %v3436
      %v3463 = vpack.c.b16 %v3439, %v3438
      %v3464 = vpack.c.b16 %v3441, %v3440
      %v3465 = vpack.c.b16 %v3443, %v3442
      %v3466 = vpack.c.b16 %v3445, %v3444
      %v3467 = vpack.c.b16 %v3447, %v3446
      %v3468 = vpack.c.b16 %v3449, %v3448
      %v3469 = vpack.c.b16 %v3451, %v3450
      %v3470 = vpack.c.b16 %v3453, %v3452
      %v3471 = vpack.c.b16 %v3455, %v3454
      %v3504 = vunpack.c.l.b16 %v3376
      %v3505 = vunpack.c.l.b16 %v3377
      %v3506 = vunpack.c.l.b16 %v3378
      %v3507 = vunpack.c.l.b16 %v3379
      %v3508 = vunpack.c.l.b16 %v3380
      %v3509 = vunpack.c.l.b16 %v3381
      %v3510 = vunpack.c.l.b16 %v3382
      %v3511 = vunpack.c.l.b16 %v3383
      %v3512 = vunpack.c.l.b16 %v3384
      %v3513 = vunpack.c.l.b16 %v3385
      %v3514 = vunpack.c.l.b16 %v3386
      %v3515 = vunpack.c.l.b16 %v3387
      %v3516 = vunpack.c.l.b16 %v3388
      %v3517 = vunpack.c.l.b16 %v3389
      %v3518 = vunpack.c.l.b16 %v3390
      %v3519 = vunpack.c.l.b16 %v3391
      %v3520 = vpack.c.b16 %v3505, %v3504
      %v3521 = vpack.c.b16 %v3507, %v3506
      %v3522 = vpack.c.b16 %v3509, %v3508
      %v3523 = vpack.c.b16 %v3511, %v3510
      %v3524 = vpack.c.b16 %v3513, %v3512
      %v3525 = vpack.c.b16 %v3515, %v3514
      %v3526 = vpack.c.b16 %v3517, %v3516
      %v3527 = vpack.c.b16 %v3519, %v3518
      %3536 = vmatprep.subr.bf16.mxu0 0
      %3537 = vmatpush1.bf16.msra.mxu0 %v3527
      %3538 = vmatprep.subr.bf16.mxu0 0
      %3539 = vmatpush1.bf16.msra.mxu0 %v3526
      %3540 = vmatprep.subr.bf16.mxu0 0
      %3541 = vmatpush1.bf16.msra.mxu0 %v3525
      %3542 = vmatprep.subr.bf16.mxu0 0
      %3543 = vmatpush1.bf16.msra.mxu0 %v3524
      %3544 = vmatprep.subr.bf16.mxu0 0
      %3545 = vmatpush1.bf16.msra.mxu0 %v3523
      %3546 = vmatprep.subr.bf16.mxu0 0
      %3547 = vmatpush1.bf16.msra.mxu0 %v3522
      %3548 = vmatprep.subr.bf16.mxu0 0
      %3549 = vmatpush1.bf16.msra.mxu0 %v3521
      %3550 = vmatprep.subr.bf16.mxu0 0
      %3551 = vmatpush1.bf16.msra.mxu0 %v3520
      %3552 = vmatprep.subr.bf16.mxu0 0
      %3553 = vmatpush2.bf16.msra.mxu0 0
      %3554 = vmatprep.subr.bf16.mxu0 0
      %3555 = vmatpush2.bf16.msra.mxu0 0
      %3556 = vmatprep.subr.bf16.mxu0 0
      %3557 = vmatpush2.bf16.msra.mxu0 0
      %3558 = vmatprep.subr.bf16.mxu0 0
      %3559 = vmatpush2.bf16.msra.mxu0 0
      %3560 = vmatprep.subr.bf16.mxu0 0
      %3561 = vmatpush2.bf16.msra.mxu0 0
      %3562 = vmatprep.subr.bf16.mxu0 0
      %3563 = vmatpush2.bf16.msra.mxu0 0
      %3564 = vmatprep.subr.bf16.mxu0 0
      %3565 = vmatpush2.bf16.msra.mxu0 0
      %3566 = vmatprep.subr.bf16.mxu0 0
      %3567 = vmatpush2.bf16.msra.mxu0 0
      %3568 = vmatprep.mubr.bf16.mxu0 0
      %3569 = vmatmul.mubr.bf16.gmra.mxu0 %v3456
      %v3570 = vpop.f32.mrf.mxu0
      %v3571 = vadd.f32 0.0, %v3570
      %v3572 = vpop.f32.mrf.mxu0
      %v3573 = vpop.f32.mrf.mxu0
      %v3574 = vadd.f32 0.0, %v3573
      %v3575 = vpop.f32.mrf.mxu0
      %3576 = vmatprep.mubr.bf16.mxu0 0
      %3577 = vmatmul.mubr.bf16.gmra.mxu0 %v3457
      %v3578 = vpop.f32.mrf.mxu0
      %v3579 = vadd.f32 0.0, %v3578
      %v3580 = vpop.f32.mrf.mxu0
      %v3581 = vpop.f32.mrf.mxu0
      %v3582 = vadd.f32 0.0, %v3581
      %v3583 = vpop.f32.mrf.mxu0
      %3584 = vmatprep.mubr.bf16.mxu0 0
      %3585 = vmatmul.mubr.bf16.gmra.mxu0 %v3458
      %v3586 = vpop.f32.mrf.mxu0
      %v3587 = vadd.f32 0.0, %v3586
      %v3588 = vpop.f32.mrf.mxu0
      %v3589 = vpop.f32.mrf.mxu0
      %v3590 = vadd.f32 0.0, %v3589
      %v3591 = vpop.f32.mrf.mxu0
      %3592 = vmatprep.mubr.bf16.mxu0 0
      %3593 = vmatmul.mubr.bf16.gmra.mxu0 %v3459
      %v3594 = vpop.f32.mrf.mxu0
      %v3595 = vadd.f32 0.0, %v3594
      %v3596 = vpop.f32.mrf.mxu0
      %v3597 = vpop.f32.mrf.mxu0
      %v3598 = vadd.f32 0.0, %v3597
      %v3599 = vpop.f32.mrf.mxu0
      %3600 = vmatprep.mubr.bf16.mxu0 0
      %3601 = vmatmul.mubr.bf16.gmra.mxu0 %v3460
      %v3602 = vpop.f32.mrf.mxu0
      %v3603 = vadd.f32 0.0, %v3602
      %v3604 = vpop.f32.mrf.mxu0
      %v3605 = vpop.f32.mrf.mxu0
      %v3606 = vadd.f32 0.0, %v3605
      %v3607 = vpop.f32.mrf.mxu0
      %3608 = vmatprep.mubr.bf16.mxu0 0
      %3609 = vmatmul.mubr.bf16.gmra.mxu0 %v3461
      %v3610 = vpop.f32.mrf.mxu0
      %v3611 = vadd.f32 0.0, %v3610
      %v3612 = vpop.f32.mrf.mxu0
      %v3613 = vpop.f32.mrf.mxu0
      %v3614 = vadd.f32 0.0, %v3613
      %v3615 = vpop.f32.mrf.mxu0
      %3616 = vmatprep.mubr.bf16.mxu0 0
      %3617 = vmatmul.mubr.bf16.gmra.mxu0 %v3462
      %v3618 = vpop.f32.mrf.mxu0
      %v3619 = vadd.f32 0.0, %v3618
      %v3620 = vpop.f32.mrf.mxu0
      %v3621 = vpop.f32.mrf.mxu0
      %v3622 = vadd.f32 0.0, %v3621
      %v3623 = vpop.f32.mrf.mxu0
      %3624 = vmatprep.mubr.bf16.mxu0 0
      %3625 = vmatmul.mubr.bf16.gmra.mxu0 %v3463
      %v3626 = vpop.f32.mrf.mxu0
      %v3627 = vadd.f32 0.0, %v3626
      %v3628 = vpop.f32.mrf.mxu0
      %v3629 = vpop.f32.mrf.mxu0
      %v3630 = vadd.f32 0.0, %v3629
      %v3631 = vpop.f32.mrf.mxu0
      %3632 = vmatprep.mubr.bf16.mxu0 0
      %3633 = vmatmul.mubr.bf16.gmra.mxu0 %v3464
      %v3634 = vpop.f32.mrf.mxu0
      %v3635 = vadd.f32 0.0, %v3634
      %v3636 = vpop.f32.mrf.mxu0
      %v3637 = vpop.f32.mrf.mxu0
      %v3638 = vadd.f32 0.0, %v3637
      %v3639 = vpop.f32.mrf.mxu0
      %3640 = vmatprep.mubr.bf16.mxu0 0
      %3641 = vmatmul.mubr.bf16.gmra.mxu0 %v3465
      %v3642 = vpop.f32.mrf.mxu0
      %v3643 = vadd.f32 0.0, %v3642
      %v3644 = vpop.f32.mrf.mxu0
      %v3645 = vpop.f32.mrf.mxu0
      %v3646 = vadd.f32 0.0, %v3645
      %v3647 = vpop.f32.mrf.mxu0
      %3648 = vmatprep.mubr.bf16.mxu0 0
      %3649 = vmatmul.mubr.bf16.gmra.mxu0 %v3466
      %v3650 = vpop.f32.mrf.mxu0
      %v3651 = vadd.f32 0.0, %v3650
      %v3652 = vpop.f32.mrf.mxu0
      %v3653 = vpop.f32.mrf.mxu0
      %v3654 = vadd.f32 0.0, %v3653
      %v3655 = vpop.f32.mrf.mxu0
      %3656 = vmatprep.mubr.bf16.mxu0 0
      %3657 = vmatmul.mubr.bf16.gmra.mxu0 %v3467
      %v3658 = vpop.f32.mrf.mxu0
      %v3659 = vadd.f32 0.0, %v3658
      %v3660 = vpop.f32.mrf.mxu0
      %v3661 = vpop.f32.mrf.mxu0
      %v3662 = vadd.f32 0.0, %v3661
      %v3663 = vpop.f32.mrf.mxu0
      %3664 = vmatprep.mubr.bf16.mxu0 0
      %3665 = vmatmul.mubr.bf16.gmra.mxu0 %v3468
      %v3666 = vpop.f32.mrf.mxu0
      %v3667 = vadd.f32 0.0, %v3666
      %v3668 = vpop.f32.mrf.mxu0
      %v3669 = vpop.f32.mrf.mxu0
      %v3670 = vadd.f32 0.0, %v3669
      %v3671 = vpop.f32.mrf.mxu0
      %3672 = vmatprep.mubr.bf16.mxu0 0
      %3673 = vmatmul.mubr.bf16.gmra.mxu0 %v3469
      %v3674 = vpop.f32.mrf.mxu0
      %v3675 = vadd.f32 0.0, %v3674
      %v3676 = vpop.f32.mrf.mxu0
      %v3677 = vpop.f32.mrf.mxu0
      %v3678 = vadd.f32 0.0, %v3677
      %v3679 = vpop.f32.mrf.mxu0
      %3680 = vmatprep.mubr.bf16.mxu0 0
      %3681 = vmatmul.mubr.bf16.gmra.mxu0 %v3470
      %v3682 = vpop.f32.mrf.mxu0
      %v3683 = vadd.f32 0.0, %v3682
      %v3684 = vpop.f32.mrf.mxu0
      %v3685 = vpop.f32.mrf.mxu0
      %v3686 = vadd.f32 0.0, %v3685
      %v3687 = vpop.f32.mrf.mxu0
      %3688 = vmatprep.mubr.bf16.mxu0 0
      %3689 = vmatmul.mubr.bf16.gmra.mxu0 %v3471
      %v3690 = vpop.f32.mrf.mxu0
      %v3691 = vadd.f32 0.0, %v3690
      %v3692 = vpop.f32.mrf.mxu0
      %v3693 = vpop.f32.mrf.mxu0
      %v3694 = vadd.f32 0.0, %v3693
      %v3695 = vpop.f32.mrf.mxu0
      %3696 = vdwg.mxu0
      %v3697 = vadd.f32 %v3310, %v3571
      %v3698 = vadd.f32 %v3311, %v3574
      %v3699 = vadd.f32 %v3312, %v3579
      %v3700 = vadd.f32 %v3313, %v3582
      %v3701 = vadd.f32 %v3314, %v3587
      %v3702 = vadd.f32 %v3315, %v3590
      %v3703 = vadd.f32 %v3316, %v3595
      %v3704 = vadd.f32 %v3317, %v3598
      %v3705 = vadd.f32 %v3318, %v3603
      %v3706 = vadd.f32 %v3319, %v3606
      %v3707 = vadd.f32 %v3320, %v3611
      %v3708 = vadd.f32 %v3321, %v3614
      %v3709 = vadd.f32 %v3322, %v3619
      %v3710 = vadd.f32 %v3323, %v3622
      %v3711 = vadd.f32 %v3324, %v3627
      %v3712 = vadd.f32 %v3325, %v3630
      %v3713 = vadd.f32 %v3326, %v3635
      %v3714 = vadd.f32 %v3327, %v3638
      %v3715 = vadd.f32 %v3328, %v3643
      %v3716 = vadd.f32 %v3329, %v3646
      %v3717 = vadd.f32 %v3330, %v3651
      %v3718 = vadd.f32 %v3331, %v3654
      %v3719 = vadd.f32 %v3332, %v3659
      %v3720 = vadd.f32 %v3333, %v3662
      %v3721 = vadd.f32 %v3334, %v3667
      %v3722 = vadd.f32 %v3335, %v3670
      %v3723 = vadd.f32 %v3336, %v3675
      %v3724 = vadd.f32 %v3337, %v3678
      %v3725 = vadd.f32 %v3338, %v3683
      %v3726 = vadd.f32 %v3339, %v3686
      %v3727 = vadd.f32 %v3340, %v3691
      %v3728 = vadd.f32 %v3341, %v3694
      %v3729 = vld [vmem:[%s3342] sm:$0xf]
      %v3730 = vld [vmem:[%s3342 + $0x4] sm:$0xf]
      %v3731 = vld [vmem:[%s3342 + $0x8] sm:$0x1]
      %v3732 = vld [vmem:[%s3342 + $0xc] sm:$0xf]
      %v3733 = vld [vmem:[%s3342 + $0x10] sm:$0xf]
      %v3734 = vld [vmem:[%s3342 + $0x14] sm:$0x1]
      %v3735 = vld [vmem:[%s3342 + $0x18] sm:$0xf]
      %v3736 = vld [vmem:[%s3342 + $0x1c] sm:$0xf]
      %v3737 = vld [vmem:[%s3342 + $0x20] sm:$0x1]
      %v3738 = vld [vmem:[%s3342 + $0x24] sm:$0xf]
      %v3739 = vld [vmem:[%s3342 + $0x28] sm:$0xf]
      %v3740 = vld [vmem:[%s3342 + $0x2c] sm:$0x1]
      %v3741 = vld [vmem:[%s3342 + $0x30] sm:$0xf]
      %v3742 = vld [vmem:[%s3342 + $0x34] sm:$0xf]
      %v3743 = vld [vmem:[%s3342 + $0x38] sm:$0x1]
      %v3744 = vld [vmem:[%s3342 + $0x3c] sm:$0xf]
      %v3745 = vld [vmem:[%s3342 + $0x40] sm:$0xf]
      %v3746 = vld [vmem:[%s3342 + $0x44] sm:$0x1]
      %v3747 = vld [vmem:[%s3342 + $0x48] sm:$0xf]
      %v3748 = vld [vmem:[%s3342 + $0x4c] sm:$0xf]
      %v3749 = vld [vmem:[%s3342 + $0x50] sm:$0x1]
      %v3750 = vld [vmem:[%s3342 + $0x54] sm:$0xf]
      %v3751 = vld [vmem:[%s3342 + $0x58] sm:$0xf]
      %v3752 = vld [vmem:[%s3342 + $0x5c] sm:$0x1]
      %v3753 = vld [vmem:[%s3342 + $0x60] sm:$0xf]
      %v3754 = vld [vmem:[%s3342 + $0x64] sm:$0xf]
      %v3755 = vld [vmem:[%s3342 + $0x68] sm:$0x1]
      %v3756 = vld [vmem:[%s3342 + $0x6c] sm:$0xf]
      %v3757 = vld [vmem:[%s3342 + $0x70] sm:$0xf]
      %v3758 = vld [vmem:[%s3342 + $0x74] sm:$0x1]
      %v3759 = vld [vmem:[%s3342 + $0x78] sm:$0xf]
      %v3760 = vld [vmem:[%s3342 + $0x7c] sm:$0xf]
      %v3761 = vld [vmem:[%s3342 + $0x80] sm:$0x1]
      %v3762 = vld [vmem:[%s3342 + $0x84] sm:$0xf]
      %v3763 = vld [vmem:[%s3342 + $0x88] sm:$0xf]
      %v3764 = vld [vmem:[%s3342 + $0x8c] sm:$0x1]
      %v3765 = vld [vmem:[%s3342 + $0x90] sm:$0xf]
      %v3766 = vld [vmem:[%s3342 + $0x94] sm:$0xf]
      %v3767 = vld [vmem:[%s3342 + $0x98] sm:$0x1]
      %v3768 = vld [vmem:[%s3342 + $0x9c] sm:$0xf]
      %v3769 = vld [vmem:[%s3342 + $0xa0] sm:$0xf]
      %v3770 = vld [vmem:[%s3342 + $0xa4] sm:$0x1]
      %v3771 = vld [vmem:[%s3342 + $0xa8] sm:$0xf]
      %v3772 = vld [vmem:[%s3342 + $0xac] sm:$0xf]
      %v3773 = vld [vmem:[%s3342 + $0xb0] sm:$0x1]
      %v3774 = vld [vmem:[%s3342 + $0xb4] sm:$0xf]
      %v3775 = vld [vmem:[%s3342 + $0xb8] sm:$0xf]
      %v3776 = vld [vmem:[%s3342 + $0xbc] sm:$0x1]
      %v3778 = vshrl.u32 %v3729, 16
      %v3780 = vrot.slane %v3778, 4
      %v3781 = vshll.u32 %v3729, 16
      %v3783 = vrot.slane %v3781, 5
      %v3784 = vor.u32 %v3780, %v3783
      %v3785 = vrot.slane %v3784, 4
      %v3787 = vshll.u32 %v3730, 16
      %v3789 = vrot.slane %v3787, 5
      %v3790 = vsel %vm238, %v3785, %v3789
      %v3791 = vshrl.u32 %v3730, 16
      %v3793 = vrot.slane %v3791, 4
      %v3794 = vor.u32 %v3793, %v3789
      %v3795 = vrot.slane %v3794, 4
      %v3797 = vshll.u32 %v3731, 16
      %v3799 = vrot.slane %v3797, 5
      %v3800 = vsel %vm238, %v3795, %v3799
      %v3802 = vshrl.u32 %v3732, 16
      %v3804 = vrot.slane %v3802, 4
      %v3805 = vshll.u32 %v3732, 16
      %v3807 = vrot.slane %v3805, 5
      %v3808 = vor.u32 %v3804, %v3807
      %v3809 = vrot.slane %v3808, 4
      %v3811 = vshll.u32 %v3733, 16
      %v3813 = vrot.slane %v3811, 5
      %v3814 = vsel %vm238, %v3809, %v3813
      %v3815 = vshrl.u32 %v3733, 16
      %v3817 = vrot.slane %v3815, 4
      %v3818 = vor.u32 %v3817, %v3813
      %v3819 = vrot.slane %v3818, 4
      %v3821 = vshll.u32 %v3734, 16
      %v3823 = vrot.slane %v3821, 5
      %v3824 = vsel %vm238, %v3819, %v3823
      %v3826 = vshrl.u32 %v3735, 16
      %v3828 = vrot.slane %v3826, 4
      %v3829 = vshll.u32 %v3735, 16
      %v3831 = vrot.slane %v3829, 5
      %v3832 = vor.u32 %v3828, %v3831
      %v3833 = vrot.slane %v3832, 4
      %v3835 = vshll.u32 %v3736, 16
      %v3837 = vrot.slane %v3835, 5
      %v3838 = vsel %vm238, %v3833, %v3837
      %v3839 = vshrl.u32 %v3736, 16
      %v3841 = vrot.slane %v3839, 4
      %v3842 = vor.u32 %v3841, %v3837
      %v3843 = vrot.slane %v3842, 4
      %v3845 = vshll.u32 %v3737, 16
      %v3847 = vrot.slane %v3845, 5
      %v3848 = vsel %vm238, %v3843, %v3847
      %v3850 = vshrl.u32 %v3738, 16
      %v3852 = vrot.slane %v3850, 4
      %v3853 = vshll.u32 %v3738, 16
      %v3855 = vrot.slane %v3853, 5
      %v3856 = vor.u32 %v3852, %v3855
      %v3857 = vrot.slane %v3856, 4
      %v3859 = vshll.u32 %v3739, 16
      %v3861 = vrot.slane %v3859, 5
      %v3862 = vsel %vm238, %v3857, %v3861
      %v3863 = vshrl.u32 %v3739, 16
      %v3865 = vrot.slane %v3863, 4
      %v3866 = vor.u32 %v3865, %v3861
      %v3867 = vrot.slane %v3866, 4
      %v3869 = vshll.u32 %v3740, 16
      %v3871 = vrot.slane %v3869, 5
      %v3872 = vsel %vm238, %v3867, %v3871
      %v3874 = vshrl.u32 %v3741, 16
      %v3876 = vrot.slane %v3874, 4
      %v3877 = vshll.u32 %v3741, 16
      %v3879 = vrot.slane %v3877, 5
      %v3880 = vor.u32 %v3876, %v3879
      %v3881 = vrot.slane %v3880, 4
      %v3883 = vshll.u32 %v3742, 16
      %v3885 = vrot.slane %v3883, 5
      %v3886 = vsel %vm238, %v3881, %v3885
      %v3887 = vshrl.u32 %v3742, 16
      %v3889 = vrot.slane %v3887, 4
      %v3890 = vor.u32 %v3889, %v3885
      %v3891 = vrot.slane %v3890, 4
      %v3893 = vshll.u32 %v3743, 16
      %v3895 = vrot.slane %v3893, 5
      %v3896 = vsel %vm238, %v3891, %v3895
      %v3898 = vshrl.u32 %v3744, 16
      %v3900 = vrot.slane %v3898, 4
      %v3901 = vshll.u32 %v3744, 16
      %v3903 = vrot.slane %v3901, 5
      %v3904 = vor.u32 %v3900, %v3903
      %v3905 = vrot.slane %v3904, 4
      %v3907 = vshll.u32 %v3745, 16
      %v3909 = vrot.slane %v3907, 5
      %v3910 = vsel %vm238, %v3905, %v3909
      %v3911 = vshrl.u32 %v3745, 16
      %v3913 = vrot.slane %v3911, 4
      %v3914 = vor.u32 %v3913, %v3909
      %v3915 = vrot.slane %v3914, 4
      %v3917 = vshll.u32 %v3746, 16
      %v3919 = vrot.slane %v3917, 5
      %v3920 = vsel %vm238, %v3915, %v3919
      %v3922 = vshrl.u32 %v3747, 16
      %v3924 = vrot.slane %v3922, 4
      %v3925 = vshll.u32 %v3747, 16
      %v3927 = vrot.slane %v3925, 5
      %v3928 = vor.u32 %v3924, %v3927
      %v3929 = vrot.slane %v3928, 4
      %v3931 = vshll.u32 %v3748, 16
      %v3933 = vrot.slane %v3931, 5
      %v3934 = vsel %vm238, %v3929, %v3933
      %v3935 = vshrl.u32 %v3748, 16
      %v3937 = vrot.slane %v3935, 4
      %v3938 = vor.u32 %v3937, %v3933
      %v3939 = vrot.slane %v3938, 4
      %v3941 = vshll.u32 %v3749, 16
      %v3943 = vrot.slane %v3941, 5
      %v3944 = vsel %vm238, %v3939, %v3943
      %v3946 = vshrl.u32 %v3750, 16
      %v3948 = vrot.slane %v3946, 4
      %v3949 = vshll.u32 %v3750, 16
      %v3951 = vrot.slane %v3949, 5
      %v3952 = vor.u32 %v3948, %v3951
      %v3953 = vrot.slane %v3952, 4
      %v3955 = vshll.u32 %v3751, 16
      %v3957 = vrot.slane %v3955, 5
      %v3958 = vsel %vm238, %v3953, %v3957
      %v3959 = vshrl.u32 %v3751, 16
      %v3961 = vrot.slane %v3959, 4
      %v3962 = vor.u32 %v3961, %v3957
      %v3963 = vrot.slane %v3962, 4
      %v3965 = vshll.u32 %v3752, 16
      %v3967 = vrot.slane %v3965, 5
      %v3968 = vsel %vm238, %v3963, %v3967
      %v3970 = vshrl.u32 %v3753, 16
      %v3972 = vrot.slane %v3970, 4
      %v3973 = vshll.u32 %v3753, 16
      %v3975 = vrot.slane %v3973, 5
      %v3976 = vor.u32 %v3972, %v3975
      %v3977 = vrot.slane %v3976, 4
      %v3979 = vshll.u32 %v3754, 16
      %v3981 = vrot.slane %v3979, 5
      %v3982 = vsel %vm238, %v3977, %v3981
      %v3983 = vshrl.u32 %v3754, 16
      %v3985 = vrot.slane %v3983, 4
      %v3986 = vor.u32 %v3985, %v3981
      %v3987 = vrot.slane %v3986, 4
      %v3989 = vshll.u32 %v3755, 16
      %v3991 = vrot.slane %v3989, 5
      %v3992 = vsel %vm238, %v3987, %v3991
      %v3994 = vshrl.u32 %v3756, 16
      %v3996 = vrot.slane %v3994, 4
      %v3997 = vshll.u32 %v3756, 16
      %v3999 = vrot.slane %v3997, 5
      %v4000 = vor.u32 %v3996, %v3999
      %v4001 = vrot.slane %v4000, 4
      %v4003 = vshll.u32 %v3757, 16
      %v4005 = vrot.slane %v4003, 5
      %v4006 = vsel %vm238, %v4001, %v4005
      %v4007 = vshrl.u32 %v3757, 16
      %v4009 = vrot.slane %v4007, 4
      %v4010 = vor.u32 %v4009, %v4005
      %v4011 = vrot.slane %v4010, 4
      %v4013 = vshll.u32 %v3758, 16
      %v4015 = vrot.slane %v4013, 5
      %v4016 = vsel %vm238, %v4011, %v4015
      %v4018 = vshrl.u32 %v3759, 16
      %v4020 = vrot.slane %v4018, 4
      %v4021 = vshll.u32 %v3759, 16
      %v4023 = vrot.slane %v4021, 5
      %v4024 = vor.u32 %v4020, %v4023
      %v4025 = vrot.slane %v4024, 4
      %v4027 = vshll.u32 %v3760, 16
      %v4029 = vrot.slane %v4027, 5
      %v4030 = vsel %vm238, %v4025, %v4029
      %v4031 = vshrl.u32 %v3760, 16
      %v4033 = vrot.slane %v4031, 4
      %v4034 = vor.u32 %v4033, %v4029
      %v4035 = vrot.slane %v4034, 4
      %v4037 = vshll.u32 %v3761, 16
      %v4039 = vrot.slane %v4037, 5
      %v4040 = vsel %vm238, %v4035, %v4039
      %v4042 = vshrl.u32 %v3762, 16
      %v4044 = vrot.slane %v4042, 4
      %v4045 = vshll.u32 %v3762, 16
      %v4047 = vrot.slane %v4045, 5
      %v4048 = vor.u32 %v4044, %v4047
      %v4049 = vrot.slane %v4048, 4
      %v4051 = vshll.u32 %v3763, 16
      %v4053 = vrot.slane %v4051, 5
      %v4054 = vsel %vm238, %v4049, %v4053
      %v4055 = vshrl.u32 %v3763, 16
      %v4057 = vrot.slane %v4055, 4
      %v4058 = vor.u32 %v4057, %v4053
      %v4059 = vrot.slane %v4058, 4
      %v4061 = vshll.u32 %v3764, 16
      %v4063 = vrot.slane %v4061, 5
      %v4064 = vsel %vm238, %v4059, %v4063
      %v4066 = vshrl.u32 %v3765, 16
      %v4068 = vrot.slane %v4066, 4
      %v4069 = vshll.u32 %v3765, 16
      %v4071 = vrot.slane %v4069, 5
      %v4072 = vor.u32 %v4068, %v4071
      %v4073 = vrot.slane %v4072, 4
      %v4075 = vshll.u32 %v3766, 16
      %v4077 = vrot.slane %v4075, 5
      %v4078 = vsel %vm238, %v4073, %v4077
      %v4079 = vshrl.u32 %v3766, 16
      %v4081 = vrot.slane %v4079, 4
      %v4082 = vor.u32 %v4081, %v4077
      %v4083 = vrot.slane %v4082, 4
      %v4085 = vshll.u32 %v3767, 16
      %v4087 = vrot.slane %v4085, 5
      %v4088 = vsel %vm238, %v4083, %v4087
      %v4090 = vshrl.u32 %v3768, 16
      %v4092 = vrot.slane %v4090, 4
      %v4093 = vshll.u32 %v3768, 16
      %v4095 = vrot.slane %v4093, 5
      %v4096 = vor.u32 %v4092, %v4095
      %v4097 = vrot.slane %v4096, 4
      %v4099 = vshll.u32 %v3769, 16
      %v4101 = vrot.slane %v4099, 5
      %v4102 = vsel %vm238, %v4097, %v4101
      %v4103 = vshrl.u32 %v3769, 16
      %v4105 = vrot.slane %v4103, 4
      %v4106 = vor.u32 %v4105, %v4101
      %v4107 = vrot.slane %v4106, 4
      %v4109 = vshll.u32 %v3770, 16
      %v4111 = vrot.slane %v4109, 5
      %v4112 = vsel %vm238, %v4107, %v4111
      %v4114 = vshrl.u32 %v3771, 16
      %v4116 = vrot.slane %v4114, 4
      %v4117 = vshll.u32 %v3771, 16
      %v4119 = vrot.slane %v4117, 5
      %v4120 = vor.u32 %v4116, %v4119
      %v4121 = vrot.slane %v4120, 4
      %v4123 = vshll.u32 %v3772, 16
      %v4125 = vrot.slane %v4123, 5
      %v4126 = vsel %vm238, %v4121, %v4125
      %v4127 = vshrl.u32 %v3772, 16
      %v4129 = vrot.slane %v4127, 4
      %v4130 = vor.u32 %v4129, %v4125
      %v4131 = vrot.slane %v4130, 4
      %v4133 = vshll.u32 %v3773, 16
      %v4135 = vrot.slane %v4133, 5
      %v4136 = vsel %vm238, %v4131, %v4135
      %v4138 = vshrl.u32 %v3774, 16
      %v4140 = vrot.slane %v4138, 4
      %v4141 = vshll.u32 %v3774, 16
      %v4143 = vrot.slane %v4141, 5
      %v4144 = vor.u32 %v4140, %v4143
      %v4145 = vrot.slane %v4144, 4
      %v4147 = vshll.u32 %v3775, 16
      %v4149 = vrot.slane %v4147, 5
      %v4150 = vsel %vm238, %v4145, %v4149
      %v4151 = vshrl.u32 %v3775, 16
      %v4153 = vrot.slane %v4151, 4
      %v4154 = vor.u32 %v4153, %v4149
      %v4155 = vrot.slane %v4154, 4
      %v4157 = vshll.u32 %v3776, 16
      %v4159 = vrot.slane %v4157, 5
      %v4160 = vsel %vm238, %v4155, %v4159
      %s4161 = scalar_lea.vmem %s1, 448
      %v4162 = vld [vmem:[%s4161] sm:$0xf]
      %v4163 = vld [vmem:[%s4161 + $0x4] sm:$0xf]
      %v4164 = vld [vmem:[%s4161 + $0x8] sm:$0xf]
      %v4165 = vld [vmem:[%s4161 + $0xc] sm:$0xf]
      %v4166 = vld [vmem:[%s4161 + $0x10] sm:$0xf]
      %v4167 = vld [vmem:[%s4161 + $0x14] sm:$0xf]
      %v4168 = vld [vmem:[%s4161 + $0x18] sm:$0xf]
      %v4169 = vld [vmem:[%s4161 + $0x1c] sm:$0xf]
      %v4170 = vld [vmem:[%s4161 + $0x20] sm:$0xf]
      %v4171 = vld [vmem:[%s4161 + $0x24] sm:$0xf]
      %v4172 = vld [vmem:[%s4161 + $0x28] sm:$0xf]
      %v4173 = vld [vmem:[%s4161 + $0x2c] sm:$0xf]
      %v4174 = vld [vmem:[%s4161 + $0x30] sm:$0xf]
      %v4175 = vld [vmem:[%s4161 + $0x34] sm:$0xf]
      %v4176 = vld [vmem:[%s4161 + $0x38] sm:$0xf]
      %v4177 = vld [vmem:[%s4161 + $0x3c] sm:$0xf]
      %v4178 = vunpack.c.l.b16 %v3790
      %v4179 = vunpack.c.l.b16 %v3800
      %v4180 = vunpack.c.l.b16 %v3814
      %v4181 = vunpack.c.l.b16 %v3824
      %v4182 = vunpack.c.l.b16 %v3838
      %v4183 = vunpack.c.l.b16 %v3848
      %v4184 = vunpack.c.l.b16 %v3862
      %v4185 = vunpack.c.l.b16 %v3872
      %v4186 = vunpack.c.l.b16 %v3886
      %v4187 = vunpack.c.l.b16 %v3896
      %v4188 = vunpack.c.l.b16 %v3910
      %v4189 = vunpack.c.l.b16 %v3920
      %v4190 = vunpack.c.l.b16 %v3934
      %v4191 = vunpack.c.l.b16 %v3944
      %v4192 = vunpack.c.l.b16 %v3958
      %v4193 = vunpack.c.l.b16 %v3968
      %v4194 = vunpack.c.l.b16 %v3982
      %v4195 = vunpack.c.l.b16 %v3992
      %v4196 = vunpack.c.l.b16 %v4006
      %v4197 = vunpack.c.l.b16 %v4016
      %v4198 = vunpack.c.l.b16 %v4030
      %v4199 = vunpack.c.l.b16 %v4040
      %v4200 = vunpack.c.l.b16 %v4054
      %v4201 = vunpack.c.l.b16 %v4064
      %v4202 = vunpack.c.l.b16 %v4078
      %v4203 = vunpack.c.l.b16 %v4088
      %v4204 = vunpack.c.l.b16 %v4102
      %v4205 = vunpack.c.l.b16 %v4112
      %v4206 = vunpack.c.l.b16 %v4126
      %v4207 = vunpack.c.l.b16 %v4136
      %v4208 = vunpack.c.l.b16 %v4150
      %v4209 = vunpack.c.l.b16 %v4160
      %v4210 = vpack.c.b16 %v4179, %v4178
      %v4211 = vpack.c.b16 %v4181, %v4180
      %v4212 = vpack.c.b16 %v4183, %v4182
      %v4213 = vpack.c.b16 %v4185, %v4184
      %v4214 = vpack.c.b16 %v4187, %v4186
      %v4215 = vpack.c.b16 %v4189, %v4188
      %v4216 = vpack.c.b16 %v4191, %v4190
      %v4217 = vpack.c.b16 %v4193, %v4192
      %v4218 = vpack.c.b16 %v4195, %v4194
      %v4219 = vpack.c.b16 %v4197, %v4196
      %v4220 = vpack.c.b16 %v4199, %v4198
      %v4221 = vpack.c.b16 %v4201, %v4200
      %v4222 = vpack.c.b16 %v4203, %v4202
      %v4223 = vpack.c.b16 %v4205, %v4204
      %v4224 = vpack.c.b16 %v4207, %v4206
      %v4225 = vpack.c.b16 %v4209, %v4208
      %v4258 = vunpack.c.l.b16 %v4162
      %v4259 = vunpack.c.l.b16 %v4163
      %v4260 = vunpack.c.l.b16 %v4164
      %v4261 = vunpack.c.l.b16 %v4165
      %v4262 = vunpack.c.l.b16 %v4166
      %v4263 = vunpack.c.l.b16 %v4167
      %v4264 = vunpack.c.l.b16 %v4168
      %v4265 = vunpack.c.l.b16 %v4169
      %v4266 = vunpack.c.l.b16 %v4170
      %v4267 = vunpack.c.l.b16 %v4171
      %v4268 = vunpack.c.l.b16 %v4172
      %v4269 = vunpack.c.l.b16 %v4173
      %v4270 = vunpack.c.l.b16 %v4174
      %v4271 = vunpack.c.l.b16 %v4175
      %v4272 = vunpack.c.l.b16 %v4176
      %v4273 = vunpack.c.l.b16 %v4177
      %v4274 = vpack.c.b16 %v4259, %v4258
      %v4275 = vpack.c.b16 %v4261, %v4260
      %v4276 = vpack.c.b16 %v4263, %v4262
      %v4277 = vpack.c.b16 %v4265, %v4264
      %v4278 = vpack.c.b16 %v4267, %v4266
      %v4279 = vpack.c.b16 %v4269, %v4268
      %v4280 = vpack.c.b16 %v4271, %v4270
      %v4281 = vpack.c.b16 %v4273, %v4272
      %4290 = vmatprep.subr.bf16.mxu0 0
      %4291 = vmatpush1.bf16.msra.mxu0 %v4281
      %4292 = vmatprep.subr.bf16.mxu0 0
      %4293 = vmatpush1.bf16.msra.mxu0 %v4280
      %4294 = vmatprep.subr.bf16.mxu0 0
      %4295 = vmatpush1.bf16.msra.mxu0 %v4279
      %4296 = vmatprep.subr.bf16.mxu0 0
      %4297 = vmatpush1.bf16.msra.mxu0 %v4278
      %4298 = vmatprep.subr.bf16.mxu0 0
      %4299 = vmatpush1.bf16.msra.mxu0 %v4277
      %4300 = vmatprep.subr.bf16.mxu0 0
      %4301 = vmatpush1.bf16.msra.mxu0 %v4276
      %4302 = vmatprep.subr.bf16.mxu0 0
      %4303 = vmatpush1.bf16.msra.mxu0 %v4275
      %4304 = vmatprep.subr.bf16.mxu0 0
      %4305 = vmatpush1.bf16.msra.mxu0 %v4274
      %4306 = vmatprep.subr.bf16.mxu0 0
      %4307 = vmatpush2.bf16.msra.mxu0 0
      %4308 = vmatprep.subr.bf16.mxu0 0
      %4309 = vmatpush2.bf16.msra.mxu0 0
      %4310 = vmatprep.subr.bf16.mxu0 0
      %4311 = vmatpush2.bf16.msra.mxu0 0
      %4312 = vmatprep.subr.bf16.mxu0 0
      %4313 = vmatpush2.bf16.msra.mxu0 0
      %4314 = vmatprep.subr.bf16.mxu0 0
      %4315 = vmatpush2.bf16.msra.mxu0 0
      %4316 = vmatprep.subr.bf16.mxu0 0
      %4317 = vmatpush2.bf16.msra.mxu0 0
      %4318 = vmatprep.subr.bf16.mxu0 0
      %4319 = vmatpush2.bf16.msra.mxu0 0
      %4320 = vmatprep.subr.bf16.mxu0 0
      %4321 = vmatpush2.bf16.msra.mxu0 0
      %4322 = vmatprep.mubr.bf16.mxu0 0
      %4323 = vmatmul.mubr.bf16.gmra.mxu0 %v4210
      %v4324 = vpop.f32.mrf.mxu0
      %v4325 = vadd.f32 0.0, %v4324
      %v4326 = vpop.f32.mrf.mxu0
      %v4327 = vpop.f32.mrf.mxu0
      %v4328 = vadd.f32 0.0, %v4327
      %v4329 = vpop.f32.mrf.mxu0
      %4330 = vmatprep.mubr.bf16.mxu0 0
      %4331 = vmatmul.mubr.bf16.gmra.mxu0 %v4211
      %v4332 = vpop.f32.mrf.mxu0
      %v4333 = vadd.f32 0.0, %v4332
      %v4334 = vpop.f32.mrf.mxu0
      %v4335 = vpop.f32.mrf.mxu0
      %v4336 = vadd.f32 0.0, %v4335
      %v4337 = vpop.f32.mrf.mxu0
      %4338 = vmatprep.mubr.bf16.mxu0 0
      %4339 = vmatmul.mubr.bf16.gmra.mxu0 %v4212
      %v4340 = vpop.f32.mrf.mxu0
      %v4341 = vadd.f32 0.0, %v4340
      %v4342 = vpop.f32.mrf.mxu0
      %v4343 = vpop.f32.mrf.mxu0
      %v4344 = vadd.f32 0.0, %v4343
      %v4345 = vpop.f32.mrf.mxu0
      %4346 = vmatprep.mubr.bf16.mxu0 0
      %4347 = vmatmul.mubr.bf16.gmra.mxu0 %v4213
      %v4348 = vpop.f32.mrf.mxu0
      %v4349 = vadd.f32 0.0, %v4348
      %v4350 = vpop.f32.mrf.mxu0
      %v4351 = vpop.f32.mrf.mxu0
      %v4352 = vadd.f32 0.0, %v4351
      %v4353 = vpop.f32.mrf.mxu0
      %4354 = vmatprep.mubr.bf16.mxu0 0
      %4355 = vmatmul.mubr.bf16.gmra.mxu0 %v4214
      %v4356 = vpop.f32.mrf.mxu0
      %v4357 = vadd.f32 0.0, %v4356
      %v4358 = vpop.f32.mrf.mxu0
      %v4359 = vpop.f32.mrf.mxu0
      %v4360 = vadd.f32 0.0, %v4359
      %v4361 = vpop.f32.mrf.mxu0
      %4362 = vmatprep.mubr.bf16.mxu0 0
      %4363 = vmatmul.mubr.bf16.gmra.mxu0 %v4215
      %v4364 = vpop.f32.mrf.mxu0
      %v4365 = vadd.f32 0.0, %v4364
      %v4366 = vpop.f32.mrf.mxu0
      %v4367 = vpop.f32.mrf.mxu0
      %v4368 = vadd.f32 0.0, %v4367
      %v4369 = vpop.f32.mrf.mxu0
      %4370 = vmatprep.mubr.bf16.mxu0 0
      %4371 = vmatmul.mubr.bf16.gmra.mxu0 %v4216
      %v4372 = vpop.f32.mrf.mxu0
      %v4373 = vadd.f32 0.0, %v4372
      %v4374 = vpop.f32.mrf.mxu0
      %v4375 = vpop.f32.mrf.mxu0
      %v4376 = vadd.f32 0.0, %v4375
      %v4377 = vpop.f32.mrf.mxu0
      %4378 = vmatprep.mubr.bf16.mxu0 0
      %4379 = vmatmul.mubr.bf16.gmra.mxu0 %v4217
      %v4380 = vpop.f32.mrf.mxu0
      %v4381 = vadd.f32 0.0, %v4380
      %v4382 = vpop.f32.mrf.mxu0
      %v4383 = vpop.f32.mrf.mxu0
      %v4384 = vadd.f32 0.0, %v4383
      %v4385 = vpop.f32.mrf.mxu0
      %4386 = vmatprep.mubr.bf16.mxu0 0
      %4387 = vmatmul.mubr.bf16.gmra.mxu0 %v4218
      %v4388 = vpop.f32.mrf.mxu0
      %v4389 = vadd.f32 0.0, %v4388
      %v4390 = vpop.f32.mrf.mxu0
      %v4391 = vpop.f32.mrf.mxu0
      %v4392 = vadd.f32 0.0, %v4391
      %v4393 = vpop.f32.mrf.mxu0
      %4394 = vmatprep.mubr.bf16.mxu0 0
      %4395 = vmatmul.mubr.bf16.gmra.mxu0 %v4219
      %v4396 = vpop.f32.mrf.mxu0
      %v4397 = vadd.f32 0.0, %v4396
      %v4398 = vpop.f32.mrf.mxu0
      %v4399 = vpop.f32.mrf.mxu0
      %v4400 = vadd.f32 0.0, %v4399
      %v4401 = vpop.f32.mrf.mxu0
      %4402 = vmatprep.mubr.bf16.mxu0 0
      %4403 = vmatmul.mubr.bf16.gmra.mxu0 %v4220
      %v4404 = vpop.f32.mrf.mxu0
      %v4405 = vadd.f32 0.0, %v4404
      %v4406 = vpop.f32.mrf.mxu0
      %v4407 = vpop.f32.mrf.mxu0
      %v4408 = vadd.f32 0.0, %v4407
      %v4409 = vpop.f32.mrf.mxu0
      %4410 = vmatprep.mubr.bf16.mxu0 0
      %4411 = vmatmul.mubr.bf16.gmra.mxu0 %v4221
      %v4412 = vpop.f32.mrf.mxu0
      %v4413 = vadd.f32 0.0, %v4412
      %v4414 = vpop.f32.mrf.mxu0
      %v4415 = vpop.f32.mrf.mxu0
      %v4416 = vadd.f32 0.0, %v4415
      %v4417 = vpop.f32.mrf.mxu0
      %4418 = vmatprep.mubr.bf16.mxu0 0
      %4419 = vmatmul.mubr.bf16.gmra.mxu0 %v4222
      %v4420 = vpop.f32.mrf.mxu0
      %v4421 = vadd.f32 0.0, %v4420
      %v4422 = vpop.f32.mrf.mxu0
      %v4423 = vpop.f32.mrf.mxu0
      %v4424 = vadd.f32 0.0, %v4423
      %v4425 = vpop.f32.mrf.mxu0
      %4426 = vmatprep.mubr.bf16.mxu0 0
      %4427 = vmatmul.mubr.bf16.gmra.mxu0 %v4223
      %v4428 = vpop.f32.mrf.mxu0
      %v4429 = vadd.f32 0.0, %v4428
      %v4430 = vpop.f32.mrf.mxu0
      %v4431 = vpop.f32.mrf.mxu0
      %v4432 = vadd.f32 0.0, %v4431
      %v4433 = vpop.f32.mrf.mxu0
      %4434 = vmatprep.mubr.bf16.mxu0 0
      %4435 = vmatmul.mubr.bf16.gmra.mxu0 %v4224
      %v4436 = vpop.f32.mrf.mxu0
      %v4437 = vadd.f32 0.0, %v4436
      %v4438 = vpop.f32.mrf.mxu0
      %v4439 = vpop.f32.mrf.mxu0
      %v4440 = vadd.f32 0.0, %v4439
      %v4441 = vpop.f32.mrf.mxu0
      %4442 = vmatprep.mubr.bf16.mxu0 0
      %4443 = vmatmul.mubr.bf16.gmra.mxu0 %v4225
      %v4444 = vpop.f32.mrf.mxu0
      %v4445 = vadd.f32 0.0, %v4444
      %v4446 = vpop.f32.mrf.mxu0
      %v4447 = vpop.f32.mrf.mxu0
      %v4448 = vadd.f32 0.0, %v4447
      %v4449 = vpop.f32.mrf.mxu0
      %4450 = vdwg.mxu0
      %v4451 = vadd.f32 %v3697, %v4325
      %v4452 = vadd.f32 %v3698, %v4328
      %v4453 = vadd.f32 %v3699, %v4333
      %v4454 = vadd.f32 %v3700, %v4336
      %v4455 = vadd.f32 %v3701, %v4341
      %v4456 = vadd.f32 %v3702, %v4344
      %v4457 = vadd.f32 %v3703, %v4349
      %v4458 = vadd.f32 %v3704, %v4352
      %v4459 = vadd.f32 %v3705, %v4357
      %v4460 = vadd.f32 %v3706, %v4360
      %v4461 = vadd.f32 %v3707, %v4365
      %v4462 = vadd.f32 %v3708, %v4368
      %v4463 = vadd.f32 %v3709, %v4373
      %v4464 = vadd.f32 %v3710, %v4376
      %v4465 = vadd.f32 %v3711, %v4381
      %v4466 = vadd.f32 %v3712, %v4384
      %v4467 = vadd.f32 %v3713, %v4389
      %v4468 = vadd.f32 %v3714, %v4392
      %v4469 = vadd.f32 %v3715, %v4397
      %v4470 = vadd.f32 %v3716, %v4400
      %v4471 = vadd.f32 %v3717, %v4405
      %v4472 = vadd.f32 %v3718, %v4408
      %v4473 = vadd.f32 %v3719, %v4413
      %v4474 = vadd.f32 %v3720, %v4416
      %v4475 = vadd.f32 %v3721, %v4421
      %v4476 = vadd.f32 %v3722, %v4424
      %v4477 = vadd.f32 %v3723, %v4429
      %v4478 = vadd.f32 %v3724, %v4432
      %v4479 = vadd.f32 %v3725, %v4437
      %v4480 = vadd.f32 %v3726, %v4440
      %v4481 = vadd.f32 %v3727, %v4445
      %v4482 = vadd.f32 %v3728, %v4448
      %v4483 = vld [vmem:[%s3342] sm:$0xe]
      %v4484 = vld [vmem:[%s3342 + $0xc] sm:$0xe]
      %v4485 = vld [vmem:[%s3342 + $0x18] sm:$0xe]
      %v4486 = vld [vmem:[%s3342 + $0x24] sm:$0xe]
      %v4487 = vld [vmem:[%s3342 + $0x30] sm:$0xe]
      %v4488 = vld [vmem:[%s3342 + $0x3c] sm:$0xe]
      %v4489 = vld [vmem:[%s3342 + $0x48] sm:$0xe]
      %v4490 = vld [vmem:[%s3342 + $0x54] sm:$0xe]
      %v4491 = vld [vmem:[%s3342 + $0x60] sm:$0xe]
      %v4492 = vld [vmem:[%s3342 + $0x6c] sm:$0xe]
      %v4493 = vld [vmem:[%s3342 + $0x78] sm:$0xe]
      %v4494 = vld [vmem:[%s3342 + $0x84] sm:$0xe]
      %v4495 = vld [vmem:[%s3342 + $0x90] sm:$0xe]
      %v4496 = vld [vmem:[%s3342 + $0x9c] sm:$0xe]
      %v4497 = vld [vmem:[%s3342 + $0xa8] sm:$0xe]
      %v4498 = vld [vmem:[%s3342 + $0xb4] sm:$0xe]
      %v4547 = vrot.slane %v4483, 5
      %v4548 = vrot.slane %v4547, 4
      %v4549 = vrot.slane %v3730, 5
      %v4550 = vsel %vm1268, %v4548, %v4549
      %v4551 = vrot.slane %v4549, 4
      %v4552 = vrot.slane %v3731, 5
      %v4553 = vsel %vm1268, %v4551, %v4552
      %v4554 = vrot.slane %v4484, 5
      %v4555 = vrot.slane %v4554, 4
      %v4556 = vrot.slane %v3733, 5
      %v4557 = vsel %vm1268, %v4555, %v4556
      %v4558 = vrot.slane %v4556, 4
      %v4559 = vrot.slane %v3734, 5
      %v4560 = vsel %vm1268, %v4558, %v4559
      %v4561 = vrot.slane %v4485, 5
      %v4562 = vrot.slane %v4561, 4
      %v4563 = vrot.slane %v3736, 5
      %v4564 = vsel %vm1268, %v4562, %v4563
      %v4565 = vrot.slane %v4563, 4
      %v4566 = vrot.slane %v3737, 5
      %v4567 = vsel %vm1268, %v4565, %v4566
      %v4568 = vrot.slane %v4486, 5
      %v4569 = vrot.slane %v4568, 4
      %v4570 = vrot.slane %v3739, 5
      %v4571 = vsel %vm1268, %v4569, %v4570
      %v4572 = vrot.slane %v4570, 4
      %v4573 = vrot.slane %v3740, 5
      %v4574 = vsel %vm1268, %v4572, %v4573
      %v4575 = vrot.slane %v4487, 5
      %v4576 = vrot.slane %v4575, 4
      %v4577 = vrot.slane %v3742, 5
      %v4578 = vsel %vm1268, %v4576, %v4577
      %v4579 = vrot.slane %v4577, 4
      %v4580 = vrot.slane %v3743, 5
      %v4581 = vsel %vm1268, %v4579, %v4580
      %v4582 = vrot.slane %v4488, 5
      %v4583 = vrot.slane %v4582, 4
      %v4584 = vrot.slane %v3745, 5
      %v4585 = vsel %vm1268, %v4583, %v4584
      %v4586 = vrot.slane %v4584, 4
      %v4587 = vrot.slane %v3746, 5
      %v4588 = vsel %vm1268, %v4586, %v4587
      %v4589 = vrot.slane %v4489, 5
      %v4590 = vrot.slane %v4589, 4
      %v4591 = vrot.slane %v3748, 5
      %v4592 = vsel %vm1268, %v4590, %v4591
      %v4593 = vrot.slane %v4591, 4
      %v4594 = vrot.slane %v3749, 5
      %v4595 = vsel %vm1268, %v4593, %v4594
      %v4596 = vrot.slane %v4490, 5
      %v4597 = vrot.slane %v4596, 4
      %v4598 = vrot.slane %v3751, 5
      %v4599 = vsel %vm1268, %v4597, %v4598
      %v4600 = vrot.slane %v4598, 4
      %v4601 = vrot.slane %v3752, 5
      %v4602 = vsel %vm1268, %v4600, %v4601
      %v4603 = vrot.slane %v4491, 5
      %v4604 = vrot.slane %v4603, 4
      %v4605 = vrot.slane %v3754, 5
      %v4606 = vsel %vm1268, %v4604, %v4605
      %v4607 = vrot.slane %v4605, 4
      %v4608 = vrot.slane %v3755, 5
      %v4609 = vsel %vm1268, %v4607, %v4608
      %v4610 = vrot.slane %v4492, 5
      %v4611 = vrot.slane %v4610, 4
      %v4612 = vrot.slane %v3757, 5
      %v4613 = vsel %vm1268, %v4611, %v4612
      %v4614 = vrot.slane %v4612, 4
      %v4615 = vrot.slane %v3758, 5
      %v4616 = vsel %vm1268, %v4614, %v4615
      %v4617 = vrot.slane %v4493, 5
      %v4618 = vrot.slane %v4617, 4
      %v4619 = vrot.slane %v3760, 5
      %v4620 = vsel %vm1268, %v4618, %v4619
      %v4621 = vrot.slane %v4619, 4
      %v4622 = vrot.slane %v3761, 5
      %v4623 = vsel %vm1268, %v4621, %v4622
      %v4624 = vrot.slane %v4494, 5
      %v4625 = vrot.slane %v4624, 4
      %v4626 = vrot.slane %v3763, 5
      %v4627 = vsel %vm1268, %v4625, %v4626
      %v4628 = vrot.slane %v4626, 4
      %v4629 = vrot.slane %v3764, 5
      %v4630 = vsel %vm1268, %v4628, %v4629
      %v4631 = vrot.slane %v4495, 5
      %v4632 = vrot.slane %v4631, 4
      %v4633 = vrot.slane %v3766, 5
      %v4634 = vsel %vm1268, %v4632, %v4633
      %v4635 = vrot.slane %v4633, 4
      %v4636 = vrot.slane %v3767, 5
      %v4637 = vsel %vm1268, %v4635, %v4636
      %v4638 = vrot.slane %v4496, 5
      %v4639 = vrot.slane %v4638, 4
      %v4640 = vrot.slane %v3769, 5
      %v4641 = vsel %vm1268, %v4639, %v4640
      %v4642 = vrot.slane %v4640, 4
      %v4643 = vrot.slane %v3770, 5
      %v4644 = vsel %vm1268, %v4642, %v4643
      %v4645 = vrot.slane %v4497, 5
      %v4646 = vrot.slane %v4645, 4
      %v4647 = vrot.slane %v3772, 5
      %v4648 = vsel %vm1268, %v4646, %v4647
      %v4649 = vrot.slane %v4647, 4
      %v4650 = vrot.slane %v3773, 5
      %v4651 = vsel %vm1268, %v4649, %v4650
      %v4652 = vrot.slane %v4498, 5
      %v4653 = vrot.slane %v4652, 4
      %v4654 = vrot.slane %v3775, 5
      %v4655 = vsel %vm1268, %v4653, %v4654
      %v4656 = vrot.slane %v4654, 4
      %v4657 = vrot.slane %v3776, 5
      %v4658 = vsel %vm1268, %v4656, %v4657
      %s4659 = scalar_lea.vmem %s1, 512
      %v4660 = vld [vmem:[%s4659] sm:$0xf]
      %v4661 = vld [vmem:[%s4659 + $0x4] sm:$0xf]
      %v4662 = vld [vmem:[%s4659 + $0x8] sm:$0xf]
      %v4663 = vld [vmem:[%s4659 + $0xc] sm:$0xf]
      %v4664 = vld [vmem:[%s4659 + $0x10] sm:$0xf]
      %v4665 = vld [vmem:[%s4659 + $0x14] sm:$0xf]
      %v4666 = vld [vmem:[%s4659 + $0x18] sm:$0xf]
      %v4667 = vld [vmem:[%s4659 + $0x1c] sm:$0xf]
      %v4668 = vld [vmem:[%s4659 + $0x20] sm:$0xf]
      %v4669 = vld [vmem:[%s4659 + $0x24] sm:$0xf]
      %v4670 = vld [vmem:[%s4659 + $0x28] sm:$0xf]
      %v4671 = vld [vmem:[%s4659 + $0x2c] sm:$0xf]
      %v4672 = vld [vmem:[%s4659 + $0x30] sm:$0xf]
      %v4673 = vld [vmem:[%s4659 + $0x34] sm:$0xf]
      %v4674 = vld [vmem:[%s4659 + $0x38] sm:$0xf]
      %v4675 = vld [vmem:[%s4659 + $0x3c] sm:$0xf]
      %v4676 = vunpack.c.l.b16 %v4550
      %v4677 = vunpack.c.l.b16 %v4553
      %v4678 = vunpack.c.l.b16 %v4557
      %v4679 = vunpack.c.l.b16 %v4560
      %v4680 = vunpack.c.l.b16 %v4564
      %v4681 = vunpack.c.l.b16 %v4567
      %v4682 = vunpack.c.l.b16 %v4571
      %v4683 = vunpack.c.l.b16 %v4574
      %v4684 = vunpack.c.l.b16 %v4578
      %v4685 = vunpack.c.l.b16 %v4581
      %v4686 = vunpack.c.l.b16 %v4585
      %v4687 = vunpack.c.l.b16 %v4588
      %v4688 = vunpack.c.l.b16 %v4592
      %v4689 = vunpack.c.l.b16 %v4595
      %v4690 = vunpack.c.l.b16 %v4599
      %v4691 = vunpack.c.l.b16 %v4602
      %v4692 = vunpack.c.l.b16 %v4606
      %v4693 = vunpack.c.l.b16 %v4609
      %v4694 = vunpack.c.l.b16 %v4613
      %v4695 = vunpack.c.l.b16 %v4616
      %v4696 = vunpack.c.l.b16 %v4620
      %v4697 = vunpack.c.l.b16 %v4623
      %v4698 = vunpack.c.l.b16 %v4627
      %v4699 = vunpack.c.l.b16 %v4630
      %v4700 = vunpack.c.l.b16 %v4634
      %v4701 = vunpack.c.l.b16 %v4637
      %v4702 = vunpack.c.l.b16 %v4641
      %v4703 = vunpack.c.l.b16 %v4644
      %v4704 = vunpack.c.l.b16 %v4648
      %v4705 = vunpack.c.l.b16 %v4651
      %v4706 = vunpack.c.l.b16 %v4655
      %v4707 = vunpack.c.l.b16 %v4658
      %v4708 = vpack.c.b16 %v4677, %v4676
      %v4709 = vpack.c.b16 %v4679, %v4678
      %v4710 = vpack.c.b16 %v4681, %v4680
      %v4711 = vpack.c.b16 %v4683, %v4682
      %v4712 = vpack.c.b16 %v4685, %v4684
      %v4713 = vpack.c.b16 %v4687, %v4686
      %v4714 = vpack.c.b16 %v4689, %v4688
      %v4715 = vpack.c.b16 %v4691, %v4690
      %v4716 = vpack.c.b16 %v4693, %v4692
      %v4717 = vpack.c.b16 %v4695, %v4694
      %v4718 = vpack.c.b16 %v4697, %v4696
      %v4719 = vpack.c.b16 %v4699, %v4698
      %v4720 = vpack.c.b16 %v4701, %v4700
      %v4721 = vpack.c.b16 %v4703, %v4702
      %v4722 = vpack.c.b16 %v4705, %v4704
      %v4723 = vpack.c.b16 %v4707, %v4706
      %v4756 = vunpack.c.l.b16 %v4660
      %v4757 = vunpack.c.l.b16 %v4661
      %v4758 = vunpack.c.l.b16 %v4662
      %v4759 = vunpack.c.l.b16 %v4663
      %v4760 = vunpack.c.l.b16 %v4664
      %v4761 = vunpack.c.l.b16 %v4665
      %v4762 = vunpack.c.l.b16 %v4666
      %v4763 = vunpack.c.l.b16 %v4667
      %v4764 = vunpack.c.l.b16 %v4668
      %v4765 = vunpack.c.l.b16 %v4669
      %v4766 = vunpack.c.l.b16 %v4670
      %v4767 = vunpack.c.l.b16 %v4671
      %v4768 = vunpack.c.l.b16 %v4672
      %v4769 = vunpack.c.l.b16 %v4673
      %v4770 = vunpack.c.l.b16 %v4674
      %v4771 = vunpack.c.l.b16 %v4675
      %v4772 = vpack.c.b16 %v4757, %v4756
      %v4773 = vpack.c.b16 %v4759, %v4758
      %v4774 = vpack.c.b16 %v4761, %v4760
      %v4775 = vpack.c.b16 %v4763, %v4762
      %v4776 = vpack.c.b16 %v4765, %v4764
      %v4777 = vpack.c.b16 %v4767, %v4766
      %v4778 = vpack.c.b16 %v4769, %v4768
      %v4779 = vpack.c.b16 %v4771, %v4770
      %4788 = vmatprep.subr.bf16.mxu0 0
      %4789 = vmatpush1.bf16.msra.mxu0 %v4779
      %4790 = vmatprep.subr.bf16.mxu0 0
      %4791 = vmatpush1.bf16.msra.mxu0 %v4778
      %4792 = vmatprep.subr.bf16.mxu0 0
      %4793 = vmatpush1.bf16.msra.mxu0 %v4777
      %4794 = vmatprep.subr.bf16.mxu0 0
      %4795 = vmatpush1.bf16.msra.mxu0 %v4776
      %4796 = vmatprep.subr.bf16.mxu0 0
      %4797 = vmatpush1.bf16.msra.mxu0 %v4775
      %4798 = vmatprep.subr.bf16.mxu0 0
      %4799 = vmatpush1.bf16.msra.mxu0 %v4774
      %4800 = vmatprep.subr.bf16.mxu0 0
      %4801 = vmatpush1.bf16.msra.mxu0 %v4773
      %4802 = vmatprep.subr.bf16.mxu0 0
      %4803 = vmatpush1.bf16.msra.mxu0 %v4772
      %4804 = vmatprep.subr.bf16.mxu0 0
      %4805 = vmatpush2.bf16.msra.mxu0 0
      %4806 = vmatprep.subr.bf16.mxu0 0
      %4807 = vmatpush2.bf16.msra.mxu0 0
      %4808 = vmatprep.subr.bf16.mxu0 0
      %4809 = vmatpush2.bf16.msra.mxu0 0
      %4810 = vmatprep.subr.bf16.mxu0 0
      %4811 = vmatpush2.bf16.msra.mxu0 0
      %4812 = vmatprep.subr.bf16.mxu0 0
      %4813 = vmatpush2.bf16.msra.mxu0 0
      %4814 = vmatprep.subr.bf16.mxu0 0
      %4815 = vmatpush2.bf16.msra.mxu0 0
      %4816 = vmatprep.subr.bf16.mxu0 0
      %4817 = vmatpush2.bf16.msra.mxu0 0
      %4818 = vmatprep.subr.bf16.mxu0 0
      %4819 = vmatpush2.bf16.msra.mxu0 0
      %4820 = vmatprep.mubr.bf16.mxu0 0
      %4821 = vmatmul.mubr.bf16.gmra.mxu0 %v4708
      %v4822 = vpop.f32.mrf.mxu0
      %v4823 = vadd.f32 0.0, %v4822
      %v4824 = vpop.f32.mrf.mxu0
      %v4825 = vpop.f32.mrf.mxu0
      %v4826 = vadd.f32 0.0, %v4825
      %v4827 = vpop.f32.mrf.mxu0
      %4828 = vmatprep.mubr.bf16.mxu0 0
      %4829 = vmatmul.mubr.bf16.gmra.mxu0 %v4709
      %v4830 = vpop.f32.mrf.mxu0
      %v4831 = vadd.f32 0.0, %v4830
      %v4832 = vpop.f32.mrf.mxu0
      %v4833 = vpop.f32.mrf.mxu0
      %v4834 = vadd.f32 0.0, %v4833
      %v4835 = vpop.f32.mrf.mxu0
      %4836 = vmatprep.mubr.bf16.mxu0 0
      %4837 = vmatmul.mubr.bf16.gmra.mxu0 %v4710
      %v4838 = vpop.f32.mrf.mxu0
      %v4839 = vadd.f32 0.0, %v4838
      %v4840 = vpop.f32.mrf.mxu0
      %v4841 = vpop.f32.mrf.mxu0
      %v4842 = vadd.f32 0.0, %v4841
      %v4843 = vpop.f32.mrf.mxu0
      %4844 = vmatprep.mubr.bf16.mxu0 0
      %4845 = vmatmul.mubr.bf16.gmra.mxu0 %v4711
      %v4846 = vpop.f32.mrf.mxu0
      %v4847 = vadd.f32 0.0, %v4846
      %v4848 = vpop.f32.mrf.mxu0
      %v4849 = vpop.f32.mrf.mxu0
      %v4850 = vadd.f32 0.0, %v4849
      %v4851 = vpop.f32.mrf.mxu0
      %4852 = vmatprep.mubr.bf16.mxu0 0
      %4853 = vmatmul.mubr.bf16.gmra.mxu0 %v4712
      %v4854 = vpop.f32.mrf.mxu0
      %v4855 = vadd.f32 0.0, %v4854
      %v4856 = vpop.f32.mrf.mxu0
      %v4857 = vpop.f32.mrf.mxu0
      %v4858 = vadd.f32 0.0, %v4857
      %v4859 = vpop.f32.mrf.mxu0
      %4860 = vmatprep.mubr.bf16.mxu0 0
      %4861 = vmatmul.mubr.bf16.gmra.mxu0 %v4713
      %v4862 = vpop.f32.mrf.mxu0
      %v4863 = vadd.f32 0.0, %v4862
      %v4864 = vpop.f32.mrf.mxu0
      %v4865 = vpop.f32.mrf.mxu0
      %v4866 = vadd.f32 0.0, %v4865
      %v4867 = vpop.f32.mrf.mxu0
      %4868 = vmatprep.mubr.bf16.mxu0 0
      %4869 = vmatmul.mubr.bf16.gmra.mxu0 %v4714
      %v4870 = vpop.f32.mrf.mxu0
      %v4871 = vadd.f32 0.0, %v4870
      %v4872 = vpop.f32.mrf.mxu0
      %v4873 = vpop.f32.mrf.mxu0
      %v4874 = vadd.f32 0.0, %v4873
      %v4875 = vpop.f32.mrf.mxu0
      %4876 = vmatprep.mubr.bf16.mxu0 0
      %4877 = vmatmul.mubr.bf16.gmra.mxu0 %v4715
      %v4878 = vpop.f32.mrf.mxu0
      %v4879 = vadd.f32 0.0, %v4878
      %v4880 = vpop.f32.mrf.mxu0
      %v4881 = vpop.f32.mrf.mxu0
      %v4882 = vadd.f32 0.0, %v4881
      %v4883 = vpop.f32.mrf.mxu0
      %4884 = vmatprep.mubr.bf16.mxu0 0
      %4885 = vmatmul.mubr.bf16.gmra.mxu0 %v4716
      %v4886 = vpop.f32.mrf.mxu0
      %v4887 = vadd.f32 0.0, %v4886
      %v4888 = vpop.f32.mrf.mxu0
      %v4889 = vpop.f32.mrf.mxu0
      %v4890 = vadd.f32 0.0, %v4889
      %v4891 = vpop.f32.mrf.mxu0
      %4892 = vmatprep.mubr.bf16.mxu0 0
      %4893 = vmatmul.mubr.bf16.gmra.mxu0 %v4717
      %v4894 = vpop.f32.mrf.mxu0
      %v4895 = vadd.f32 0.0, %v4894
      %v4896 = vpop.f32.mrf.mxu0
      %v4897 = vpop.f32.mrf.mxu0
      %v4898 = vadd.f32 0.0, %v4897
      %v4899 = vpop.f32.mrf.mxu0
      %4900 = vmatprep.mubr.bf16.mxu0 0
      %4901 = vmatmul.mubr.bf16.gmra.mxu0 %v4718
      %v4902 = vpop.f32.mrf.mxu0
      %v4903 = vadd.f32 0.0, %v4902
      %v4904 = vpop.f32.mrf.mxu0
      %v4905 = vpop.f32.mrf.mxu0
      %v4906 = vadd.f32 0.0, %v4905
      %v4907 = vpop.f32.mrf.mxu0
      %4908 = vmatprep.mubr.bf16.mxu0 0
      %4909 = vmatmul.mubr.bf16.gmra.mxu0 %v4719
      %v4910 = vpop.f32.mrf.mxu0
      %v4911 = vadd.f32 0.0, %v4910
      %v4912 = vpop.f32.mrf.mxu0
      %v4913 = vpop.f32.mrf.mxu0
      %v4914 = vadd.f32 0.0, %v4913
      %v4915 = vpop.f32.mrf.mxu0
      %4916 = vmatprep.mubr.bf16.mxu0 0
      %4917 = vmatmul.mubr.bf16.gmra.mxu0 %v4720
      %v4918 = vpop.f32.mrf.mxu0
      %v4919 = vadd.f32 0.0, %v4918
      %v4920 = vpop.f32.mrf.mxu0
      %v4921 = vpop.f32.mrf.mxu0
      %v4922 = vadd.f32 0.0, %v4921
      %v4923 = vpop.f32.mrf.mxu0
      %4924 = vmatprep.mubr.bf16.mxu0 0
      %4925 = vmatmul.mubr.bf16.gmra.mxu0 %v4721
      %v4926 = vpop.f32.mrf.mxu0
      %v4927 = vadd.f32 0.0, %v4926
      %v4928 = vpop.f32.mrf.mxu0
      %v4929 = vpop.f32.mrf.mxu0
      %v4930 = vadd.f32 0.0, %v4929
      %v4931 = vpop.f32.mrf.mxu0
      %4932 = vmatprep.mubr.bf16.mxu0 0
      %4933 = vmatmul.mubr.bf16.gmra.mxu0 %v4722
      %v4934 = vpop.f32.mrf.mxu0
      %v4935 = vadd.f32 0.0, %v4934
      %v4936 = vpop.f32.mrf.mxu0
      %v4937 = vpop.f32.mrf.mxu0
      %v4938 = vadd.f32 0.0, %v4937
      %v4939 = vpop.f32.mrf.mxu0
      %4940 = vmatprep.mubr.bf16.mxu0 0
      %4941 = vmatmul.mubr.bf16.gmra.mxu0 %v4723
      %v4942 = vpop.f32.mrf.mxu0
      %v4943 = vadd.f32 0.0, %v4942
      %v4944 = vpop.f32.mrf.mxu0
      %v4945 = vpop.f32.mrf.mxu0
      %v4946 = vadd.f32 0.0, %v4945
      %v4947 = vpop.f32.mrf.mxu0
      %4948 = vdwg.mxu0
      %v4949 = vadd.f32 %v4451, %v4823
      %v4950 = vadd.f32 %v4452, %v4826
      %v4951 = vadd.f32 %v4453, %v4831
      %v4952 = vadd.f32 %v4454, %v4834
      %v4953 = vadd.f32 %v4455, %v4839
      %v4954 = vadd.f32 %v4456, %v4842
      %v4955 = vadd.f32 %v4457, %v4847
      %v4956 = vadd.f32 %v4458, %v4850
      %v4957 = vadd.f32 %v4459, %v4855
      %v4958 = vadd.f32 %v4460, %v4858
      %v4959 = vadd.f32 %v4461, %v4863
      %v4960 = vadd.f32 %v4462, %v4866
      %v4961 = vadd.f32 %v4463, %v4871
      %v4962 = vadd.f32 %v4464, %v4874
      %v4963 = vadd.f32 %v4465, %v4879
      %v4964 = vadd.f32 %v4466, %v4882
      %v4965 = vadd.f32 %v4467, %v4887
      %v4966 = vadd.f32 %v4468, %v4890
      %v4967 = vadd.f32 %v4469, %v4895
      %v4968 = vadd.f32 %v4470, %v4898
      %v4969 = vadd.f32 %v4471, %v4903
      %v4970 = vadd.f32 %v4472, %v4906
      %v4971 = vadd.f32 %v4473, %v4911
      %v4972 = vadd.f32 %v4474, %v4914
      %v4973 = vadd.f32 %v4475, %v4919
      %v4974 = vadd.f32 %v4476, %v4922
      %v4975 = vadd.f32 %v4477, %v4927
      %v4976 = vadd.f32 %v4478, %v4930
      %v4977 = vadd.f32 %v4479, %v4935
      %v4978 = vadd.f32 %v4480, %v4938
      %v4979 = vadd.f32 %v4481, %v4943
      %v4980 = vadd.f32 %v4482, %v4946
      %v4981 = vadd.f32 %v4949, %v4950
      %v4982 = vadd.f32 %v4981, %v4951
      %v4983 = vadd.f32 %v4982, %v4952
      %v4984 = vadd.f32 %v4983, %v4953
      %v4985 = vadd.f32 %v4984, %v4954
      %v4986 = vadd.f32 %v4985, %v4955
      %v4987 = vadd.f32 %v4986, %v4956
      %v4988 = vadd.f32 %v4987, %v4957
      %v4989 = vadd.f32 %v4988, %v4958
      %v4990 = vadd.f32 %v4989, %v4959
      %v4991 = vadd.f32 %v4990, %v4960
      %v4992 = vadd.f32 %v4991, %v4961
      %v4993 = vadd.f32 %v4992, %v4962
      %v4994 = vadd.f32 %v4993, %v4963
      %v4995 = vadd.f32 %v4994, %v4964
      %v4996 = vadd.f32 %v4995, %v4965
      %v4997 = vadd.f32 %v4996, %v4966
      %v4998 = vadd.f32 %v4997, %v4967
      %v4999 = vadd.f32 %v4998, %v4968
      %v5000 = vadd.f32 %v4999, %v4969
      %v5001 = vadd.f32 %v5000, %v4970
      %v5002 = vadd.f32 %v5001, %v4971
      %v5003 = vadd.f32 %v5002, %v4972
      %v5004 = vadd.f32 %v5003, %v4973
      %v5005 = vadd.f32 %v5004, %v4974
      %v5006 = vadd.f32 %v5005, %v4975
      %v5007 = vadd.f32 %v5006, %v4976
      %v5008 = vadd.f32 %v5007, %v4977
      %v5009 = vadd.f32 %v5008, %v4978
      %v5010 = vadd.f32 %v5009, %v4979
      %v5011 = vadd.f32 %v5010, %v4980
      %v5012 = vrot.slane %v5011, 4
      %v5013 = vadd.f32 %v5011, %v5012
      %v5014 = vrot.slane %v5013, 2
      %v5015 = vadd.f32 %v5013, %v5014
      %v5016 = vrot.slane %v5015, 1
      %v5017 = vadd.f32 %v5015, %v5016
      %v5018 = vmul.f32 %v5017, 0.00390625
      %v5019 = vmul.f32 %v4949, %v4949
      %v5020 = vmul.f32 %v4950, %v4950
      %v5021 = vmul.f32 %v4951, %v4951
      %v5022 = vmul.f32 %v4952, %v4952
      %v5023 = vmul.f32 %v4953, %v4953
      %v5024 = vmul.f32 %v4954, %v4954
      %v5025 = vmul.f32 %v4955, %v4955
      %v5026 = vmul.f32 %v4956, %v4956
      %v5027 = vmul.f32 %v4957, %v4957
      %v5028 = vmul.f32 %v4958, %v4958
      %v5029 = vmul.f32 %v4959, %v4959
      %v5030 = vmul.f32 %v4960, %v4960
      %v5031 = vmul.f32 %v4961, %v4961
      %v5032 = vmul.f32 %v4962, %v4962
      %v5033 = vmul.f32 %v4963, %v4963
      %v5034 = vmul.f32 %v4964, %v4964
      %v5035 = vmul.f32 %v4965, %v4965
      %v5036 = vmul.f32 %v4966, %v4966
      %v5037 = vmul.f32 %v4967, %v4967
      %v5038 = vmul.f32 %v4968, %v4968
      %v5039 = vmul.f32 %v4969, %v4969
      %v5040 = vmul.f32 %v4970, %v4970
      %v5041 = vmul.f32 %v4971, %v4971
      %v5042 = vmul.f32 %v4972, %v4972
      %v5043 = vmul.f32 %v4973, %v4973
      %v5044 = vmul.f32 %v4974, %v4974
      %v5045 = vmul.f32 %v4975, %v4975
      %v5046 = vmul.f32 %v4976, %v4976
      %v5047 = vmul.f32 %v4977, %v4977
      %v5048 = vmul.f32 %v4978, %v4978
      %v5049 = vmul.f32 %v4979, %v4979
      %v5050 = vmul.f32 %v4980, %v4980
      %v5051 = vadd.f32 %v5019, %v5020
      %v5052 = vadd.f32 %v5051, %v5021
      %v5053 = vadd.f32 %v5052, %v5022
      %v5054 = vadd.f32 %v5053, %v5023
      %v5055 = vadd.f32 %v5054, %v5024
      %v5056 = vadd.f32 %v5055, %v5025
      %v5057 = vadd.f32 %v5056, %v5026
      %v5058 = vadd.f32 %v5057, %v5027
      %v5059 = vadd.f32 %v5058, %v5028
      %v5060 = vadd.f32 %v5059, %v5029
      %v5061 = vadd.f32 %v5060, %v5030
      %v5062 = vadd.f32 %v5061, %v5031
      %v5063 = vadd.f32 %v5062, %v5032
      %v5064 = vadd.f32 %v5063, %v5033
      %v5065 = vadd.f32 %v5064, %v5034
      %v5066 = vadd.f32 %v5065, %v5035
      %v5067 = vadd.f32 %v5066, %v5036
      %v5068 = vadd.f32 %v5067, %v5037
      %v5069 = vadd.f32 %v5068, %v5038
      %v5070 = vadd.f32 %v5069, %v5039
      %v5071 = vadd.f32 %v5070, %v5040
      %v5072 = vadd.f32 %v5071, %v5041
      %v5073 = vadd.f32 %v5072, %v5042
      %v5074 = vadd.f32 %v5073, %v5043
      %v5075 = vadd.f32 %v5074, %v5044
      %v5076 = vadd.f32 %v5075, %v5045
      %v5077 = vadd.f32 %v5076, %v5046
      %v5078 = vadd.f32 %v5077, %v5047
      %v5079 = vadd.f32 %v5078, %v5048
      %v5080 = vadd.f32 %v5079, %v5049
      %v5081 = vadd.f32 %v5080, %v5050
      %v5082 = vrot.slane %v5081, 4
      %v5083 = vadd.f32 %v5081, %v5082
      %v5084 = vrot.slane %v5083, 2
      %v5085 = vadd.f32 %v5083, %v5084
      %v5086 = vrot.slane %v5085, 1
      %v5087 = vadd.f32 %v5085, %v5086
      %v5088 = vmul.f32 %v5087, 0.00390625
      %v5089 = vmul.f32 %v5018, %v5018
      %v5090 = vsub.f32 %v5088, %v5089
      %v5091 = vmax.f32 %v5090, 0.0
      %v5092 = vsub.f32 %v4949, %v5018
      %v5093 = vsub.f32 %v4950, %v5018
      %v5094 = vsub.f32 %v4951, %v5018
      %v5095 = vsub.f32 %v4952, %v5018
      %v5096 = vsub.f32 %v4953, %v5018
      %v5097 = vsub.f32 %v4954, %v5018
      %v5098 = vsub.f32 %v4955, %v5018
      %v5099 = vsub.f32 %v4956, %v5018
      %v5100 = vsub.f32 %v4957, %v5018
      %v5101 = vsub.f32 %v4958, %v5018
      %v5102 = vsub.f32 %v4959, %v5018
      %v5103 = vsub.f32 %v4960, %v5018
      %v5104 = vsub.f32 %v4961, %v5018
      %v5105 = vsub.f32 %v4962, %v5018
      %v5106 = vsub.f32 %v4963, %v5018
      %v5107 = vsub.f32 %v4964, %v5018
      %v5108 = vsub.f32 %v4965, %v5018
      %v5109 = vsub.f32 %v4966, %v5018
      %v5110 = vsub.f32 %v4967, %v5018
      %v5111 = vsub.f32 %v4968, %v5018
      %v5112 = vsub.f32 %v4969, %v5018
      %v5113 = vsub.f32 %v4970, %v5018
      %v5114 = vsub.f32 %v4971, %v5018
      %v5115 = vsub.f32 %v4972, %v5018
      %v5116 = vsub.f32 %v4973, %v5018
      %v5117 = vsub.f32 %v4974, %v5018
      %v5118 = vsub.f32 %v4975, %v5018
      %v5119 = vsub.f32 %v4976, %v5018
      %v5120 = vsub.f32 %v4977, %v5018
      %v5121 = vsub.f32 %v4978, %v5018
      %v5122 = vsub.f32 %v4979, %v5018
      %v5123 = vsub.f32 %v4980, %v5018
      %v5124 = vadd.f32 %v5091, 1e-05
      %v5125 = vrsqrt.pop %v5124
      %v5126 = vmul.f32 %v5092, %v5125
      %v5127 = vmul.f32 %v5093, %v5125
      %v5128 = vmul.f32 %v5094, %v5125
      %v5129 = vmul.f32 %v5095, %v5125
      %v5130 = vmul.f32 %v5096, %v5125
      %v5131 = vmul.f32 %v5097, %v5125
      %v5132 = vmul.f32 %v5098, %v5125
      %v5133 = vmul.f32 %v5099, %v5125
      %v5134 = vmul.f32 %v5100, %v5125
      %v5135 = vmul.f32 %v5101, %v5125
      %v5136 = vmul.f32 %v5102, %v5125
      %v5137 = vmul.f32 %v5103, %v5125
      %v5138 = vmul.f32 %v5104, %v5125
      %v5139 = vmul.f32 %v5105, %v5125
      %v5140 = vmul.f32 %v5106, %v5125
      %v5141 = vmul.f32 %v5107, %v5125
      %v5142 = vmul.f32 %v5108, %v5125
      %v5143 = vmul.f32 %v5109, %v5125
      %v5144 = vmul.f32 %v5110, %v5125
      %v5145 = vmul.f32 %v5111, %v5125
      %v5146 = vmul.f32 %v5112, %v5125
      %v5147 = vmul.f32 %v5113, %v5125
      %v5148 = vmul.f32 %v5114, %v5125
      %v5149 = vmul.f32 %v5115, %v5125
      %v5150 = vmul.f32 %v5116, %v5125
      %v5151 = vmul.f32 %v5117, %v5125
      %v5152 = vmul.f32 %v5118, %v5125
      %v5153 = vmul.f32 %v5119, %v5125
      %v5154 = vmul.f32 %v5120, %v5125
      %v5155 = vmul.f32 %v5121, %v5125
      %v5156 = vmul.f32 %v5122, %v5125
      %v5157 = vmul.f32 %v5123, %v5125
      %v5158 = vmax.f32 %v5126, 0.0
      %v5159 = vmax.f32 %v5127, 0.0
      %v5160 = vmax.f32 %v5128, 0.0
      %v5161 = vmax.f32 %v5129, 0.0
      %v5162 = vmax.f32 %v5130, 0.0
      %v5163 = vmax.f32 %v5131, 0.0
      %v5164 = vmax.f32 %v5132, 0.0
      %v5165 = vmax.f32 %v5133, 0.0
      %v5166 = vmax.f32 %v5134, 0.0
      %v5167 = vmax.f32 %v5135, 0.0
      %v5168 = vmax.f32 %v5136, 0.0
      %v5169 = vmax.f32 %v5137, 0.0
      %v5170 = vmax.f32 %v5138, 0.0
      %v5171 = vmax.f32 %v5139, 0.0
      %v5172 = vmax.f32 %v5140, 0.0
      %v5173 = vmax.f32 %v5141, 0.0
      %v5174 = vmax.f32 %v5142, 0.0
      %v5175 = vmax.f32 %v5143, 0.0
      %v5176 = vmax.f32 %v5144, 0.0
      %v5177 = vmax.f32 %v5145, 0.0
      %v5178 = vmax.f32 %v5146, 0.0
      %v5179 = vmax.f32 %v5147, 0.0
      %v5180 = vmax.f32 %v5148, 0.0
      %v5181 = vmax.f32 %v5149, 0.0
      %v5182 = vmax.f32 %v5150, 0.0
      %v5183 = vmax.f32 %v5151, 0.0
      %v5184 = vmax.f32 %v5152, 0.0
      %v5185 = vmax.f32 %v5153, 0.0
      %v5186 = vmax.f32 %v5154, 0.0
      %v5187 = vmax.f32 %v5155, 0.0
      %v5188 = vmax.f32 %v5156, 0.0
      %v5189 = vmax.f32 %v5157, 0.0
      %5190 = vst [vmem:[#allocation2] sm:$0xff] 0.0
      %5191 = vst [vmem:[#allocation2 + $0x8] sm:$0xff] 0.0
      %5192 = vst [vmem:[#allocation2 + $0x10] sm:$0x3] 0.0
      %5193 = vst [vmem:[#allocation2 + $0x18] sm:$0xff] 0.0
      %5194 = vst [vmem:[#allocation2 + $0x20] sm:$0xff] 0.0
      %5195 = vst [vmem:[#allocation2 + $0x28] sm:$0x3] 0.0
      %5196 = vst [vmem:[#allocation2 + $0x30] sm:$0xff] 0.0
      %5197 = vst [vmem:[#allocation2 + $0x38] sm:$0xff] 0.0
      %5198 = vst [vmem:[#allocation2 + $0x40] sm:$0x3] 0.0
      %5199 = vst [vmem:[#allocation2 + $0x48] sm:$0xff] 0.0
      %5200 = vst [vmem:[#allocation2 + $0x50] sm:$0xff] 0.0
      %5201 = vst [vmem:[#allocation2 + $0x58] sm:$0x3] 0.0
      %5202 = vst [vmem:[#allocation2 + $0x60] sm:$0xff] 0.0
      %5203 = vst [vmem:[#allocation2 + $0x68] sm:$0xff] 0.0
      %5204 = vst [vmem:[#allocation2 + $0x70] sm:$0x3] 0.0
      %5205 = vst [vmem:[#allocation2 + $0x78] sm:$0xff] 0.0
      %5206 = vst [vmem:[#allocation2 + $0x80] sm:$0xff] 0.0
      %5207 = vst [vmem:[#allocation2 + $0x88] sm:$0x3] 0.0
      %5208 = vst [vmem:[#allocation2 + $0x90] sm:$0xff] 0.0
      %5209 = vst [vmem:[#allocation2 + $0x98] sm:$0xff] 0.0
      %5210 = vst [vmem:[#allocation2 + $0xa0] sm:$0x3] 0.0
      %5211 = vst [vmem:[#allocation2 + $0xa8] sm:$0xff] 0.0
      %5212 = vst [vmem:[#allocation2 + $0xb0] sm:$0xff] 0.0
      %5213 = vst [vmem:[#allocation2 + $0xb8] sm:$0x3] 0.0
      %5214 = vst [vmem:[#allocation2 + $0xc0] sm:$0xff] 0.0
      %5215 = vst [vmem:[#allocation2 + $0xc8] sm:$0xff] 0.0
      %5216 = vst [vmem:[#allocation2 + $0xd0] sm:$0x3] 0.0
      %5217 = vst [vmem:[#allocation2 + $0xd8] sm:$0xff] 0.0
      %5218 = vst [vmem:[#allocation2 + $0xe0] sm:$0xff] 0.0
      %5219 = vst [vmem:[#allocation2 + $0xe8] sm:$0x3] 0.0
      %5220 = vst [vmem:[#allocation2 + $0xf0] sm:$0xff] 0.0
      %5221 = vst [vmem:[#allocation2 + $0xf8] sm:$0xff] 0.0
      %5222 = vst [vmem:[#allocation2 + $0x100] sm:$0x3] 0.0
      %5223 = vst [vmem:[#allocation2 + $0x108] sm:$0xff] 0.0
      %5224 = vst [vmem:[#allocation2 + $0x110] sm:$0xff] 0.0
      %5225 = vst [vmem:[#allocation2 + $0x118] sm:$0x3] 0.0
      %5226 = vst [vmem:[#allocation2 + $0x120] sm:$0xff] 0.0
      %5227 = vst [vmem:[#allocation2 + $0x128] sm:$0xff] 0.0
      %5228 = vst [vmem:[#allocation2 + $0x130] sm:$0x3] 0.0
      %5229 = vst [vmem:[#allocation2 + $0x138] sm:$0xff] 0.0
      %5230 = vst [vmem:[#allocation2 + $0x140] sm:$0xff] 0.0
      %5231 = vst [vmem:[#allocation2 + $0x148] sm:$0x3] 0.0
      %5232 = vst [vmem:[#allocation2 + $0x150] sm:$0xff] 0.0
      %5233 = vst [vmem:[#allocation2 + $0x158] sm:$0xff] 0.0
      %5234 = vst [vmem:[#allocation2 + $0x160] sm:$0x3] 0.0
      %5235 = vst [vmem:[#allocation2 + $0x168] sm:$0xff] 0.0
      %5236 = vst [vmem:[#allocation2 + $0x170] sm:$0xff] 0.0
      %5237 = vst [vmem:[#allocation2 + $0x178] sm:$0x3] 0.0
      %5238 = vst [vmem:[#allocation2 + $0x180] sm:$0xff] 0.0
      %5239 = vst [vmem:[#allocation2 + $0x188] sm:$0xff] 0.0
      %5240 = vst [vmem:[#allocation2 + $0x190] sm:$0x3] 0.0
      %5241 = vst [vmem:[#allocation2 + $0x198] sm:$0xff] 0.0
      %5242 = vst [vmem:[#allocation2 + $0x1a0] sm:$0xff] 0.0
      %5243 = vst [vmem:[#allocation2 + $0x1a8] sm:$0x3] 0.0
      %s5244 = scalar_lea.vmem [#allocation2], 24
      %5245 = vst [vmem:[%s5244 + $0x1] sm:$0xff] %v5158
      %5246 = vst [vmem:[%s5244 + $0x9] sm:$0xff] %v5159
      %5247 = vst [vmem:[%s5244 + $0x19] sm:$0xff] %v5160
      %5248 = vst [vmem:[%s5244 + $0x21] sm:$0xff] %v5161
      %5249 = vst [vmem:[%s5244 + $0x31] sm:$0xff] %v5162
      %5250 = vst [vmem:[%s5244 + $0x39] sm:$0xff] %v5163
      %5251 = vst [vmem:[%s5244 + $0x49] sm:$0xff] %v5164
      %5252 = vst [vmem:[%s5244 + $0x51] sm:$0xff] %v5165
      %5253 = vst [vmem:[%s5244 + $0x61] sm:$0xff] %v5166
      %5254 = vst [vmem:[%s5244 + $0x69] sm:$0xff] %v5167
      %5255 = vst [vmem:[%s5244 + $0x79] sm:$0xff] %v5168
      %5256 = vst [vmem:[%s5244 + $0x81] sm:$0xff] %v5169
      %5257 = vst [vmem:[%s5244 + $0x91] sm:$0xff] %v5170
      %5258 = vst [vmem:[%s5244 + $0x99] sm:$0xff] %v5171
      %5259 = vst [vmem:[%s5244 + $0xa9] sm:$0xff] %v5172
      %5260 = vst [vmem:[%s5244 + $0xb1] sm:$0xff] %v5173
      %5261 = vst [vmem:[%s5244 + $0xc1] sm:$0xff] %v5174
      %5262 = vst [vmem:[%s5244 + $0xc9] sm:$0xff] %v5175
      %5263 = vst [vmem:[%s5244 + $0xd9] sm:$0xff] %v5176
      %5264 = vst [vmem:[%s5244 + $0xe1] sm:$0xff] %v5177
      %5265 = vst [vmem:[%s5244 + $0xf1] sm:$0xff] %v5178
      %5266 = vst [vmem:[%s5244 + $0xf9] sm:$0xff] %v5179
      %5267 = vst [vmem:[%s5244 + $0x109] sm:$0xff] %v5180
      %5268 = vst [vmem:[%s5244 + $0x111] sm:$0xff] %v5181
      %5269 = vst [vmem:[%s5244 + $0x121] sm:$0xff] %v5182
      %5270 = vst [vmem:[%s5244 + $0x129] sm:$0xff] %v5183
      %5271 = vst [vmem:[%s5244 + $0x139] sm:$0xff] %v5184
      %5272 = vst [vmem:[%s5244 + $0x141] sm:$0xff] %v5185
      %5273 = vst [vmem:[%s5244 + $0x151] sm:$0xff] %v5186
      %5274 = vst [vmem:[%s5244 + $0x159] sm:$0xff] %v5187
      %5275 = vst [vmem:[%s5244 + $0x169] sm:$0xff] %v5188
      %5276 = vst [vmem:[%s5244 + $0x171] sm:$0xff] %v5189
      %v5277 = vld [vmem:[#allocation2] sm:$0xff]
      %v5278 = vld [vmem:[#allocation2 + $0x8] sm:$0xff]
      %v5279 = vld [vmem:[#allocation2 + $0x18] sm:$0xff]
      %v5280 = vld [vmem:[#allocation2 + $0x20] sm:$0xff]
      %v5281 = vld [vmem:[#allocation2 + $0x30] sm:$0xff]
      %v5282 = vld [vmem:[#allocation2 + $0x38] sm:$0xff]
      %v5283 = vld [vmem:[#allocation2 + $0x48] sm:$0xff]
      %v5284 = vld [vmem:[#allocation2 + $0x50] sm:$0xff]
      %v5285 = vld [vmem:[#allocation2 + $0x60] sm:$0xff]
      %v5286 = vld [vmem:[#allocation2 + $0x68] sm:$0xff]
      %v5287 = vld [vmem:[#allocation2 + $0x78] sm:$0xff]
      %v5288 = vld [vmem:[#allocation2 + $0x80] sm:$0xff]
      %v5289 = vld [vmem:[#allocation2 + $0x90] sm:$0xff]
      %v5290 = vld [vmem:[#allocation2 + $0x98] sm:$0xff]
      %v5291 = vld [vmem:[#allocation2 + $0xa8] sm:$0xff]
      %v5292 = vld [vmem:[#allocation2 + $0xb0] sm:$0xff]
      %v5293 = vld [vmem:[#allocation2 + $0xc0] sm:$0xff]
      %v5294 = vld [vmem:[#allocation2 + $0xc8] sm:$0xff]
      %v5295 = vld [vmem:[#allocation2 + $0xd8] sm:$0xff]
      %v5296 = vld [vmem:[#allocation2 + $0xe0] sm:$0xff]
      %v5297 = vld [vmem:[#allocation2 + $0xf0] sm:$0xff]
      %v5298 = vld [vmem:[#allocation2 + $0xf8] sm:$0xff]
      %v5299 = vld [vmem:[#allocation2 + $0x108] sm:$0xff]
      %v5300 = vld [vmem:[#allocation2 + $0x110] sm:$0xff]
      %v5301 = vld [vmem:[#allocation2 + $0x120] sm:$0xff]
      %v5302 = vld [vmem:[#allocation2 + $0x128] sm:$0xff]
      %v5303 = vld [vmem:[#allocation2 + $0x138] sm:$0xff]
      %v5304 = vld [vmem:[#allocation2 + $0x140] sm:$0xff]
      %v5305 = vld [vmem:[#allocation2 + $0x150] sm:$0xff]
      %v5306 = vld [vmem:[#allocation2 + $0x158] sm:$0xff]
      %v5307 = vld [vmem:[#allocation2 + $0x168] sm:$0xff]
      %v5308 = vld [vmem:[#allocation2 + $0x170] sm:$0xff]
      %v5309 = vpack.c.bf16 %v5278, %v5277
      %v5310 = vpack.c.bf16 %v5280, %v5279
      %v5311 = vpack.c.bf16 %v5282, %v5281
      %v5312 = vpack.c.bf16 %v5284, %v5283
      %v5313 = vpack.c.bf16 %v5286, %v5285
      %v5314 = vpack.c.bf16 %v5288, %v5287
      %v5315 = vpack.c.bf16 %v5290, %v5289
      %v5316 = vpack.c.bf16 %v5292, %v5291
      %v5317 = vpack.c.bf16 %v5294, %v5293
      %v5318 = vpack.c.bf16 %v5296, %v5295
      %v5319 = vpack.c.bf16 %v5298, %v5297
      %v5320 = vpack.c.bf16 %v5300, %v5299
      %v5321 = vpack.c.bf16 %v5302, %v5301
      %v5322 = vpack.c.bf16 %v5304, %v5303
      %v5323 = vpack.c.bf16 %v5306, %v5305
      %v5324 = vpack.c.bf16 %v5308, %v5307
      %v5325 = vld [vmem:[%s2] sm:$0xf]
      %v5326 = vld [vmem:[%s2 + $0x4] sm:$0xf]
      %v5327 = vld [vmem:[%s2 + $0x8] sm:$0xf]
      %v5328 = vld [vmem:[%s2 + $0xc] sm:$0xf]
      %v5329 = vld [vmem:[%s2 + $0x10] sm:$0xf]
      %v5330 = vld [vmem:[%s2 + $0x14] sm:$0xf]
      %v5331 = vld [vmem:[%s2 + $0x18] sm:$0xf]
      %v5332 = vld [vmem:[%s2 + $0x1c] sm:$0xf]
      %v5333 = vld [vmem:[%s2 + $0x20] sm:$0xf]
      %v5334 = vld [vmem:[%s2 + $0x24] sm:$0xf]
      %v5335 = vld [vmem:[%s2 + $0x28] sm:$0xf]
      %v5336 = vld [vmem:[%s2 + $0x2c] sm:$0xf]
      %v5337 = vld [vmem:[%s2 + $0x30] sm:$0xf]
      %v5338 = vld [vmem:[%s2 + $0x34] sm:$0xf]
      %v5339 = vld [vmem:[%s2 + $0x38] sm:$0xf]
      %v5340 = vld [vmem:[%s2 + $0x3c] sm:$0xf]
      %v5341 = vld [vmem:[#allocation2 + $0x1] sm:$0xff]
      %v5342 = vld [vmem:[#allocation2 + $0x9] sm:$0xff]
      %v5343 = vld [vmem:[#allocation2 + $0x19] sm:$0xff]
      %v5344 = vld [vmem:[#allocation2 + $0x21] sm:$0xff]
      %v5345 = vld [vmem:[#allocation2 + $0x31] sm:$0xff]
      %v5346 = vld [vmem:[#allocation2 + $0x39] sm:$0xff]
      %v5347 = vld [vmem:[#allocation2 + $0x49] sm:$0xff]
      %v5348 = vld [vmem:[#allocation2 + $0x51] sm:$0xff]
      %v5349 = vld [vmem:[#allocation2 + $0x61] sm:$0xff]
      %v5350 = vld [vmem:[#allocation2 + $0x69] sm:$0xff]
      %v5351 = vld [vmem:[#allocation2 + $0x79] sm:$0xff]
      %v5352 = vld [vmem:[#allocation2 + $0x81] sm:$0xff]
      %v5353 = vld [vmem:[#allocation2 + $0x91] sm:$0xff]
      %v5354 = vld [vmem:[#allocation2 + $0x99] sm:$0xff]
      %v5355 = vld [vmem:[#allocation2 + $0xa9] sm:$0xff]
      %v5356 = vld [vmem:[#allocation2 + $0xb1] sm:$0xff]
      %v5357 = vld [vmem:[#allocation2 + $0xc1] sm:$0xff]
      %v5358 = vld [vmem:[#allocation2 + $0xc9] sm:$0xff]
      %v5359 = vld [vmem:[#allocation2 + $0xd9] sm:$0xff]
      %v5360 = vld [vmem:[#allocation2 + $0xe1] sm:$0xff]
      %v5361 = vld [vmem:[#allocation2 + $0xf1] sm:$0xff]
      %v5362 = vld [vmem:[#allocation2 + $0xf9] sm:$0xff]
      %v5363 = vld [vmem:[#allocation2 + $0x109] sm:$0xff]
      %v5364 = vld [vmem:[#allocation2 + $0x111] sm:$0xff]
      %v5365 = vld [vmem:[#allocation2 + $0x121] sm:$0xff]
      %v5366 = vld [vmem:[#allocation2 + $0x129] sm:$0xff]
      %v5367 = vld [vmem:[#allocation2 + $0x139] sm:$0xff]
      %v5368 = vld [vmem:[#allocation2 + $0x141] sm:$0xff]
      %v5369 = vld [vmem:[#allocation2 + $0x151] sm:$0xff]
      %v5370 = vld [vmem:[#allocation2 + $0x159] sm:$0xff]
      %v5371 = vld [vmem:[#allocation2 + $0x169] sm:$0xff]
      %v5372 = vld [vmem:[#allocation2 + $0x171] sm:$0xff]
      %v5373 = vpack.c.bf16 %v5342, %v5341
      %v5374 = vpack.c.bf16 %v5344, %v5343
      %v5375 = vpack.c.bf16 %v5346, %v5345
      %v5376 = vpack.c.bf16 %v5348, %v5347
      %v5377 = vpack.c.bf16 %v5350, %v5349
      %v5378 = vpack.c.bf16 %v5352, %v5351
      %v5379 = vpack.c.bf16 %v5354, %v5353
      %v5380 = vpack.c.bf16 %v5356, %v5355
      %v5381 = vpack.c.bf16 %v5358, %v5357
      %v5382 = vpack.c.bf16 %v5360, %v5359
      %v5383 = vpack.c.bf16 %v5362, %v5361
      %v5384 = vpack.c.bf16 %v5364, %v5363
      %v5385 = vpack.c.bf16 %v5366, %v5365
      %v5386 = vpack.c.bf16 %v5368, %v5367
      %v5387 = vpack.c.bf16 %v5370, %v5369
      %v5388 = vpack.c.bf16 %v5372, %v5371
      %s5389 = scalar_lea.vmem %s2, 64
      %v5390 = vld [vmem:[%s5389] sm:$0xf]
      %v5391 = vld [vmem:[%s5389 + $0x4] sm:$0xf]
      %v5392 = vld [vmem:[%s5389 + $0x8] sm:$0xf]
      %v5393 = vld [vmem:[%s5389 + $0xc] sm:$0xf]
      %v5394 = vld [vmem:[%s5389 + $0x10] sm:$0xf]
      %v5395 = vld [vmem:[%s5389 + $0x14] sm:$0xf]
      %v5396 = vld [vmem:[%s5389 + $0x18] sm:$0xf]
      %v5397 = vld [vmem:[%s5389 + $0x1c] sm:$0xf]
      %v5398 = vld [vmem:[%s5389 + $0x20] sm:$0xf]
      %v5399 = vld [vmem:[%s5389 + $0x24] sm:$0xf]
      %v5400 = vld [vmem:[%s5389 + $0x28] sm:$0xf]
      %v5401 = vld [vmem:[%s5389 + $0x2c] sm:$0xf]
      %v5402 = vld [vmem:[%s5389 + $0x30] sm:$0xf]
      %v5403 = vld [vmem:[%s5389 + $0x34] sm:$0xf]
      %v5404 = vld [vmem:[%s5389 + $0x38] sm:$0xf]
      %v5405 = vld [vmem:[%s5389 + $0x3c] sm:$0xf]
      %v5422 = vunpack.c.l.b16 %v5390
      %v5423 = vunpack.c.l.b16 %v5391
      %v5424 = vunpack.c.l.b16 %v5392
      %v5425 = vunpack.c.l.b16 %v5393
      %v5426 = vunpack.c.l.b16 %v5394
      %v5427 = vunpack.c.l.b16 %v5395
      %v5428 = vunpack.c.l.b16 %v5396
      %v5429 = vunpack.c.l.b16 %v5397
      %v5430 = vunpack.c.l.b16 %v5398
      %v5431 = vunpack.c.l.b16 %v5399
      %v5432 = vunpack.c.l.b16 %v5400
      %v5433 = vunpack.c.l.b16 %v5401
      %v5434 = vunpack.c.l.b16 %v5402
      %v5435 = vunpack.c.l.b16 %v5403
      %v5436 = vunpack.c.l.b16 %v5404
      %v5437 = vunpack.c.l.b16 %v5405
      %v5438 = vpack.c.b16 %v5423, %v5422
      %v5439 = vpack.c.b16 %v5425, %v5424
      %v5440 = vpack.c.b16 %v5427, %v5426
      %v5441 = vpack.c.b16 %v5429, %v5428
      %v5442 = vpack.c.b16 %v5431, %v5430
      %v5443 = vpack.c.b16 %v5433, %v5432
      %v5444 = vpack.c.b16 %v5435, %v5434
      %v5445 = vpack.c.b16 %v5437, %v5436
      %5454 = vmatprep.subr.bf16.mxu0 0
      %5455 = vmatpush1.bf16.msra.mxu0 %v5445
      %5456 = vmatprep.subr.bf16.mxu0 0
      %5457 = vmatpush1.bf16.msra.mxu0 %v5444
      %5458 = vmatprep.subr.bf16.mxu0 0
      %5459 = vmatpush1.bf16.msra.mxu0 %v5443
      %5460 = vmatprep.subr.bf16.mxu0 0
      %5461 = vmatpush1.bf16.msra.mxu0 %v5442
      %5462 = vmatprep.subr.bf16.mxu0 0
      %5463 = vmatpush1.bf16.msra.mxu0 %v5441
      %5464 = vmatprep.subr.bf16.mxu0 0
      %5465 = vmatpush1.bf16.msra.mxu0 %v5440
      %5466 = vmatprep.subr.bf16.mxu0 0
      %5467 = vmatpush1.bf16.msra.mxu0 %v5439
      %5468 = vmatprep.subr.bf16.mxu0 0
      %5469 = vmatpush1.bf16.msra.mxu0 %v5438
      %5470 = vmatprep.subr.bf16.mxu0 0
      %5471 = vmatpush2.bf16.msra.mxu0 0
      %5472 = vmatprep.subr.bf16.mxu0 0
      %5473 = vmatpush2.bf16.msra.mxu0 0
      %5474 = vmatprep.subr.bf16.mxu0 0
      %5475 = vmatpush2.bf16.msra.mxu0 0
      %5476 = vmatprep.subr.bf16.mxu0 0
      %5477 = vmatpush2.bf16.msra.mxu0 0
      %5478 = vmatprep.subr.bf16.mxu0 0
      %5479 = vmatpush2.bf16.msra.mxu0 0
      %5480 = vmatprep.subr.bf16.mxu0 0
      %5481 = vmatpush2.bf16.msra.mxu0 0
      %5482 = vmatprep.subr.bf16.mxu0 0
      %5483 = vmatpush2.bf16.msra.mxu0 0
      %5484 = vmatprep.subr.bf16.mxu0 0
      %5485 = vmatpush2.bf16.msra.mxu0 0
      %5486 = vmatprep.mubr.bf16.mxu0 0
      %5487 = vmatmul.mubr.bf16.gmra.mxu0 %v5373
      %v5488 = vpop.f32.mrf.mxu0
      %v5489 = vadd.f32 0.0, %v5488
      %v5490 = vpop.f32.mrf.mxu0
      %v5491 = vpop.f32.mrf.mxu0
      %v5492 = vadd.f32 0.0, %v5491
      %v5493 = vpop.f32.mrf.mxu0
      %5494 = vmatprep.mubr.bf16.mxu0 0
      %5495 = vmatmul.mubr.bf16.gmra.mxu0 %v5374
      %v5496 = vpop.f32.mrf.mxu0
      %v5497 = vadd.f32 0.0, %v5496
      %v5498 = vpop.f32.mrf.mxu0
      %v5499 = vpop.f32.mrf.mxu0
      %v5500 = vadd.f32 0.0, %v5499
      %v5501 = vpop.f32.mrf.mxu0
      %5502 = vmatprep.mubr.bf16.mxu0 0
      %5503 = vmatmul.mubr.bf16.gmra.mxu0 %v5375
      %v5504 = vpop.f32.mrf.mxu0
      %v5505 = vadd.f32 0.0, %v5504
      %v5506 = vpop.f32.mrf.mxu0
      %v5507 = vpop.f32.mrf.mxu0
      %v5508 = vadd.f32 0.0, %v5507
      %v5509 = vpop.f32.mrf.mxu0
      %5510 = vmatprep.mubr.bf16.mxu0 0
      %5511 = vmatmul.mubr.bf16.gmra.mxu0 %v5376
      %v5512 = vpop.f32.mrf.mxu0
      %v5513 = vadd.f32 0.0, %v5512
      %v5514 = vpop.f32.mrf.mxu0
      %v5515 = vpop.f32.mrf.mxu0
      %v5516 = vadd.f32 0.0, %v5515
      %v5517 = vpop.f32.mrf.mxu0
      %5518 = vmatprep.mubr.bf16.mxu0 0
      %5519 = vmatmul.mubr.bf16.gmra.mxu0 %v5377
      %v5520 = vpop.f32.mrf.mxu0
      %v5521 = vadd.f32 0.0, %v5520
      %v5522 = vpop.f32.mrf.mxu0
      %v5523 = vpop.f32.mrf.mxu0
      %v5524 = vadd.f32 0.0, %v5523
      %v5525 = vpop.f32.mrf.mxu0
      %5526 = vmatprep.mubr.bf16.mxu0 0
      %5527 = vmatmul.mubr.bf16.gmra.mxu0 %v5378
      %v5528 = vpop.f32.mrf.mxu0
      %v5529 = vadd.f32 0.0, %v5528
      %v5530 = vpop.f32.mrf.mxu0
      %v5531 = vpop.f32.mrf.mxu0
      %v5532 = vadd.f32 0.0, %v5531
      %v5533 = vpop.f32.mrf.mxu0
      %5534 = vmatprep.mubr.bf16.mxu0 0
      %5535 = vmatmul.mubr.bf16.gmra.mxu0 %v5379
      %v5536 = vpop.f32.mrf.mxu0
      %v5537 = vadd.f32 0.0, %v5536
      %v5538 = vpop.f32.mrf.mxu0
      %v5539 = vpop.f32.mrf.mxu0
      %v5540 = vadd.f32 0.0, %v5539
      %v5541 = vpop.f32.mrf.mxu0
      %5542 = vmatprep.mubr.bf16.mxu0 0
      %5543 = vmatmul.mubr.bf16.gmra.mxu0 %v5380
      %v5544 = vpop.f32.mrf.mxu0
      %v5545 = vadd.f32 0.0, %v5544
      %v5546 = vpop.f32.mrf.mxu0
      %v5547 = vpop.f32.mrf.mxu0
      %v5548 = vadd.f32 0.0, %v5547
      %v5549 = vpop.f32.mrf.mxu0
      %5550 = vmatprep.mubr.bf16.mxu0 0
      %5551 = vmatmul.mubr.bf16.gmra.mxu0 %v5381
      %v5552 = vpop.f32.mrf.mxu0
      %v5553 = vadd.f32 0.0, %v5552
      %v5554 = vpop.f32.mrf.mxu0
      %v5555 = vpop.f32.mrf.mxu0
      %v5556 = vadd.f32 0.0, %v5555
      %v5557 = vpop.f32.mrf.mxu0
      %5558 = vmatprep.mubr.bf16.mxu0 0
      %5559 = vmatmul.mubr.bf16.gmra.mxu0 %v5382
      %v5560 = vpop.f32.mrf.mxu0
      %v5561 = vadd.f32 0.0, %v5560
      %v5562 = vpop.f32.mrf.mxu0
      %v5563 = vpop.f32.mrf.mxu0
      %v5564 = vadd.f32 0.0, %v5563
      %v5565 = vpop.f32.mrf.mxu0
      %5566 = vmatprep.mubr.bf16.mxu0 0
      %5567 = vmatmul.mubr.bf16.gmra.mxu0 %v5383
      %v5568 = vpop.f32.mrf.mxu0
      %v5569 = vadd.f32 0.0, %v5568
      %v5570 = vpop.f32.mrf.mxu0
      %v5571 = vpop.f32.mrf.mxu0
      %v5572 = vadd.f32 0.0, %v5571
      %v5573 = vpop.f32.mrf.mxu0
      %5574 = vmatprep.mubr.bf16.mxu0 0
      %5575 = vmatmul.mubr.bf16.gmra.mxu0 %v5384
      %v5576 = vpop.f32.mrf.mxu0
      %v5577 = vadd.f32 0.0, %v5576
      %v5578 = vpop.f32.mrf.mxu0
      %v5579 = vpop.f32.mrf.mxu0
      %v5580 = vadd.f32 0.0, %v5579
      %v5581 = vpop.f32.mrf.mxu0
      %5582 = vmatprep.mubr.bf16.mxu0 0
      %5583 = vmatmul.mubr.bf16.gmra.mxu0 %v5385
      %v5584 = vpop.f32.mrf.mxu0
      %v5585 = vadd.f32 0.0, %v5584
      %v5586 = vpop.f32.mrf.mxu0
      %v5587 = vpop.f32.mrf.mxu0
      %v5588 = vadd.f32 0.0, %v5587
      %v5589 = vpop.f32.mrf.mxu0
      %5590 = vmatprep.mubr.bf16.mxu0 0
      %5591 = vmatmul.mubr.bf16.gmra.mxu0 %v5386
      %v5592 = vpop.f32.mrf.mxu0
      %v5593 = vadd.f32 0.0, %v5592
      %v5594 = vpop.f32.mrf.mxu0
      %v5595 = vpop.f32.mrf.mxu0
      %v5596 = vadd.f32 0.0, %v5595
      %v5597 = vpop.f32.mrf.mxu0
      %5598 = vmatprep.mubr.bf16.mxu0 0
      %5599 = vmatmul.mubr.bf16.gmra.mxu0 %v5387
      %v5600 = vpop.f32.mrf.mxu0
      %v5601 = vadd.f32 0.0, %v5600
      %v5602 = vpop.f32.mrf.mxu0
      %v5603 = vpop.f32.mrf.mxu0
      %v5604 = vadd.f32 0.0, %v5603
      %v5605 = vpop.f32.mrf.mxu0
      %5606 = vmatprep.mubr.bf16.mxu0 0
      %5607 = vmatmul.mubr.bf16.gmra.mxu0 %v5388
      %v5608 = vpop.f32.mrf.mxu0
      %v5609 = vadd.f32 0.0, %v5608
      %v5610 = vpop.f32.mrf.mxu0
      %v5611 = vpop.f32.mrf.mxu0
      %v5612 = vadd.f32 0.0, %v5611
      %v5613 = vpop.f32.mrf.mxu0
      %5614 = vdwg.mxu0
      %v5631 = vunpack.c.l.b16 %v5325
      %v5632 = vunpack.c.l.b16 %v5326
      %v5633 = vunpack.c.l.b16 %v5327
      %v5634 = vunpack.c.l.b16 %v5328
      %v5635 = vunpack.c.l.b16 %v5329
      %v5636 = vunpack.c.l.b16 %v5330
      %v5637 = vunpack.c.l.b16 %v5331
      %v5638 = vunpack.c.l.b16 %v5332
      %v5639 = vunpack.c.l.b16 %v5333
      %v5640 = vunpack.c.l.b16 %v5334
      %v5641 = vunpack.c.l.b16 %v5335
      %v5642 = vunpack.c.l.b16 %v5336
      %v5643 = vunpack.c.l.b16 %v5337
      %v5644 = vunpack.c.l.b16 %v5338
      %v5645 = vunpack.c.l.b16 %v5339
      %v5646 = vunpack.c.l.b16 %v5340
      %v5647 = vpack.c.b16 %v5632, %v5631
      %v5648 = vpack.c.b16 %v5634, %v5633
      %v5649 = vpack.c.b16 %v5636, %v5635
      %v5650 = vpack.c.b16 %v5638, %v5637
      %v5651 = vpack.c.b16 %v5640, %v5639
      %v5652 = vpack.c.b16 %v5642, %v5641
      %v5653 = vpack.c.b16 %v5644, %v5643
      %v5654 = vpack.c.b16 %v5646, %v5645
      %5663 = vmatprep.subr.bf16.mxu0 0
      %5664 = vmatpush1.bf16.msra.mxu0 %v5654
      %5665 = vmatprep.subr.bf16.mxu0 0
      %5666 = vmatpush1.bf16.msra.mxu0 %v5653
      %5667 = vmatprep.subr.bf16.mxu0 0
      %5668 = vmatpush1.bf16.msra.mxu0 %v5652
      %5669 = vmatprep.subr.bf16.mxu0 0
      %5670 = vmatpush1.bf16.msra.mxu0 %v5651
      %5671 = vmatprep.subr.bf16.mxu0 0
      %5672 = vmatpush1.bf16.msra.mxu0 %v5650
      %5673 = vmatprep.subr.bf16.mxu0 0
      %5674 = vmatpush1.bf16.msra.mxu0 %v5649
      %5675 = vmatprep.subr.bf16.mxu0 0
      %5676 = vmatpush1.bf16.msra.mxu0 %v5648
      %5677 = vmatprep.subr.bf16.mxu0 0
      %5678 = vmatpush1.bf16.msra.mxu0 %v5647
      %5679 = vmatprep.subr.bf16.mxu0 0
      %5680 = vmatpush2.bf16.msra.mxu0 0
      %5681 = vmatprep.subr.bf16.mxu0 0
      %5682 = vmatpush2.bf16.msra.mxu0 0
      %5683 = vmatprep.subr.bf16.mxu0 0
      %5684 = vmatpush2.bf16.msra.mxu0 0
      %5685 = vmatprep.subr.bf16.mxu0 0
      %5686 = vmatpush2.bf16.msra.mxu0 0
      %5687 = vmatprep.subr.bf16.mxu0 0
      %5688 = vmatpush2.bf16.msra.mxu0 0
      %5689 = vmatprep.subr.bf16.mxu0 0
      %5690 = vmatpush2.bf16.msra.mxu0 0
      %5691 = vmatprep.subr.bf16.mxu0 0
      %5692 = vmatpush2.bf16.msra.mxu0 0
      %5693 = vmatprep.subr.bf16.mxu0 0
      %5694 = vmatpush2.bf16.msra.mxu0 0
      %5695 = vmatprep.mubr.bf16.mxu0 0
      %5696 = vmatmul.mubr.bf16.gmra.mxu0 %v5309
      %v5697 = vpop.f32.mrf.mxu0
      %v5698 = vadd.f32 %v5489, %v5697
      %v5699 = vpop.f32.mrf.mxu0
      %v5700 = vpop.f32.mrf.mxu0
      %v5701 = vadd.f32 %v5492, %v5700
      %v5702 = vpop.f32.mrf.mxu0
      %5703 = vmatprep.mubr.bf16.mxu0 0
      %5704 = vmatmul.mubr.bf16.gmra.mxu0 %v5310
      %v5705 = vpop.f32.mrf.mxu0
      %v5706 = vadd.f32 %v5497, %v5705
      %v5707 = vpop.f32.mrf.mxu0
      %v5708 = vpop.f32.mrf.mxu0
      %v5709 = vadd.f32 %v5500, %v5708
      %v5710 = vpop.f32.mrf.mxu0
      %5711 = vmatprep.mubr.bf16.mxu0 0
      %5712 = vmatmul.mubr.bf16.gmra.mxu0 %v5311
      %v5713 = vpop.f32.mrf.mxu0
      %v5714 = vadd.f32 %v5505, %v5713
      %v5715 = vpop.f32.mrf.mxu0
      %v5716 = vpop.f32.mrf.mxu0
      %v5717 = vadd.f32 %v5508, %v5716
      %v5718 = vpop.f32.mrf.mxu0
      %5719 = vmatprep.mubr.bf16.mxu0 0
      %5720 = vmatmul.mubr.bf16.gmra.mxu0 %v5312
      %v5721 = vpop.f32.mrf.mxu0
      %v5722 = vadd.f32 %v5513, %v5721
      %v5723 = vpop.f32.mrf.mxu0
      %v5724 = vpop.f32.mrf.mxu0
      %v5725 = vadd.f32 %v5516, %v5724
      %v5726 = vpop.f32.mrf.mxu0
      %5727 = vmatprep.mubr.bf16.mxu0 0
      %5728 = vmatmul.mubr.bf16.gmra.mxu0 %v5313
      %v5729 = vpop.f32.mrf.mxu0
      %v5730 = vadd.f32 %v5521, %v5729
      %v5731 = vpop.f32.mrf.mxu0
      %v5732 = vpop.f32.mrf.mxu0
      %v5733 = vadd.f32 %v5524, %v5732
      %v5734 = vpop.f32.mrf.mxu0
      %5735 = vmatprep.mubr.bf16.mxu0 0
      %5736 = vmatmul.mubr.bf16.gmra.mxu0 %v5314
      %v5737 = vpop.f32.mrf.mxu0
      %v5738 = vadd.f32 %v5529, %v5737
      %v5739 = vpop.f32.mrf.mxu0
      %v5740 = vpop.f32.mrf.mxu0
      %v5741 = vadd.f32 %v5532, %v5740
      %v5742 = vpop.f32.mrf.mxu0
      %5743 = vmatprep.mubr.bf16.mxu0 0
      %5744 = vmatmul.mubr.bf16.gmra.mxu0 %v5315
      %v5745 = vpop.f32.mrf.mxu0
      %v5746 = vadd.f32 %v5537, %v5745
      %v5747 = vpop.f32.mrf.mxu0
      %v5748 = vpop.f32.mrf.mxu0
      %v5749 = vadd.f32 %v5540, %v5748
      %v5750 = vpop.f32.mrf.mxu0
      %5751 = vmatprep.mubr.bf16.mxu0 0
      %5752 = vmatmul.mubr.bf16.gmra.mxu0 %v5316
      %v5753 = vpop.f32.mrf.mxu0
      %v5754 = vadd.f32 %v5545, %v5753
      %v5755 = vpop.f32.mrf.mxu0
      %v5756 = vpop.f32.mrf.mxu0
      %v5757 = vadd.f32 %v5548, %v5756
      %v5758 = vpop.f32.mrf.mxu0
      %5759 = vmatprep.mubr.bf16.mxu0 0
      %5760 = vmatmul.mubr.bf16.gmra.mxu0 %v5317
      %v5761 = vpop.f32.mrf.mxu0
      %v5762 = vadd.f32 %v5553, %v5761
      %v5763 = vpop.f32.mrf.mxu0
      %v5764 = vpop.f32.mrf.mxu0
      %v5765 = vadd.f32 %v5556, %v5764
      %v5766 = vpop.f32.mrf.mxu0
      %5767 = vmatprep.mubr.bf16.mxu0 0
      %5768 = vmatmul.mubr.bf16.gmra.mxu0 %v5318
      %v5769 = vpop.f32.mrf.mxu0
      %v5770 = vadd.f32 %v5561, %v5769
      %v5771 = vpop.f32.mrf.mxu0
      %v5772 = vpop.f32.mrf.mxu0
      %v5773 = vadd.f32 %v5564, %v5772
      %v5774 = vpop.f32.mrf.mxu0
      %5775 = vmatprep.mubr.bf16.mxu0 0
      %5776 = vmatmul.mubr.bf16.gmra.mxu0 %v5319
      %v5777 = vpop.f32.mrf.mxu0
      %v5778 = vadd.f32 %v5569, %v5777
      %v5779 = vpop.f32.mrf.mxu0
      %v5780 = vpop.f32.mrf.mxu0
      %v5781 = vadd.f32 %v5572, %v5780
      %v5782 = vpop.f32.mrf.mxu0
      %5783 = vmatprep.mubr.bf16.mxu0 0
      %5784 = vmatmul.mubr.bf16.gmra.mxu0 %v5320
      %v5785 = vpop.f32.mrf.mxu0
      %v5786 = vadd.f32 %v5577, %v5785
      %v5787 = vpop.f32.mrf.mxu0
      %v5788 = vpop.f32.mrf.mxu0
      %v5789 = vadd.f32 %v5580, %v5788
      %v5790 = vpop.f32.mrf.mxu0
      %5791 = vmatprep.mubr.bf16.mxu0 0
      %5792 = vmatmul.mubr.bf16.gmra.mxu0 %v5321
      %v5793 = vpop.f32.mrf.mxu0
      %v5794 = vadd.f32 %v5585, %v5793
      %v5795 = vpop.f32.mrf.mxu0
      %v5796 = vpop.f32.mrf.mxu0
      %v5797 = vadd.f32 %v5588, %v5796
      %v5798 = vpop.f32.mrf.mxu0
      %5799 = vmatprep.mubr.bf16.mxu0 0
      %5800 = vmatmul.mubr.bf16.gmra.mxu0 %v5322
      %v5801 = vpop.f32.mrf.mxu0
      %v5802 = vadd.f32 %v5593, %v5801
      %v5803 = vpop.f32.mrf.mxu0
      %v5804 = vpop.f32.mrf.mxu0
      %v5805 = vadd.f32 %v5596, %v5804
      %v5806 = vpop.f32.mrf.mxu0
      %5807 = vmatprep.mubr.bf16.mxu0 0
      %5808 = vmatmul.mubr.bf16.gmra.mxu0 %v5323
      %v5809 = vpop.f32.mrf.mxu0
      %v5810 = vadd.f32 %v5601, %v5809
      %v5811 = vpop.f32.mrf.mxu0
      %v5812 = vpop.f32.mrf.mxu0
      %v5813 = vadd.f32 %v5604, %v5812
      %v5814 = vpop.f32.mrf.mxu0
      %5815 = vmatprep.mubr.bf16.mxu0 0
      %5816 = vmatmul.mubr.bf16.gmra.mxu0 %v5324
      %v5817 = vpop.f32.mrf.mxu0
      %v5818 = vadd.f32 %v5609, %v5817
      %v5819 = vpop.f32.mrf.mxu0
      %v5820 = vpop.f32.mrf.mxu0
      %v5821 = vadd.f32 %v5612, %v5820
      %v5822 = vpop.f32.mrf.mxu0
      %5823 = vdwg.mxu0
      %v5824 = vld [vmem:[#allocation2 + $0x2] sm:$0xff]
      %v5825 = vld [vmem:[#allocation2 + $0xa] sm:$0xff]
      %v5826 = vld [vmem:[#allocation2 + $0x1a] sm:$0xff]
      %v5827 = vld [vmem:[#allocation2 + $0x22] sm:$0xff]
      %v5828 = vld [vmem:[#allocation2 + $0x32] sm:$0xff]
      %v5829 = vld [vmem:[#allocation2 + $0x3a] sm:$0xff]
      %v5830 = vld [vmem:[#allocation2 + $0x4a] sm:$0xff]
      %v5831 = vld [vmem:[#allocation2 + $0x52] sm:$0xff]
      %v5832 = vld [vmem:[#allocation2 + $0x62] sm:$0xff]
      %v5833 = vld [vmem:[#allocation2 + $0x6a] sm:$0xff]
      %v5834 = vld [vmem:[#allocation2 + $0x7a] sm:$0xff]
      %v5835 = vld [vmem:[#allocation2 + $0x82] sm:$0xff]
      %v5836 = vld [vmem:[#allocation2 + $0x92] sm:$0xff]
      %v5837 = vld [vmem:[#allocation2 + $0x9a] sm:$0xff]
      %v5838 = vld [vmem:[#allocation2 + $0xaa] sm:$0xff]
      %v5839 = vld [vmem:[#allocation2 + $0xb2] sm:$0xff]
      %v5840 = vld [vmem:[#allocation2 + $0xc2] sm:$0xff]
      %v5841 = vld [vmem:[#allocation2 + $0xca] sm:$0xff]
      %v5842 = vld [vmem:[#allocation2 + $0xda] sm:$0xff]
      %v5843 = vld [vmem:[#allocation2 + $0xe2] sm:$0xff]
      %v5844 = vld [vmem:[#allocation2 + $0xf2] sm:$0xff]
      %v5845 = vld [vmem:[#allocation2 + $0xfa] sm:$0xff]
      %v5846 = vld [vmem:[#allocation2 + $0x10a] sm:$0xff]
      %v5847 = vld [vmem:[#allocation2 + $0x112] sm:$0xff]
      %v5848 = vld [vmem:[#allocation2 + $0x122] sm:$0xff]
      %v5849 = vld [vmem:[#allocation2 + $0x12a] sm:$0xff]
      %v5850 = vld [vmem:[#allocation2 + $0x13a] sm:$0xff]
      %v5851 = vld [vmem:[#allocation2 + $0x142] sm:$0xff]
      %v5852 = vld [vmem:[#allocation2 + $0x152] sm:$0xff]
      %v5853 = vld [vmem:[#allocation2 + $0x15a] sm:$0xff]
      %v5854 = vld [vmem:[#allocation2 + $0x16a] sm:$0xff]
      %v5855 = vld [vmem:[#allocation2 + $0x172] sm:$0xff]
      %v5856 = vpack.c.bf16 %v5825, %v5824
      %v5857 = vpack.c.bf16 %v5827, %v5826
      %v5858 = vpack.c.bf16 %v5829, %v5828
      %v5859 = vpack.c.bf16 %v5831, %v5830
      %v5860 = vpack.c.bf16 %v5833, %v5832
      %v5861 = vpack.c.bf16 %v5835, %v5834
      %v5862 = vpack.c.bf16 %v5837, %v5836
      %v5863 = vpack.c.bf16 %v5839, %v5838
      %v5864 = vpack.c.bf16 %v5841, %v5840
      %v5865 = vpack.c.bf16 %v5843, %v5842
      %v5866 = vpack.c.bf16 %v5845, %v5844
      %v5867 = vpack.c.bf16 %v5847, %v5846
      %v5868 = vpack.c.bf16 %v5849, %v5848
      %v5869 = vpack.c.bf16 %v5851, %v5850
      %v5870 = vpack.c.bf16 %v5853, %v5852
      %v5871 = vpack.c.bf16 %v5855, %v5854
      %s5872 = scalar_lea.vmem %s2, 128
      %v5873 = vld [vmem:[%s5872] sm:$0xf]
      %v5874 = vld [vmem:[%s5872 + $0x4] sm:$0xf]
      %v5875 = vld [vmem:[%s5872 + $0x8] sm:$0xf]
      %v5876 = vld [vmem:[%s5872 + $0xc] sm:$0xf]
      %v5877 = vld [vmem:[%s5872 + $0x10] sm:$0xf]
      %v5878 = vld [vmem:[%s5872 + $0x14] sm:$0xf]
      %v5879 = vld [vmem:[%s5872 + $0x18] sm:$0xf]
      %v5880 = vld [vmem:[%s5872 + $0x1c] sm:$0xf]
      %v5881 = vld [vmem:[%s5872 + $0x20] sm:$0xf]
      %v5882 = vld [vmem:[%s5872 + $0x24] sm:$0xf]
      %v5883 = vld [vmem:[%s5872 + $0x28] sm:$0xf]
      %v5884 = vld [vmem:[%s5872 + $0x2c] sm:$0xf]
      %v5885 = vld [vmem:[%s5872 + $0x30] sm:$0xf]
      %v5886 = vld [vmem:[%s5872 + $0x34] sm:$0xf]
      %v5887 = vld [vmem:[%s5872 + $0x38] sm:$0xf]
      %v5888 = vld [vmem:[%s5872 + $0x3c] sm:$0xf]
      %v5905 = vunpack.c.l.b16 %v5873
      %v5906 = vunpack.c.l.b16 %v5874
      %v5907 = vunpack.c.l.b16 %v5875
      %v5908 = vunpack.c.l.b16 %v5876
      %v5909 = vunpack.c.l.b16 %v5877
      %v5910 = vunpack.c.l.b16 %v5878
      %v5911 = vunpack.c.l.b16 %v5879
      %v5912 = vunpack.c.l.b16 %v5880
      %v5913 = vunpack.c.l.b16 %v5881
      %v5914 = vunpack.c.l.b16 %v5882
      %v5915 = vunpack.c.l.b16 %v5883
      %v5916 = vunpack.c.l.b16 %v5884
      %v5917 = vunpack.c.l.b16 %v5885
      %v5918 = vunpack.c.l.b16 %v5886
      %v5919 = vunpack.c.l.b16 %v5887
      %v5920 = vunpack.c.l.b16 %v5888
      %v5921 = vpack.c.b16 %v5906, %v5905
      %v5922 = vpack.c.b16 %v5908, %v5907
      %v5923 = vpack.c.b16 %v5910, %v5909
      %v5924 = vpack.c.b16 %v5912, %v5911
      %v5925 = vpack.c.b16 %v5914, %v5913
      %v5926 = vpack.c.b16 %v5916, %v5915
      %v5927 = vpack.c.b16 %v5918, %v5917
      %v5928 = vpack.c.b16 %v5920, %v5919
      %5937 = vmatprep.subr.bf16.mxu0 0
      %5938 = vmatpush1.bf16.msra.mxu0 %v5928
      %5939 = vmatprep.subr.bf16.mxu0 0
      %5940 = vmatpush1.bf16.msra.mxu0 %v5927
      %5941 = vmatprep.subr.bf16.mxu0 0
      %5942 = vmatpush1.bf16.msra.mxu0 %v5926
      %5943 = vmatprep.subr.bf16.mxu0 0
      %5944 = vmatpush1.bf16.msra.mxu0 %v5925
      %5945 = vmatprep.subr.bf16.mxu0 0
      %5946 = vmatpush1.bf16.msra.mxu0 %v5924
      %5947 = vmatprep.subr.bf16.mxu0 0
      %5948 = vmatpush1.bf16.msra.mxu0 %v5923
      %5949 = vmatprep.subr.bf16.mxu0 0
      %5950 = vmatpush1.bf16.msra.mxu0 %v5922
      %5951 = vmatprep.subr.bf16.mxu0 0
      %5952 = vmatpush1.bf16.msra.mxu0 %v5921
      %5953 = vmatprep.subr.bf16.mxu0 0
      %5954 = vmatpush2.bf16.msra.mxu0 0
      %5955 = vmatprep.subr.bf16.mxu0 0
      %5956 = vmatpush2.bf16.msra.mxu0 0
      %5957 = vmatprep.subr.bf16.mxu0 0
      %5958 = vmatpush2.bf16.msra.mxu0 0
      %5959 = vmatprep.subr.bf16.mxu0 0
      %5960 = vmatpush2.bf16.msra.mxu0 0
      %5961 = vmatprep.subr.bf16.mxu0 0
      %5962 = vmatpush2.bf16.msra.mxu0 0
      %5963 = vmatprep.subr.bf16.mxu0 0
      %5964 = vmatpush2.bf16.msra.mxu0 0
      %5965 = vmatprep.subr.bf16.mxu0 0
      %5966 = vmatpush2.bf16.msra.mxu0 0
      %5967 = vmatprep.subr.bf16.mxu0 0
      %5968 = vmatpush2.bf16.msra.mxu0 0
      %5969 = vmatprep.mubr.bf16.mxu0 0
      %5970 = vmatmul.mubr.bf16.gmra.mxu0 %v5856
      %v5971 = vpop.f32.mrf.mxu0
      %v5972 = vadd.f32 0.0, %v5971
      %v5973 = vpop.f32.mrf.mxu0
      %v5974 = vpop.f32.mrf.mxu0
      %v5975 = vadd.f32 0.0, %v5974
      %v5976 = vpop.f32.mrf.mxu0
      %5977 = vmatprep.mubr.bf16.mxu0 0
      %5978 = vmatmul.mubr.bf16.gmra.mxu0 %v5857
      %v5979 = vpop.f32.mrf.mxu0
      %v5980 = vadd.f32 0.0, %v5979
      %v5981 = vpop.f32.mrf.mxu0
      %v5982 = vpop.f32.mrf.mxu0
      %v5983 = vadd.f32 0.0, %v5982
      %v5984 = vpop.f32.mrf.mxu0
      %5985 = vmatprep.mubr.bf16.mxu0 0
      %5986 = vmatmul.mubr.bf16.gmra.mxu0 %v5858
      %v5987 = vpop.f32.mrf.mxu0
      %v5988 = vadd.f32 0.0, %v5987
      %v5989 = vpop.f32.mrf.mxu0
      %v5990 = vpop.f32.mrf.mxu0
      %v5991 = vadd.f32 0.0, %v5990
      %v5992 = vpop.f32.mrf.mxu0
      %5993 = vmatprep.mubr.bf16.mxu0 0
      %5994 = vmatmul.mubr.bf16.gmra.mxu0 %v5859
      %v5995 = vpop.f32.mrf.mxu0
      %v5996 = vadd.f32 0.0, %v5995
      %v5997 = vpop.f32.mrf.mxu0
      %v5998 = vpop.f32.mrf.mxu0
      %v5999 = vadd.f32 0.0, %v5998
      %v6000 = vpop.f32.mrf.mxu0
      %6001 = vmatprep.mubr.bf16.mxu0 0
      %6002 = vmatmul.mubr.bf16.gmra.mxu0 %v5860
      %v6003 = vpop.f32.mrf.mxu0
      %v6004 = vadd.f32 0.0, %v6003
      %v6005 = vpop.f32.mrf.mxu0
      %v6006 = vpop.f32.mrf.mxu0
      %v6007 = vadd.f32 0.0, %v6006
      %v6008 = vpop.f32.mrf.mxu0
      %6009 = vmatprep.mubr.bf16.mxu0 0
      %6010 = vmatmul.mubr.bf16.gmra.mxu0 %v5861
      %v6011 = vpop.f32.mrf.mxu0
      %v6012 = vadd.f32 0.0, %v6011
      %v6013 = vpop.f32.mrf.mxu0
      %v6014 = vpop.f32.mrf.mxu0
      %v6015 = vadd.f32 0.0, %v6014
      %v6016 = vpop.f32.mrf.mxu0
      %6017 = vmatprep.mubr.bf16.mxu0 0
      %6018 = vmatmul.mubr.bf16.gmra.mxu0 %v5862
      %v6019 = vpop.f32.mrf.mxu0
      %v6020 = vadd.f32 0.0, %v6019
      %v6021 = vpop.f32.mrf.mxu0
      %v6022 = vpop.f32.mrf.mxu0
      %v6023 = vadd.f32 0.0, %v6022
      %v6024 = vpop.f32.mrf.mxu0
      %6025 = vmatprep.mubr.bf16.mxu0 0
      %6026 = vmatmul.mubr.bf16.gmra.mxu0 %v5863
      %v6027 = vpop.f32.mrf.mxu0
      %v6028 = vadd.f32 0.0, %v6027
      %v6029 = vpop.f32.mrf.mxu0
      %v6030 = vpop.f32.mrf.mxu0
      %v6031 = vadd.f32 0.0, %v6030
      %v6032 = vpop.f32.mrf.mxu0
      %6033 = vmatprep.mubr.bf16.mxu0 0
      %6034 = vmatmul.mubr.bf16.gmra.mxu0 %v5864
      %v6035 = vpop.f32.mrf.mxu0
      %v6036 = vadd.f32 0.0, %v6035
      %v6037 = vpop.f32.mrf.mxu0
      %v6038 = vpop.f32.mrf.mxu0
      %v6039 = vadd.f32 0.0, %v6038
      %v6040 = vpop.f32.mrf.mxu0
      %6041 = vmatprep.mubr.bf16.mxu0 0
      %6042 = vmatmul.mubr.bf16.gmra.mxu0 %v5865
      %v6043 = vpop.f32.mrf.mxu0
      %v6044 = vadd.f32 0.0, %v6043
      %v6045 = vpop.f32.mrf.mxu0
      %v6046 = vpop.f32.mrf.mxu0
      %v6047 = vadd.f32 0.0, %v6046
      %v6048 = vpop.f32.mrf.mxu0
      %6049 = vmatprep.mubr.bf16.mxu0 0
      %6050 = vmatmul.mubr.bf16.gmra.mxu0 %v5866
      %v6051 = vpop.f32.mrf.mxu0
      %v6052 = vadd.f32 0.0, %v6051
      %v6053 = vpop.f32.mrf.mxu0
      %v6054 = vpop.f32.mrf.mxu0
      %v6055 = vadd.f32 0.0, %v6054
      %v6056 = vpop.f32.mrf.mxu0
      %6057 = vmatprep.mubr.bf16.mxu0 0
      %6058 = vmatmul.mubr.bf16.gmra.mxu0 %v5867
      %v6059 = vpop.f32.mrf.mxu0
      %v6060 = vadd.f32 0.0, %v6059
      %v6061 = vpop.f32.mrf.mxu0
      %v6062 = vpop.f32.mrf.mxu0
      %v6063 = vadd.f32 0.0, %v6062
      %v6064 = vpop.f32.mrf.mxu0
      %6065 = vmatprep.mubr.bf16.mxu0 0
      %6066 = vmatmul.mubr.bf16.gmra.mxu0 %v5868
      %v6067 = vpop.f32.mrf.mxu0
      %v6068 = vadd.f32 0.0, %v6067
      %v6069 = vpop.f32.mrf.mxu0
      %v6070 = vpop.f32.mrf.mxu0
      %v6071 = vadd.f32 0.0, %v6070
      %v6072 = vpop.f32.mrf.mxu0
      %6073 = vmatprep.mubr.bf16.mxu0 0
      %6074 = vmatmul.mubr.bf16.gmra.mxu0 %v5869
      %v6075 = vpop.f32.mrf.mxu0
      %v6076 = vadd.f32 0.0, %v6075
      %v6077 = vpop.f32.mrf.mxu0
      %v6078 = vpop.f32.mrf.mxu0
      %v6079 = vadd.f32 0.0, %v6078
      %v6080 = vpop.f32.mrf.mxu0
      %6081 = vmatprep.mubr.bf16.mxu0 0
      %6082 = vmatmul.mubr.bf16.gmra.mxu0 %v5870
      %v6083 = vpop.f32.mrf.mxu0
      %v6084 = vadd.f32 0.0, %v6083
      %v6085 = vpop.f32.mrf.mxu0
      %v6086 = vpop.f32.mrf.mxu0
      %v6087 = vadd.f32 0.0, %v6086
      %v6088 = vpop.f32.mrf.mxu0
      %6089 = vmatprep.mubr.bf16.mxu0 0
      %6090 = vmatmul.mubr.bf16.gmra.mxu0 %v5871
      %v6091 = vpop.f32.mrf.mxu0
      %v6092 = vadd.f32 0.0, %v6091
      %v6093 = vpop.f32.mrf.mxu0
      %v6094 = vpop.f32.mrf.mxu0
      %v6095 = vadd.f32 0.0, %v6094
      %v6096 = vpop.f32.mrf.mxu0
      %6097 = vdwg.mxu0
      %v6098 = vadd.f32 %v5698, %v5972
      %v6099 = vadd.f32 %v5701, %v5975
      %v6100 = vadd.f32 %v5706, %v5980
      %v6101 = vadd.f32 %v5709, %v5983
      %v6102 = vadd.f32 %v5714, %v5988
      %v6103 = vadd.f32 %v5717, %v5991
      %v6104 = vadd.f32 %v5722, %v5996
      %v6105 = vadd.f32 %v5725, %v5999
      %v6106 = vadd.f32 %v5730, %v6004
      %v6107 = vadd.f32 %v5733, %v6007
      %v6108 = vadd.f32 %v5738, %v6012
      %v6109 = vadd.f32 %v5741, %v6015
      %v6110 = vadd.f32 %v5746, %v6020
      %v6111 = vadd.f32 %v5749, %v6023
      %v6112 = vadd.f32 %v5754, %v6028
      %v6113 = vadd.f32 %v5757, %v6031
      %v6114 = vadd.f32 %v5762, %v6036
      %v6115 = vadd.f32 %v5765, %v6039
      %v6116 = vadd.f32 %v5770, %v6044
      %v6117 = vadd.f32 %v5773, %v6047
      %v6118 = vadd.f32 %v5778, %v6052
      %v6119 = vadd.f32 %v5781, %v6055
      %v6120 = vadd.f32 %v5786, %v6060
      %v6121 = vadd.f32 %v5789, %v6063
      %v6122 = vadd.f32 %v5794, %v6068
      %v6123 = vadd.f32 %v5797, %v6071
      %v6124 = vadd.f32 %v5802, %v6076
      %v6125 = vadd.f32 %v5805, %v6079
      %v6126 = vadd.f32 %v5810, %v6084
      %v6127 = vadd.f32 %v5813, %v6087
      %v6128 = vadd.f32 %v5818, %v6092
      %v6129 = vadd.f32 %v5821, %v6095
      %v6130 = vld [vmem:[%s5244] sm:$0xff]
      %v6131 = vld [vmem:[%s5244 + $0x8] sm:$0xff]
      %v6132 = vld [vmem:[%s5244 + $0x18] sm:$0xff]
      %v6133 = vld [vmem:[%s5244 + $0x20] sm:$0xff]
      %v6134 = vld [vmem:[%s5244 + $0x30] sm:$0xff]
      %v6135 = vld [vmem:[%s5244 + $0x38] sm:$0xff]
      %v6136 = vld [vmem:[%s5244 + $0x48] sm:$0xff]
      %v6137 = vld [vmem:[%s5244 + $0x50] sm:$0xff]
      %v6138 = vld [vmem:[%s5244 + $0x60] sm:$0xff]
      %v6139 = vld [vmem:[%s5244 + $0x68] sm:$0xff]
      %v6140 = vld [vmem:[%s5244 + $0x78] sm:$0xff]
      %v6141 = vld [vmem:[%s5244 + $0x80] sm:$0xff]
      %v6142 = vld [vmem:[%s5244 + $0x90] sm:$0xff]
      %v6143 = vld [vmem:[%s5244 + $0x98] sm:$0xff]
      %v6144 = vld [vmem:[%s5244 + $0xa8] sm:$0xff]
      %v6145 = vld [vmem:[%s5244 + $0xb0] sm:$0xff]
      %v6146 = vld [vmem:[%s5244 + $0xc0] sm:$0xff]
      %v6147 = vld [vmem:[%s5244 + $0xc8] sm:$0xff]
      %v6148 = vld [vmem:[%s5244 + $0xd8] sm:$0xff]
      %v6149 = vld [vmem:[%s5244 + $0xe0] sm:$0xff]
      %v6150 = vld [vmem:[%s5244 + $0xf0] sm:$0xff]
      %v6151 = vld [vmem:[%s5244 + $0xf8] sm:$0xff]
      %v6152 = vld [vmem:[%s5244 + $0x108] sm:$0xff]
      %v6153 = vld [vmem:[%s5244 + $0x110] sm:$0xff]
      %v6154 = vld [vmem:[%s5244 + $0x120] sm:$0xff]
      %v6155 = vld [vmem:[%s5244 + $0x128] sm:$0xff]
      %v6156 = vld [vmem:[%s5244 + $0x138] sm:$0xff]
      %v6157 = vld [vmem:[%s5244 + $0x140] sm:$0xff]
      %v6158 = vld [vmem:[%s5244 + $0x150] sm:$0xff]
      %v6159 = vld [vmem:[%s5244 + $0x158] sm:$0xff]
      %v6160 = vld [vmem:[%s5244 + $0x168] sm:$0xff]
      %v6161 = vld [vmem:[%s5244 + $0x170] sm:$0xff]
      %v6162 = vpack.c.bf16 %v6131, %v6130
      %v6163 = vpack.c.bf16 %v6133, %v6132
      %v6164 = vpack.c.bf16 %v6135, %v6134
      %v6165 = vpack.c.bf16 %v6137, %v6136
      %v6166 = vpack.c.bf16 %v6139, %v6138
      %v6167 = vpack.c.bf16 %v6141, %v6140
      %v6168 = vpack.c.bf16 %v6143, %v6142
      %v6169 = vpack.c.bf16 %v6145, %v6144
      %v6170 = vpack.c.bf16 %v6147, %v6146
      %v6171 = vpack.c.bf16 %v6149, %v6148
      %v6172 = vpack.c.bf16 %v6151, %v6150
      %v6173 = vpack.c.bf16 %v6153, %v6152
      %v6174 = vpack.c.bf16 %v6155, %v6154
      %v6175 = vpack.c.bf16 %v6157, %v6156
      %v6176 = vpack.c.bf16 %v6159, %v6158
      %v6177 = vpack.c.bf16 %v6161, %v6160
      %s6178 = scalar_lea.vmem %s2, 192
      %v6179 = vld [vmem:[%s6178] sm:$0xf]
      %v6180 = vld [vmem:[%s6178 + $0x4] sm:$0xf]
      %v6181 = vld [vmem:[%s6178 + $0x8] sm:$0xf]
      %v6182 = vld [vmem:[%s6178 + $0xc] sm:$0xf]
      %v6183 = vld [vmem:[%s6178 + $0x10] sm:$0xf]
      %v6184 = vld [vmem:[%s6178 + $0x14] sm:$0xf]
      %v6185 = vld [vmem:[%s6178 + $0x18] sm:$0xf]
      %v6186 = vld [vmem:[%s6178 + $0x1c] sm:$0xf]
      %v6187 = vld [vmem:[%s6178 + $0x20] sm:$0xf]
      %v6188 = vld [vmem:[%s6178 + $0x24] sm:$0xf]
      %v6189 = vld [vmem:[%s6178 + $0x28] sm:$0xf]
      %v6190 = vld [vmem:[%s6178 + $0x2c] sm:$0xf]
      %v6191 = vld [vmem:[%s6178 + $0x30] sm:$0xf]
      %v6192 = vld [vmem:[%s6178 + $0x34] sm:$0xf]
      %v6193 = vld [vmem:[%s6178 + $0x38] sm:$0xf]
      %v6194 = vld [vmem:[%s6178 + $0x3c] sm:$0xf]
      %v6211 = vunpack.c.l.b16 %v6179
      %v6212 = vunpack.c.l.b16 %v6180
      %v6213 = vunpack.c.l.b16 %v6181
      %v6214 = vunpack.c.l.b16 %v6182
      %v6215 = vunpack.c.l.b16 %v6183
      %v6216 = vunpack.c.l.b16 %v6184
      %v6217 = vunpack.c.l.b16 %v6185
      %v6218 = vunpack.c.l.b16 %v6186
      %v6219 = vunpack.c.l.b16 %v6187
      %v6220 = vunpack.c.l.b16 %v6188
      %v6221 = vunpack.c.l.b16 %v6189
      %v6222 = vunpack.c.l.b16 %v6190
      %v6223 = vunpack.c.l.b16 %v6191
      %v6224 = vunpack.c.l.b16 %v6192
      %v6225 = vunpack.c.l.b16 %v6193
      %v6226 = vunpack.c.l.b16 %v6194
      %v6227 = vpack.c.b16 %v6212, %v6211
      %v6228 = vpack.c.b16 %v6214, %v6213
      %v6229 = vpack.c.b16 %v6216, %v6215
      %v6230 = vpack.c.b16 %v6218, %v6217
      %v6231 = vpack.c.b16 %v6220, %v6219
      %v6232 = vpack.c.b16 %v6222, %v6221
      %v6233 = vpack.c.b16 %v6224, %v6223
      %v6234 = vpack.c.b16 %v6226, %v6225
      %6243 = vmatprep.subr.bf16.mxu0 0
      %6244 = vmatpush1.bf16.msra.mxu0 %v6234
      %6245 = vmatprep.subr.bf16.mxu0 0
      %6246 = vmatpush1.bf16.msra.mxu0 %v6233
      %6247 = vmatprep.subr.bf16.mxu0 0
      %6248 = vmatpush1.bf16.msra.mxu0 %v6232
      %6249 = vmatprep.subr.bf16.mxu0 0
      %6250 = vmatpush1.bf16.msra.mxu0 %v6231
      %6251 = vmatprep.subr.bf16.mxu0 0
      %6252 = vmatpush1.bf16.msra.mxu0 %v6230
      %6253 = vmatprep.subr.bf16.mxu0 0
      %6254 = vmatpush1.bf16.msra.mxu0 %v6229
      %6255 = vmatprep.subr.bf16.mxu0 0
      %6256 = vmatpush1.bf16.msra.mxu0 %v6228
      %6257 = vmatprep.subr.bf16.mxu0 0
      %6258 = vmatpush1.bf16.msra.mxu0 %v6227
      %6259 = vmatprep.subr.bf16.mxu0 0
      %6260 = vmatpush2.bf16.msra.mxu0 0
      %6261 = vmatprep.subr.bf16.mxu0 0
      %6262 = vmatpush2.bf16.msra.mxu0 0
      %6263 = vmatprep.subr.bf16.mxu0 0
      %6264 = vmatpush2.bf16.msra.mxu0 0
      %6265 = vmatprep.subr.bf16.mxu0 0
      %6266 = vmatpush2.bf16.msra.mxu0 0
      %6267 = vmatprep.subr.bf16.mxu0 0
      %6268 = vmatpush2.bf16.msra.mxu0 0
      %6269 = vmatprep.subr.bf16.mxu0 0
      %6270 = vmatpush2.bf16.msra.mxu0 0
      %6271 = vmatprep.subr.bf16.mxu0 0
      %6272 = vmatpush2.bf16.msra.mxu0 0
      %6273 = vmatprep.subr.bf16.mxu0 0
      %6274 = vmatpush2.bf16.msra.mxu0 0
      %6275 = vmatprep.mubr.bf16.mxu0 0
      %6276 = vmatmul.mubr.bf16.gmra.mxu0 %v6162
      %v6277 = vpop.f32.mrf.mxu0
      %v6278 = vadd.f32 0.0, %v6277
      %v6279 = vpop.f32.mrf.mxu0
      %v6280 = vpop.f32.mrf.mxu0
      %v6281 = vadd.f32 0.0, %v6280
      %v6282 = vpop.f32.mrf.mxu0
      %6283 = vmatprep.mubr.bf16.mxu0 0
      %6284 = vmatmul.mubr.bf16.gmra.mxu0 %v6163
      %v6285 = vpop.f32.mrf.mxu0
      %v6286 = vadd.f32 0.0, %v6285
      %v6287 = vpop.f32.mrf.mxu0
      %v6288 = vpop.f32.mrf.mxu0
      %v6289 = vadd.f32 0.0, %v6288
      %v6290 = vpop.f32.mrf.mxu0
      %6291 = vmatprep.mubr.bf16.mxu0 0
      %6292 = vmatmul.mubr.bf16.gmra.mxu0 %v6164
      %v6293 = vpop.f32.mrf.mxu0
      %v6294 = vadd.f32 0.0, %v6293
      %v6295 = vpop.f32.mrf.mxu0
      %v6296 = vpop.f32.mrf.mxu0
      %v6297 = vadd.f32 0.0, %v6296
      %v6298 = vpop.f32.mrf.mxu0
      %6299 = vmatprep.mubr.bf16.mxu0 0
      %6300 = vmatmul.mubr.bf16.gmra.mxu0 %v6165
      %v6301 = vpop.f32.mrf.mxu0
      %v6302 = vadd.f32 0.0, %v6301
      %v6303 = vpop.f32.mrf.mxu0
      %v6304 = vpop.f32.mrf.mxu0
      %v6305 = vadd.f32 0.0, %v6304
      %v6306 = vpop.f32.mrf.mxu0
      %6307 = vmatprep.mubr.bf16.mxu0 0
      %6308 = vmatmul.mubr.bf16.gmra.mxu0 %v6166
      %v6309 = vpop.f32.mrf.mxu0
      %v6310 = vadd.f32 0.0, %v6309
      %v6311 = vpop.f32.mrf.mxu0
      %v6312 = vpop.f32.mrf.mxu0
      %v6313 = vadd.f32 0.0, %v6312
      %v6314 = vpop.f32.mrf.mxu0
      %6315 = vmatprep.mubr.bf16.mxu0 0
      %6316 = vmatmul.mubr.bf16.gmra.mxu0 %v6167
      %v6317 = vpop.f32.mrf.mxu0
      %v6318 = vadd.f32 0.0, %v6317
      %v6319 = vpop.f32.mrf.mxu0
      %v6320 = vpop.f32.mrf.mxu0
      %v6321 = vadd.f32 0.0, %v6320
      %v6322 = vpop.f32.mrf.mxu0
      %6323 = vmatprep.mubr.bf16.mxu0 0
      %6324 = vmatmul.mubr.bf16.gmra.mxu0 %v6168
      %v6325 = vpop.f32.mrf.mxu0
      %v6326 = vadd.f32 0.0, %v6325
      %v6327 = vpop.f32.mrf.mxu0
      %v6328 = vpop.f32.mrf.mxu0
      %v6329 = vadd.f32 0.0, %v6328
      %v6330 = vpop.f32.mrf.mxu0
      %6331 = vmatprep.mubr.bf16.mxu0 0
      %6332 = vmatmul.mubr.bf16.gmra.mxu0 %v6169
      %v6333 = vpop.f32.mrf.mxu0
      %v6334 = vadd.f32 0.0, %v6333
      %v6335 = vpop.f32.mrf.mxu0
      %v6336 = vpop.f32.mrf.mxu0
      %v6337 = vadd.f32 0.0, %v6336
      %v6338 = vpop.f32.mrf.mxu0
      %6339 = vmatprep.mubr.bf16.mxu0 0
      %6340 = vmatmul.mubr.bf16.gmra.mxu0 %v6170
      %v6341 = vpop.f32.mrf.mxu0
      %v6342 = vadd.f32 0.0, %v6341
      %v6343 = vpop.f32.mrf.mxu0
      %v6344 = vpop.f32.mrf.mxu0
      %v6345 = vadd.f32 0.0, %v6344
      %v6346 = vpop.f32.mrf.mxu0
      %6347 = vmatprep.mubr.bf16.mxu0 0
      %6348 = vmatmul.mubr.bf16.gmra.mxu0 %v6171
      %v6349 = vpop.f32.mrf.mxu0
      %v6350 = vadd.f32 0.0, %v6349
      %v6351 = vpop.f32.mrf.mxu0
      %v6352 = vpop.f32.mrf.mxu0
      %v6353 = vadd.f32 0.0, %v6352
      %v6354 = vpop.f32.mrf.mxu0
      %6355 = vmatprep.mubr.bf16.mxu0 0
      %6356 = vmatmul.mubr.bf16.gmra.mxu0 %v6172
      %v6357 = vpop.f32.mrf.mxu0
      %v6358 = vadd.f32 0.0, %v6357
      %v6359 = vpop.f32.mrf.mxu0
      %v6360 = vpop.f32.mrf.mxu0
      %v6361 = vadd.f32 0.0, %v6360
      %v6362 = vpop.f32.mrf.mxu0
      %6363 = vmatprep.mubr.bf16.mxu0 0
      %6364 = vmatmul.mubr.bf16.gmra.mxu0 %v6173
      %v6365 = vpop.f32.mrf.mxu0
      %v6366 = vadd.f32 0.0, %v6365
      %v6367 = vpop.f32.mrf.mxu0
      %v6368 = vpop.f32.mrf.mxu0
      %v6369 = vadd.f32 0.0, %v6368
      %v6370 = vpop.f32.mrf.mxu0
      %6371 = vmatprep.mubr.bf16.mxu0 0
      %6372 = vmatmul.mubr.bf16.gmra.mxu0 %v6174
      %v6373 = vpop.f32.mrf.mxu0
      %v6374 = vadd.f32 0.0, %v6373
      %v6375 = vpop.f32.mrf.mxu0
      %v6376 = vpop.f32.mrf.mxu0
      %v6377 = vadd.f32 0.0, %v6376
      %v6378 = vpop.f32.mrf.mxu0
      %6379 = vmatprep.mubr.bf16.mxu0 0
      %6380 = vmatmul.mubr.bf16.gmra.mxu0 %v6175
      %v6381 = vpop.f32.mrf.mxu0
      %v6382 = vadd.f32 0.0, %v6381
      %v6383 = vpop.f32.mrf.mxu0
      %v6384 = vpop.f32.mrf.mxu0
      %v6385 = vadd.f32 0.0, %v6384
      %v6386 = vpop.f32.mrf.mxu0
      %6387 = vmatprep.mubr.bf16.mxu0 0
      %6388 = vmatmul.mubr.bf16.gmra.mxu0 %v6176
      %v6389 = vpop.f32.mrf.mxu0
      %v6390 = vadd.f32 0.0, %v6389
      %v6391 = vpop.f32.mrf.mxu0
      %v6392 = vpop.f32.mrf.mxu0
      %v6393 = vadd.f32 0.0, %v6392
      %v6394 = vpop.f32.mrf.mxu0
      %6395 = vmatprep.mubr.bf16.mxu0 0
      %6396 = vmatmul.mubr.bf16.gmra.mxu0 %v6177
      %v6397 = vpop.f32.mrf.mxu0
      %v6398 = vadd.f32 0.0, %v6397
      %v6399 = vpop.f32.mrf.mxu0
      %v6400 = vpop.f32.mrf.mxu0
      %v6401 = vadd.f32 0.0, %v6400
      %v6402 = vpop.f32.mrf.mxu0
      %6403 = vdwg.mxu0
      %v6404 = vadd.f32 %v6098, %v6278
      %v6405 = vadd.f32 %v6099, %v6281
      %v6406 = vadd.f32 %v6100, %v6286
      %v6407 = vadd.f32 %v6101, %v6289
      %v6408 = vadd.f32 %v6102, %v6294
      %v6409 = vadd.f32 %v6103, %v6297
      %v6410 = vadd.f32 %v6104, %v6302
      %v6411 = vadd.f32 %v6105, %v6305
      %v6412 = vadd.f32 %v6106, %v6310
      %v6413 = vadd.f32 %v6107, %v6313
      %v6414 = vadd.f32 %v6108, %v6318
      %v6415 = vadd.f32 %v6109, %v6321
      %v6416 = vadd.f32 %v6110, %v6326
      %v6417 = vadd.f32 %v6111, %v6329
      %v6418 = vadd.f32 %v6112, %v6334
      %v6419 = vadd.f32 %v6113, %v6337
      %v6420 = vadd.f32 %v6114, %v6342
      %v6421 = vadd.f32 %v6115, %v6345
      %v6422 = vadd.f32 %v6116, %v6350
      %v6423 = vadd.f32 %v6117, %v6353
      %v6424 = vadd.f32 %v6118, %v6358
      %v6425 = vadd.f32 %v6119, %v6361
      %v6426 = vadd.f32 %v6120, %v6366
      %v6427 = vadd.f32 %v6121, %v6369
      %v6428 = vadd.f32 %v6122, %v6374
      %v6429 = vadd.f32 %v6123, %v6377
      %v6430 = vadd.f32 %v6124, %v6382
      %v6431 = vadd.f32 %v6125, %v6385
      %v6432 = vadd.f32 %v6126, %v6390
      %v6433 = vadd.f32 %v6127, %v6393
      %v6434 = vadd.f32 %v6128, %v6398
      %v6435 = vadd.f32 %v6129, %v6401
      %v6436 = vld [vmem:[%s5244 + $0x1] sm:$0xff]
      %v6437 = vld [vmem:[%s5244 + $0x9] sm:$0xff]
      %v6438 = vld [vmem:[%s5244 + $0x19] sm:$0xff]
      %v6439 = vld [vmem:[%s5244 + $0x21] sm:$0xff]
      %v6440 = vld [vmem:[%s5244 + $0x31] sm:$0xff]
      %v6441 = vld [vmem:[%s5244 + $0x39] sm:$0xff]
      %v6442 = vld [vmem:[%s5244 + $0x49] sm:$0xff]
      %v6443 = vld [vmem:[%s5244 + $0x51] sm:$0xff]
      %v6444 = vld [vmem:[%s5244 + $0x61] sm:$0xff]
      %v6445 = vld [vmem:[%s5244 + $0x69] sm:$0xff]
      %v6446 = vld [vmem:[%s5244 + $0x79] sm:$0xff]
      %v6447 = vld [vmem:[%s5244 + $0x81] sm:$0xff]
      %v6448 = vld [vmem:[%s5244 + $0x91] sm:$0xff]
      %v6449 = vld [vmem:[%s5244 + $0x99] sm:$0xff]
      %v6450 = vld [vmem:[%s5244 + $0xa9] sm:$0xff]
      %v6451 = vld [vmem:[%s5244 + $0xb1] sm:$0xff]
      %v6452 = vld [vmem:[%s5244 + $0xc1] sm:$0xff]
      %v6453 = vld [vmem:[%s5244 + $0xc9] sm:$0xff]
      %v6454 = vld [vmem:[%s5244 + $0xd9] sm:$0xff]
      %v6455 = vld [vmem:[%s5244 + $0xe1] sm:$0xff]
      %v6456 = vld [vmem:[%s5244 + $0xf1] sm:$0xff]
      %v6457 = vld [vmem:[%s5244 + $0xf9] sm:$0xff]
      %v6458 = vld [vmem:[%s5244 + $0x109] sm:$0xff]
      %v6459 = vld [vmem:[%s5244 + $0x111] sm:$0xff]
      %v6460 = vld [vmem:[%s5244 + $0x121] sm:$0xff]
      %v6461 = vld [vmem:[%s5244 + $0x129] sm:$0xff]
      %v6462 = vld [vmem:[%s5244 + $0x139] sm:$0xff]
      %v6463 = vld [vmem:[%s5244 + $0x141] sm:$0xff]
      %v6464 = vld [vmem:[%s5244 + $0x151] sm:$0xff]
      %v6465 = vld [vmem:[%s5244 + $0x159] sm:$0xff]
      %v6466 = vld [vmem:[%s5244 + $0x169] sm:$0xff]
      %v6467 = vld [vmem:[%s5244 + $0x171] sm:$0xff]
      %v6468 = vpack.c.bf16 %v6437, %v6436
      %v6469 = vpack.c.bf16 %v6439, %v6438
      %v6470 = vpack.c.bf16 %v6441, %v6440
      %v6471 = vpack.c.bf16 %v6443, %v6442
      %v6472 = vpack.c.bf16 %v6445, %v6444
      %v6473 = vpack.c.bf16 %v6447, %v6446
      %v6474 = vpack.c.bf16 %v6449, %v6448
      %v6475 = vpack.c.bf16 %v6451, %v6450
      %v6476 = vpack.c.bf16 %v6453, %v6452
      %v6477 = vpack.c.bf16 %v6455, %v6454
      %v6478 = vpack.c.bf16 %v6457, %v6456
      %v6479 = vpack.c.bf16 %v6459, %v6458
      %v6480 = vpack.c.bf16 %v6461, %v6460
      %v6481 = vpack.c.bf16 %v6463, %v6462
      %v6482 = vpack.c.bf16 %v6465, %v6464
      %v6483 = vpack.c.bf16 %v6467, %v6466
      %s6484 = scalar_lea.vmem %s2, 256
      %v6485 = vld [vmem:[%s6484] sm:$0xf]
      %v6486 = vld [vmem:[%s6484 + $0x4] sm:$0xf]
      %v6487 = vld [vmem:[%s6484 + $0x8] sm:$0xf]
      %v6488 = vld [vmem:[%s6484 + $0xc] sm:$0xf]
      %v6489 = vld [vmem:[%s6484 + $0x10] sm:$0xf]
      %v6490 = vld [vmem:[%s6484 + $0x14] sm:$0xf]
      %v6491 = vld [vmem:[%s6484 + $0x18] sm:$0xf]
      %v6492 = vld [vmem:[%s6484 + $0x1c] sm:$0xf]
      %v6493 = vld [vmem:[%s6484 + $0x20] sm:$0xf]
      %v6494 = vld [vmem:[%s6484 + $0x24] sm:$0xf]
      %v6495 = vld [vmem:[%s6484 + $0x28] sm:$0xf]
      %v6496 = vld [vmem:[%s6484 + $0x2c] sm:$0xf]
      %v6497 = vld [vmem:[%s6484 + $0x30] sm:$0xf]
      %v6498 = vld [vmem:[%s6484 + $0x34] sm:$0xf]
      %v6499 = vld [vmem:[%s6484 + $0x38] sm:$0xf]
      %v6500 = vld [vmem:[%s6484 + $0x3c] sm:$0xf]
      %v6517 = vunpack.c.l.b16 %v6485
      %v6518 = vunpack.c.l.b16 %v6486
      %v6519 = vunpack.c.l.b16 %v6487
      %v6520 = vunpack.c.l.b16 %v6488
      %v6521 = vunpack.c.l.b16 %v6489
      %v6522 = vunpack.c.l.b16 %v6490
      %v6523 = vunpack.c.l.b16 %v6491
      %v6524 = vunpack.c.l.b16 %v6492
      %v6525 = vunpack.c.l.b16 %v6493
      %v6526 = vunpack.c.l.b16 %v6494
      %v6527 = vunpack.c.l.b16 %v6495
      %v6528 = vunpack.c.l.b16 %v6496
      %v6529 = vunpack.c.l.b16 %v6497
      %v6530 = vunpack.c.l.b16 %v6498
      %v6531 = vunpack.c.l.b16 %v6499
      %v6532 = vunpack.c.l.b16 %v6500
      %v6533 = vpack.c.b16 %v6518, %v6517
      %v6534 = vpack.c.b16 %v6520, %v6519
      %v6535 = vpack.c.b16 %v6522, %v6521
      %v6536 = vpack.c.b16 %v6524, %v6523
      %v6537 = vpack.c.b16 %v6526, %v6525
      %v6538 = vpack.c.b16 %v6528, %v6527
      %v6539 = vpack.c.b16 %v6530, %v6529
      %v6540 = vpack.c.b16 %v6532, %v6531
      %6549 = vmatprep.subr.bf16.mxu0 0
      %6550 = vmatpush1.bf16.msra.mxu0 %v6540
      %6551 = vmatprep.subr.bf16.mxu0 0
      %6552 = vmatpush1.bf16.msra.mxu0 %v6539
      %6553 = vmatprep.subr.bf16.mxu0 0
      %6554 = vmatpush1.bf16.msra.mxu0 %v6538
      %6555 = vmatprep.subr.bf16.mxu0 0
      %6556 = vmatpush1.bf16.msra.mxu0 %v6537
      %6557 = vmatprep.subr.bf16.mxu0 0
      %6558 = vmatpush1.bf16.msra.mxu0 %v6536
      %6559 = vmatprep.subr.bf16.mxu0 0
      %6560 = vmatpush1.bf16.msra.mxu0 %v6535
      %6561 = vmatprep.subr.bf16.mxu0 0
      %6562 = vmatpush1.bf16.msra.mxu0 %v6534
      %6563 = vmatprep.subr.bf16.mxu0 0
      %6564 = vmatpush1.bf16.msra.mxu0 %v6533
      %6565 = vmatprep.subr.bf16.mxu0 0
      %6566 = vmatpush2.bf16.msra.mxu0 0
      %6567 = vmatprep.subr.bf16.mxu0 0
      %6568 = vmatpush2.bf16.msra.mxu0 0
      %6569 = vmatprep.subr.bf16.mxu0 0
      %6570 = vmatpush2.bf16.msra.mxu0 0
      %6571 = vmatprep.subr.bf16.mxu0 0
      %6572 = vmatpush2.bf16.msra.mxu0 0
      %6573 = vmatprep.subr.bf16.mxu0 0
      %6574 = vmatpush2.bf16.msra.mxu0 0
      %6575 = vmatprep.subr.bf16.mxu0 0
      %6576 = vmatpush2.bf16.msra.mxu0 0
      %6577 = vmatprep.subr.bf16.mxu0 0
      %6578 = vmatpush2.bf16.msra.mxu0 0
      %6579 = vmatprep.subr.bf16.mxu0 0
      %6580 = vmatpush2.bf16.msra.mxu0 0
      %6581 = vmatprep.mubr.bf16.mxu0 0
      %6582 = vmatmul.mubr.bf16.gmra.mxu0 %v6468
      %v6583 = vpop.f32.mrf.mxu0
      %v6584 = vadd.f32 0.0, %v6583
      %v6585 = vpop.f32.mrf.mxu0
      %v6586 = vpop.f32.mrf.mxu0
      %v6587 = vadd.f32 0.0, %v6586
      %v6588 = vpop.f32.mrf.mxu0
      %6589 = vmatprep.mubr.bf16.mxu0 0
      %6590 = vmatmul.mubr.bf16.gmra.mxu0 %v6469
      %v6591 = vpop.f32.mrf.mxu0
      %v6592 = vadd.f32 0.0, %v6591
      %v6593 = vpop.f32.mrf.mxu0
      %v6594 = vpop.f32.mrf.mxu0
      %v6595 = vadd.f32 0.0, %v6594
      %v6596 = vpop.f32.mrf.mxu0
      %6597 = vmatprep.mubr.bf16.mxu0 0
      %6598 = vmatmul.mubr.bf16.gmra.mxu0 %v6470
      %v6599 = vpop.f32.mrf.mxu0
      %v6600 = vadd.f32 0.0, %v6599
      %v6601 = vpop.f32.mrf.mxu0
      %v6602 = vpop.f32.mrf.mxu0
      %v6603 = vadd.f32 0.0, %v6602
      %v6604 = vpop.f32.mrf.mxu0
      %6605 = vmatprep.mubr.bf16.mxu0 0
      %6606 = vmatmul.mubr.bf16.gmra.mxu0 %v6471
      %v6607 = vpop.f32.mrf.mxu0
      %v6608 = vadd.f32 0.0, %v6607
      %v6609 = vpop.f32.mrf.mxu0
      %v6610 = vpop.f32.mrf.mxu0
      %v6611 = vadd.f32 0.0, %v6610
      %v6612 = vpop.f32.mrf.mxu0
      %6613 = vmatprep.mubr.bf16.mxu0 0
      %6614 = vmatmul.mubr.bf16.gmra.mxu0 %v6472
      %v6615 = vpop.f32.mrf.mxu0
      %v6616 = vadd.f32 0.0, %v6615
      %v6617 = vpop.f32.mrf.mxu0
      %v6618 = vpop.f32.mrf.mxu0
      %v6619 = vadd.f32 0.0, %v6618
      %v6620 = vpop.f32.mrf.mxu0
      %6621 = vmatprep.mubr.bf16.mxu0 0
      %6622 = vmatmul.mubr.bf16.gmra.mxu0 %v6473
      %v6623 = vpop.f32.mrf.mxu0
      %v6624 = vadd.f32 0.0, %v6623
      %v6625 = vpop.f32.mrf.mxu0
      %v6626 = vpop.f32.mrf.mxu0
      %v6627 = vadd.f32 0.0, %v6626
      %v6628 = vpop.f32.mrf.mxu0
      %6629 = vmatprep.mubr.bf16.mxu0 0
      %6630 = vmatmul.mubr.bf16.gmra.mxu0 %v6474
      %v6631 = vpop.f32.mrf.mxu0
      %v6632 = vadd.f32 0.0, %v6631
      %v6633 = vpop.f32.mrf.mxu0
      %v6634 = vpop.f32.mrf.mxu0
      %v6635 = vadd.f32 0.0, %v6634
      %v6636 = vpop.f32.mrf.mxu0
      %6637 = vmatprep.mubr.bf16.mxu0 0
      %6638 = vmatmul.mubr.bf16.gmra.mxu0 %v6475
      %v6639 = vpop.f32.mrf.mxu0
      %v6640 = vadd.f32 0.0, %v6639
      %v6641 = vpop.f32.mrf.mxu0
      %v6642 = vpop.f32.mrf.mxu0
      %v6643 = vadd.f32 0.0, %v6642
      %v6644 = vpop.f32.mrf.mxu0
      %6645 = vmatprep.mubr.bf16.mxu0 0
      %6646 = vmatmul.mubr.bf16.gmra.mxu0 %v6476
      %v6647 = vpop.f32.mrf.mxu0
      %v6648 = vadd.f32 0.0, %v6647
      %v6649 = vpop.f32.mrf.mxu0
      %v6650 = vpop.f32.mrf.mxu0
      %v6651 = vadd.f32 0.0, %v6650
      %v6652 = vpop.f32.mrf.mxu0
      %6653 = vmatprep.mubr.bf16.mxu0 0
      %6654 = vmatmul.mubr.bf16.gmra.mxu0 %v6477
      %v6655 = vpop.f32.mrf.mxu0
      %v6656 = vadd.f32 0.0, %v6655
      %v6657 = vpop.f32.mrf.mxu0
      %v6658 = vpop.f32.mrf.mxu0
      %v6659 = vadd.f32 0.0, %v6658
      %v6660 = vpop.f32.mrf.mxu0
      %6661 = vmatprep.mubr.bf16.mxu0 0
      %6662 = vmatmul.mubr.bf16.gmra.mxu0 %v6478
      %v6663 = vpop.f32.mrf.mxu0
      %v6664 = vadd.f32 0.0, %v6663
      %v6665 = vpop.f32.mrf.mxu0
      %v6666 = vpop.f32.mrf.mxu0
      %v6667 = vadd.f32 0.0, %v6666
      %v6668 = vpop.f32.mrf.mxu0
      %6669 = vmatprep.mubr.bf16.mxu0 0
      %6670 = vmatmul.mubr.bf16.gmra.mxu0 %v6479
      %v6671 = vpop.f32.mrf.mxu0
      %v6672 = vadd.f32 0.0, %v6671
      %v6673 = vpop.f32.mrf.mxu0
      %v6674 = vpop.f32.mrf.mxu0
      %v6675 = vadd.f32 0.0, %v6674
      %v6676 = vpop.f32.mrf.mxu0
      %6677 = vmatprep.mubr.bf16.mxu0 0
      %6678 = vmatmul.mubr.bf16.gmra.mxu0 %v6480
      %v6679 = vpop.f32.mrf.mxu0
      %v6680 = vadd.f32 0.0, %v6679
      %v6681 = vpop.f32.mrf.mxu0
      %v6682 = vpop.f32.mrf.mxu0
      %v6683 = vadd.f32 0.0, %v6682
      %v6684 = vpop.f32.mrf.mxu0
      %6685 = vmatprep.mubr.bf16.mxu0 0
      %6686 = vmatmul.mubr.bf16.gmra.mxu0 %v6481
      %v6687 = vpop.f32.mrf.mxu0
      %v6688 = vadd.f32 0.0, %v6687
      %v6689 = vpop.f32.mrf.mxu0
      %v6690 = vpop.f32.mrf.mxu0
      %v6691 = vadd.f32 0.0, %v6690
      %v6692 = vpop.f32.mrf.mxu0
      %6693 = vmatprep.mubr.bf16.mxu0 0
      %6694 = vmatmul.mubr.bf16.gmra.mxu0 %v6482
      %v6695 = vpop.f32.mrf.mxu0
      %v6696 = vadd.f32 0.0, %v6695
      %v6697 = vpop.f32.mrf.mxu0
      %v6698 = vpop.f32.mrf.mxu0
      %v6699 = vadd.f32 0.0, %v6698
      %v6700 = vpop.f32.mrf.mxu0
      %6701 = vmatprep.mubr.bf16.mxu0 0
      %6702 = vmatmul.mubr.bf16.gmra.mxu0 %v6483
      %v6703 = vpop.f32.mrf.mxu0
      %v6704 = vadd.f32 0.0, %v6703
      %v6705 = vpop.f32.mrf.mxu0
      %v6706 = vpop.f32.mrf.mxu0
      %v6707 = vadd.f32 0.0, %v6706
      %v6708 = vpop.f32.mrf.mxu0
      %6709 = vdwg.mxu0
      %v6710 = vadd.f32 %v6404, %v6584
      %v6711 = vadd.f32 %v6405, %v6587
      %v6712 = vadd.f32 %v6406, %v6592
      %v6713 = vadd.f32 %v6407, %v6595
      %v6714 = vadd.f32 %v6408, %v6600
      %v6715 = vadd.f32 %v6409, %v6603
      %v6716 = vadd.f32 %v6410, %v6608
      %v6717 = vadd.f32 %v6411, %v6611
      %v6718 = vadd.f32 %v6412, %v6616
      %v6719 = vadd.f32 %v6413, %v6619
      %v6720 = vadd.f32 %v6414, %v6624
      %v6721 = vadd.f32 %v6415, %v6627
      %v6722 = vadd.f32 %v6416, %v6632
      %v6723 = vadd.f32 %v6417, %v6635
      %v6724 = vadd.f32 %v6418, %v6640
      %v6725 = vadd.f32 %v6419, %v6643
      %v6726 = vadd.f32 %v6420, %v6648
      %v6727 = vadd.f32 %v6421, %v6651
      %v6728 = vadd.f32 %v6422, %v6656
      %v6729 = vadd.f32 %v6423, %v6659
      %v6730 = vadd.f32 %v6424, %v6664
      %v6731 = vadd.f32 %v6425, %v6667
      %v6732 = vadd.f32 %v6426, %v6672
      %v6733 = vadd.f32 %v6427, %v6675
      %v6734 = vadd.f32 %v6428, %v6680
      %v6735 = vadd.f32 %v6429, %v6683
      %v6736 = vadd.f32 %v6430, %v6688
      %v6737 = vadd.f32 %v6431, %v6691
      %v6738 = vadd.f32 %v6432, %v6696
      %v6739 = vadd.f32 %v6433, %v6699
      %v6740 = vadd.f32 %v6434, %v6704
      %v6741 = vadd.f32 %v6435, %v6707
      %v6742 = vld [vmem:[%s5244 + $0x2] sm:$0xff]
      %v6743 = vld [vmem:[%s5244 + $0xa] sm:$0xff]
      %v6744 = vld [vmem:[%s5244 + $0x1a] sm:$0xff]
      %v6745 = vld [vmem:[%s5244 + $0x22] sm:$0xff]
      %v6746 = vld [vmem:[%s5244 + $0x32] sm:$0xff]
      %v6747 = vld [vmem:[%s5244 + $0x3a] sm:$0xff]
      %v6748 = vld [vmem:[%s5244 + $0x4a] sm:$0xff]
      %v6749 = vld [vmem:[%s5244 + $0x52] sm:$0xff]
      %v6750 = vld [vmem:[%s5244 + $0x62] sm:$0xff]
      %v6751 = vld [vmem:[%s5244 + $0x6a] sm:$0xff]
      %v6752 = vld [vmem:[%s5244 + $0x7a] sm:$0xff]
      %v6753 = vld [vmem:[%s5244 + $0x82] sm:$0xff]
      %v6754 = vld [vmem:[%s5244 + $0x92] sm:$0xff]
      %v6755 = vld [vmem:[%s5244 + $0x9a] sm:$0xff]
      %v6756 = vld [vmem:[%s5244 + $0xaa] sm:$0xff]
      %v6757 = vld [vmem:[%s5244 + $0xb2] sm:$0xff]
      %v6758 = vld [vmem:[%s5244 + $0xc2] sm:$0xff]
      %v6759 = vld [vmem:[%s5244 + $0xca] sm:$0xff]
      %v6760 = vld [vmem:[%s5244 + $0xda] sm:$0xff]
      %v6761 = vld [vmem:[%s5244 + $0xe2] sm:$0xff]
      %v6762 = vld [vmem:[%s5244 + $0xf2] sm:$0xff]
      %v6763 = vld [vmem:[%s5244 + $0xfa] sm:$0xff]
      %v6764 = vld [vmem:[%s5244 + $0x10a] sm:$0xff]
      %v6765 = vld [vmem:[%s5244 + $0x112] sm:$0xff]
      %v6766 = vld [vmem:[%s5244 + $0x122] sm:$0xff]
      %v6767 = vld [vmem:[%s5244 + $0x12a] sm:$0xff]
      %v6768 = vld [vmem:[%s5244 + $0x13a] sm:$0xff]
      %v6769 = vld [vmem:[%s5244 + $0x142] sm:$0xff]
      %v6770 = vld [vmem:[%s5244 + $0x152] sm:$0xff]
      %v6771 = vld [vmem:[%s5244 + $0x15a] sm:$0xff]
      %v6772 = vld [vmem:[%s5244 + $0x16a] sm:$0xff]
      %v6773 = vld [vmem:[%s5244 + $0x172] sm:$0xff]
      %v6774 = vpack.c.bf16 %v6743, %v6742
      %v6775 = vpack.c.bf16 %v6745, %v6744
      %v6776 = vpack.c.bf16 %v6747, %v6746
      %v6777 = vpack.c.bf16 %v6749, %v6748
      %v6778 = vpack.c.bf16 %v6751, %v6750
      %v6779 = vpack.c.bf16 %v6753, %v6752
      %v6780 = vpack.c.bf16 %v6755, %v6754
      %v6781 = vpack.c.bf16 %v6757, %v6756
      %v6782 = vpack.c.bf16 %v6759, %v6758
      %v6783 = vpack.c.bf16 %v6761, %v6760
      %v6784 = vpack.c.bf16 %v6763, %v6762
      %v6785 = vpack.c.bf16 %v6765, %v6764
      %v6786 = vpack.c.bf16 %v6767, %v6766
      %v6787 = vpack.c.bf16 %v6769, %v6768
      %v6788 = vpack.c.bf16 %v6771, %v6770
      %v6789 = vpack.c.bf16 %v6773, %v6772
      %s6790 = scalar_lea.vmem %s2, 320
      %v6791 = vld [vmem:[%s6790] sm:$0xf]
      %v6792 = vld [vmem:[%s6790 + $0x4] sm:$0xf]
      %v6793 = vld [vmem:[%s6790 + $0x8] sm:$0xf]
      %v6794 = vld [vmem:[%s6790 + $0xc] sm:$0xf]
      %v6795 = vld [vmem:[%s6790 + $0x10] sm:$0xf]
      %v6796 = vld [vmem:[%s6790 + $0x14] sm:$0xf]
      %v6797 = vld [vmem:[%s6790 + $0x18] sm:$0xf]
      %v6798 = vld [vmem:[%s6790 + $0x1c] sm:$0xf]
      %v6799 = vld [vmem:[%s6790 + $0x20] sm:$0xf]
      %v6800 = vld [vmem:[%s6790 + $0x24] sm:$0xf]
      %v6801 = vld [vmem:[%s6790 + $0x28] sm:$0xf]
      %v6802 = vld [vmem:[%s6790 + $0x2c] sm:$0xf]
      %v6803 = vld [vmem:[%s6790 + $0x30] sm:$0xf]
      %v6804 = vld [vmem:[%s6790 + $0x34] sm:$0xf]
      %v6805 = vld [vmem:[%s6790 + $0x38] sm:$0xf]
      %v6806 = vld [vmem:[%s6790 + $0x3c] sm:$0xf]
      %v6823 = vunpack.c.l.b16 %v6791
      %v6824 = vunpack.c.l.b16 %v6792
      %v6825 = vunpack.c.l.b16 %v6793
      %v6826 = vunpack.c.l.b16 %v6794
      %v6827 = vunpack.c.l.b16 %v6795
      %v6828 = vunpack.c.l.b16 %v6796
      %v6829 = vunpack.c.l.b16 %v6797
      %v6830 = vunpack.c.l.b16 %v6798
      %v6831 = vunpack.c.l.b16 %v6799
      %v6832 = vunpack.c.l.b16 %v6800
      %v6833 = vunpack.c.l.b16 %v6801
      %v6834 = vunpack.c.l.b16 %v6802
      %v6835 = vunpack.c.l.b16 %v6803
      %v6836 = vunpack.c.l.b16 %v6804
      %v6837 = vunpack.c.l.b16 %v6805
      %v6838 = vunpack.c.l.b16 %v6806
      %v6839 = vpack.c.b16 %v6824, %v6823
      %v6840 = vpack.c.b16 %v6826, %v6825
      %v6841 = vpack.c.b16 %v6828, %v6827
      %v6842 = vpack.c.b16 %v6830, %v6829
      %v6843 = vpack.c.b16 %v6832, %v6831
      %v6844 = vpack.c.b16 %v6834, %v6833
      %v6845 = vpack.c.b16 %v6836, %v6835
      %v6846 = vpack.c.b16 %v6838, %v6837
      %6855 = vmatprep.subr.bf16.mxu0 0
      %6856 = vmatpush1.bf16.msra.mxu0 %v6846
      %6857 = vmatprep.subr.bf16.mxu0 0
      %6858 = vmatpush1.bf16.msra.mxu0 %v6845
      %6859 = vmatprep.subr.bf16.mxu0 0
      %6860 = vmatpush1.bf16.msra.mxu0 %v6844
      %6861 = vmatprep.subr.bf16.mxu0 0
      %6862 = vmatpush1.bf16.msra.mxu0 %v6843
      %6863 = vmatprep.subr.bf16.mxu0 0
      %6864 = vmatpush1.bf16.msra.mxu0 %v6842
      %6865 = vmatprep.subr.bf16.mxu0 0
      %6866 = vmatpush1.bf16.msra.mxu0 %v6841
      %6867 = vmatprep.subr.bf16.mxu0 0
      %6868 = vmatpush1.bf16.msra.mxu0 %v6840
      %6869 = vmatprep.subr.bf16.mxu0 0
      %6870 = vmatpush1.bf16.msra.mxu0 %v6839
      %6871 = vmatprep.subr.bf16.mxu0 0
      %6872 = vmatpush2.bf16.msra.mxu0 0
      %6873 = vmatprep.subr.bf16.mxu0 0
      %6874 = vmatpush2.bf16.msra.mxu0 0
      %6875 = vmatprep.subr.bf16.mxu0 0
      %6876 = vmatpush2.bf16.msra.mxu0 0
      %6877 = vmatprep.subr.bf16.mxu0 0
      %6878 = vmatpush2.bf16.msra.mxu0 0
      %6879 = vmatprep.subr.bf16.mxu0 0
      %6880 = vmatpush2.bf16.msra.mxu0 0
      %6881 = vmatprep.subr.bf16.mxu0 0
      %6882 = vmatpush2.bf16.msra.mxu0 0
      %6883 = vmatprep.subr.bf16.mxu0 0
      %6884 = vmatpush2.bf16.msra.mxu0 0
      %6885 = vmatprep.subr.bf16.mxu0 0
      %6886 = vmatpush2.bf16.msra.mxu0 0
      %6887 = vmatprep.mubr.bf16.mxu0 0
      %6888 = vmatmul.mubr.bf16.gmra.mxu0 %v6774
      %v6889 = vpop.f32.mrf.mxu0
      %v6890 = vadd.f32 0.0, %v6889
      %v6891 = vpop.f32.mrf.mxu0
      %v6892 = vpop.f32.mrf.mxu0
      %v6893 = vadd.f32 0.0, %v6892
      %v6894 = vpop.f32.mrf.mxu0
      %6895 = vmatprep.mubr.bf16.mxu0 0
      %6896 = vmatmul.mubr.bf16.gmra.mxu0 %v6775
      %v6897 = vpop.f32.mrf.mxu0
      %v6898 = vadd.f32 0.0, %v6897
      %v6899 = vpop.f32.mrf.mxu0
      %v6900 = vpop.f32.mrf.mxu0
      %v6901 = vadd.f32 0.0, %v6900
      %v6902 = vpop.f32.mrf.mxu0
      %6903 = vmatprep.mubr.bf16.mxu0 0
      %6904 = vmatmul.mubr.bf16.gmra.mxu0 %v6776
      %v6905 = vpop.f32.mrf.mxu0
      %v6906 = vadd.f32 0.0, %v6905
      %v6907 = vpop.f32.mrf.mxu0
      %v6908 = vpop.f32.mrf.mxu0
      %v6909 = vadd.f32 0.0, %v6908
      %v6910 = vpop.f32.mrf.mxu0
      %6911 = vmatprep.mubr.bf16.mxu0 0
      %6912 = vmatmul.mubr.bf16.gmra.mxu0 %v6777
      %v6913 = vpop.f32.mrf.mxu0
      %v6914 = vadd.f32 0.0, %v6913
      %v6915 = vpop.f32.mrf.mxu0
      %v6916 = vpop.f32.mrf.mxu0
      %v6917 = vadd.f32 0.0, %v6916
      %v6918 = vpop.f32.mrf.mxu0
      %6919 = vmatprep.mubr.bf16.mxu0 0
      %6920 = vmatmul.mubr.bf16.gmra.mxu0 %v6778
      %v6921 = vpop.f32.mrf.mxu0
      %v6922 = vadd.f32 0.0, %v6921
      %v6923 = vpop.f32.mrf.mxu0
      %v6924 = vpop.f32.mrf.mxu0
      %v6925 = vadd.f32 0.0, %v6924
      %v6926 = vpop.f32.mrf.mxu0
      %6927 = vmatprep.mubr.bf16.mxu0 0
      %6928 = vmatmul.mubr.bf16.gmra.mxu0 %v6779
      %v6929 = vpop.f32.mrf.mxu0
      %v6930 = vadd.f32 0.0, %v6929
      %v6931 = vpop.f32.mrf.mxu0
      %v6932 = vpop.f32.mrf.mxu0
      %v6933 = vadd.f32 0.0, %v6932
      %v6934 = vpop.f32.mrf.mxu0
      %6935 = vmatprep.mubr.bf16.mxu0 0
      %6936 = vmatmul.mubr.bf16.gmra.mxu0 %v6780
      %v6937 = vpop.f32.mrf.mxu0
      %v6938 = vadd.f32 0.0, %v6937
      %v6939 = vpop.f32.mrf.mxu0
      %v6940 = vpop.f32.mrf.mxu0
      %v6941 = vadd.f32 0.0, %v6940
      %v6942 = vpop.f32.mrf.mxu0
      %6943 = vmatprep.mubr.bf16.mxu0 0
      %6944 = vmatmul.mubr.bf16.gmra.mxu0 %v6781
      %v6945 = vpop.f32.mrf.mxu0
      %v6946 = vadd.f32 0.0, %v6945
      %v6947 = vpop.f32.mrf.mxu0
      %v6948 = vpop.f32.mrf.mxu0
      %v6949 = vadd.f32 0.0, %v6948
      %v6950 = vpop.f32.mrf.mxu0
      %6951 = vmatprep.mubr.bf16.mxu0 0
      %6952 = vmatmul.mubr.bf16.gmra.mxu0 %v6782
      %v6953 = vpop.f32.mrf.mxu0
      %v6954 = vadd.f32 0.0, %v6953
      %v6955 = vpop.f32.mrf.mxu0
      %v6956 = vpop.f32.mrf.mxu0
      %v6957 = vadd.f32 0.0, %v6956
      %v6958 = vpop.f32.mrf.mxu0
      %6959 = vmatprep.mubr.bf16.mxu0 0
      %6960 = vmatmul.mubr.bf16.gmra.mxu0 %v6783
      %v6961 = vpop.f32.mrf.mxu0
      %v6962 = vadd.f32 0.0, %v6961
      %v6963 = vpop.f32.mrf.mxu0
      %v6964 = vpop.f32.mrf.mxu0
      %v6965 = vadd.f32 0.0, %v6964
      %v6966 = vpop.f32.mrf.mxu0
      %6967 = vmatprep.mubr.bf16.mxu0 0
      %6968 = vmatmul.mubr.bf16.gmra.mxu0 %v6784
      %v6969 = vpop.f32.mrf.mxu0
      %v6970 = vadd.f32 0.0, %v6969
      %v6971 = vpop.f32.mrf.mxu0
      %v6972 = vpop.f32.mrf.mxu0
      %v6973 = vadd.f32 0.0, %v6972
      %v6974 = vpop.f32.mrf.mxu0
      %6975 = vmatprep.mubr.bf16.mxu0 0
      %6976 = vmatmul.mubr.bf16.gmra.mxu0 %v6785
      %v6977 = vpop.f32.mrf.mxu0
      %v6978 = vadd.f32 0.0, %v6977
      %v6979 = vpop.f32.mrf.mxu0
      %v6980 = vpop.f32.mrf.mxu0
      %v6981 = vadd.f32 0.0, %v6980
      %v6982 = vpop.f32.mrf.mxu0
      %6983 = vmatprep.mubr.bf16.mxu0 0
      %6984 = vmatmul.mubr.bf16.gmra.mxu0 %v6786
      %v6985 = vpop.f32.mrf.mxu0
      %v6986 = vadd.f32 0.0, %v6985
      %v6987 = vpop.f32.mrf.mxu0
      %v6988 = vpop.f32.mrf.mxu0
      %v6989 = vadd.f32 0.0, %v6988
      %v6990 = vpop.f32.mrf.mxu0
      %6991 = vmatprep.mubr.bf16.mxu0 0
      %6992 = vmatmul.mubr.bf16.gmra.mxu0 %v6787
      %v6993 = vpop.f32.mrf.mxu0
      %v6994 = vadd.f32 0.0, %v6993
      %v6995 = vpop.f32.mrf.mxu0
      %v6996 = vpop.f32.mrf.mxu0
      %v6997 = vadd.f32 0.0, %v6996
      %v6998 = vpop.f32.mrf.mxu0
      %6999 = vmatprep.mubr.bf16.mxu0 0
      %7000 = vmatmul.mubr.bf16.gmra.mxu0 %v6788
      %v7001 = vpop.f32.mrf.mxu0
      %v7002 = vadd.f32 0.0, %v7001
      %v7003 = vpop.f32.mrf.mxu0
      %v7004 = vpop.f32.mrf.mxu0
      %v7005 = vadd.f32 0.0, %v7004
      %v7006 = vpop.f32.mrf.mxu0
      %7007 = vmatprep.mubr.bf16.mxu0 0
      %7008 = vmatmul.mubr.bf16.gmra.mxu0 %v6789
      %v7009 = vpop.f32.mrf.mxu0
      %v7010 = vadd.f32 0.0, %v7009
      %v7011 = vpop.f32.mrf.mxu0
      %v7012 = vpop.f32.mrf.mxu0
      %v7013 = vadd.f32 0.0, %v7012
      %v7014 = vpop.f32.mrf.mxu0
      %7015 = vdwg.mxu0
      %v7016 = vadd.f32 %v6710, %v6890
      %v7017 = vadd.f32 %v6711, %v6893
      %v7018 = vadd.f32 %v6712, %v6898
      %v7019 = vadd.f32 %v6713, %v6901
      %v7020 = vadd.f32 %v6714, %v6906
      %v7021 = vadd.f32 %v6715, %v6909
      %v7022 = vadd.f32 %v6716, %v6914
      %v7023 = vadd.f32 %v6717, %v6917
      %v7024 = vadd.f32 %v6718, %v6922
      %v7025 = vadd.f32 %v6719, %v6925
      %v7026 = vadd.f32 %v6720, %v6930
      %v7027 = vadd.f32 %v6721, %v6933
      %v7028 = vadd.f32 %v6722, %v6938
      %v7029 = vadd.f32 %v6723, %v6941
      %v7030 = vadd.f32 %v6724, %v6946
      %v7031 = vadd.f32 %v6725, %v6949
      %v7032 = vadd.f32 %v6726, %v6954
      %v7033 = vadd.f32 %v6727, %v6957
      %v7034 = vadd.f32 %v6728, %v6962
      %v7035 = vadd.f32 %v6729, %v6965
      %v7036 = vadd.f32 %v6730, %v6970
      %v7037 = vadd.f32 %v6731, %v6973
      %v7038 = vadd.f32 %v6732, %v6978
      %v7039 = vadd.f32 %v6733, %v6981
      %v7040 = vadd.f32 %v6734, %v6986
      %v7041 = vadd.f32 %v6735, %v6989
      %v7042 = vadd.f32 %v6736, %v6994
      %v7043 = vadd.f32 %v6737, %v6997
      %v7044 = vadd.f32 %v6738, %v7002
      %v7045 = vadd.f32 %v6739, %v7005
      %v7046 = vadd.f32 %v6740, %v7010
      %v7047 = vadd.f32 %v6741, %v7013
      %s7048 = scalar_lea.vmem [#allocation2], 48
      %v7049 = vld [vmem:[%s7048] sm:$0xff]
      %v7050 = vld [vmem:[%s7048 + $0x8] sm:$0xff]
      %v7051 = vld [vmem:[%s7048 + $0x18] sm:$0xff]
      %v7052 = vld [vmem:[%s7048 + $0x20] sm:$0xff]
      %v7053 = vld [vmem:[%s7048 + $0x30] sm:$0xff]
      %v7054 = vld [vmem:[%s7048 + $0x38] sm:$0xff]
      %v7055 = vld [vmem:[%s7048 + $0x48] sm:$0xff]
      %v7056 = vld [vmem:[%s7048 + $0x50] sm:$0xff]
      %v7057 = vld [vmem:[%s7048 + $0x60] sm:$0xff]
      %v7058 = vld [vmem:[%s7048 + $0x68] sm:$0xff]
      %v7059 = vld [vmem:[%s7048 + $0x78] sm:$0xff]
      %v7060 = vld [vmem:[%s7048 + $0x80] sm:$0xff]
      %v7061 = vld [vmem:[%s7048 + $0x90] sm:$0xff]
      %v7062 = vld [vmem:[%s7048 + $0x98] sm:$0xff]
      %v7063 = vld [vmem:[%s7048 + $0xa8] sm:$0xff]
      %v7064 = vld [vmem:[%s7048 + $0xb0] sm:$0xff]
      %v7065 = vld [vmem:[%s7048 + $0xc0] sm:$0xff]
      %v7066 = vld [vmem:[%s7048 + $0xc8] sm:$0xff]
      %v7067 = vld [vmem:[%s7048 + $0xd8] sm:$0xff]
      %v7068 = vld [vmem:[%s7048 + $0xe0] sm:$0xff]
      %v7069 = vld [vmem:[%s7048 + $0xf0] sm:$0xff]
      %v7070 = vld [vmem:[%s7048 + $0xf8] sm:$0xff]
      %v7071 = vld [vmem:[%s7048 + $0x108] sm:$0xff]
      %v7072 = vld [vmem:[%s7048 + $0x110] sm:$0xff]
      %v7073 = vld [vmem:[%s7048 + $0x120] sm:$0xff]
      %v7074 = vld [vmem:[%s7048 + $0x128] sm:$0xff]
      %v7075 = vld [vmem:[%s7048 + $0x138] sm:$0xff]
      %v7076 = vld [vmem:[%s7048 + $0x140] sm:$0xff]
      %v7077 = vld [vmem:[%s7048 + $0x150] sm:$0xff]
      %v7078 = vld [vmem:[%s7048 + $0x158] sm:$0xff]
      %v7079 = vld [vmem:[%s7048 + $0x168] sm:$0xff]
      %v7080 = vld [vmem:[%s7048 + $0x170] sm:$0xff]
      %v7081 = vpack.c.bf16 %v7050, %v7049
      %v7082 = vpack.c.bf16 %v7052, %v7051
      %v7083 = vpack.c.bf16 %v7054, %v7053
      %v7084 = vpack.c.bf16 %v7056, %v7055
      %v7085 = vpack.c.bf16 %v7058, %v7057
      %v7086 = vpack.c.bf16 %v7060, %v7059
      %v7087 = vpack.c.bf16 %v7062, %v7061
      %v7088 = vpack.c.bf16 %v7064, %v7063
      %v7089 = vpack.c.bf16 %v7066, %v7065
      %v7090 = vpack.c.bf16 %v7068, %v7067
      %v7091 = vpack.c.bf16 %v7070, %v7069
      %v7092 = vpack.c.bf16 %v7072, %v7071
      %v7093 = vpack.c.bf16 %v7074, %v7073
      %v7094 = vpack.c.bf16 %v7076, %v7075
      %v7095 = vpack.c.bf16 %v7078, %v7077
      %v7096 = vpack.c.bf16 %v7080, %v7079
      %s7097 = scalar_lea.vmem %s2, 384
      %v7098 = vld [vmem:[%s7097] sm:$0xf]
      %v7099 = vld [vmem:[%s7097 + $0x4] sm:$0xf]
      %v7100 = vld [vmem:[%s7097 + $0x8] sm:$0xf]
      %v7101 = vld [vmem:[%s7097 + $0xc] sm:$0xf]
      %v7102 = vld [vmem:[%s7097 + $0x10] sm:$0xf]
      %v7103 = vld [vmem:[%s7097 + $0x14] sm:$0xf]
      %v7104 = vld [vmem:[%s7097 + $0x18] sm:$0xf]
      %v7105 = vld [vmem:[%s7097 + $0x1c] sm:$0xf]
      %v7106 = vld [vmem:[%s7097 + $0x20] sm:$0xf]
      %v7107 = vld [vmem:[%s7097 + $0x24] sm:$0xf]
      %v7108 = vld [vmem:[%s7097 + $0x28] sm:$0xf]
      %v7109 = vld [vmem:[%s7097 + $0x2c] sm:$0xf]
      %v7110 = vld [vmem:[%s7097 + $0x30] sm:$0xf]
      %v7111 = vld [vmem:[%s7097 + $0x34] sm:$0xf]
      %v7112 = vld [vmem:[%s7097 + $0x38] sm:$0xf]
      %v7113 = vld [vmem:[%s7097 + $0x3c] sm:$0xf]
      %v7130 = vunpack.c.l.b16 %v7098
      %v7131 = vunpack.c.l.b16 %v7099
      %v7132 = vunpack.c.l.b16 %v7100
      %v7133 = vunpack.c.l.b16 %v7101
      %v7134 = vunpack.c.l.b16 %v7102
      %v7135 = vunpack.c.l.b16 %v7103
      %v7136 = vunpack.c.l.b16 %v7104
      %v7137 = vunpack.c.l.b16 %v7105
      %v7138 = vunpack.c.l.b16 %v7106
      %v7139 = vunpack.c.l.b16 %v7107
      %v7140 = vunpack.c.l.b16 %v7108
      %v7141 = vunpack.c.l.b16 %v7109
      %v7142 = vunpack.c.l.b16 %v7110
      %v7143 = vunpack.c.l.b16 %v7111
      %v7144 = vunpack.c.l.b16 %v7112
      %v7145 = vunpack.c.l.b16 %v7113
      %v7146 = vpack.c.b16 %v7131, %v7130
      %v7147 = vpack.c.b16 %v7133, %v7132
      %v7148 = vpack.c.b16 %v7135, %v7134
      %v7149 = vpack.c.b16 %v7137, %v7136
      %v7150 = vpack.c.b16 %v7139, %v7138
      %v7151 = vpack.c.b16 %v7141, %v7140
      %v7152 = vpack.c.b16 %v7143, %v7142
      %v7153 = vpack.c.b16 %v7145, %v7144
      %7162 = vmatprep.subr.bf16.mxu0 0
      %7163 = vmatpush1.bf16.msra.mxu0 %v7153
      %7164 = vmatprep.subr.bf16.mxu0 0
      %7165 = vmatpush1.bf16.msra.mxu0 %v7152
      %7166 = vmatprep.subr.bf16.mxu0 0
      %7167 = vmatpush1.bf16.msra.mxu0 %v7151
      %7168 = vmatprep.subr.bf16.mxu0 0
      %7169 = vmatpush1.bf16.msra.mxu0 %v7150
      %7170 = vmatprep.subr.bf16.mxu0 0
      %7171 = vmatpush1.bf16.msra.mxu0 %v7149
      %7172 = vmatprep.subr.bf16.mxu0 0
      %7173 = vmatpush1.bf16.msra.mxu0 %v7148
      %7174 = vmatprep.subr.bf16.mxu0 0
      %7175 = vmatpush1.bf16.msra.mxu0 %v7147
      %7176 = vmatprep.subr.bf16.mxu0 0
      %7177 = vmatpush1.bf16.msra.mxu0 %v7146
      %7178 = vmatprep.subr.bf16.mxu0 0
      %7179 = vmatpush2.bf16.msra.mxu0 0
      %7180 = vmatprep.subr.bf16.mxu0 0
      %7181 = vmatpush2.bf16.msra.mxu0 0
      %7182 = vmatprep.subr.bf16.mxu0 0
      %7183 = vmatpush2.bf16.msra.mxu0 0
      %7184 = vmatprep.subr.bf16.mxu0 0
      %7185 = vmatpush2.bf16.msra.mxu0 0
      %7186 = vmatprep.subr.bf16.mxu0 0
      %7187 = vmatpush2.bf16.msra.mxu0 0
      %7188 = vmatprep.subr.bf16.mxu0 0
      %7189 = vmatpush2.bf16.msra.mxu0 0
      %7190 = vmatprep.subr.bf16.mxu0 0
      %7191 = vmatpush2.bf16.msra.mxu0 0
      %7192 = vmatprep.subr.bf16.mxu0 0
      %7193 = vmatpush2.bf16.msra.mxu0 0
      %7194 = vmatprep.mubr.bf16.mxu0 0
      %7195 = vmatmul.mubr.bf16.gmra.mxu0 %v7081
      %v7196 = vpop.f32.mrf.mxu0
      %v7197 = vadd.f32 0.0, %v7196
      %v7198 = vpop.f32.mrf.mxu0
      %v7199 = vpop.f32.mrf.mxu0
      %v7200 = vadd.f32 0.0, %v7199
      %v7201 = vpop.f32.mrf.mxu0
      %7202 = vmatprep.mubr.bf16.mxu0 0
      %7203 = vmatmul.mubr.bf16.gmra.mxu0 %v7082
      %v7204 = vpop.f32.mrf.mxu0
      %v7205 = vadd.f32 0.0, %v7204
      %v7206 = vpop.f32.mrf.mxu0
      %v7207 = vpop.f32.mrf.mxu0
      %v7208 = vadd.f32 0.0, %v7207
      %v7209 = vpop.f32.mrf.mxu0
      %7210 = vmatprep.mubr.bf16.mxu0 0
      %7211 = vmatmul.mubr.bf16.gmra.mxu0 %v7083
      %v7212 = vpop.f32.mrf.mxu0
      %v7213 = vadd.f32 0.0, %v7212
      %v7214 = vpop.f32.mrf.mxu0
      %v7215 = vpop.f32.mrf.mxu0
      %v7216 = vadd.f32 0.0, %v7215
      %v7217 = vpop.f32.mrf.mxu0
      %7218 = vmatprep.mubr.bf16.mxu0 0
      %7219 = vmatmul.mubr.bf16.gmra.mxu0 %v7084
      %v7220 = vpop.f32.mrf.mxu0
      %v7221 = vadd.f32 0.0, %v7220
      %v7222 = vpop.f32.mrf.mxu0
      %v7223 = vpop.f32.mrf.mxu0
      %v7224 = vadd.f32 0.0, %v7223
      %v7225 = vpop.f32.mrf.mxu0
      %7226 = vmatprep.mubr.bf16.mxu0 0
      %7227 = vmatmul.mubr.bf16.gmra.mxu0 %v7085
      %v7228 = vpop.f32.mrf.mxu0
      %v7229 = vadd.f32 0.0, %v7228
      %v7230 = vpop.f32.mrf.mxu0
      %v7231 = vpop.f32.mrf.mxu0
      %v7232 = vadd.f32 0.0, %v7231
      %v7233 = vpop.f32.mrf.mxu0
      %7234 = vmatprep.mubr.bf16.mxu0 0
      %7235 = vmatmul.mubr.bf16.gmra.mxu0 %v7086
      %v7236 = vpop.f32.mrf.mxu0
      %v7237 = vadd.f32 0.0, %v7236
      %v7238 = vpop.f32.mrf.mxu0
      %v7239 = vpop.f32.mrf.mxu0
      %v7240 = vadd.f32 0.0, %v7239
      %v7241 = vpop.f32.mrf.mxu0
      %7242 = vmatprep.mubr.bf16.mxu0 0
      %7243 = vmatmul.mubr.bf16.gmra.mxu0 %v7087
      %v7244 = vpop.f32.mrf.mxu0
      %v7245 = vadd.f32 0.0, %v7244
      %v7246 = vpop.f32.mrf.mxu0
      %v7247 = vpop.f32.mrf.mxu0
      %v7248 = vadd.f32 0.0, %v7247
      %v7249 = vpop.f32.mrf.mxu0
      %7250 = vmatprep.mubr.bf16.mxu0 0
      %7251 = vmatmul.mubr.bf16.gmra.mxu0 %v7088
      %v7252 = vpop.f32.mrf.mxu0
      %v7253 = vadd.f32 0.0, %v7252
      %v7254 = vpop.f32.mrf.mxu0
      %v7255 = vpop.f32.mrf.mxu0
      %v7256 = vadd.f32 0.0, %v7255
      %v7257 = vpop.f32.mrf.mxu0
      %7258 = vmatprep.mubr.bf16.mxu0 0
      %7259 = vmatmul.mubr.bf16.gmra.mxu0 %v7089
      %v7260 = vpop.f32.mrf.mxu0
      %v7261 = vadd.f32 0.0, %v7260
      %v7262 = vpop.f32.mrf.mxu0
      %v7263 = vpop.f32.mrf.mxu0
      %v7264 = vadd.f32 0.0, %v7263
      %v7265 = vpop.f32.mrf.mxu0
      %7266 = vmatprep.mubr.bf16.mxu0 0
      %7267 = vmatmul.mubr.bf16.gmra.mxu0 %v7090
      %v7268 = vpop.f32.mrf.mxu0
      %v7269 = vadd.f32 0.0, %v7268
      %v7270 = vpop.f32.mrf.mxu0
      %v7271 = vpop.f32.mrf.mxu0
      %v7272 = vadd.f32 0.0, %v7271
      %v7273 = vpop.f32.mrf.mxu0
      %7274 = vmatprep.mubr.bf16.mxu0 0
      %7275 = vmatmul.mubr.bf16.gmra.mxu0 %v7091
      %v7276 = vpop.f32.mrf.mxu0
      %v7277 = vadd.f32 0.0, %v7276
      %v7278 = vpop.f32.mrf.mxu0
      %v7279 = vpop.f32.mrf.mxu0
      %v7280 = vadd.f32 0.0, %v7279
      %v7281 = vpop.f32.mrf.mxu0
      %7282 = vmatprep.mubr.bf16.mxu0 0
      %7283 = vmatmul.mubr.bf16.gmra.mxu0 %v7092
      %v7284 = vpop.f32.mrf.mxu0
      %v7285 = vadd.f32 0.0, %v7284
      %v7286 = vpop.f32.mrf.mxu0
      %v7287 = vpop.f32.mrf.mxu0
      %v7288 = vadd.f32 0.0, %v7287
      %v7289 = vpop.f32.mrf.mxu0
      %7290 = vmatprep.mubr.bf16.mxu0 0
      %7291 = vmatmul.mubr.bf16.gmra.mxu0 %v7093
      %v7292 = vpop.f32.mrf.mxu0
      %v7293 = vadd.f32 0.0, %v7292
      %v7294 = vpop.f32.mrf.mxu0
      %v7295 = vpop.f32.mrf.mxu0
      %v7296 = vadd.f32 0.0, %v7295
      %v7297 = vpop.f32.mrf.mxu0
      %7298 = vmatprep.mubr.bf16.mxu0 0
      %7299 = vmatmul.mubr.bf16.gmra.mxu0 %v7094
      %v7300 = vpop.f32.mrf.mxu0
      %v7301 = vadd.f32 0.0, %v7300
      %v7302 = vpop.f32.mrf.mxu0
      %v7303 = vpop.f32.mrf.mxu0
      %v7304 = vadd.f32 0.0, %v7303
      %v7305 = vpop.f32.mrf.mxu0
      %7306 = vmatprep.mubr.bf16.mxu0 0
      %7307 = vmatmul.mubr.bf16.gmra.mxu0 %v7095
      %v7308 = vpop.f32.mrf.mxu0
      %v7309 = vadd.f32 0.0, %v7308
      %v7310 = vpop.f32.mrf.mxu0
      %v7311 = vpop.f32.mrf.mxu0
      %v7312 = vadd.f32 0.0, %v7311
      %v7313 = vpop.f32.mrf.mxu0
      %7314 = vmatprep.mubr.bf16.mxu0 0
      %7315 = vmatmul.mubr.bf16.gmra.mxu0 %v7096
      %v7316 = vpop.f32.mrf.mxu0
      %v7317 = vadd.f32 0.0, %v7316
      %v7318 = vpop.f32.mrf.mxu0
      %v7319 = vpop.f32.mrf.mxu0
      %v7320 = vadd.f32 0.0, %v7319
      %v7321 = vpop.f32.mrf.mxu0
      %7322 = vdwg.mxu0
      %v7323 = vadd.f32 %v7016, %v7197
      %v7324 = vadd.f32 %v7017, %v7200
      %v7325 = vadd.f32 %v7018, %v7205
      %v7326 = vadd.f32 %v7019, %v7208
      %v7327 = vadd.f32 %v7020, %v7213
      %v7328 = vadd.f32 %v7021, %v7216
      %v7329 = vadd.f32 %v7022, %v7221
      %v7330 = vadd.f32 %v7023, %v7224
      %v7331 = vadd.f32 %v7024, %v7229
      %v7332 = vadd.f32 %v7025, %v7232
      %v7333 = vadd.f32 %v7026, %v7237
      %v7334 = vadd.f32 %v7027, %v7240
      %v7335 = vadd.f32 %v7028, %v7245
      %v7336 = vadd.f32 %v7029, %v7248
      %v7337 = vadd.f32 %v7030, %v7253
      %v7338 = vadd.f32 %v7031, %v7256
      %v7339 = vadd.f32 %v7032, %v7261
      %v7340 = vadd.f32 %v7033, %v7264
      %v7341 = vadd.f32 %v7034, %v7269
      %v7342 = vadd.f32 %v7035, %v7272
      %v7343 = vadd.f32 %v7036, %v7277
      %v7344 = vadd.f32 %v7037, %v7280
      %v7345 = vadd.f32 %v7038, %v7285
      %v7346 = vadd.f32 %v7039, %v7288
      %v7347 = vadd.f32 %v7040, %v7293
      %v7348 = vadd.f32 %v7041, %v7296
      %v7349 = vadd.f32 %v7042, %v7301
      %v7350 = vadd.f32 %v7043, %v7304
      %v7351 = vadd.f32 %v7044, %v7309
      %v7352 = vadd.f32 %v7045, %v7312
      %v7353 = vadd.f32 %v7046, %v7317
      %v7354 = vadd.f32 %v7047, %v7320
      %v7355 = vld [vmem:[%s7048 + $0x1] sm:$0xff]
      %v7356 = vld [vmem:[%s7048 + $0x9] sm:$0xff]
      %v7357 = vld [vmem:[%s7048 + $0x19] sm:$0xff]
      %v7358 = vld [vmem:[%s7048 + $0x21] sm:$0xff]
      %v7359 = vld [vmem:[%s7048 + $0x31] sm:$0xff]
      %v7360 = vld [vmem:[%s7048 + $0x39] sm:$0xff]
      %v7361 = vld [vmem:[%s7048 + $0x49] sm:$0xff]
      %v7362 = vld [vmem:[%s7048 + $0x51] sm:$0xff]
      %v7363 = vld [vmem:[%s7048 + $0x61] sm:$0xff]
      %v7364 = vld [vmem:[%s7048 + $0x69] sm:$0xff]
      %v7365 = vld [vmem:[%s7048 + $0x79] sm:$0xff]
      %v7366 = vld [vmem:[%s7048 + $0x81] sm:$0xff]
      %v7367 = vld [vmem:[%s7048 + $0x91] sm:$0xff]
      %v7368 = vld [vmem:[%s7048 + $0x99] sm:$0xff]
      %v7369 = vld [vmem:[%s7048 + $0xa9] sm:$0xff]
      %v7370 = vld [vmem:[%s7048 + $0xb1] sm:$0xff]
      %v7371 = vld [vmem:[%s7048 + $0xc1] sm:$0xff]
      %v7372 = vld [vmem:[%s7048 + $0xc9] sm:$0xff]
      %v7373 = vld [vmem:[%s7048 + $0xd9] sm:$0xff]
      %v7374 = vld [vmem:[%s7048 + $0xe1] sm:$0xff]
      %v7375 = vld [vmem:[%s7048 + $0xf1] sm:$0xff]
      %v7376 = vld [vmem:[%s7048 + $0xf9] sm:$0xff]
      %v7377 = vld [vmem:[%s7048 + $0x109] sm:$0xff]
      %v7378 = vld [vmem:[%s7048 + $0x111] sm:$0xff]
      %v7379 = vld [vmem:[%s7048 + $0x121] sm:$0xff]
      %v7380 = vld [vmem:[%s7048 + $0x129] sm:$0xff]
      %v7381 = vld [vmem:[%s7048 + $0x139] sm:$0xff]
      %v7382 = vld [vmem:[%s7048 + $0x141] sm:$0xff]
      %v7383 = vld [vmem:[%s7048 + $0x151] sm:$0xff]
      %v7384 = vld [vmem:[%s7048 + $0x159] sm:$0xff]
      %v7385 = vld [vmem:[%s7048 + $0x169] sm:$0xff]
      %v7386 = vld [vmem:[%s7048 + $0x171] sm:$0xff]
      %v7387 = vpack.c.bf16 %v7356, %v7355
      %v7388 = vpack.c.bf16 %v7358, %v7357
      %v7389 = vpack.c.bf16 %v7360, %v7359
      %v7390 = vpack.c.bf16 %v7362, %v7361
      %v7391 = vpack.c.bf16 %v7364, %v7363
      %v7392 = vpack.c.bf16 %v7366, %v7365
      %v7393 = vpack.c.bf16 %v7368, %v7367
      %v7394 = vpack.c.bf16 %v7370, %v7369
      %v7395 = vpack.c.bf16 %v7372, %v7371
      %v7396 = vpack.c.bf16 %v7374, %v7373
      %v7397 = vpack.c.bf16 %v7376, %v7375
      %v7398 = vpack.c.bf16 %v7378, %v7377
      %v7399 = vpack.c.bf16 %v7380, %v7379
      %v7400 = vpack.c.bf16 %v7382, %v7381
      %v7401 = vpack.c.bf16 %v7384, %v7383
      %v7402 = vpack.c.bf16 %v7386, %v7385
      %s7403 = scalar_lea.vmem %s2, 448
      %v7404 = vld [vmem:[%s7403] sm:$0xf]
      %v7405 = vld [vmem:[%s7403 + $0x4] sm:$0xf]
      %v7406 = vld [vmem:[%s7403 + $0x8] sm:$0xf]
      %v7407 = vld [vmem:[%s7403 + $0xc] sm:$0xf]
      %v7408 = vld [vmem:[%s7403 + $0x10] sm:$0xf]
      %v7409 = vld [vmem:[%s7403 + $0x14] sm:$0xf]
      %v7410 = vld [vmem:[%s7403 + $0x18] sm:$0xf]
      %v7411 = vld [vmem:[%s7403 + $0x1c] sm:$0xf]
      %v7412 = vld [vmem:[%s7403 + $0x20] sm:$0xf]
      %v7413 = vld [vmem:[%s7403 + $0x24] sm:$0xf]
      %v7414 = vld [vmem:[%s7403 + $0x28] sm:$0xf]
      %v7415 = vld [vmem:[%s7403 + $0x2c] sm:$0xf]
      %v7416 = vld [vmem:[%s7403 + $0x30] sm:$0xf]
      %v7417 = vld [vmem:[%s7403 + $0x34] sm:$0xf]
      %v7418 = vld [vmem:[%s7403 + $0x38] sm:$0xf]
      %v7419 = vld [vmem:[%s7403 + $0x3c] sm:$0xf]
      %v7436 = vunpack.c.l.b16 %v7404
      %v7437 = vunpack.c.l.b16 %v7405
      %v7438 = vunpack.c.l.b16 %v7406
      %v7439 = vunpack.c.l.b16 %v7407
      %v7440 = vunpack.c.l.b16 %v7408
      %v7441 = vunpack.c.l.b16 %v7409
      %v7442 = vunpack.c.l.b16 %v7410
      %v7443 = vunpack.c.l.b16 %v7411
      %v7444 = vunpack.c.l.b16 %v7412
      %v7445 = vunpack.c.l.b16 %v7413
      %v7446 = vunpack.c.l.b16 %v7414
      %v7447 = vunpack.c.l.b16 %v7415
      %v7448 = vunpack.c.l.b16 %v7416
      %v7449 = vunpack.c.l.b16 %v7417
      %v7450 = vunpack.c.l.b16 %v7418
      %v7451 = vunpack.c.l.b16 %v7419
      %v7452 = vpack.c.b16 %v7437, %v7436
      %v7453 = vpack.c.b16 %v7439, %v7438
      %v7454 = vpack.c.b16 %v7441, %v7440
      %v7455 = vpack.c.b16 %v7443, %v7442
      %v7456 = vpack.c.b16 %v7445, %v7444
      %v7457 = vpack.c.b16 %v7447, %v7446
      %v7458 = vpack.c.b16 %v7449, %v7448
      %v7459 = vpack.c.b16 %v7451, %v7450
      %7468 = vmatprep.subr.bf16.mxu0 0
      %7469 = vmatpush1.bf16.msra.mxu0 %v7459
      %7470 = vmatprep.subr.bf16.mxu0 0
      %7471 = vmatpush1.bf16.msra.mxu0 %v7458
      %7472 = vmatprep.subr.bf16.mxu0 0
      %7473 = vmatpush1.bf16.msra.mxu0 %v7457
      %7474 = vmatprep.subr.bf16.mxu0 0
      %7475 = vmatpush1.bf16.msra.mxu0 %v7456
      %7476 = vmatprep.subr.bf16.mxu0 0
      %7477 = vmatpush1.bf16.msra.mxu0 %v7455
      %7478 = vmatprep.subr.bf16.mxu0 0
      %7479 = vmatpush1.bf16.msra.mxu0 %v7454
      %7480 = vmatprep.subr.bf16.mxu0 0
      %7481 = vmatpush1.bf16.msra.mxu0 %v7453
      %7482 = vmatprep.subr.bf16.mxu0 0
      %7483 = vmatpush1.bf16.msra.mxu0 %v7452
      %7484 = vmatprep.subr.bf16.mxu0 0
      %7485 = vmatpush2.bf16.msra.mxu0 0
      %7486 = vmatprep.subr.bf16.mxu0 0
      %7487 = vmatpush2.bf16.msra.mxu0 0
      %7488 = vmatprep.subr.bf16.mxu0 0
      %7489 = vmatpush2.bf16.msra.mxu0 0
      %7490 = vmatprep.subr.bf16.mxu0 0
      %7491 = vmatpush2.bf16.msra.mxu0 0
      %7492 = vmatprep.subr.bf16.mxu0 0
      %7493 = vmatpush2.bf16.msra.mxu0 0
      %7494 = vmatprep.subr.bf16.mxu0 0
      %7495 = vmatpush2.bf16.msra.mxu0 0
      %7496 = vmatprep.subr.bf16.mxu0 0
      %7497 = vmatpush2.bf16.msra.mxu0 0
      %7498 = vmatprep.subr.bf16.mxu0 0
      %7499 = vmatpush2.bf16.msra.mxu0 0
      %7500 = vmatprep.mubr.bf16.mxu0 0
      %7501 = vmatmul.mubr.bf16.gmra.mxu0 %v7387
      %v7502 = vpop.f32.mrf.mxu0
      %v7503 = vadd.f32 0.0, %v7502
      %v7504 = vpop.f32.mrf.mxu0
      %v7505 = vpop.f32.mrf.mxu0
      %v7506 = vadd.f32 0.0, %v7505
      %v7507 = vpop.f32.mrf.mxu0
      %7508 = vmatprep.mubr.bf16.mxu0 0
      %7509 = vmatmul.mubr.bf16.gmra.mxu0 %v7388
      %v7510 = vpop.f32.mrf.mxu0
      %v7511 = vadd.f32 0.0, %v7510
      %v7512 = vpop.f32.mrf.mxu0
      %v7513 = vpop.f32.mrf.mxu0
      %v7514 = vadd.f32 0.0, %v7513
      %v7515 = vpop.f32.mrf.mxu0
      %7516 = vmatprep.mubr.bf16.mxu0 0
      %7517 = vmatmul.mubr.bf16.gmra.mxu0 %v7389
      %v7518 = vpop.f32.mrf.mxu0
      %v7519 = vadd.f32 0.0, %v7518
      %v7520 = vpop.f32.mrf.mxu0
      %v7521 = vpop.f32.mrf.mxu0
      %v7522 = vadd.f32 0.0, %v7521
      %v7523 = vpop.f32.mrf.mxu0
      %7524 = vmatprep.mubr.bf16.mxu0 0
      %7525 = vmatmul.mubr.bf16.gmra.mxu0 %v7390
      %v7526 = vpop.f32.mrf.mxu0
      %v7527 = vadd.f32 0.0, %v7526
      %v7528 = vpop.f32.mrf.mxu0
      %v7529 = vpop.f32.mrf.mxu0
      %v7530 = vadd.f32 0.0, %v7529
      %v7531 = vpop.f32.mrf.mxu0
      %7532 = vmatprep.mubr.bf16.mxu0 0
      %7533 = vmatmul.mubr.bf16.gmra.mxu0 %v7391
      %v7534 = vpop.f32.mrf.mxu0
      %v7535 = vadd.f32 0.0, %v7534
      %v7536 = vpop.f32.mrf.mxu0
      %v7537 = vpop.f32.mrf.mxu0
      %v7538 = vadd.f32 0.0, %v7537
      %v7539 = vpop.f32.mrf.mxu0
      %7540 = vmatprep.mubr.bf16.mxu0 0
      %7541 = vmatmul.mubr.bf16.gmra.mxu0 %v7392
      %v7542 = vpop.f32.mrf.mxu0
      %v7543 = vadd.f32 0.0, %v7542
      %v7544 = vpop.f32.mrf.mxu0
      %v7545 = vpop.f32.mrf.mxu0
      %v7546 = vadd.f32 0.0, %v7545
      %v7547 = vpop.f32.mrf.mxu0
      %7548 = vmatprep.mubr.bf16.mxu0 0
      %7549 = vmatmul.mubr.bf16.gmra.mxu0 %v7393
      %v7550 = vpop.f32.mrf.mxu0
      %v7551 = vadd.f32 0.0, %v7550
      %v7552 = vpop.f32.mrf.mxu0
      %v7553 = vpop.f32.mrf.mxu0
      %v7554 = vadd.f32 0.0, %v7553
      %v7555 = vpop.f32.mrf.mxu0
      %7556 = vmatprep.mubr.bf16.mxu0 0
      %7557 = vmatmul.mubr.bf16.gmra.mxu0 %v7394
      %v7558 = vpop.f32.mrf.mxu0
      %v7559 = vadd.f32 0.0, %v7558
      %v7560 = vpop.f32.mrf.mxu0
      %v7561 = vpop.f32.mrf.mxu0
      %v7562 = vadd.f32 0.0, %v7561
      %v7563 = vpop.f32.mrf.mxu0
      %7564 = vmatprep.mubr.bf16.mxu0 0
      %7565 = vmatmul.mubr.bf16.gmra.mxu0 %v7395
      %v7566 = vpop.f32.mrf.mxu0
      %v7567 = vadd.f32 0.0, %v7566
      %v7568 = vpop.f32.mrf.mxu0
      %v7569 = vpop.f32.mrf.mxu0
      %v7570 = vadd.f32 0.0, %v7569
      %v7571 = vpop.f32.mrf.mxu0
      %7572 = vmatprep.mubr.bf16.mxu0 0
      %7573 = vmatmul.mubr.bf16.gmra.mxu0 %v7396
      %v7574 = vpop.f32.mrf.mxu0
      %v7575 = vadd.f32 0.0, %v7574
      %v7576 = vpop.f32.mrf.mxu0
      %v7577 = vpop.f32.mrf.mxu0
      %v7578 = vadd.f32 0.0, %v7577
      %v7579 = vpop.f32.mrf.mxu0
      %7580 = vmatprep.mubr.bf16.mxu0 0
      %7581 = vmatmul.mubr.bf16.gmra.mxu0 %v7397
      %v7582 = vpop.f32.mrf.mxu0
      %v7583 = vadd.f32 0.0, %v7582
      %v7584 = vpop.f32.mrf.mxu0
      %v7585 = vpop.f32.mrf.mxu0
      %v7586 = vadd.f32 0.0, %v7585
      %v7587 = vpop.f32.mrf.mxu0
      %7588 = vmatprep.mubr.bf16.mxu0 0
      %7589 = vmatmul.mubr.bf16.gmra.mxu0 %v7398
      %v7590 = vpop.f32.mrf.mxu0
      %v7591 = vadd.f32 0.0, %v7590
      %v7592 = vpop.f32.mrf.mxu0
      %v7593 = vpop.f32.mrf.mxu0
      %v7594 = vadd.f32 0.0, %v7593
      %v7595 = vpop.f32.mrf.mxu0
      %7596 = vmatprep.mubr.bf16.mxu0 0
      %7597 = vmatmul.mubr.bf16.gmra.mxu0 %v7399
      %v7598 = vpop.f32.mrf.mxu0
      %v7599 = vadd.f32 0.0, %v7598
      %v7600 = vpop.f32.mrf.mxu0
      %v7601 = vpop.f32.mrf.mxu0
      %v7602 = vadd.f32 0.0, %v7601
      %v7603 = vpop.f32.mrf.mxu0
      %7604 = vmatprep.mubr.bf16.mxu0 0
      %7605 = vmatmul.mubr.bf16.gmra.mxu0 %v7400
      %v7606 = vpop.f32.mrf.mxu0
      %v7607 = vadd.f32 0.0, %v7606
      %v7608 = vpop.f32.mrf.mxu0
      %v7609 = vpop.f32.mrf.mxu0
      %v7610 = vadd.f32 0.0, %v7609
      %v7611 = vpop.f32.mrf.mxu0
      %7612 = vmatprep.mubr.bf16.mxu0 0
      %7613 = vmatmul.mubr.bf16.gmra.mxu0 %v7401
      %v7614 = vpop.f32.mrf.mxu0
      %v7615 = vadd.f32 0.0, %v7614
      %v7616 = vpop.f32.mrf.mxu0
      %v7617 = vpop.f32.mrf.mxu0
      %v7618 = vadd.f32 0.0, %v7617
      %v7619 = vpop.f32.mrf.mxu0
      %7620 = vmatprep.mubr.bf16.mxu0 0
      %7621 = vmatmul.mubr.bf16.gmra.mxu0 %v7402
      %v7622 = vpop.f32.mrf.mxu0
      %v7623 = vadd.f32 0.0, %v7622
      %v7624 = vpop.f32.mrf.mxu0
      %v7625 = vpop.f32.mrf.mxu0
      %v7626 = vadd.f32 0.0, %v7625
      %v7627 = vpop.f32.mrf.mxu0
      %7628 = vdwg.mxu0
      %v7629 = vadd.f32 %v7323, %v7503
      %v7630 = vadd.f32 %v7324, %v7506
      %v7631 = vadd.f32 %v7325, %v7511
      %v7632 = vadd.f32 %v7326, %v7514
      %v7633 = vadd.f32 %v7327, %v7519
      %v7634 = vadd.f32 %v7328, %v7522
      %v7635 = vadd.f32 %v7329, %v7527
      %v7636 = vadd.f32 %v7330, %v7530
      %v7637 = vadd.f32 %v7331, %v7535
      %v7638 = vadd.f32 %v7332, %v7538
      %v7639 = vadd.f32 %v7333, %v7543
      %v7640 = vadd.f32 %v7334, %v7546
      %v7641 = vadd.f32 %v7335, %v7551
      %v7642 = vadd.f32 %v7336, %v7554
      %v7643 = vadd.f32 %v7337, %v7559
      %v7644 = vadd.f32 %v7338, %v7562
      %v7645 = vadd.f32 %v7339, %v7567
      %v7646 = vadd.f32 %v7340, %v7570
      %v7647 = vadd.f32 %v7341, %v7575
      %v7648 = vadd.f32 %v7342, %v7578
      %v7649 = vadd.f32 %v7343, %v7583
      %v7650 = vadd.f32 %v7344, %v7586
      %v7651 = vadd.f32 %v7345, %v7591
      %v7652 = vadd.f32 %v7346, %v7594
      %v7653 = vadd.f32 %v7347, %v7599
      %v7654 = vadd.f32 %v7348, %v7602
      %v7655 = vadd.f32 %v7349, %v7607
      %v7656 = vadd.f32 %v7350, %v7610
      %v7657 = vadd.f32 %v7351, %v7615
      %v7658 = vadd.f32 %v7352, %v7618
      %v7659 = vadd.f32 %v7353, %v7623
      %v7660 = vadd.f32 %v7354, %v7626
      %v7661 = vld [vmem:[%s7048 + $0x2] sm:$0xff]
      %v7662 = vld [vmem:[%s7048 + $0xa] sm:$0xff]
      %v7663 = vld [vmem:[%s7048 + $0x1a] sm:$0xff]
      %v7664 = vld [vmem:[%s7048 + $0x22] sm:$0xff]
      %v7665 = vld [vmem:[%s7048 + $0x32] sm:$0xff]
      %v7666 = vld [vmem:[%s7048 + $0x3a] sm:$0xff]
      %v7667 = vld [vmem:[%s7048 + $0x4a] sm:$0xff]
      %v7668 = vld [vmem:[%s7048 + $0x52] sm:$0xff]
      %v7669 = vld [vmem:[%s7048 + $0x62] sm:$0xff]
      %v7670 = vld [vmem:[%s7048 + $0x6a] sm:$0xff]
      %v7671 = vld [vmem:[%s7048 + $0x7a] sm:$0xff]
      %v7672 = vld [vmem:[%s7048 + $0x82] sm:$0xff]
      %v7673 = vld [vmem:[%s7048 + $0x92] sm:$0xff]
      %v7674 = vld [vmem:[%s7048 + $0x9a] sm:$0xff]
      %v7675 = vld [vmem:[%s7048 + $0xaa] sm:$0xff]
      %v7676 = vld [vmem:[%s7048 + $0xb2] sm:$0xff]
      %v7677 = vld [vmem:[%s7048 + $0xc2] sm:$0xff]
      %v7678 = vld [vmem:[%s7048 + $0xca] sm:$0xff]
      %v7679 = vld [vmem:[%s7048 + $0xda] sm:$0xff]
      %v7680 = vld [vmem:[%s7048 + $0xe2] sm:$0xff]
      %v7681 = vld [vmem:[%s7048 + $0xf2] sm:$0xff]
      %v7682 = vld [vmem:[%s7048 + $0xfa] sm:$0xff]
      %v7683 = vld [vmem:[%s7048 + $0x10a] sm:$0xff]
      %v7684 = vld [vmem:[%s7048 + $0x112] sm:$0xff]
      %v7685 = vld [vmem:[%s7048 + $0x122] sm:$0xff]
      %v7686 = vld [vmem:[%s7048 + $0x12a] sm:$0xff]
      %v7687 = vld [vmem:[%s7048 + $0x13a] sm:$0xff]
      %v7688 = vld [vmem:[%s7048 + $0x142] sm:$0xff]
      %v7689 = vld [vmem:[%s7048 + $0x152] sm:$0xff]
      %v7690 = vld [vmem:[%s7048 + $0x15a] sm:$0xff]
      %v7691 = vld [vmem:[%s7048 + $0x16a] sm:$0xff]
      %v7692 = vld [vmem:[%s7048 + $0x172] sm:$0xff]
      %v7693 = vpack.c.bf16 %v7662, %v7661
      %v7694 = vpack.c.bf16 %v7664, %v7663
      %v7695 = vpack.c.bf16 %v7666, %v7665
      %v7696 = vpack.c.bf16 %v7668, %v7667
      %v7697 = vpack.c.bf16 %v7670, %v7669
      %v7698 = vpack.c.bf16 %v7672, %v7671
      %v7699 = vpack.c.bf16 %v7674, %v7673
      %v7700 = vpack.c.bf16 %v7676, %v7675
      %v7701 = vpack.c.bf16 %v7678, %v7677
      %v7702 = vpack.c.bf16 %v7680, %v7679
      %v7703 = vpack.c.bf16 %v7682, %v7681
      %v7704 = vpack.c.bf16 %v7684, %v7683
      %v7705 = vpack.c.bf16 %v7686, %v7685
      %v7706 = vpack.c.bf16 %v7688, %v7687
      %v7707 = vpack.c.bf16 %v7690, %v7689
      %v7708 = vpack.c.bf16 %v7692, %v7691
      %s7709 = scalar_lea.vmem %s2, 512
      %v7710 = vld [vmem:[%s7709] sm:$0xf]
      %v7711 = vld [vmem:[%s7709 + $0x4] sm:$0xf]
      %v7712 = vld [vmem:[%s7709 + $0x8] sm:$0xf]
      %v7713 = vld [vmem:[%s7709 + $0xc] sm:$0xf]
      %v7714 = vld [vmem:[%s7709 + $0x10] sm:$0xf]
      %v7715 = vld [vmem:[%s7709 + $0x14] sm:$0xf]
      %v7716 = vld [vmem:[%s7709 + $0x18] sm:$0xf]
      %v7717 = vld [vmem:[%s7709 + $0x1c] sm:$0xf]
      %v7718 = vld [vmem:[%s7709 + $0x20] sm:$0xf]
      %v7719 = vld [vmem:[%s7709 + $0x24] sm:$0xf]
      %v7720 = vld [vmem:[%s7709 + $0x28] sm:$0xf]
      %v7721 = vld [vmem:[%s7709 + $0x2c] sm:$0xf]
      %v7722 = vld [vmem:[%s7709 + $0x30] sm:$0xf]
      %v7723 = vld [vmem:[%s7709 + $0x34] sm:$0xf]
      %v7724 = vld [vmem:[%s7709 + $0x38] sm:$0xf]
      %v7725 = vld [vmem:[%s7709 + $0x3c] sm:$0xf]
      %v7742 = vunpack.c.l.b16 %v7710
      %v7743 = vunpack.c.l.b16 %v7711
      %v7744 = vunpack.c.l.b16 %v7712
      %v7745 = vunpack.c.l.b16 %v7713
      %v7746 = vunpack.c.l.b16 %v7714
      %v7747 = vunpack.c.l.b16 %v7715
      %v7748 = vunpack.c.l.b16 %v7716
      %v7749 = vunpack.c.l.b16 %v7717
      %v7750 = vunpack.c.l.b16 %v7718
      %v7751 = vunpack.c.l.b16 %v7719
      %v7752 = vunpack.c.l.b16 %v7720
      %v7753 = vunpack.c.l.b16 %v7721
      %v7754 = vunpack.c.l.b16 %v7722
      %v7755 = vunpack.c.l.b16 %v7723
      %v7756 = vunpack.c.l.b16 %v7724
      %v7757 = vunpack.c.l.b16 %v7725
      %v7758 = vpack.c.b16 %v7743, %v7742
      %v7759 = vpack.c.b16 %v7745, %v7744
      %v7760 = vpack.c.b16 %v7747, %v7746
      %v7761 = vpack.c.b16 %v7749, %v7748
      %v7762 = vpack.c.b16 %v7751, %v7750
      %v7763 = vpack.c.b16 %v7753, %v7752
      %v7764 = vpack.c.b16 %v7755, %v7754
      %v7765 = vpack.c.b16 %v7757, %v7756
      %7774 = vmatprep.subr.bf16.mxu0 0
      %7775 = vmatpush1.bf16.msra.mxu0 %v7765
      %7776 = vmatprep.subr.bf16.mxu0 0
      %7777 = vmatpush1.bf16.msra.mxu0 %v7764
      %7778 = vmatprep.subr.bf16.mxu0 0
      %7779 = vmatpush1.bf16.msra.mxu0 %v7763
      %7780 = vmatprep.subr.bf16.mxu0 0
      %7781 = vmatpush1.bf16.msra.mxu0 %v7762
      %7782 = vmatprep.subr.bf16.mxu0 0
      %7783 = vmatpush1.bf16.msra.mxu0 %v7761
      %7784 = vmatprep.subr.bf16.mxu0 0
      %7785 = vmatpush1.bf16.msra.mxu0 %v7760
      %7786 = vmatprep.subr.bf16.mxu0 0
      %7787 = vmatpush1.bf16.msra.mxu0 %v7759
      %7788 = vmatprep.subr.bf16.mxu0 0
      %7789 = vmatpush1.bf16.msra.mxu0 %v7758
      %7790 = vmatprep.subr.bf16.mxu0 0
      %7791 = vmatpush2.bf16.msra.mxu0 0
      %7792 = vmatprep.subr.bf16.mxu0 0
      %7793 = vmatpush2.bf16.msra.mxu0 0
      %7794 = vmatprep.subr.bf16.mxu0 0
      %7795 = vmatpush2.bf16.msra.mxu0 0
      %7796 = vmatprep.subr.bf16.mxu0 0
      %7797 = vmatpush2.bf16.msra.mxu0 0
      %7798 = vmatprep.subr.bf16.mxu0 0
      %7799 = vmatpush2.bf16.msra.mxu0 0
      %7800 = vmatprep.subr.bf16.mxu0 0
      %7801 = vmatpush2.bf16.msra.mxu0 0
      %7802 = vmatprep.subr.bf16.mxu0 0
      %7803 = vmatpush2.bf16.msra.mxu0 0
      %7804 = vmatprep.subr.bf16.mxu0 0
      %7805 = vmatpush2.bf16.msra.mxu0 0
      %7806 = vmatprep.mubr.bf16.mxu0 0
      %7807 = vmatmul.mubr.bf16.gmra.mxu0 %v7693
      %v7808 = vpop.f32.mrf.mxu0
      %v7809 = vadd.f32 0.0, %v7808
      %v7810 = vpop.f32.mrf.mxu0
      %v7811 = vpop.f32.mrf.mxu0
      %v7812 = vadd.f32 0.0, %v7811
      %v7813 = vpop.f32.mrf.mxu0
      %7814 = vmatprep.mubr.bf16.mxu0 0
      %7815 = vmatmul.mubr.bf16.gmra.mxu0 %v7694
      %v7816 = vpop.f32.mrf.mxu0
      %v7817 = vadd.f32 0.0, %v7816
      %v7818 = vpop.f32.mrf.mxu0
      %v7819 = vpop.f32.mrf.mxu0
      %v7820 = vadd.f32 0.0, %v7819
      %v7821 = vpop.f32.mrf.mxu0
      %7822 = vmatprep.mubr.bf16.mxu0 0
      %7823 = vmatmul.mubr.bf16.gmra.mxu0 %v7695
      %v7824 = vpop.f32.mrf.mxu0
      %v7825 = vadd.f32 0.0, %v7824
      %v7826 = vpop.f32.mrf.mxu0
      %v7827 = vpop.f32.mrf.mxu0
      %v7828 = vadd.f32 0.0, %v7827
      %v7829 = vpop.f32.mrf.mxu0
      %7830 = vmatprep.mubr.bf16.mxu0 0
      %7831 = vmatmul.mubr.bf16.gmra.mxu0 %v7696
      %v7832 = vpop.f32.mrf.mxu0
      %v7833 = vadd.f32 0.0, %v7832
      %v7834 = vpop.f32.mrf.mxu0
      %v7835 = vpop.f32.mrf.mxu0
      %v7836 = vadd.f32 0.0, %v7835
      %v7837 = vpop.f32.mrf.mxu0
      %7838 = vmatprep.mubr.bf16.mxu0 0
      %7839 = vmatmul.mubr.bf16.gmra.mxu0 %v7697
      %v7840 = vpop.f32.mrf.mxu0
      %v7841 = vadd.f32 0.0, %v7840
      %v7842 = vpop.f32.mrf.mxu0
      %v7843 = vpop.f32.mrf.mxu0
      %v7844 = vadd.f32 0.0, %v7843
      %v7845 = vpop.f32.mrf.mxu0
      %7846 = vmatprep.mubr.bf16.mxu0 0
      %7847 = vmatmul.mubr.bf16.gmra.mxu0 %v7698
      %v7848 = vpop.f32.mrf.mxu0
      %v7849 = vadd.f32 0.0, %v7848
      %v7850 = vpop.f32.mrf.mxu0
      %v7851 = vpop.f32.mrf.mxu0
      %v7852 = vadd.f32 0.0, %v7851
      %v7853 = vpop.f32.mrf.mxu0
      %7854 = vmatprep.mubr.bf16.mxu0 0
      %7855 = vmatmul.mubr.bf16.gmra.mxu0 %v7699
      %v7856 = vpop.f32.mrf.mxu0
      %v7857 = vadd.f32 0.0, %v7856
      %v7858 = vpop.f32.mrf.mxu0
      %v7859 = vpop.f32.mrf.mxu0
      %v7860 = vadd.f32 0.0, %v7859
      %v7861 = vpop.f32.mrf.mxu0
      %7862 = vmatprep.mubr.bf16.mxu0 0
      %7863 = vmatmul.mubr.bf16.gmra.mxu0 %v7700
      %v7864 = vpop.f32.mrf.mxu0
      %v7865 = vadd.f32 0.0, %v7864
      %v7866 = vpop.f32.mrf.mxu0
      %v7867 = vpop.f32.mrf.mxu0
      %v7868 = vadd.f32 0.0, %v7867
      %v7869 = vpop.f32.mrf.mxu0
      %7870 = vmatprep.mubr.bf16.mxu0 0
      %7871 = vmatmul.mubr.bf16.gmra.mxu0 %v7701
      %v7872 = vpop.f32.mrf.mxu0
      %v7873 = vadd.f32 0.0, %v7872
      %v7874 = vpop.f32.mrf.mxu0
      %v7875 = vpop.f32.mrf.mxu0
      %v7876 = vadd.f32 0.0, %v7875
      %v7877 = vpop.f32.mrf.mxu0
      %7878 = vmatprep.mubr.bf16.mxu0 0
      %7879 = vmatmul.mubr.bf16.gmra.mxu0 %v7702
      %v7880 = vpop.f32.mrf.mxu0
      %v7881 = vadd.f32 0.0, %v7880
      %v7882 = vpop.f32.mrf.mxu0
      %v7883 = vpop.f32.mrf.mxu0
      %v7884 = vadd.f32 0.0, %v7883
      %v7885 = vpop.f32.mrf.mxu0
      %7886 = vmatprep.mubr.bf16.mxu0 0
      %7887 = vmatmul.mubr.bf16.gmra.mxu0 %v7703
      %v7888 = vpop.f32.mrf.mxu0
      %v7889 = vadd.f32 0.0, %v7888
      %v7890 = vpop.f32.mrf.mxu0
      %v7891 = vpop.f32.mrf.mxu0
      %v7892 = vadd.f32 0.0, %v7891
      %v7893 = vpop.f32.mrf.mxu0
      %7894 = vmatprep.mubr.bf16.mxu0 0
      %7895 = vmatmul.mubr.bf16.gmra.mxu0 %v7704
      %v7896 = vpop.f32.mrf.mxu0
      %v7897 = vadd.f32 0.0, %v7896
      %v7898 = vpop.f32.mrf.mxu0
      %v7899 = vpop.f32.mrf.mxu0
      %v7900 = vadd.f32 0.0, %v7899
      %v7901 = vpop.f32.mrf.mxu0
      %7902 = vmatprep.mubr.bf16.mxu0 0
      %7903 = vmatmul.mubr.bf16.gmra.mxu0 %v7705
      %v7904 = vpop.f32.mrf.mxu0
      %v7905 = vadd.f32 0.0, %v7904
      %v7906 = vpop.f32.mrf.mxu0
      %v7907 = vpop.f32.mrf.mxu0
      %v7908 = vadd.f32 0.0, %v7907
      %v7909 = vpop.f32.mrf.mxu0
      %7910 = vmatprep.mubr.bf16.mxu0 0
      %7911 = vmatmul.mubr.bf16.gmra.mxu0 %v7706
      %v7912 = vpop.f32.mrf.mxu0
      %v7913 = vadd.f32 0.0, %v7912
      %v7914 = vpop.f32.mrf.mxu0
      %v7915 = vpop.f32.mrf.mxu0
      %v7916 = vadd.f32 0.0, %v7915
      %v7917 = vpop.f32.mrf.mxu0
      %7918 = vmatprep.mubr.bf16.mxu0 0
      %7919 = vmatmul.mubr.bf16.gmra.mxu0 %v7707
      %v7920 = vpop.f32.mrf.mxu0
      %v7921 = vadd.f32 0.0, %v7920
      %v7922 = vpop.f32.mrf.mxu0
      %v7923 = vpop.f32.mrf.mxu0
      %v7924 = vadd.f32 0.0, %v7923
      %v7925 = vpop.f32.mrf.mxu0
      %7926 = vmatprep.mubr.bf16.mxu0 0
      %7927 = vmatmul.mubr.bf16.gmra.mxu0 %v7708
      %v7928 = vpop.f32.mrf.mxu0
      %v7929 = vadd.f32 0.0, %v7928
      %v7930 = vpop.f32.mrf.mxu0
      %v7931 = vpop.f32.mrf.mxu0
      %v7932 = vadd.f32 0.0, %v7931
      %v7933 = vpop.f32.mrf.mxu0
      %7934 = vdwg.mxu0
      %v7935 = vadd.f32 %v7629, %v7809
      %v7936 = vadd.f32 %v7630, %v7812
      %v7937 = vadd.f32 %v7631, %v7817
      %v7938 = vadd.f32 %v7632, %v7820
      %v7939 = vadd.f32 %v7633, %v7825
      %v7940 = vadd.f32 %v7634, %v7828
      %v7941 = vadd.f32 %v7635, %v7833
      %v7942 = vadd.f32 %v7636, %v7836
      %v7943 = vadd.f32 %v7637, %v7841
      %v7944 = vadd.f32 %v7638, %v7844
      %v7945 = vadd.f32 %v7639, %v7849
      %v7946 = vadd.f32 %v7640, %v7852
      %v7947 = vadd.f32 %v7641, %v7857
      %v7948 = vadd.f32 %v7642, %v7860
      %v7949 = vadd.f32 %v7643, %v7865
      %v7950 = vadd.f32 %v7644, %v7868
      %v7951 = vadd.f32 %v7645, %v7873
      %v7952 = vadd.f32 %v7646, %v7876
      %v7953 = vadd.f32 %v7647, %v7881
      %v7954 = vadd.f32 %v7648, %v7884
      %v7955 = vadd.f32 %v7649, %v7889
      %v7956 = vadd.f32 %v7650, %v7892
      %v7957 = vadd.f32 %v7651, %v7897
      %v7958 = vadd.f32 %v7652, %v7900
      %v7959 = vadd.f32 %v7653, %v7905
      %v7960 = vadd.f32 %v7654, %v7908
      %v7961 = vadd.f32 %v7655, %v7913
      %v7962 = vadd.f32 %v7656, %v7916
      %v7963 = vadd.f32 %v7657, %v7921
      %v7964 = vadd.f32 %v7658, %v7924
      %v7965 = vadd.f32 %v7659, %v7929
      %v7966 = vadd.f32 %v7660, %v7932
      %v7967 = vadd.f32 %v7935, %v7936
      %v7968 = vadd.f32 %v7967, %v7937
      %v7969 = vadd.f32 %v7968, %v7938
      %v7970 = vadd.f32 %v7969, %v7939
      %v7971 = vadd.f32 %v7970, %v7940
      %v7972 = vadd.f32 %v7971, %v7941
      %v7973 = vadd.f32 %v7972, %v7942
      %v7974 = vadd.f32 %v7973, %v7943
      %v7975 = vadd.f32 %v7974, %v7944
      %v7976 = vadd.f32 %v7975, %v7945
      %v7977 = vadd.f32 %v7976, %v7946
      %v7978 = vadd.f32 %v7977, %v7947
      %v7979 = vadd.f32 %v7978, %v7948
      %v7980 = vadd.f32 %v7979, %v7949
      %v7981 = vadd.f32 %v7980, %v7950
      %v7982 = vadd.f32 %v7981, %v7951
      %v7983 = vadd.f32 %v7982, %v7952
      %v7984 = vadd.f32 %v7983, %v7953
      %v7985 = vadd.f32 %v7984, %v7954
      %v7986 = vadd.f32 %v7985, %v7955
      %v7987 = vadd.f32 %v7986, %v7956
      %v7988 = vadd.f32 %v7987, %v7957
      %v7989 = vadd.f32 %v7988, %v7958
      %v7990 = vadd.f32 %v7989, %v7959
      %v7991 = vadd.f32 %v7990, %v7960
      %v7992 = vadd.f32 %v7991, %v7961
      %v7993 = vadd.f32 %v7992, %v7962
      %v7994 = vadd.f32 %v7993, %v7963
      %v7995 = vadd.f32 %v7994, %v7964
      %v7996 = vadd.f32 %v7995, %v7965
      %v7997 = vadd.f32 %v7996, %v7966
      %v7998 = vrot.slane %v7997, 4
      %v7999 = vadd.f32 %v7997, %v7998
      %v8000 = vrot.slane %v7999, 2
      %v8001 = vadd.f32 %v7999, %v8000
      %v8002 = vrot.slane %v8001, 1
      %v8003 = vadd.f32 %v8001, %v8002
      %v8004 = vmul.f32 %v8003, 0.00390625
      %v8005 = vmul.f32 %v7935, %v7935
      %v8006 = vmul.f32 %v7936, %v7936
      %v8007 = vmul.f32 %v7937, %v7937
      %v8008 = vmul.f32 %v7938, %v7938
      %v8009 = vmul.f32 %v7939, %v7939
      %v8010 = vmul.f32 %v7940, %v7940
      %v8011 = vmul.f32 %v7941, %v7941
      %v8012 = vmul.f32 %v7942, %v7942
      %v8013 = vmul.f32 %v7943, %v7943
      %v8014 = vmul.f32 %v7944, %v7944
      %v8015 = vmul.f32 %v7945, %v7945
      %v8016 = vmul.f32 %v7946, %v7946
      %v8017 = vmul.f32 %v7947, %v7947
      %v8018 = vmul.f32 %v7948, %v7948
      %v8019 = vmul.f32 %v7949, %v7949
      %v8020 = vmul.f32 %v7950, %v7950
      %v8021 = vmul.f32 %v7951, %v7951
      %v8022 = vmul.f32 %v7952, %v7952
      %v8023 = vmul.f32 %v7953, %v7953
      %v8024 = vmul.f32 %v7954, %v7954
      %v8025 = vmul.f32 %v7955, %v7955
      %v8026 = vmul.f32 %v7956, %v7956
      %v8027 = vmul.f32 %v7957, %v7957
      %v8028 = vmul.f32 %v7958, %v7958
      %v8029 = vmul.f32 %v7959, %v7959
      %v8030 = vmul.f32 %v7960, %v7960
      %v8031 = vmul.f32 %v7961, %v7961
      %v8032 = vmul.f32 %v7962, %v7962
      %v8033 = vmul.f32 %v7963, %v7963
      %v8034 = vmul.f32 %v7964, %v7964
      %v8035 = vmul.f32 %v7965, %v7965
      %v8036 = vmul.f32 %v7966, %v7966
      %v8037 = vadd.f32 %v8005, %v8006
      %v8038 = vadd.f32 %v8037, %v8007
      %v8039 = vadd.f32 %v8038, %v8008
      %v8040 = vadd.f32 %v8039, %v8009
      %v8041 = vadd.f32 %v8040, %v8010
      %v8042 = vadd.f32 %v8041, %v8011
      %v8043 = vadd.f32 %v8042, %v8012
      %v8044 = vadd.f32 %v8043, %v8013
      %v8045 = vadd.f32 %v8044, %v8014
      %v8046 = vadd.f32 %v8045, %v8015
      %v8047 = vadd.f32 %v8046, %v8016
      %v8048 = vadd.f32 %v8047, %v8017
      %v8049 = vadd.f32 %v8048, %v8018
      %v8050 = vadd.f32 %v8049, %v8019
      %v8051 = vadd.f32 %v8050, %v8020
      %v8052 = vadd.f32 %v8051, %v8021
      %v8053 = vadd.f32 %v8052, %v8022
      %v8054 = vadd.f32 %v8053, %v8023
      %v8055 = vadd.f32 %v8054, %v8024
      %v8056 = vadd.f32 %v8055, %v8025
      %v8057 = vadd.f32 %v8056, %v8026
      %v8058 = vadd.f32 %v8057, %v8027
      %v8059 = vadd.f32 %v8058, %v8028
      %v8060 = vadd.f32 %v8059, %v8029
      %v8061 = vadd.f32 %v8060, %v8030
      %v8062 = vadd.f32 %v8061, %v8031
      %v8063 = vadd.f32 %v8062, %v8032
      %v8064 = vadd.f32 %v8063, %v8033
      %v8065 = vadd.f32 %v8064, %v8034
      %v8066 = vadd.f32 %v8065, %v8035
      %v8067 = vadd.f32 %v8066, %v8036
      %v8068 = vrot.slane %v8067, 4
      %v8069 = vadd.f32 %v8067, %v8068
      %v8070 = vrot.slane %v8069, 2
      %v8071 = vadd.f32 %v8069, %v8070
      %v8072 = vrot.slane %v8071, 1
      %v8073 = vadd.f32 %v8071, %v8072
      %v8074 = vmul.f32 %v8073, 0.00390625
      %v8075 = vmul.f32 %v8004, %v8004
      %v8076 = vsub.f32 %v8074, %v8075
      %v8077 = vmax.f32 %v8076, 0.0
      %v8078 = vsub.f32 %v7935, %v8004
      %v8079 = vsub.f32 %v7936, %v8004
      %v8080 = vsub.f32 %v7937, %v8004
      %v8081 = vsub.f32 %v7938, %v8004
      %v8082 = vsub.f32 %v7939, %v8004
      %v8083 = vsub.f32 %v7940, %v8004
      %v8084 = vsub.f32 %v7941, %v8004
      %v8085 = vsub.f32 %v7942, %v8004
      %v8086 = vsub.f32 %v7943, %v8004
      %v8087 = vsub.f32 %v7944, %v8004
      %v8088 = vsub.f32 %v7945, %v8004
      %v8089 = vsub.f32 %v7946, %v8004
      %v8090 = vsub.f32 %v7947, %v8004
      %v8091 = vsub.f32 %v7948, %v8004
      %v8092 = vsub.f32 %v7949, %v8004
      %v8093 = vsub.f32 %v7950, %v8004
      %v8094 = vsub.f32 %v7951, %v8004
      %v8095 = vsub.f32 %v7952, %v8004
      %v8096 = vsub.f32 %v7953, %v8004
      %v8097 = vsub.f32 %v7954, %v8004
      %v8098 = vsub.f32 %v7955, %v8004
      %v8099 = vsub.f32 %v7956, %v8004
      %v8100 = vsub.f32 %v7957, %v8004
      %v8101 = vsub.f32 %v7958, %v8004
      %v8102 = vsub.f32 %v7959, %v8004
      %v8103 = vsub.f32 %v7960, %v8004
      %v8104 = vsub.f32 %v7961, %v8004
      %v8105 = vsub.f32 %v7962, %v8004
      %v8106 = vsub.f32 %v7963, %v8004
      %v8107 = vsub.f32 %v7964, %v8004
      %v8108 = vsub.f32 %v7965, %v8004
      %v8109 = vsub.f32 %v7966, %v8004
      %v8110 = vadd.f32 %v8077, 1e-05
      %v8111 = vrsqrt.pop %v8110
      %v8112 = vmul.f32 %v8078, %v8111
      %v8113 = vmul.f32 %v8079, %v8111
      %v8114 = vmul.f32 %v8080, %v8111
      %v8115 = vmul.f32 %v8081, %v8111
      %v8116 = vmul.f32 %v8082, %v8111
      %v8117 = vmul.f32 %v8083, %v8111
      %v8118 = vmul.f32 %v8084, %v8111
      %v8119 = vmul.f32 %v8085, %v8111
      %v8120 = vmul.f32 %v8086, %v8111
      %v8121 = vmul.f32 %v8087, %v8111
      %v8122 = vmul.f32 %v8088, %v8111
      %v8123 = vmul.f32 %v8089, %v8111
      %v8124 = vmul.f32 %v8090, %v8111
      %v8125 = vmul.f32 %v8091, %v8111
      %v8126 = vmul.f32 %v8092, %v8111
      %v8127 = vmul.f32 %v8093, %v8111
      %v8128 = vmul.f32 %v8094, %v8111
      %v8129 = vmul.f32 %v8095, %v8111
      %v8130 = vmul.f32 %v8096, %v8111
      %v8131 = vmul.f32 %v8097, %v8111
      %v8132 = vmul.f32 %v8098, %v8111
      %v8133 = vmul.f32 %v8099, %v8111
      %v8134 = vmul.f32 %v8100, %v8111
      %v8135 = vmul.f32 %v8101, %v8111
      %v8136 = vmul.f32 %v8102, %v8111
      %v8137 = vmul.f32 %v8103, %v8111
      %v8138 = vmul.f32 %v8104, %v8111
      %v8139 = vmul.f32 %v8105, %v8111
      %v8140 = vmul.f32 %v8106, %v8111
      %v8141 = vmul.f32 %v8107, %v8111
      %v8142 = vmul.f32 %v8108, %v8111
      %v8143 = vmul.f32 %v8109, %v8111
      %v8144 = vadd.f32 %v6436, %v8112
      %v8145 = vadd.f32 %v6437, %v8113
      %v8146 = vadd.f32 %v6438, %v8114
      %v8147 = vadd.f32 %v6439, %v8115
      %v8148 = vadd.f32 %v6440, %v8116
      %v8149 = vadd.f32 %v6441, %v8117
      %v8150 = vadd.f32 %v6442, %v8118
      %v8151 = vadd.f32 %v6443, %v8119
      %v8152 = vadd.f32 %v6444, %v8120
      %v8153 = vadd.f32 %v6445, %v8121
      %v8154 = vadd.f32 %v6446, %v8122
      %v8155 = vadd.f32 %v6447, %v8123
      %v8156 = vadd.f32 %v6448, %v8124
      %v8157 = vadd.f32 %v6449, %v8125
      %v8158 = vadd.f32 %v6450, %v8126
      %v8159 = vadd.f32 %v6451, %v8127
      %v8160 = vadd.f32 %v6452, %v8128
      %v8161 = vadd.f32 %v6453, %v8129
      %v8162 = vadd.f32 %v6454, %v8130
      %v8163 = vadd.f32 %v6455, %v8131
      %v8164 = vadd.f32 %v6456, %v8132
      %v8165 = vadd.f32 %v6457, %v8133
      %v8166 = vadd.f32 %v6458, %v8134
      %v8167 = vadd.f32 %v6459, %v8135
      %v8168 = vadd.f32 %v6460, %v8136
      %v8169 = vadd.f32 %v6461, %v8137
      %v8170 = vadd.f32 %v6462, %v8138
      %v8171 = vadd.f32 %v6463, %v8139
      %v8172 = vadd.f32 %v6464, %v8140
      %v8173 = vadd.f32 %v6465, %v8141
      %v8174 = vadd.f32 %v6466, %v8142
      %v8175 = vadd.f32 %v6467, %v8143
      %8176 = vst [vmem:[%s170] sm:$0xff] %v8144
      %8177 = vst [vmem:[%s170 + $0x8] sm:$0xff] %v8145
      %8178 = vst [vmem:[%s170 + $0x10] sm:$0xff] %v8146
      %8179 = vst [vmem:[%s170 + $0x18] sm:$0xff] %v8147
      %8180 = vst [vmem:[%s170 + $0x20] sm:$0xff] %v8148
      %8181 = vst [vmem:[%s170 + $0x28] sm:$0xff] %v8149
      %8182 = vst [vmem:[%s170 + $0x30] sm:$0xff] %v8150
      %8183 = vst [vmem:[%s170 + $0x38] sm:$0xff] %v8151
      %8184 = vst [vmem:[%s170 + $0x40] sm:$0xff] %v8152
      %8185 = vst [vmem:[%s170 + $0x48] sm:$0xff] %v8153
      %8186 = vst [vmem:[%s170 + $0x50] sm:$0xff] %v8154
      %8187 = vst [vmem:[%s170 + $0x58] sm:$0xff] %v8155
      %8188 = vst [vmem:[%s170 + $0x60] sm:$0xff] %v8156
      %8189 = vst [vmem:[%s170 + $0x68] sm:$0xff] %v8157
      %8190 = vst [vmem:[%s170 + $0x70] sm:$0xff] %v8158
      %8191 = vst [vmem:[%s170 + $0x78] sm:$0xff] %v8159
      %8192 = vst [vmem:[%s170 + $0x80] sm:$0xff] %v8160
      %8193 = vst [vmem:[%s170 + $0x88] sm:$0xff] %v8161
      %8194 = vst [vmem:[%s170 + $0x90] sm:$0xff] %v8162
      %8195 = vst [vmem:[%s170 + $0x98] sm:$0xff] %v8163
      %8196 = vst [vmem:[%s170 + $0xa0] sm:$0xff] %v8164
      %8197 = vst [vmem:[%s170 + $0xa8] sm:$0xff] %v8165
      %8198 = vst [vmem:[%s170 + $0xb0] sm:$0xff] %v8166
      %8199 = vst [vmem:[%s170 + $0xb8] sm:$0xff] %v8167
      %8200 = vst [vmem:[%s170 + $0xc0] sm:$0xff] %v8168
      %8201 = vst [vmem:[%s170 + $0xc8] sm:$0xff] %v8169
      %8202 = vst [vmem:[%s170 + $0xd0] sm:$0xff] %v8170
      %8203 = vst [vmem:[%s170 + $0xd8] sm:$0xff] %v8171
      %8204 = vst [vmem:[%s170 + $0xe0] sm:$0xff] %v8172
      %8205 = vst [vmem:[%s170 + $0xe8] sm:$0xff] %v8173
      %8206 = vst [vmem:[%s170 + $0xf0] sm:$0xff] %v8174
      %8207 = vst [vmem:[%s170 + $0xf8] sm:$0xff] %v8175
      %p8208 = scmp.lt.s32.totalorder %s14, 1
      %s8209 = scalar_select %p8208, %s14, 1
      %s8210 = smul.addr %s8209, 32
      %s8211 = smul.addr %s8210, 8
      %s8212 = scalar_lea.vmem %s3, %s8211
      // Predicated region
      $region33: #{residual_block.1} parent=31 // pred_check
        %p8213 = pneg %p100
      $region34: #{residual_block.1} parent=31 // pred_check_branch
        %8215 = sbr.rel (%p8213) target = $region36
      $region35: #{residual_block.1} parent=31 // pred_region
        _
      $region36: #{residual_block.1} parent=31 // pred_fallthru
        _
    $region32: #{residual_block.1} parent=5 // pred_fallthru
      _
    %p8216 = scmp.le.s32.totalorder 2, %s9
    // Predicated region
    $region37: #{residual_block.1} parent=5 // pred_check
      %p8217 = pneg %p8216
    $region38: #{residual_block.1} parent=5 // pred_check_branch
      %8219 = sbr.rel (%p8217) target = $region40
    $region39: #{residual_block.1} parent=5 // pred_region
      %s8220 = ssub.s32 %s9, 2
      // Predicated region
      $region41: #{residual_block.1} parent=39 // pred_check
        %p8221 = pneg %p106
      $region42: #{residual_block.1} parent=39 // pred_check_branch
        %8223 = sbr.rel (%p8221) target = $region44
      $region43: #{residual_block.1} parent=39 // pred_region
        %p8224 = scmp.lt.s32.totalorder %s15, 1
        %s8225 = scalar_select %p8224, %s15, 1
        %s8226 = smul.addr %s8225, 32
        %s8227 = smul.addr %s8226, 8
        %s8228 = scalar_lea.vmem %s3, %s8227
      $region44: #{residual_block.1} parent=39 // pred_fallthru
        _
    $region40: #{residual_block.1} parent=5 // pred_fallthru
      _
  $region6: #{residual_block.1} parent=0 // loop_footer
    %s13 = sadd.s32 1, %s9
  $region7: #{residual_block.1} parent=0 // loop_footer_branch
    %8 = sbr.rel target = $region3
  $region8: #{residual_block.1} parent=0 // loop_exit
    _

</llo_original>
